<compile_context>
chip_gen: v5e
topology: v5e:2x2
jax: 0.10.0
libtpu: 0.0.40
codegen_flags: <defaults>
</compile_context>

<pallas_src>
import functools
import math

import jax
import jax.numpy as jnp
from jax.experimental import pallas as pl
from jax.experimental.pallas import tpu as pltpu

LANE = 128
_EPS = 1e-5  # torch LayerNorm default

ENC_KEYS = ["wqkv", "bqkv", "wo", "bo", "ln1g", "ln1b",
            "w1", "b1", "w2", "b2", "ln2g", "ln2b"]
DEC_KEYS = ["sa_wqkv", "sa_bqkv", "sa_wo", "sa_bo", "ln1g", "ln1b",
            "ca_wqkv", "ca_bqkv", "ca_wo", "ca_bo", "ln2g", "ln2b",
            "w1", "b1", "w2", "b2", "ln3g", "ln3b"]


def _round_up(x, m):
    return ((x + m - 1) // m) * m


def _const_spec(shape):
    # Full-array block, constant index_map -> stays VMEM-resident across grid steps.
    return pl.BlockSpec(shape, lambda b: (0,) * len(shape))


# --------------------------------------------------------------------------
# The single fused forward kernel (one grid point == one batch element)
# --------------------------------------------------------------------------

def _make_fused_kernel(D, DP, nhead, n_enc, n_dec):
    dh = D // nhead
    scale = 1.0 / math.sqrt(dh)
    NE_ARR, ND_ARR = len(ENC_KEYS), len(DEC_KEYS)

    def kernel(x_ref, t_ref, *refs):
        out_ref = refs[-1]
        refs = refs[:-1]
        idx = 0
        enc = refs[idx:idx + NE_ARR]; idx += NE_ARR
        enc_ng, enc_nb = refs[idx], refs[idx + 1]; idx += 2
        dec = refs[idx:idx + ND_ARR]; idx += ND_ARR
        dec_ng, dec_nb = refs[idx], refs[idx + 1]; idx += 2
        out_w_ref, out_b_ref = refs[idx], refs[idx + 1]

        (e_wqkv, e_bqkv, e_wo, e_bo, e_g1, e_b1,
         e_w1, e_bf1, e_w2, e_bf2, e_g2, e_b2) = enc
        (d_sa_wqkv, d_sa_bqkv, d_sa_wo, d_sa_bo, d_g1, d_b1,
         d_ca_wqkv, d_ca_bqkv, d_ca_wo, d_ca_bo, d_g2, d_b2,
         d_w1, d_bf1, d_w2, d_bf2, d_g3, d_b3) = dec

        # hoisted lane masks (feature validity + per-head lane ranges)
        lane = jax.lax.broadcasted_iota(jnp.int32, (1, DP), 1)
        dmask = (lane < D).astype(jnp.float32)
        head_masks = [((lane >= h * dh) & (lane < (h + 1) * dh)).astype(jnp.float32)
                      for h in range(nhead)]
        inv_d = 1.0 / D

        def layer_norm(z, g, b):
            mu = jnp.sum(z * dmask, axis=-1, keepdims=True) * inv_d
            diff = (z - mu) * dmask
            var = jnp.sum(diff * diff, axis=-1, keepdims=True) * inv_d
            return diff * jax.lax.rsqrt(var + _EPS) * g + b

        def mha(xq, xkv, wqkv, bqkv, wo, bo, self_attn):
            # xq: (Sq, DP) f32 ; xkv: (Sk, DP) f32
            Sq = xq.shape[0]
            kv_bf = xkv.astype(jnp.bfloat16)
            qkv_kv = jnp.dot(kv_bf, wqkv,
                             preferred_element_type=jnp.float32) + bqkv   # (Sk, 3DP)
            k = qkv_kv[:, DP:2 * DP].astype(jnp.bfloat16)
            v = qkv_kv[:, 2 * DP:3 * DP].astype(jnp.bfloat16)
            if self_attn:
                q = qkv_kv[:, 0:DP]
            else:
                q = jnp.dot(xq.astype(jnp.bfloat16), wqkv[:, 0:DP],
                            preferred_element_type=jnp.float32) + bqkv[:, 0:DP]
            # stacked-head scores: ONE (nhead*Sq, DP) x (Sk, DP)^T matmul
            q_stack = jnp.concatenate([q * head_masks[h] for h in range(nhead)],
                                      axis=0)                             # (nhead*Sq, DP)
            s = jax.lax.dot_general(q_stack.astype(jnp.bfloat16), k,
                                    (((1,), (1,)), ((), ())),
                                    preferred_element_type=jnp.float32) * scale
            m = jnp.max(s, axis=-1, keepdims=True)
            e = jnp.exp(s - m)
            p = e * pl.reciprocal(jnp.sum(e, axis=-1, keepdims=True), approx=True)
            # ONE p·v matmul; then mask each head's row-block and sum over heads
            o_stack = jnp.dot(p.astype(jnp.bfloat16), v,
                              preferred_element_type=jnp.float32)         # (nhead*Sq, DP)
            attn = o_stack[0:Sq, :] * head_masks[0]
            for h in range(1, nhead):
                attn = attn + o_stack[h * Sq:(h + 1) * Sq, :] * head_masks[h]
            return jnp.dot(attn.astype(jnp.bfloat16), wo,
                           preferred_element_type=jnp.float32) + bo

        def ffn(y, w1, b1, w2, b2):
            h1 = jnp.maximum(jnp.dot(y.astype(jnp.bfloat16), w1,
                                     preferred_element_type=jnp.float32) + b1, 0.0)
            return jnp.dot(h1.astype(jnp.bfloat16), w2,
                           preferred_element_type=jnp.float32) + b2

        # ---- encoder (post-norm) ----
        x = x_ref[0]                                            # (S, DP) f32
        for i in range(n_enc):
            x = layer_norm(x + mha(x, x, e_wqkv[i], e_bqkv[i], e_wo[i], e_bo[i], True),
                           e_g1[i], e_b1[i])
            x = layer_norm(x + ffn(x, e_w1[i], e_bf1[i], e_w2[i], e_bf2[i]),
                           e_g2[i], e_b2[i])
        mem = layer_norm(x, enc_ng[...], enc_nb[...])           # final encoder norm

        # ---- decoder (post-norm) ----
        t = t_ref[0]                                            # (T, DP) f32
        for i in range(n_dec):
            t = layer_norm(t + mha(t, t, d_sa_wqkv[i], d_sa_bqkv[i],
                                   d_sa_wo[i], d_sa_bo[i], True),
                           d_g1[i], d_b1[i])
            t = layer_norm(t + mha(t, mem, d_ca_wqkv[i], d_ca_bqkv[i],
                                   d_ca_wo[i], d_ca_bo[i], False),
                           d_g2[i], d_b2[i])
            t = layer_norm(t + ffn(t, d_w1[i], d_bf1[i], d_w2[i], d_bf2[i]),
                           d_g3[i], d_b3[i])
        t = layer_norm(t, dec_ng[...], dec_nb[...])             # final decoder norm

        # ---- output head: Linear(d_model -> vocab) + Softmax over the SEQ axis ----
        logits = jnp.dot(t.astype(jnp.bfloat16), out_w_ref[...],
                         preferred_element_type=jnp.float32) + out_b_ref[...]  # (T, VP)
        m = jnp.max(logits, axis=0, keepdims=True)              # softmax(dim=1) == seq axis
        e = jnp.exp(logits - m)
        out_ref[0] = e / jnp.sum(e, axis=0, keepdims=True)

    return kernel


# --------------------------------------------------------------------------
# Forward wrapper: one pallas_call for the whole model
# --------------------------------------------------------------------------

def transformer_forward(params, src_tokens, tgt_tokens, *, d_model, nhead, tgt_vocab):
    # embedding lookup (gather) is XLA glue; tables are pre-padded to 128 lanes
    x = params["src_embed"][src_tokens]                         # (B, S, DP) f32
    t = params["tgt_embed"][tgt_tokens]                         # (B, T, DP) f32
    B, S, DP = x.shape
    T = t.shape[1]
    VP = params["out_w"].shape[1]
    n_enc = params["enc"]["wqkv"].shape[0]
    n_dec = params["dec"]["sa_wqkv"].shape[0]

    weight_args = ([params["enc"][k] for k in ENC_KEYS]
                   + [params["enc_norm_g"], params["enc_norm_b"]]
                   + [params["dec"][k] for k in DEC_KEYS]
                   + [params["dec_norm_g"], params["dec_norm_b"]]
                   + [params["out_w"], params["out_b"]])

    kernel = _make_fused_kernel(d_model, DP, nhead, n_enc, n_dec)
    in_specs = ([pl.BlockSpec((1, S, DP), lambda b: (b, 0, 0)),
                 pl.BlockSpec((1, T, DP), lambda b: (b, 0, 0))]
                + [_const_spec(a.shape) for a in weight_args])

    out = pl.pallas_call(
        kernel,
        out_shape=jax.ShapeDtypeStruct((B, T, VP), jnp.float32),
        grid=(B,),
        in_specs=in_specs,
        out_specs=pl.BlockSpec((1, T, VP), lambda b: (b, 0, 0)),
        compiler_params=pltpu.CompilerParams(dimension_semantics=("parallel",)),
    )(x, t, *weight_args)
    return out[:, :, :tgt_vocab]


# --------------------------------------------------------------------------
# Deterministic parameter initialization (lane-padded; matmul weights in bf16)
# --------------------------------------------------------------------------

def _pad_matrix(w, rows_p, cols_p):
    r, c = w.shape
    return jnp.zeros((rows_p, cols_p), jnp.float32).at[:r, :c].set(w)


def _pad_rowvec(v, cols_p):
    return jnp.zeros((1, cols_p), jnp.float32).at[0, :v.shape[0]].set(v)


def _linear(key, fan_in, fan_out):
    k1, k2 = jax.random.split(key)
    bound = 1.0 / math.sqrt(fan_in)
    w = jax.random.uniform(k1, (fan_in, fan_out), jnp.float32, -bound, bound)
    b = jax.random.uniform(k2, (fan_out,), jnp.float32, -bound, bound)
    return w, b


def _mha_params(key, d_model, DP):
    ks = jax.random.split(key, 4)
    wq, bq = _linear(ks[0], d_model, d_model)
    wk, bk = _linear(ks[1], d_model, d_model)
    wv, bv = _linear(ks[2], d_model, d_model)
    wo, bo = _linear(ks[3], d_model, d_model)
    wqkv = jnp.concatenate([_pad_matrix(wq, DP, DP), _pad_matrix(wk, DP, DP),
                            _pad_matrix(wv, DP, DP)], axis=1)     # (DP, 3DP)
    bqkv = jnp.concatenate([_pad_rowvec(bq, DP), _pad_rowvec(bk, DP),
                            _pad_rowvec(bv, DP)], axis=1)         # (1, 3DP)
    return (wqkv.astype(jnp.bfloat16), bqkv,
            _pad_matrix(wo, DP, DP).astype(jnp.bfloat16), _pad_rowvec(bo, DP))


def _ln_params(d_model, DP):
    # gamma/beta zero-padded beyond d_model so padded lanes stay exactly zero after LN
    return (_pad_rowvec(jnp.ones((d_model,), jnp.float32), DP),
            _pad_rowvec(jnp.zeros((d_model,), jnp.float32), DP))


def init_params(key, src_vocab, tgt_vocab, d_model, nhead, d_ff=100,
                n_enc_layers=2, n_dec_layers=2):
    DP = _round_up(d_model, LANE)
    FP = _round_up(d_ff, LANE)
    VP = _round_up(tgt_vocab, LANE)
    keys = jax.random.split(key, 8)
    params = {}

    src_e = jax.random.normal(keys[0], (src_vocab, d_model), jnp.float32)
    tgt_e = jax.random.normal(keys[1], (tgt_vocab, d_model), jnp.float32)
    params["src_embed"] = _pad_matrix(src_e, src_vocab, DP)
    params["tgt_embed"] = _pad_matrix(tgt_e, tgt_vocab, DP)

    # encoder layers (stacked along a leading layer axis)
    enc = {k: [] for k in ENC_KEYS}
    enc_rand = jax.random.split(keys[2], n_enc_layers)
    for i in range(n_enc_layers):
        ks = jax.random.split(enc_rand[i], 3)
        wqkv, bqkv, wo, bo = _mha_params(ks[0], d_model, DP)
        w1, b1 = _linear(ks[1], d_model, d_ff)
        w2, b2 = _linear(ks[2], d_ff, d_model)
        g1, bb1 = _ln_params(d_model, DP)
        g2, bb2 = _ln_params(d_model, DP)
        vals = [wqkv, bqkv, wo, bo, g1, bb1,
                _pad_matrix(w1, DP, FP).astype(jnp.bfloat16), _pad_rowvec(b1, FP),
                _pad_matrix(w2, FP, DP).astype(jnp.bfloat16), _pad_rowvec(b2, DP),
                g2, bb2]
        for k, v in zip(ENC_KEYS, vals):
            enc[k].append(v)
    params["enc"] = {k: jnp.stack(v) for k, v in enc.items()}

    # decoder layers
    dec = {k: [] for k in DEC_KEYS}
    dec_rand = jax.random.split(keys[3], n_dec_layers)
    for i in range(n_dec_layers):
        ks = jax.random.split(dec_rand[i], 4)
        sa = _mha_params(ks[0], d_model, DP)
        ca = _mha_params(ks[1], d_model, DP)
        w1, b1 = _linear(ks[2], d_model, d_ff)
        w2, b2 = _linear(ks[3], d_ff, d_model)
        g1, bb1 = _ln_params(d_model, DP)
        g2, bb2 = _ln_params(d_model, DP)
        g3, bb3 = _ln_params(d_model, DP)
        vals = [sa[0], sa[1], sa[2], sa[3], g1, bb1,
                ca[0], ca[1], ca[2], ca[3], g2, bb2,
                _pad_matrix(w1, DP, FP).astype(jnp.bfloat16), _pad_rowvec(b1, FP),
                _pad_matrix(w2, FP, DP).astype(jnp.bfloat16), _pad_rowvec(b2, DP),
                g3, bb3]
        for k, v in zip(DEC_KEYS, vals):
            dec[k].append(v)
    params["dec"] = {k: jnp.stack(v) for k, v in dec.items()}

    params["enc_norm_g"], params["enc_norm_b"] = _ln_params(d_model, DP)
    params["dec_norm_g"], params["dec_norm_b"] = _ln_params(d_model, DP)

    ow, ob = _linear(keys[4], d_model, tgt_vocab)
    params["out_w"] = _pad_matrix(ow, DP, VP).astype(jnp.bfloat16)
    params["out_b"] = _pad_rowvec(ob, VP)
    return params


# --------------------------------------------------------------------------
# Main
# --------------------------------------------------------------------------

if __name__ == "__main__":
    SRC_VOCAB, TGT_VOCAB = 50, 40
    D_MODEL, NHEAD = 32, 4
    B, S, T = 2, 8, 8

    key = jax.random.PRNGKey(0)
    kp, kx, kt = jax.random.split(key, 3)

    params = init_params(kp, SRC_VOCAB, TGT_VOCAB, D_MODEL, NHEAD)
    src_tokens = jax.random.randint(kx, (B, S), 0, SRC_VOCAB, dtype=jnp.int32)
    tgt_tokens = jax.random.randint(kt, (B, T), 0, TGT_VOCAB, dtype=jnp.int32)

    fwd = jax.jit(functools.partial(transformer_forward,
                                    d_model=D_MODEL, nhead=NHEAD, tgt_vocab=TGT_VOCAB))
    out = jax.block_until_ready(fwd(params, src_tokens, tgt_tokens))

    assert out.shape == (B, T, TGT_VOCAB), out.shape
    # nn.Softmax(dim=1): sums over the sequence axis are 1
    colsum = jnp.sum(out, axis=1)
    assert bool(jnp.all(jnp.abs(colsum - 1.0) < 1e-4)), colsum
    assert bool(jnp.all(jnp.isfinite(out)))
    print("KERNEL_OK")
</pallas_src>

<mosaic_0001>
module attributes {stable_mosaic.version = 11 : i64} {
  func.func @kernel(%arg0: i32, %arg1: memref<1x8x128xf32, #tpu.memory_space<vmem>>, %arg2: memref<1x8x128xf32, #tpu.memory_space<vmem>>, %arg3: memref<2x128x384xbf16, #tpu.memory_space<vmem>>, %arg4: memref<2x1x384xf32, #tpu.memory_space<vmem>>, %arg5: memref<2x128x128xbf16, #tpu.memory_space<vmem>>, %arg6: memref<2x1x128xf32, #tpu.memory_space<vmem>>, %arg7: memref<2x1x128xf32, #tpu.memory_space<vmem>>, %arg8: memref<2x1x128xf32, #tpu.memory_space<vmem>>, %arg9: memref<2x128x128xbf16, #tpu.memory_space<vmem>>, %arg10: memref<2x1x128xf32, #tpu.memory_space<vmem>>, %arg11: memref<2x128x128xbf16, #tpu.memory_space<vmem>>, %arg12: memref<2x1x128xf32, #tpu.memory_space<vmem>>, %arg13: memref<2x1x128xf32, #tpu.memory_space<vmem>>, %arg14: memref<2x1x128xf32, #tpu.memory_space<vmem>>, %arg15: memref<1x128xf32, #tpu.memory_space<vmem>>, %arg16: memref<1x128xf32, #tpu.memory_space<vmem>>, %arg17: memref<2x128x384xbf16, #tpu.memory_space<vmem>>, %arg18: memref<2x1x384xf32, #tpu.memory_space<vmem>>, %arg19: memref<2x128x128xbf16, #tpu.memory_space<vmem>>, %arg20: memref<2x1x128xf32, #tpu.memory_space<vmem>>, %arg21: memref<2x1x128xf32, #tpu.memory_space<vmem>>, %arg22: memref<2x1x128xf32, #tpu.memory_space<vmem>>, %arg23: memref<2x128x384xbf16, #tpu.memory_space<vmem>>, %arg24: memref<2x1x384xf32, #tpu.memory_space<vmem>>, %arg25: memref<2x128x128xbf16, #tpu.memory_space<vmem>>, %arg26: memref<2x1x128xf32, #tpu.memory_space<vmem>>, %arg27: memref<2x1x128xf32, #tpu.memory_space<vmem>>, %arg28: memref<2x1x128xf32, #tpu.memory_space<vmem>>, %arg29: memref<2x128x128xbf16, #tpu.memory_space<vmem>>, %arg30: memref<2x1x128xf32, #tpu.memory_space<vmem>>, %arg31: memref<2x128x128xbf16, #tpu.memory_space<vmem>>, %arg32: memref<2x1x128xf32, #tpu.memory_space<vmem>>, %arg33: memref<2x1x128xf32, #tpu.memory_space<vmem>>, %arg34: memref<2x1x128xf32, #tpu.memory_space<vmem>>, %arg35: memref<1x128xf32, #tpu.memory_space<vmem>>, %arg36: memref<1x128xf32, #tpu.memory_space<vmem>>, %arg37: memref<128x128xbf16, #tpu.memory_space<vmem>>, %arg38: memref<1x128xf32, #tpu.memory_space<vmem>>, %arg39: memref<1x8x128xf32, #tpu.memory_space<vmem>>) attributes {dimension_semantics = [#tpu.dimension_semantics<parallel>], iteration_bounds = array<i64: 2>, scalar_prefetch = 0 : i64, scratch_operands = 0 : i64, tpu.core_type = #tpu.core_type<tc>, window_params = [{transform_indices = @transform_0, window_bounds = array<i64: 1, 8, 128>}, {transform_indices = @transform_1, window_bounds = array<i64: 1, 8, 128>}, {pipeline_mode = #tpu.pipeline_mode<synchronous>, transform_indices = @transform_2, window_bounds = array<i64: 2, 128, 384>}, {pipeline_mode = #tpu.pipeline_mode<synchronous>, transform_indices = @transform_3, window_bounds = array<i64: 2, 1, 384>}, {pipeline_mode = #tpu.pipeline_mode<synchronous>, transform_indices = @transform_4, window_bounds = array<i64: 2, 128, 128>}, {pipeline_mode = #tpu.pipeline_mode<synchronous>, transform_indices = @transform_5, window_bounds = array<i64: 2, 1, 128>}, {pipeline_mode = #tpu.pipeline_mode<synchronous>, transform_indices = @transform_6, window_bounds = array<i64: 2, 1, 128>}, {pipeline_mode = #tpu.pipeline_mode<synchronous>, transform_indices = @transform_7, window_bounds = array<i64: 2, 1, 128>}, {pipeline_mode = #tpu.pipeline_mode<synchronous>, transform_indices = @transform_8, window_bounds = array<i64: 2, 128, 128>}, {pipeline_mode = #tpu.pipeline_mode<synchronous>, transform_indices = @transform_9, window_bounds = array<i64: 2, 1, 128>}, {pipeline_mode = #tpu.pipeline_mode<synchronous>, transform_indices = @transform_10, window_bounds = array<i64: 2, 128, 128>}, {pipeline_mode = #tpu.pipeline_mode<synchronous>, transform_indices = @transform_11, window_bounds = array<i64: 2, 1, 128>}, {pipeline_mode = #tpu.pipeline_mode<synchronous>, transform_indices = @transform_12, window_bounds = array<i64: 2, 1, 128>}, {pipeline_mode = #tpu.pipeline_mode<synchronous>, transform_indices = @transform_13, window_bounds = array<i64: 2, 1, 128>}, {pipeline_mode = #tpu.pipeline_mode<synchronous>, transform_indices = @transform_14, window_bounds = array<i64: 1, 128>}, {pipeline_mode = #tpu.pipeline_mode<synchronous>, transform_indices = @transform_15, window_bounds = array<i64: 1, 128>}, {pipeline_mode = #tpu.pipeline_mode<synchronous>, transform_indices = @transform_16, window_bounds = array<i64: 2, 128, 384>}, {pipeline_mode = #tpu.pipeline_mode<synchronous>, transform_indices = @transform_17, window_bounds = array<i64: 2, 1, 384>}, {pipeline_mode = #tpu.pipeline_mode<synchronous>, transform_indices = @transform_18, window_bounds = array<i64: 2, 128, 128>}, {pipeline_mode = #tpu.pipeline_mode<synchronous>, transform_indices = @transform_19, window_bounds = array<i64: 2, 1, 128>}, {pipeline_mode = #tpu.pipeline_mode<synchronous>, transform_indices = @transform_20, window_bounds = array<i64: 2, 1, 128>}, {pipeline_mode = #tpu.pipeline_mode<synchronous>, transform_indices = @transform_21, window_bounds = array<i64: 2, 1, 128>}, {pipeline_mode = #tpu.pipeline_mode<synchronous>, transform_indices = @transform_22, window_bounds = array<i64: 2, 128, 384>}, {pipeline_mode = #tpu.pipeline_mode<synchronous>, transform_indices = @transform_23, window_bounds = array<i64: 2, 1, 384>}, {pipeline_mode = #tpu.pipeline_mode<synchronous>, transform_indices = @transform_24, window_bounds = array<i64: 2, 128, 128>}, {pipeline_mode = #tpu.pipeline_mode<synchronous>, transform_indices = @transform_25, window_bounds = array<i64: 2, 1, 128>}, {pipeline_mode = #tpu.pipeline_mode<synchronous>, transform_indices = @transform_26, window_bounds = array<i64: 2, 1, 128>}, {pipeline_mode = #tpu.pipeline_mode<synchronous>, transform_indices = @transform_27, window_bounds = array<i64: 2, 1, 128>}, {pipeline_mode = #tpu.pipeline_mode<synchronous>, transform_indices = @transform_28, window_bounds = array<i64: 2, 128, 128>}, {pipeline_mode = #tpu.pipeline_mode<synchronous>, transform_indices = @transform_29, window_bounds = array<i64: 2, 1, 128>}, {pipeline_mode = #tpu.pipeline_mode<synchronous>, transform_indices = @transform_30, window_bounds = array<i64: 2, 128, 128>}, {pipeline_mode = #tpu.pipeline_mode<synchronous>, transform_indices = @transform_31, window_bounds = array<i64: 2, 1, 128>}, {pipeline_mode = #tpu.pipeline_mode<synchronous>, transform_indices = @transform_32, window_bounds = array<i64: 2, 1, 128>}, {pipeline_mode = #tpu.pipeline_mode<synchronous>, transform_indices = @transform_33, window_bounds = array<i64: 2, 1, 128>}, {pipeline_mode = #tpu.pipeline_mode<synchronous>, transform_indices = @transform_34, window_bounds = array<i64: 1, 128>}, {pipeline_mode = #tpu.pipeline_mode<synchronous>, transform_indices = @transform_35, window_bounds = array<i64: 1, 128>}, {pipeline_mode = #tpu.pipeline_mode<synchronous>, transform_indices = @transform_36, window_bounds = array<i64: 128, 128>}, {pipeline_mode = #tpu.pipeline_mode<synchronous>, transform_indices = @transform_37, window_bounds = array<i64: 1, 128>}, {transform_indices = @transform_38, window_bounds = array<i64: 1, 8, 128>}]} {
    %0 = tpu.iota {dimensions = array<i32: 1>} : vector<1x128xi32>
    %c32_i32 = arith.constant 32 : i32
    %1 = vector.broadcast %c32_i32 : i32 to vector<1x128xi32>
    %2 = arith.cmpi slt, %0, %1 : vector<1x128xi32>
    %3 = arith.extui %2 : vector<1x128xi1> to vector<1x128xi32>
    %4 = arith.sitofp %3 : vector<1x128xi32> to vector<1x128xf32>
    %c0_i32 = arith.constant 0 : i32
    %5 = vector.broadcast %c0_i32 : i32 to vector<1x128xi32>
    %6 = arith.cmpi sge, %0, %5 : vector<1x128xi32>
    %c8_i32 = arith.constant 8 : i32
    %7 = vector.broadcast %c8_i32 : i32 to vector<1x128xi32>
    %8 = arith.cmpi slt, %0, %7 : vector<1x128xi32>
    %9 = arith.andi %6, %8 : vector<1x128xi1>
    %10 = arith.extui %9 : vector<1x128xi1> to vector<1x128xi32>
    %11 = arith.sitofp %10 : vector<1x128xi32> to vector<1x128xf32>
    %c8_i32_0 = arith.constant 8 : i32
    %12 = vector.broadcast %c8_i32_0 : i32 to vector<1x128xi32>
    %13 = arith.cmpi sge, %0, %12 : vector<1x128xi32>
    %c16_i32 = arith.constant 16 : i32
    %14 = vector.broadcast %c16_i32 : i32 to vector<1x128xi32>
    %15 = arith.cmpi slt, %0, %14 : vector<1x128xi32>
    %16 = arith.andi %13, %15 : vector<1x128xi1>
    %17 = arith.extui %16 : vector<1x128xi1> to vector<1x128xi32>
    %18 = arith.sitofp %17 : vector<1x128xi32> to vector<1x128xf32>
    %c16_i32_1 = arith.constant 16 : i32
    %19 = vector.broadcast %c16_i32_1 : i32 to vector<1x128xi32>
    %20 = arith.cmpi sge, %0, %19 : vector<1x128xi32>
    %c24_i32 = arith.constant 24 : i32
    %21 = vector.broadcast %c24_i32 : i32 to vector<1x128xi32>
    %22 = arith.cmpi slt, %0, %21 : vector<1x128xi32>
    %23 = arith.andi %20, %22 : vector<1x128xi1>
    %24 = arith.extui %23 : vector<1x128xi1> to vector<1x128xi32>
    %25 = arith.sitofp %24 : vector<1x128xi32> to vector<1x128xf32>
    %c24_i32_2 = arith.constant 24 : i32
    %26 = vector.broadcast %c24_i32_2 : i32 to vector<1x128xi32>
    %27 = arith.cmpi sge, %0, %26 : vector<1x128xi32>
    %c32_i32_3 = arith.constant 32 : i32
    %28 = vector.broadcast %c32_i32_3 : i32 to vector<1x128xi32>
    %29 = arith.cmpi slt, %0, %28 : vector<1x128xi32>
    %30 = arith.andi %27, %29 : vector<1x128xi1>
    %31 = arith.extui %30 : vector<1x128xi1> to vector<1x128xi32>
    %32 = arith.sitofp %31 : vector<1x128xi32> to vector<1x128xf32>
    %c0 = arith.constant 0 : index
    %c0_4 = arith.constant 0 : index
    %c0_5 = arith.constant 0 : index
    %33 = vector.load %arg1[%c0, %c0_4, %c0_5] : memref<1x8x128xf32, #tpu.memory_space<vmem>>, vector<1x8x128xf32>
    %34 = vector.shape_cast %33 : vector<1x8x128xf32> to vector<8x128xf32>
    %c0_6 = arith.constant 0 : index
    %c0_7 = arith.constant 0 : index
    %c0_8 = arith.constant 0 : index
    %35 = vector.load %arg3[%c0_6, %c0_7, %c0_8] : memref<2x128x384xbf16, #tpu.memory_space<vmem>>, vector<1x128x384xbf16>
    %36 = vector.shape_cast %35 : vector<1x128x384xbf16> to vector<128x384xbf16>
    %c0_9 = arith.constant 0 : index
    %c0_10 = arith.constant 0 : index
    %c0_11 = arith.constant 0 : index
    %37 = vector.load %arg4[%c0_9, %c0_10, %c0_11] : memref<2x1x384xf32, #tpu.memory_space<vmem>>, vector<1x1x384xf32>
    %38 = vector.shape_cast %37 : vector<1x1x384xf32> to vector<1x384xf32>
    %c0_12 = arith.constant 0 : index
    %c0_13 = arith.constant 0 : index
    %c0_14 = arith.constant 0 : index
    %39 = vector.load %arg5[%c0_12, %c0_13, %c0_14] : memref<2x128x128xbf16, #tpu.memory_space<vmem>>, vector<1x128x128xbf16>
    %40 = vector.shape_cast %39 : vector<1x128x128xbf16> to vector<128x128xbf16>
    %c0_15 = arith.constant 0 : index
    %c0_16 = arith.constant 0 : index
    %c0_17 = arith.constant 0 : index
    %41 = vector.load %arg6[%c0_15, %c0_16, %c0_17] : memref<2x1x128xf32, #tpu.memory_space<vmem>>, vector<1x1x128xf32>
    %42 = vector.shape_cast %41 : vector<1x1x128xf32> to vector<1x128xf32>
    %43 = arith.truncf %34 : vector<8x128xf32> to vector<8x128xbf16>
    %cst = arith.constant dense<0.000000e+00> : vector<8x384xf32>
    %44 = tpu.matmul %43, %36, %cst {dimension_numbers = #tpu.dot_dimension_numbers<[1], [0], [0], [1], [0, 0, 1, 1], [], []>} : vector<8x128xbf16>, vector<128x384xbf16>, vector<8x384xf32> -> vector<8x384xf32>
    %45 = vector.broadcast %38 : vector<1x384xf32> to vector<8x384xf32>
    %46 = arith.addf %44, %45 : vector<8x384xf32>
    %47 = vector.extract_strided_slice %46 {offsets = [0, 128], sizes = [8, 128], strides = [1, 1]} : vector<8x384xf32> to vector<8x128xf32>
    %48 = arith.truncf %47 : vector<8x128xf32> to vector<8x128xbf16>
    %49 = vector.extract_strided_slice %46 {offsets = [0, 256], sizes = [8, 128], strides = [1, 1]} : vector<8x384xf32> to vector<8x128xf32>
    %50 = arith.truncf %49 : vector<8x128xf32> to vector<8x128xbf16>
    %51 = vector.extract_strided_slice %46 {offsets = [0, 0], sizes = [8, 128], strides = [1, 1]} : vector<8x384xf32> to vector<8x128xf32>
    %52 = vector.broadcast %11 : vector<1x128xf32> to vector<8x128xf32>
    %53 = arith.mulf %51, %52 : vector<8x128xf32>
    %54 = vector.broadcast %18 : vector<1x128xf32> to vector<8x128xf32>
    %55 = arith.mulf %51, %54 : vector<8x128xf32>
    %56 = vector.broadcast %25 : vector<1x128xf32> to vector<8x128xf32>
    %57 = arith.mulf %51, %56 : vector<8x128xf32>
    %58 = vector.broadcast %32 : vector<1x128xf32> to vector<8x128xf32>
    %59 = arith.mulf %51, %58 : vector<8x128xf32>
    %60 = tpu.concatenate %53, %55, %57, %59 in 0 : vector<8x128xf32>, vector<8x128xf32>, vector<8x128xf32>, vector<8x128xf32> -> vector<32x128xf32>
    %61 = arith.truncf %60 : vector<32x128xf32> to vector<32x128xbf16>
    %cst_18 = arith.constant dense<0.000000e+00> : vector<32x8xf32>
    %62 = tpu.matmul %61, %48, %cst_18 {dimension_numbers = #tpu.dot_dimension_numbers<[1], [1], [0], [0], [0, 0, 1, 0], [], []>} : vector<32x128xbf16>, vector<8x128xbf16>, vector<32x8xf32> -> vector<32x8xf32>
    %cst_19 = arith.constant 0.353553385 : f32
    %63 = vector.broadcast %cst_19 : f32 to vector<32x8xf32>
    %64 = arith.mulf %62, %63 : vector<32x8xf32>
    %cst_20 = arith.constant dense<0xFF800000> : vector<32xf32>
    %65 = vector.multi_reduction <maximumf>, %64, %cst_20 [1] : vector<32x8xf32> to vector<32xf32>
    %66 = vector.shape_cast %65 : vector<32xf32> to vector<32x1xf32>
    %67 = vector.broadcast %66 : vector<32x1xf32> to vector<32x8xf32>
    %68 = arith.subf %64, %67 : vector<32x8xf32>
    %69 = math.exp %68 : vector<32x8xf32>
    %cst_21 = arith.constant dense<0.000000e+00> : vector<32xf32>
    %70 = vector.multi_reduction <add>, %69, %cst_21 [1] : vector<32x8xf32> to vector<32xf32>
    %71 = vector.shape_cast %70 : vector<32xf32> to vector<32x1xf32>
    %72 = tpu.reciprocal %71 {approx = true} : vector<32x1xf32> -> vector<32x1xf32>
    %73 = vector.broadcast %72 : vector<32x1xf32> to vector<32x8xf32>
    %74 = arith.mulf %69, %73 : vector<32x8xf32>
    %75 = arith.truncf %74 : vector<32x8xf32> to vector<32x8xbf16>
    %cst_22 = arith.constant dense<0.000000e+00> : vector<32x128xf32>
    %76 = tpu.matmul %75, %50, %cst_22 {dimension_numbers = #tpu.dot_dimension_numbers<[1], [0], [0], [1], [0, 0, 1, 1], [], []>} : vector<32x8xbf16>, vector<8x128xbf16>, vector<32x128xf32> -> vector<32x128xf32>
    %77 = vector.extract_strided_slice %76 {offsets = [0, 0], sizes = [8, 128], strides = [1, 1]} : vector<32x128xf32> to vector<8x128xf32>
    %78 = vector.broadcast %11 : vector<1x128xf32> to vector<8x128xf32>
    %79 = arith.mulf %77, %78 : vector<8x128xf32>
    %80 = vector.extract_strided_slice %76 {offsets = [8, 0], sizes = [8, 128], strides = [1, 1]} : vector<32x128xf32> to vector<8x128xf32>
    %81 = vector.broadcast %18 : vector<1x128xf32> to vector<8x128xf32>
    %82 = arith.mulf %80, %81 : vector<8x128xf32>
    %83 = arith.addf %79, %82 : vector<8x128xf32>
    %84 = vector.extract_strided_slice %76 {offsets = [16, 0], sizes = [8, 128], strides = [1, 1]} : vector<32x128xf32> to vector<8x128xf32>
    %85 = vector.broadcast %25 : vector<1x128xf32> to vector<8x128xf32>
    %86 = arith.mulf %84, %85 : vector<8x128xf32>
    %87 = arith.addf %83, %86 : vector<8x128xf32>
    %88 = vector.extract_strided_slice %76 {offsets = [24, 0], sizes = [8, 128], strides = [1, 1]} : vector<32x128xf32> to vector<8x128xf32>
    %89 = vector.broadcast %32 : vector<1x128xf32> to vector<8x128xf32>
    %90 = arith.mulf %88, %89 : vector<8x128xf32>
    %91 = arith.addf %87, %90 : vector<8x128xf32>
    %92 = arith.truncf %91 : vector<8x128xf32> to vector<8x128xbf16>
    %cst_23 = arith.constant dense<0.000000e+00> : vector<8x128xf32>
    %93 = tpu.matmul %92, %40, %cst_23 {dimension_numbers = #tpu.dot_dimension_numbers<[1], [0], [0], [1], [0, 0, 1, 1], [], []>} : vector<8x128xbf16>, vector<128x128xbf16>, vector<8x128xf32> -> vector<8x128xf32>
    %94 = vector.broadcast %42 : vector<1x128xf32> to vector<8x128xf32>
    %95 = arith.addf %93, %94 : vector<8x128xf32>
    %96 = arith.addf %34, %95 : vector<8x128xf32>
    %c0_24 = arith.constant 0 : index
    %c0_25 = arith.constant 0 : index
    %c0_26 = arith.constant 0 : index
    %97 = vector.load %arg7[%c0_24, %c0_25, %c0_26] : memref<2x1x128xf32, #tpu.memory_space<vmem>>, vector<1x1x128xf32>
    %98 = vector.shape_cast %97 : vector<1x1x128xf32> to vector<1x128xf32>
    %c0_27 = arith.constant 0 : index
    %c0_28 = arith.constant 0 : index
    %c0_29 = arith.constant 0 : index
    %99 = vector.load %arg8[%c0_27, %c0_28, %c0_29] : memref<2x1x128xf32, #tpu.memory_space<vmem>>, vector<1x1x128xf32>
    %100 = vector.shape_cast %99 : vector<1x1x128xf32> to vector<1x128xf32>
    %101 = vector.broadcast %4 : vector<1x128xf32> to vector<8x128xf32>
    %102 = arith.mulf %96, %101 : vector<8x128xf32>
    %cst_30 = arith.constant dense<0.000000e+00> : vector<8xf32>
    %103 = vector.multi_reduction <add>, %102, %cst_30 [1] : vector<8x128xf32> to vector<8xf32>
    %104 = vector.shape_cast %103 : vector<8xf32> to vector<8x1xf32>
    %cst_31 = arith.constant 3.125000e-02 : f32
    %105 = vector.broadcast %cst_31 : f32 to vector<8x1xf32>
    %106 = arith.mulf %104, %105 : vector<8x1xf32>
    %107 = vector.broadcast %106 : vector<8x1xf32> to vector<8x128xf32>
    %108 = arith.subf %96, %107 : vector<8x128xf32>
    %109 = vector.broadcast %4 : vector<1x128xf32> to vector<8x128xf32>
    %110 = arith.mulf %108, %109 : vector<8x128xf32>
    %111 = arith.mulf %110, %110 : vector<8x128xf32>
    %cst_32 = arith.constant dense<0.000000e+00> : vector<8xf32>
    %112 = vector.multi_reduction <add>, %111, %cst_32 [1] : vector<8x128xf32> to vector<8xf32>
    %113 = vector.shape_cast %112 : vector<8xf32> to vector<8x1xf32>
    %cst_33 = arith.constant 3.125000e-02 : f32
    %114 = vector.broadcast %cst_33 : f32 to vector<8x1xf32>
    %115 = arith.mulf %113, %114 : vector<8x1xf32>
    %cst_34 = arith.constant 9.99999974E-6 : f32
    %116 = vector.broadcast %cst_34 : f32 to vector<8x1xf32>
    %117 = arith.addf %115, %116 : vector<8x1xf32>
    %118 = math.rsqrt %117 : vector<8x1xf32>
    %119 = vector.broadcast %118 : vector<8x1xf32> to vector<8x128xf32>
    %120 = arith.mulf %110, %119 : vector<8x128xf32>
    %121 = vector.broadcast %98 : vector<1x128xf32> to vector<8x128xf32>
    %122 = arith.mulf %120, %121 : vector<8x128xf32>
    %123 = vector.broadcast %100 : vector<1x128xf32> to vector<8x128xf32>
    %124 = arith.addf %122, %123 : vector<8x128xf32>
    %c0_35 = arith.constant 0 : index
    %c0_36 = arith.constant 0 : index
    %c0_37 = arith.constant 0 : index
    %125 = vector.load %arg9[%c0_35, %c0_36, %c0_37] : memref<2x128x128xbf16, #tpu.memory_space<vmem>>, vector<1x128x128xbf16>
    %126 = vector.shape_cast %125 : vector<1x128x128xbf16> to vector<128x128xbf16>
    %c0_38 = arith.constant 0 : index
    %c0_39 = arith.constant 0 : index
    %c0_40 = arith.constant 0 : index
    %127 = vector.load %arg10[%c0_38, %c0_39, %c0_40] : memref<2x1x128xf32, #tpu.memory_space<vmem>>, vector<1x1x128xf32>
    %128 = vector.shape_cast %127 : vector<1x1x128xf32> to vector<1x128xf32>
    %c0_41 = arith.constant 0 : index
    %c0_42 = arith.constant 0 : index
    %c0_43 = arith.constant 0 : index
    %129 = vector.load %arg11[%c0_41, %c0_42, %c0_43] : memref<2x128x128xbf16, #tpu.memory_space<vmem>>, vector<1x128x128xbf16>
    %130 = vector.shape_cast %129 : vector<1x128x128xbf16> to vector<128x128xbf16>
    %c0_44 = arith.constant 0 : index
    %c0_45 = arith.constant 0 : index
    %c0_46 = arith.constant 0 : index
    %131 = vector.load %arg12[%c0_44, %c0_45, %c0_46] : memref<2x1x128xf32, #tpu.memory_space<vmem>>, vector<1x1x128xf32>
    %132 = vector.shape_cast %131 : vector<1x1x128xf32> to vector<1x128xf32>
    %133 = arith.truncf %124 : vector<8x128xf32> to vector<8x128xbf16>
    %cst_47 = arith.constant dense<0.000000e+00> : vector<8x128xf32>
    %134 = tpu.matmul %133, %126, %cst_47 {dimension_numbers = #tpu.dot_dimension_numbers<[1], [0], [0], [1], [0, 0, 1, 1], [], []>} : vector<8x128xbf16>, vector<128x128xbf16>, vector<8x128xf32> -> vector<8x128xf32>
    %135 = vector.broadcast %128 : vector<1x128xf32> to vector<8x128xf32>
    %136 = arith.addf %134, %135 : vector<8x128xf32>
    %cst_48 = arith.constant 0.000000e+00 : f32
    %137 = vector.broadcast %cst_48 : f32 to vector<8x128xf32>
    %138 = arith.maximumf %136, %137 : vector<8x128xf32>
    %139 = arith.truncf %138 : vector<8x128xf32> to vector<8x128xbf16>
    %cst_49 = arith.constant dense<0.000000e+00> : vector<8x128xf32>
    %140 = tpu.matmul %139, %130, %cst_49 {dimension_numbers = #tpu.dot_dimension_numbers<[1], [0], [0], [1], [0, 0, 1, 1], [], []>} : vector<8x128xbf16>, vector<128x128xbf16>, vector<8x128xf32> -> vector<8x128xf32>
    %141 = vector.broadcast %132 : vector<1x128xf32> to vector<8x128xf32>
    %142 = arith.addf %140, %141 : vector<8x128xf32>
    %143 = arith.addf %124, %142 : vector<8x128xf32>
    %c0_50 = arith.constant 0 : index
    %c0_51 = arith.constant 0 : index
    %c0_52 = arith.constant 0 : index
    %144 = vector.load %arg13[%c0_50, %c0_51, %c0_52] : memref<2x1x128xf32, #tpu.memory_space<vmem>>, vector<1x1x128xf32>
    %145 = vector.shape_cast %144 : vector<1x1x128xf32> to vector<1x128xf32>
    %c0_53 = arith.constant 0 : index
    %c0_54 = arith.constant 0 : index
    %c0_55 = arith.constant 0 : index
    %146 = vector.load %arg14[%c0_53, %c0_54, %c0_55] : memref<2x1x128xf32, #tpu.memory_space<vmem>>, vector<1x1x128xf32>
    %147 = vector.shape_cast %146 : vector<1x1x128xf32> to vector<1x128xf32>
    %148 = vector.broadcast %4 : vector<1x128xf32> to vector<8x128xf32>
    %149 = arith.mulf %143, %148 : vector<8x128xf32>
    %cst_56 = arith.constant dense<0.000000e+00> : vector<8xf32>
    %150 = vector.multi_reduction <add>, %149, %cst_56 [1] : vector<8x128xf32> to vector<8xf32>
    %151 = vector.shape_cast %150 : vector<8xf32> to vector<8x1xf32>
    %cst_57 = arith.constant 3.125000e-02 : f32
    %152 = vector.broadcast %cst_57 : f32 to vector<8x1xf32>
    %153 = arith.mulf %151, %152 : vector<8x1xf32>
    %154 = vector.broadcast %153 : vector<8x1xf32> to vector<8x128xf32>
    %155 = arith.subf %143, %154 : vector<8x128xf32>
    %156 = vector.broadcast %4 : vector<1x128xf32> to vector<8x128xf32>
    %157 = arith.mulf %155, %156 : vector<8x128xf32>
    %158 = arith.mulf %157, %157 : vector<8x128xf32>
    %cst_58 = arith.constant dense<0.000000e+00> : vector<8xf32>
    %159 = vector.multi_reduction <add>, %158, %cst_58 [1] : vector<8x128xf32> to vector<8xf32>
    %160 = vector.shape_cast %159 : vector<8xf32> to vector<8x1xf32>
    %cst_59 = arith.constant 3.125000e-02 : f32
    %161 = vector.broadcast %cst_59 : f32 to vector<8x1xf32>
    %162 = arith.mulf %160, %161 : vector<8x1xf32>
    %cst_60 = arith.constant 9.99999974E-6 : f32
    %163 = vector.broadcast %cst_60 : f32 to vector<8x1xf32>
    %164 = arith.addf %162, %163 : vector<8x1xf32>
    %165 = math.rsqrt %164 : vector<8x1xf32>
    %166 = vector.broadcast %165 : vector<8x1xf32> to vector<8x128xf32>
    %167 = arith.mulf %157, %166 : vector<8x128xf32>
    %168 = vector.broadcast %145 : vector<1x128xf32> to vector<8x128xf32>
    %169 = arith.mulf %167, %168 : vector<8x128xf32>
    %170 = vector.broadcast %147 : vector<1x128xf32> to vector<8x128xf32>
    %171 = arith.addf %169, %170 : vector<8x128xf32>
    %c1 = arith.constant 1 : index
    %c0_61 = arith.constant 0 : index
    %c0_62 = arith.constant 0 : index
    %172 = vector.load %arg3[%c1, %c0_61, %c0_62] : memref<2x128x384xbf16, #tpu.memory_space<vmem>>, vector<1x128x384xbf16>
    %173 = vector.shape_cast %172 : vector<1x128x384xbf16> to vector<128x384xbf16>
    %c1_63 = arith.constant 1 : index
    %c0_64 = arith.constant 0 : index
    %c0_65 = arith.constant 0 : index
    %174 = vector.load %arg4[%c1_63, %c0_64, %c0_65] : memref<2x1x384xf32, #tpu.memory_space<vmem>>, vector<1x1x384xf32>
    %175 = vector.shape_cast %174 : vector<1x1x384xf32> to vector<1x384xf32>
    %c1_66 = arith.constant 1 : index
    %c0_67 = arith.constant 0 : index
    %c0_68 = arith.constant 0 : index
    %176 = vector.load %arg5[%c1_66, %c0_67, %c0_68] : memref<2x128x128xbf16, #tpu.memory_space<vmem>>, vector<1x128x128xbf16>
    %177 = vector.shape_cast %176 : vector<1x128x128xbf16> to vector<128x128xbf16>
    %c1_69 = arith.constant 1 : index
    %c0_70 = arith.constant 0 : index
    %c0_71 = arith.constant 0 : index
    %178 = vector.load %arg6[%c1_69, %c0_70, %c0_71] : memref<2x1x128xf32, #tpu.memory_space<vmem>>, vector<1x1x128xf32>
    %179 = vector.shape_cast %178 : vector<1x1x128xf32> to vector<1x128xf32>
    %180 = arith.truncf %171 : vector<8x128xf32> to vector<8x128xbf16>
    %cst_72 = arith.constant dense<0.000000e+00> : vector<8x384xf32>
    %181 = tpu.matmul %180, %173, %cst_72 {dimension_numbers = #tpu.dot_dimension_numbers<[1], [0], [0], [1], [0, 0, 1, 1], [], []>} : vector<8x128xbf16>, vector<128x384xbf16>, vector<8x384xf32> -> vector<8x384xf32>
    %182 = vector.broadcast %175 : vector<1x384xf32> to vector<8x384xf32>
    %183 = arith.addf %181, %182 : vector<8x384xf32>
    %184 = vector.extract_strided_slice %183 {offsets = [0, 128], sizes = [8, 128], strides = [1, 1]} : vector<8x384xf32> to vector<8x128xf32>
    %185 = arith.truncf %184 : vector<8x128xf32> to vector<8x128xbf16>
    %186 = vector.extract_strided_slice %183 {offsets = [0, 256], sizes = [8, 128], strides = [1, 1]} : vector<8x384xf32> to vector<8x128xf32>
    %187 = arith.truncf %186 : vector<8x128xf32> to vector<8x128xbf16>
    %188 = vector.extract_strided_slice %183 {offsets = [0, 0], sizes = [8, 128], strides = [1, 1]} : vector<8x384xf32> to vector<8x128xf32>
    %189 = vector.broadcast %11 : vector<1x128xf32> to vector<8x128xf32>
    %190 = arith.mulf %188, %189 : vector<8x128xf32>
    %191 = vector.broadcast %18 : vector<1x128xf32> to vector<8x128xf32>
    %192 = arith.mulf %188, %191 : vector<8x128xf32>
    %193 = vector.broadcast %25 : vector<1x128xf32> to vector<8x128xf32>
    %194 = arith.mulf %188, %193 : vector<8x128xf32>
    %195 = vector.broadcast %32 : vector<1x128xf32> to vector<8x128xf32>
    %196 = arith.mulf %188, %195 : vector<8x128xf32>
    %197 = tpu.concatenate %190, %192, %194, %196 in 0 : vector<8x128xf32>, vector<8x128xf32>, vector<8x128xf32>, vector<8x128xf32> -> vector<32x128xf32>
    %198 = arith.truncf %197 : vector<32x128xf32> to vector<32x128xbf16>
    %cst_73 = arith.constant dense<0.000000e+00> : vector<32x8xf32>
    %199 = tpu.matmul %198, %185, %cst_73 {dimension_numbers = #tpu.dot_dimension_numbers<[1], [1], [0], [0], [0, 0, 1, 0], [], []>} : vector<32x128xbf16>, vector<8x128xbf16>, vector<32x8xf32> -> vector<32x8xf32>
    %cst_74 = arith.constant 0.353553385 : f32
    %200 = vector.broadcast %cst_74 : f32 to vector<32x8xf32>
    %201 = arith.mulf %199, %200 : vector<32x8xf32>
    %cst_75 = arith.constant dense<0xFF800000> : vector<32xf32>
    %202 = vector.multi_reduction <maximumf>, %201, %cst_75 [1] : vector<32x8xf32> to vector<32xf32>
    %203 = vector.shape_cast %202 : vector<32xf32> to vector<32x1xf32>
    %204 = vector.broadcast %203 : vector<32x1xf32> to vector<32x8xf32>
    %205 = arith.subf %201, %204 : vector<32x8xf32>
    %206 = math.exp %205 : vector<32x8xf32>
    %cst_76 = arith.constant dense<0.000000e+00> : vector<32xf32>
    %207 = vector.multi_reduction <add>, %206, %cst_76 [1] : vector<32x8xf32> to vector<32xf32>
    %208 = vector.shape_cast %207 : vector<32xf32> to vector<32x1xf32>
    %209 = tpu.reciprocal %208 {approx = true} : vector<32x1xf32> -> vector<32x1xf32>
    %210 = vector.broadcast %209 : vector<32x1xf32> to vector<32x8xf32>
    %211 = arith.mulf %206, %210 : vector<32x8xf32>
    %212 = arith.truncf %211 : vector<32x8xf32> to vector<32x8xbf16>
    %cst_77 = arith.constant dense<0.000000e+00> : vector<32x128xf32>
    %213 = tpu.matmul %212, %187, %cst_77 {dimension_numbers = #tpu.dot_dimension_numbers<[1], [0], [0], [1], [0, 0, 1, 1], [], []>} : vector<32x8xbf16>, vector<8x128xbf16>, vector<32x128xf32> -> vector<32x128xf32>
    %214 = vector.extract_strided_slice %213 {offsets = [0, 0], sizes = [8, 128], strides = [1, 1]} : vector<32x128xf32> to vector<8x128xf32>
    %215 = vector.broadcast %11 : vector<1x128xf32> to vector<8x128xf32>
    %216 = arith.mulf %214, %215 : vector<8x128xf32>
    %217 = vector.extract_strided_slice %213 {offsets = [8, 0], sizes = [8, 128], strides = [1, 1]} : vector<32x128xf32> to vector<8x128xf32>
    %218 = vector.broadcast %18 : vector<1x128xf32> to vector<8x128xf32>
    %219 = arith.mulf %217, %218 : vector<8x128xf32>
    %220 = arith.addf %216, %219 : vector<8x128xf32>
    %221 = vector.extract_strided_slice %213 {offsets = [16, 0], sizes = [8, 128], strides = [1, 1]} : vector<32x128xf32> to vector<8x128xf32>
    %222 = vector.broadcast %25 : vector<1x128xf32> to vector<8x128xf32>
    %223 = arith.mulf %221, %222 : vector<8x128xf32>
    %224 = arith.addf %220, %223 : vector<8x128xf32>
    %225 = vector.extract_strided_slice %213 {offsets = [24, 0], sizes = [8, 128], strides = [1, 1]} : vector<32x128xf32> to vector<8x128xf32>
    %226 = vector.broadcast %32 : vector<1x128xf32> to vector<8x128xf32>
    %227 = arith.mulf %225, %226 : vector<8x128xf32>
    %228 = arith.addf %224, %227 : vector<8x128xf32>
    %229 = arith.truncf %228 : vector<8x128xf32> to vector<8x128xbf16>
    %cst_78 = arith.constant dense<0.000000e+00> : vector<8x128xf32>
    %230 = tpu.matmul %229, %177, %cst_78 {dimension_numbers = #tpu.dot_dimension_numbers<[1], [0], [0], [1], [0, 0, 1, 1], [], []>} : vector<8x128xbf16>, vector<128x128xbf16>, vector<8x128xf32> -> vector<8x128xf32>
    %231 = vector.broadcast %179 : vector<1x128xf32> to vector<8x128xf32>
    %232 = arith.addf %230, %231 : vector<8x128xf32>
    %233 = arith.addf %171, %232 : vector<8x128xf32>
    %c1_79 = arith.constant 1 : index
    %c0_80 = arith.constant 0 : index
    %c0_81 = arith.constant 0 : index
    %234 = vector.load %arg7[%c1_79, %c0_80, %c0_81] : memref<2x1x128xf32, #tpu.memory_space<vmem>>, vector<1x1x128xf32>
    %235 = vector.shape_cast %234 : vector<1x1x128xf32> to vector<1x128xf32>
    %c1_82 = arith.constant 1 : index
    %c0_83 = arith.constant 0 : index
    %c0_84 = arith.constant 0 : index
    %236 = vector.load %arg8[%c1_82, %c0_83, %c0_84] : memref<2x1x128xf32, #tpu.memory_space<vmem>>, vector<1x1x128xf32>
    %237 = vector.shape_cast %236 : vector<1x1x128xf32> to vector<1x128xf32>
    %238 = vector.broadcast %4 : vector<1x128xf32> to vector<8x128xf32>
    %239 = arith.mulf %233, %238 : vector<8x128xf32>
    %cst_85 = arith.constant dense<0.000000e+00> : vector<8xf32>
    %240 = vector.multi_reduction <add>, %239, %cst_85 [1] : vector<8x128xf32> to vector<8xf32>
    %241 = vector.shape_cast %240 : vector<8xf32> to vector<8x1xf32>
    %cst_86 = arith.constant 3.125000e-02 : f32
    %242 = vector.broadcast %cst_86 : f32 to vector<8x1xf32>
    %243 = arith.mulf %241, %242 : vector<8x1xf32>
    %244 = vector.broadcast %243 : vector<8x1xf32> to vector<8x128xf32>
    %245 = arith.subf %233, %244 : vector<8x128xf32>
    %246 = vector.broadcast %4 : vector<1x128xf32> to vector<8x128xf32>
    %247 = arith.mulf %245, %246 : vector<8x128xf32>
    %248 = arith.mulf %247, %247 : vector<8x128xf32>
    %cst_87 = arith.constant dense<0.000000e+00> : vector<8xf32>
    %249 = vector.multi_reduction <add>, %248, %cst_87 [1] : vector<8x128xf32> to vector<8xf32>
    %250 = vector.shape_cast %249 : vector<8xf32> to vector<8x1xf32>
    %cst_88 = arith.constant 3.125000e-02 : f32
    %251 = vector.broadcast %cst_88 : f32 to vector<8x1xf32>
    %252 = arith.mulf %250, %251 : vector<8x1xf32>
    %cst_89 = arith.constant 9.99999974E-6 : f32
    %253 = vector.broadcast %cst_89 : f32 to vector<8x1xf32>
    %254 = arith.addf %252, %253 : vector<8x1xf32>
    %255 = math.rsqrt %254 : vector<8x1xf32>
    %256 = vector.broadcast %255 : vector<8x1xf32> to vector<8x128xf32>
    %257 = arith.mulf %247, %256 : vector<8x128xf32>
    %258 = vector.broadcast %235 : vector<1x128xf32> to vector<8x128xf32>
    %259 = arith.mulf %257, %258 : vector<8x128xf32>
    %260 = vector.broadcast %237 : vector<1x128xf32> to vector<8x128xf32>
    %261 = arith.addf %259, %260 : vector<8x128xf32>
    %c1_90 = arith.constant 1 : index
    %c0_91 = arith.constant 0 : index
    %c0_92 = arith.constant 0 : index
    %262 = vector.load %arg9[%c1_90, %c0_91, %c0_92] : memref<2x128x128xbf16, #tpu.memory_space<vmem>>, vector<1x128x128xbf16>
    %263 = vector.shape_cast %262 : vector<1x128x128xbf16> to vector<128x128xbf16>
    %c1_93 = arith.constant 1 : index
    %c0_94 = arith.constant 0 : index
    %c0_95 = arith.constant 0 : index
    %264 = vector.load %arg10[%c1_93, %c0_94, %c0_95] : memref<2x1x128xf32, #tpu.memory_space<vmem>>, vector<1x1x128xf32>
    %265 = vector.shape_cast %264 : vector<1x1x128xf32> to vector<1x128xf32>
    %c1_96 = arith.constant 1 : index
    %c0_97 = arith.constant 0 : index
    %c0_98 = arith.constant 0 : index
    %266 = vector.load %arg11[%c1_96, %c0_97, %c0_98] : memref<2x128x128xbf16, #tpu.memory_space<vmem>>, vector<1x128x128xbf16>
    %267 = vector.shape_cast %266 : vector<1x128x128xbf16> to vector<128x128xbf16>
    %c1_99 = arith.constant 1 : index
    %c0_100 = arith.constant 0 : index
    %c0_101 = arith.constant 0 : index
    %268 = vector.load %arg12[%c1_99, %c0_100, %c0_101] : memref<2x1x128xf32, #tpu.memory_space<vmem>>, vector<1x1x128xf32>
    %269 = vector.shape_cast %268 : vector<1x1x128xf32> to vector<1x128xf32>
    %270 = arith.truncf %261 : vector<8x128xf32> to vector<8x128xbf16>
    %cst_102 = arith.constant dense<0.000000e+00> : vector<8x128xf32>
    %271 = tpu.matmul %270, %263, %cst_102 {dimension_numbers = #tpu.dot_dimension_numbers<[1], [0], [0], [1], [0, 0, 1, 1], [], []>} : vector<8x128xbf16>, vector<128x128xbf16>, vector<8x128xf32> -> vector<8x128xf32>
    %272 = vector.broadcast %265 : vector<1x128xf32> to vector<8x128xf32>
    %273 = arith.addf %271, %272 : vector<8x128xf32>
    %cst_103 = arith.constant 0.000000e+00 : f32
    %274 = vector.broadcast %cst_103 : f32 to vector<8x128xf32>
    %275 = arith.maximumf %273, %274 : vector<8x128xf32>
    %276 = arith.truncf %275 : vector<8x128xf32> to vector<8x128xbf16>
    %cst_104 = arith.constant dense<0.000000e+00> : vector<8x128xf32>
    %277 = tpu.matmul %276, %267, %cst_104 {dimension_numbers = #tpu.dot_dimension_numbers<[1], [0], [0], [1], [0, 0, 1, 1], [], []>} : vector<8x128xbf16>, vector<128x128xbf16>, vector<8x128xf32> -> vector<8x128xf32>
    %278 = vector.broadcast %269 : vector<1x128xf32> to vector<8x128xf32>
    %279 = arith.addf %277, %278 : vector<8x128xf32>
    %280 = arith.addf %261, %279 : vector<8x128xf32>
    %c1_105 = arith.constant 1 : index
    %c0_106 = arith.constant 0 : index
    %c0_107 = arith.constant 0 : index
    %281 = vector.load %arg13[%c1_105, %c0_106, %c0_107] : memref<2x1x128xf32, #tpu.memory_space<vmem>>, vector<1x1x128xf32>
    %282 = vector.shape_cast %281 : vector<1x1x128xf32> to vector<1x128xf32>
    %c1_108 = arith.constant 1 : index
    %c0_109 = arith.constant 0 : index
    %c0_110 = arith.constant 0 : index
    %283 = vector.load %arg14[%c1_108, %c0_109, %c0_110] : memref<2x1x128xf32, #tpu.memory_space<vmem>>, vector<1x1x128xf32>
    %284 = vector.shape_cast %283 : vector<1x1x128xf32> to vector<1x128xf32>
    %285 = vector.broadcast %4 : vector<1x128xf32> to vector<8x128xf32>
    %286 = arith.mulf %280, %285 : vector<8x128xf32>
    %cst_111 = arith.constant dense<0.000000e+00> : vector<8xf32>
    %287 = vector.multi_reduction <add>, %286, %cst_111 [1] : vector<8x128xf32> to vector<8xf32>
    %288 = vector.shape_cast %287 : vector<8xf32> to vector<8x1xf32>
    %cst_112 = arith.constant 3.125000e-02 : f32
    %289 = vector.broadcast %cst_112 : f32 to vector<8x1xf32>
    %290 = arith.mulf %288, %289 : vector<8x1xf32>
    %291 = vector.broadcast %290 : vector<8x1xf32> to vector<8x128xf32>
    %292 = arith.subf %280, %291 : vector<8x128xf32>
    %293 = vector.broadcast %4 : vector<1x128xf32> to vector<8x128xf32>
    %294 = arith.mulf %292, %293 : vector<8x128xf32>
    %295 = arith.mulf %294, %294 : vector<8x128xf32>
    %cst_113 = arith.constant dense<0.000000e+00> : vector<8xf32>
    %296 = vector.multi_reduction <add>, %295, %cst_113 [1] : vector<8x128xf32> to vector<8xf32>
    %297 = vector.shape_cast %296 : vector<8xf32> to vector<8x1xf32>
    %cst_114 = arith.constant 3.125000e-02 : f32
    %298 = vector.broadcast %cst_114 : f32 to vector<8x1xf32>
    %299 = arith.mulf %297, %298 : vector<8x1xf32>
    %cst_115 = arith.constant 9.99999974E-6 : f32
    %300 = vector.broadcast %cst_115 : f32 to vector<8x1xf32>
    %301 = arith.addf %299, %300 : vector<8x1xf32>
    %302 = math.rsqrt %301 : vector<8x1xf32>
    %303 = vector.broadcast %302 : vector<8x1xf32> to vector<8x128xf32>
    %304 = arith.mulf %294, %303 : vector<8x128xf32>
    %305 = vector.broadcast %282 : vector<1x128xf32> to vector<8x128xf32>
    %306 = arith.mulf %304, %305 : vector<8x128xf32>
    %307 = vector.broadcast %284 : vector<1x128xf32> to vector<8x128xf32>
    %308 = arith.addf %306, %307 : vector<8x128xf32>
    %c0_116 = arith.constant 0 : index
    %c0_117 = arith.constant 0 : index
    %309 = vector.load %arg15[%c0_116, %c0_117] : memref<1x128xf32, #tpu.memory_space<vmem>>, vector<1x128xf32>
    %c0_118 = arith.constant 0 : index
    %c0_119 = arith.constant 0 : index
    %310 = vector.load %arg16[%c0_118, %c0_119] : memref<1x128xf32, #tpu.memory_space<vmem>>, vector<1x128xf32>
    %311 = vector.broadcast %4 : vector<1x128xf32> to vector<8x128xf32>
    %312 = arith.mulf %308, %311 : vector<8x128xf32>
    %cst_120 = arith.constant dense<0.000000e+00> : vector<8xf32>
    %313 = vector.multi_reduction <add>, %312, %cst_120 [1] : vector<8x128xf32> to vector<8xf32>
    %314 = vector.shape_cast %313 : vector<8xf32> to vector<8x1xf32>
    %cst_121 = arith.constant 3.125000e-02 : f32
    %315 = vector.broadcast %cst_121 : f32 to vector<8x1xf32>
    %316 = arith.mulf %314, %315 : vector<8x1xf32>
    %317 = vector.broadcast %316 : vector<8x1xf32> to vector<8x128xf32>
    %318 = arith.subf %308, %317 : vector<8x128xf32>
    %319 = vector.broadcast %4 : vector<1x128xf32> to vector<8x128xf32>
    %320 = arith.mulf %318, %319 : vector<8x128xf32>
    %321 = arith.mulf %320, %320 : vector<8x128xf32>
    %cst_122 = arith.constant dense<0.000000e+00> : vector<8xf32>
    %322 = vector.multi_reduction <add>, %321, %cst_122 [1] : vector<8x128xf32> to vector<8xf32>
    %323 = vector.shape_cast %322 : vector<8xf32> to vector<8x1xf32>
    %cst_123 = arith.constant 3.125000e-02 : f32
    %324 = vector.broadcast %cst_123 : f32 to vector<8x1xf32>
    %325 = arith.mulf %323, %324 : vector<8x1xf32>
    %cst_124 = arith.constant 9.99999974E-6 : f32
    %326 = vector.broadcast %cst_124 : f32 to vector<8x1xf32>
    %327 = arith.addf %325, %326 : vector<8x1xf32>
    %328 = math.rsqrt %327 : vector<8x1xf32>
    %329 = vector.broadcast %328 : vector<8x1xf32> to vector<8x128xf32>
    %330 = arith.mulf %320, %329 : vector<8x128xf32>
    %331 = vector.broadcast %309 : vector<1x128xf32> to vector<8x128xf32>
    %332 = arith.mulf %330, %331 : vector<8x128xf32>
    %333 = vector.broadcast %310 : vector<1x128xf32> to vector<8x128xf32>
    %334 = arith.addf %332, %333 : vector<8x128xf32>
    %c0_125 = arith.constant 0 : index
    %c0_126 = arith.constant 0 : index
    %c0_127 = arith.constant 0 : index
    %335 = vector.load %arg2[%c0_125, %c0_126, %c0_127] : memref<1x8x128xf32, #tpu.memory_space<vmem>>, vector<1x8x128xf32>
    %336 = vector.shape_cast %335 : vector<1x8x128xf32> to vector<8x128xf32>
    %c0_128 = arith.constant 0 : index
    %c0_129 = arith.constant 0 : index
    %c0_130 = arith.constant 0 : index
    %337 = vector.load %arg17[%c0_128, %c0_129, %c0_130] : memref<2x128x384xbf16, #tpu.memory_space<vmem>>, vector<1x128x384xbf16>
    %338 = vector.shape_cast %337 : vector<1x128x384xbf16> to vector<128x384xbf16>
    %c0_131 = arith.constant 0 : index
    %c0_132 = arith.constant 0 : index
    %c0_133 = arith.constant 0 : index
    %339 = vector.load %arg18[%c0_131, %c0_132, %c0_133] : memref<2x1x384xf32, #tpu.memory_space<vmem>>, vector<1x1x384xf32>
    %340 = vector.shape_cast %339 : vector<1x1x384xf32> to vector<1x384xf32>
    %c0_134 = arith.constant 0 : index
    %c0_135 = arith.constant 0 : index
    %c0_136 = arith.constant 0 : index
    %341 = vector.load %arg19[%c0_134, %c0_135, %c0_136] : memref<2x128x128xbf16, #tpu.memory_space<vmem>>, vector<1x128x128xbf16>
    %342 = vector.shape_cast %341 : vector<1x128x128xbf16> to vector<128x128xbf16>
    %c0_137 = arith.constant 0 : index
    %c0_138 = arith.constant 0 : index
    %c0_139 = arith.constant 0 : index
    %343 = vector.load %arg20[%c0_137, %c0_138, %c0_139] : memref<2x1x128xf32, #tpu.memory_space<vmem>>, vector<1x1x128xf32>
    %344 = vector.shape_cast %343 : vector<1x1x128xf32> to vector<1x128xf32>
    %345 = arith.truncf %336 : vector<8x128xf32> to vector<8x128xbf16>
    %cst_140 = arith.constant dense<0.000000e+00> : vector<8x384xf32>
    %346 = tpu.matmul %345, %338, %cst_140 {dimension_numbers = #tpu.dot_dimension_numbers<[1], [0], [0], [1], [0, 0, 1, 1], [], []>} : vector<8x128xbf16>, vector<128x384xbf16>, vector<8x384xf32> -> vector<8x384xf32>
    %347 = vector.broadcast %340 : vector<1x384xf32> to vector<8x384xf32>
    %348 = arith.addf %346, %347 : vector<8x384xf32>
    %349 = vector.extract_strided_slice %348 {offsets = [0, 128], sizes = [8, 128], strides = [1, 1]} : vector<8x384xf32> to vector<8x128xf32>
    %350 = arith.truncf %349 : vector<8x128xf32> to vector<8x128xbf16>
    %351 = vector.extract_strided_slice %348 {offsets = [0, 256], sizes = [8, 128], strides = [1, 1]} : vector<8x384xf32> to vector<8x128xf32>
    %352 = arith.truncf %351 : vector<8x128xf32> to vector<8x128xbf16>
    %353 = vector.extract_strided_slice %348 {offsets = [0, 0], sizes = [8, 128], strides = [1, 1]} : vector<8x384xf32> to vector<8x128xf32>
    %354 = vector.broadcast %11 : vector<1x128xf32> to vector<8x128xf32>
    %355 = arith.mulf %353, %354 : vector<8x128xf32>
    %356 = vector.broadcast %18 : vector<1x128xf32> to vector<8x128xf32>
    %357 = arith.mulf %353, %356 : vector<8x128xf32>
    %358 = vector.broadcast %25 : vector<1x128xf32> to vector<8x128xf32>
    %359 = arith.mulf %353, %358 : vector<8x128xf32>
    %360 = vector.broadcast %32 : vector<1x128xf32> to vector<8x128xf32>
    %361 = arith.mulf %353, %360 : vector<8x128xf32>
    %362 = tpu.concatenate %355, %357, %359, %361 in 0 : vector<8x128xf32>, vector<8x128xf32>, vector<8x128xf32>, vector<8x128xf32> -> vector<32x128xf32>
    %363 = arith.truncf %362 : vector<32x128xf32> to vector<32x128xbf16>
    %cst_141 = arith.constant dense<0.000000e+00> : vector<32x8xf32>
    %364 = tpu.matmul %363, %350, %cst_141 {dimension_numbers = #tpu.dot_dimension_numbers<[1], [1], [0], [0], [0, 0, 1, 0], [], []>} : vector<32x128xbf16>, vector<8x128xbf16>, vector<32x8xf32> -> vector<32x8xf32>
    %cst_142 = arith.constant 0.353553385 : f32
    %365 = vector.broadcast %cst_142 : f32 to vector<32x8xf32>
    %366 = arith.mulf %364, %365 : vector<32x8xf32>
    %cst_143 = arith.constant dense<0xFF800000> : vector<32xf32>
    %367 = vector.multi_reduction <maximumf>, %366, %cst_143 [1] : vector<32x8xf32> to vector<32xf32>
    %368 = vector.shape_cast %367 : vector<32xf32> to vector<32x1xf32>
    %369 = vector.broadcast %368 : vector<32x1xf32> to vector<32x8xf32>
    %370 = arith.subf %366, %369 : vector<32x8xf32>
    %371 = math.exp %370 : vector<32x8xf32>
    %cst_144 = arith.constant dense<0.000000e+00> : vector<32xf32>
    %372 = vector.multi_reduction <add>, %371, %cst_144 [1] : vector<32x8xf32> to vector<32xf32>
    %373 = vector.shape_cast %372 : vector<32xf32> to vector<32x1xf32>
    %374 = tpu.reciprocal %373 {approx = true} : vector<32x1xf32> -> vector<32x1xf32>
    %375 = vector.broadcast %374 : vector<32x1xf32> to vector<32x8xf32>
    %376 = arith.mulf %371, %375 : vector<32x8xf32>
    %377 = arith.truncf %376 : vector<32x8xf32> to vector<32x8xbf16>
    %cst_145 = arith.constant dense<0.000000e+00> : vector<32x128xf32>
    %378 = tpu.matmul %377, %352, %cst_145 {dimension_numbers = #tpu.dot_dimension_numbers<[1], [0], [0], [1], [0, 0, 1, 1], [], []>} : vector<32x8xbf16>, vector<8x128xbf16>, vector<32x128xf32> -> vector<32x128xf32>
    %379 = vector.extract_strided_slice %378 {offsets = [0, 0], sizes = [8, 128], strides = [1, 1]} : vector<32x128xf32> to vector<8x128xf32>
    %380 = vector.broadcast %11 : vector<1x128xf32> to vector<8x128xf32>
    %381 = arith.mulf %379, %380 : vector<8x128xf32>
    %382 = vector.extract_strided_slice %378 {offsets = [8, 0], sizes = [8, 128], strides = [1, 1]} : vector<32x128xf32> to vector<8x128xf32>
    %383 = vector.broadcast %18 : vector<1x128xf32> to vector<8x128xf32>
    %384 = arith.mulf %382, %383 : vector<8x128xf32>
    %385 = arith.addf %381, %384 : vector<8x128xf32>
    %386 = vector.extract_strided_slice %378 {offsets = [16, 0], sizes = [8, 128], strides = [1, 1]} : vector<32x128xf32> to vector<8x128xf32>
    %387 = vector.broadcast %25 : vector<1x128xf32> to vector<8x128xf32>
    %388 = arith.mulf %386, %387 : vector<8x128xf32>
    %389 = arith.addf %385, %388 : vector<8x128xf32>
    %390 = vector.extract_strided_slice %378 {offsets = [24, 0], sizes = [8, 128], strides = [1, 1]} : vector<32x128xf32> to vector<8x128xf32>
    %391 = vector.broadcast %32 : vector<1x128xf32> to vector<8x128xf32>
    %392 = arith.mulf %390, %391 : vector<8x128xf32>
    %393 = arith.addf %389, %392 : vector<8x128xf32>
    %394 = arith.truncf %393 : vector<8x128xf32> to vector<8x128xbf16>
    %cst_146 = arith.constant dense<0.000000e+00> : vector<8x128xf32>
    %395 = tpu.matmul %394, %342, %cst_146 {dimension_numbers = #tpu.dot_dimension_numbers<[1], [0], [0], [1], [0, 0, 1, 1], [], []>} : vector<8x128xbf16>, vector<128x128xbf16>, vector<8x128xf32> -> vector<8x128xf32>
    %396 = vector.broadcast %344 : vector<1x128xf32> to vector<8x128xf32>
    %397 = arith.addf %395, %396 : vector<8x128xf32>
    %398 = arith.addf %336, %397 : vector<8x128xf32>
    %c0_147 = arith.constant 0 : index
    %c0_148 = arith.constant 0 : index
    %c0_149 = arith.constant 0 : index
    %399 = vector.load %arg21[%c0_147, %c0_148, %c0_149] : memref<2x1x128xf32, #tpu.memory_space<vmem>>, vector<1x1x128xf32>
    %400 = vector.shape_cast %399 : vector<1x1x128xf32> to vector<1x128xf32>
    %c0_150 = arith.constant 0 : index
    %c0_151 = arith.constant 0 : index
    %c0_152 = arith.constant 0 : index
    %401 = vector.load %arg22[%c0_150, %c0_151, %c0_152] : memref<2x1x128xf32, #tpu.memory_space<vmem>>, vector<1x1x128xf32>
    %402 = vector.shape_cast %401 : vector<1x1x128xf32> to vector<1x128xf32>
    %403 = vector.broadcast %4 : vector<1x128xf32> to vector<8x128xf32>
    %404 = arith.mulf %398, %403 : vector<8x128xf32>
    %cst_153 = arith.constant dense<0.000000e+00> : vector<8xf32>
    %405 = vector.multi_reduction <add>, %404, %cst_153 [1] : vector<8x128xf32> to vector<8xf32>
    %406 = vector.shape_cast %405 : vector<8xf32> to vector<8x1xf32>
    %cst_154 = arith.constant 3.125000e-02 : f32
    %407 = vector.broadcast %cst_154 : f32 to vector<8x1xf32>
    %408 = arith.mulf %406, %407 : vector<8x1xf32>
    %409 = vector.broadcast %408 : vector<8x1xf32> to vector<8x128xf32>
    %410 = arith.subf %398, %409 : vector<8x128xf32>
    %411 = vector.broadcast %4 : vector<1x128xf32> to vector<8x128xf32>
    %412 = arith.mulf %410, %411 : vector<8x128xf32>
    %413 = arith.mulf %412, %412 : vector<8x128xf32>
    %cst_155 = arith.constant dense<0.000000e+00> : vector<8xf32>
    %414 = vector.multi_reduction <add>, %413, %cst_155 [1] : vector<8x128xf32> to vector<8xf32>
    %415 = vector.shape_cast %414 : vector<8xf32> to vector<8x1xf32>
    %cst_156 = arith.constant 3.125000e-02 : f32
    %416 = vector.broadcast %cst_156 : f32 to vector<8x1xf32>
    %417 = arith.mulf %415, %416 : vector<8x1xf32>
    %cst_157 = arith.constant 9.99999974E-6 : f32
    %418 = vector.broadcast %cst_157 : f32 to vector<8x1xf32>
    %419 = arith.addf %417, %418 : vector<8x1xf32>
    %420 = math.rsqrt %419 : vector<8x1xf32>
    %421 = vector.broadcast %420 : vector<8x1xf32> to vector<8x128xf32>
    %422 = arith.mulf %412, %421 : vector<8x128xf32>
    %423 = vector.broadcast %400 : vector<1x128xf32> to vector<8x128xf32>
    %424 = arith.mulf %422, %423 : vector<8x128xf32>
    %425 = vector.broadcast %402 : vector<1x128xf32> to vector<8x128xf32>
    %426 = arith.addf %424, %425 : vector<8x128xf32>
    %c0_158 = arith.constant 0 : index
    %c0_159 = arith.constant 0 : index
    %c0_160 = arith.constant 0 : index
    %427 = vector.load %arg23[%c0_158, %c0_159, %c0_160] : memref<2x128x384xbf16, #tpu.memory_space<vmem>>, vector<1x128x384xbf16>
    %428 = vector.shape_cast %427 : vector<1x128x384xbf16> to vector<128x384xbf16>
    %c0_161 = arith.constant 0 : index
    %c0_162 = arith.constant 0 : index
    %c0_163 = arith.constant 0 : index
    %429 = vector.load %arg24[%c0_161, %c0_162, %c0_163] : memref<2x1x384xf32, #tpu.memory_space<vmem>>, vector<1x1x384xf32>
    %430 = vector.shape_cast %429 : vector<1x1x384xf32> to vector<1x384xf32>
    %c0_164 = arith.constant 0 : index
    %c0_165 = arith.constant 0 : index
    %c0_166 = arith.constant 0 : index
    %431 = vector.load %arg25[%c0_164, %c0_165, %c0_166] : memref<2x128x128xbf16, #tpu.memory_space<vmem>>, vector<1x128x128xbf16>
    %432 = vector.shape_cast %431 : vector<1x128x128xbf16> to vector<128x128xbf16>
    %c0_167 = arith.constant 0 : index
    %c0_168 = arith.constant 0 : index
    %c0_169 = arith.constant 0 : index
    %433 = vector.load %arg26[%c0_167, %c0_168, %c0_169] : memref<2x1x128xf32, #tpu.memory_space<vmem>>, vector<1x1x128xf32>
    %434 = vector.shape_cast %433 : vector<1x1x128xf32> to vector<1x128xf32>
    %435 = arith.truncf %334 : vector<8x128xf32> to vector<8x128xbf16>
    %cst_170 = arith.constant dense<0.000000e+00> : vector<8x384xf32>
    %436 = tpu.matmul %435, %428, %cst_170 {dimension_numbers = #tpu.dot_dimension_numbers<[1], [0], [0], [1], [0, 0, 1, 1], [], []>} : vector<8x128xbf16>, vector<128x384xbf16>, vector<8x384xf32> -> vector<8x384xf32>
    %437 = vector.broadcast %430 : vector<1x384xf32> to vector<8x384xf32>
    %438 = arith.addf %436, %437 : vector<8x384xf32>
    %439 = vector.extract_strided_slice %438 {offsets = [0, 128], sizes = [8, 128], strides = [1, 1]} : vector<8x384xf32> to vector<8x128xf32>
    %440 = arith.truncf %439 : vector<8x128xf32> to vector<8x128xbf16>
    %441 = vector.extract_strided_slice %438 {offsets = [0, 256], sizes = [8, 128], strides = [1, 1]} : vector<8x384xf32> to vector<8x128xf32>
    %442 = arith.truncf %441 : vector<8x128xf32> to vector<8x128xbf16>
    %443 = arith.truncf %426 : vector<8x128xf32> to vector<8x128xbf16>
    %444 = vector.extract_strided_slice %428 {offsets = [0, 0], sizes = [128, 128], strides = [1, 1]} : vector<128x384xbf16> to vector<128x128xbf16>
    %cst_171 = arith.constant dense<0.000000e+00> : vector<8x128xf32>
    %445 = tpu.matmul %443, %444, %cst_171 {dimension_numbers = #tpu.dot_dimension_numbers<[1], [0], [0], [1], [0, 0, 1, 1], [], []>} : vector<8x128xbf16>, vector<128x128xbf16>, vector<8x128xf32> -> vector<8x128xf32>
    %446 = vector.extract_strided_slice %430 {offsets = [0, 0], sizes = [1, 128], strides = [1, 1]} : vector<1x384xf32> to vector<1x128xf32>
    %447 = vector.broadcast %446 : vector<1x128xf32> to vector<8x128xf32>
    %448 = arith.addf %445, %447 : vector<8x128xf32>
    %449 = vector.broadcast %11 : vector<1x128xf32> to vector<8x128xf32>
    %450 = arith.mulf %448, %449 : vector<8x128xf32>
    %451 = vector.broadcast %18 : vector<1x128xf32> to vector<8x128xf32>
    %452 = arith.mulf %448, %451 : vector<8x128xf32>
    %453 = vector.broadcast %25 : vector<1x128xf32> to vector<8x128xf32>
    %454 = arith.mulf %448, %453 : vector<8x128xf32>
    %455 = vector.broadcast %32 : vector<1x128xf32> to vector<8x128xf32>
    %456 = arith.mulf %448, %455 : vector<8x128xf32>
    %457 = tpu.concatenate %450, %452, %454, %456 in 0 : vector<8x128xf32>, vector<8x128xf32>, vector<8x128xf32>, vector<8x128xf32> -> vector<32x128xf32>
    %458 = arith.truncf %457 : vector<32x128xf32> to vector<32x128xbf16>
    %cst_172 = arith.constant dense<0.000000e+00> : vector<32x8xf32>
    %459 = tpu.matmul %458, %440, %cst_172 {dimension_numbers = #tpu.dot_dimension_numbers<[1], [1], [0], [0], [0, 0, 1, 0], [], []>} : vector<32x128xbf16>, vector<8x128xbf16>, vector<32x8xf32> -> vector<32x8xf32>
    %cst_173 = arith.constant 0.353553385 : f32
    %460 = vector.broadcast %cst_173 : f32 to vector<32x8xf32>
    %461 = arith.mulf %459, %460 : vector<32x8xf32>
    %cst_174 = arith.constant dense<0xFF800000> : vector<32xf32>
    %462 = vector.multi_reduction <maximumf>, %461, %cst_174 [1] : vector<32x8xf32> to vector<32xf32>
    %463 = vector.shape_cast %462 : vector<32xf32> to vector<32x1xf32>
    %464 = vector.broadcast %463 : vector<32x1xf32> to vector<32x8xf32>
    %465 = arith.subf %461, %464 : vector<32x8xf32>
    %466 = math.exp %465 : vector<32x8xf32>
    %cst_175 = arith.constant dense<0.000000e+00> : vector<32xf32>
    %467 = vector.multi_reduction <add>, %466, %cst_175 [1] : vector<32x8xf32> to vector<32xf32>
    %468 = vector.shape_cast %467 : vector<32xf32> to vector<32x1xf32>
    %469 = tpu.reciprocal %468 {approx = true} : vector<32x1xf32> -> vector<32x1xf32>
    %470 = vector.broadcast %469 : vector<32x1xf32> to vector<32x8xf32>
    %471 = arith.mulf %466, %470 : vector<32x8xf32>
    %472 = arith.truncf %471 : vector<32x8xf32> to vector<32x8xbf16>
    %cst_176 = arith.constant dense<0.000000e+00> : vector<32x128xf32>
    %473 = tpu.matmul %472, %442, %cst_176 {dimension_numbers = #tpu.dot_dimension_numbers<[1], [0], [0], [1], [0, 0, 1, 1], [], []>} : vector<32x8xbf16>, vector<8x128xbf16>, vector<32x128xf32> -> vector<32x128xf32>
    %474 = vector.extract_strided_slice %473 {offsets = [0, 0], sizes = [8, 128], strides = [1, 1]} : vector<32x128xf32> to vector<8x128xf32>
    %475 = vector.broadcast %11 : vector<1x128xf32> to vector<8x128xf32>
    %476 = arith.mulf %474, %475 : vector<8x128xf32>
    %477 = vector.extract_strided_slice %473 {offsets = [8, 0], sizes = [8, 128], strides = [1, 1]} : vector<32x128xf32> to vector<8x128xf32>
    %478 = vector.broadcast %18 : vector<1x128xf32> to vector<8x128xf32>
    %479 = arith.mulf %477, %478 : vector<8x128xf32>
    %480 = arith.addf %476, %479 : vector<8x128xf32>
    %481 = vector.extract_strided_slice %473 {offsets = [16, 0], sizes = [8, 128], strides = [1, 1]} : vector<32x128xf32> to vector<8x128xf32>
    %482 = vector.broadcast %25 : vector<1x128xf32> to vector<8x128xf32>
    %483 = arith.mulf %481, %482 : vector<8x128xf32>
    %484 = arith.addf %480, %483 : vector<8x128xf32>
    %485 = vector.extract_strided_slice %473 {offsets = [24, 0], sizes = [8, 128], strides = [1, 1]} : vector<32x128xf32> to vector<8x128xf32>
    %486 = vector.broadcast %32 : vector<1x128xf32> to vector<8x128xf32>
    %487 = arith.mulf %485, %486 : vector<8x128xf32>
    %488 = arith.addf %484, %487 : vector<8x128xf32>
    %489 = arith.truncf %488 : vector<8x128xf32> to vector<8x128xbf16>
    %cst_177 = arith.constant dense<0.000000e+00> : vector<8x128xf32>
    %490 = tpu.matmul %489, %432, %cst_177 {dimension_numbers = #tpu.dot_dimension_numbers<[1], [0], [0], [1], [0, 0, 1, 1], [], []>} : vector<8x128xbf16>, vector<128x128xbf16>, vector<8x128xf32> -> vector<8x128xf32>
    %491 = vector.broadcast %434 : vector<1x128xf32> to vector<8x128xf32>
    %492 = arith.addf %490, %491 : vector<8x128xf32>
    %493 = arith.addf %426, %492 : vector<8x128xf32>
    %c0_178 = arith.constant 0 : index
    %c0_179 = arith.constant 0 : index
    %c0_180 = arith.constant 0 : index
    %494 = vector.load %arg27[%c0_178, %c0_179, %c0_180] : memref<2x1x128xf32, #tpu.memory_space<vmem>>, vector<1x1x128xf32>
    %495 = vector.shape_cast %494 : vector<1x1x128xf32> to vector<1x128xf32>
    %c0_181 = arith.constant 0 : index
    %c0_182 = arith.constant 0 : index
    %c0_183 = arith.constant 0 : index
    %496 = vector.load %arg28[%c0_181, %c0_182, %c0_183] : memref<2x1x128xf32, #tpu.memory_space<vmem>>, vector<1x1x128xf32>
    %497 = vector.shape_cast %496 : vector<1x1x128xf32> to vector<1x128xf32>
    %498 = vector.broadcast %4 : vector<1x128xf32> to vector<8x128xf32>
    %499 = arith.mulf %493, %498 : vector<8x128xf32>
    %cst_184 = arith.constant dense<0.000000e+00> : vector<8xf32>
    %500 = vector.multi_reduction <add>, %499, %cst_184 [1] : vector<8x128xf32> to vector<8xf32>
    %501 = vector.shape_cast %500 : vector<8xf32> to vector<8x1xf32>
    %cst_185 = arith.constant 3.125000e-02 : f32
    %502 = vector.broadcast %cst_185 : f32 to vector<8x1xf32>
    %503 = arith.mulf %501, %502 : vector<8x1xf32>
    %504 = vector.broadcast %503 : vector<8x1xf32> to vector<8x128xf32>
    %505 = arith.subf %493, %504 : vector<8x128xf32>
    %506 = vector.broadcast %4 : vector<1x128xf32> to vector<8x128xf32>
    %507 = arith.mulf %505, %506 : vector<8x128xf32>
    %508 = arith.mulf %507, %507 : vector<8x128xf32>
    %cst_186 = arith.constant dense<0.000000e+00> : vector<8xf32>
    %509 = vector.multi_reduction <add>, %508, %cst_186 [1] : vector<8x128xf32> to vector<8xf32>
    %510 = vector.shape_cast %509 : vector<8xf32> to vector<8x1xf32>
    %cst_187 = arith.constant 3.125000e-02 : f32
    %511 = vector.broadcast %cst_187 : f32 to vector<8x1xf32>
    %512 = arith.mulf %510, %511 : vector<8x1xf32>
    %cst_188 = arith.constant 9.99999974E-6 : f32
    %513 = vector.broadcast %cst_188 : f32 to vector<8x1xf32>
    %514 = arith.addf %512, %513 : vector<8x1xf32>
    %515 = math.rsqrt %514 : vector<8x1xf32>
    %516 = vector.broadcast %515 : vector<8x1xf32> to vector<8x128xf32>
    %517 = arith.mulf %507, %516 : vector<8x128xf32>
    %518 = vector.broadcast %495 : vector<1x128xf32> to vector<8x128xf32>
    %519 = arith.mulf %517, %518 : vector<8x128xf32>
    %520 = vector.broadcast %497 : vector<1x128xf32> to vector<8x128xf32>
    %521 = arith.addf %519, %520 : vector<8x128xf32>
    %c0_189 = arith.constant 0 : index
    %c0_190 = arith.constant 0 : index
    %c0_191 = arith.constant 0 : index
    %522 = vector.load %arg29[%c0_189, %c0_190, %c0_191] : memref<2x128x128xbf16, #tpu.memory_space<vmem>>, vector<1x128x128xbf16>
    %523 = vector.shape_cast %522 : vector<1x128x128xbf16> to vector<128x128xbf16>
    %c0_192 = arith.constant 0 : index
    %c0_193 = arith.constant 0 : index
    %c0_194 = arith.constant 0 : index
    %524 = vector.load %arg30[%c0_192, %c0_193, %c0_194] : memref<2x1x128xf32, #tpu.memory_space<vmem>>, vector<1x1x128xf32>
    %525 = vector.shape_cast %524 : vector<1x1x128xf32> to vector<1x128xf32>
    %c0_195 = arith.constant 0 : index
    %c0_196 = arith.constant 0 : index
    %c0_197 = arith.constant 0 : index
    %526 = vector.load %arg31[%c0_195, %c0_196, %c0_197] : memref<2x128x128xbf16, #tpu.memory_space<vmem>>, vector<1x128x128xbf16>
    %527 = vector.shape_cast %526 : vector<1x128x128xbf16> to vector<128x128xbf16>
    %c0_198 = arith.constant 0 : index
    %c0_199 = arith.constant 0 : index
    %c0_200 = arith.constant 0 : index
    %528 = vector.load %arg32[%c0_198, %c0_199, %c0_200] : memref<2x1x128xf32, #tpu.memory_space<vmem>>, vector<1x1x128xf32>
    %529 = vector.shape_cast %528 : vector<1x1x128xf32> to vector<1x128xf32>
    %530 = arith.truncf %521 : vector<8x128xf32> to vector<8x128xbf16>
    %cst_201 = arith.constant dense<0.000000e+00> : vector<8x128xf32>
    %531 = tpu.matmul %530, %523, %cst_201 {dimension_numbers = #tpu.dot_dimension_numbers<[1], [0], [0], [1], [0, 0, 1, 1], [], []>} : vector<8x128xbf16>, vector<128x128xbf16>, vector<8x128xf32> -> vector<8x128xf32>
    %532 = vector.broadcast %525 : vector<1x128xf32> to vector<8x128xf32>
    %533 = arith.addf %531, %532 : vector<8x128xf32>
    %cst_202 = arith.constant 0.000000e+00 : f32
    %534 = vector.broadcast %cst_202 : f32 to vector<8x128xf32>
    %535 = arith.maximumf %533, %534 : vector<8x128xf32>
    %536 = arith.truncf %535 : vector<8x128xf32> to vector<8x128xbf16>
    %cst_203 = arith.constant dense<0.000000e+00> : vector<8x128xf32>
    %537 = tpu.matmul %536, %527, %cst_203 {dimension_numbers = #tpu.dot_dimension_numbers<[1], [0], [0], [1], [0, 0, 1, 1], [], []>} : vector<8x128xbf16>, vector<128x128xbf16>, vector<8x128xf32> -> vector<8x128xf32>
    %538 = vector.broadcast %529 : vector<1x128xf32> to vector<8x128xf32>
    %539 = arith.addf %537, %538 : vector<8x128xf32>
    %540 = arith.addf %521, %539 : vector<8x128xf32>
    %c0_204 = arith.constant 0 : index
    %c0_205 = arith.constant 0 : index
    %c0_206 = arith.constant 0 : index
    %541 = vector.load %arg33[%c0_204, %c0_205, %c0_206] : memref<2x1x128xf32, #tpu.memory_space<vmem>>, vector<1x1x128xf32>
    %542 = vector.shape_cast %541 : vector<1x1x128xf32> to vector<1x128xf32>
    %c0_207 = arith.constant 0 : index
    %c0_208 = arith.constant 0 : index
    %c0_209 = arith.constant 0 : index
    %543 = vector.load %arg34[%c0_207, %c0_208, %c0_209] : memref<2x1x128xf32, #tpu.memory_space<vmem>>, vector<1x1x128xf32>
    %544 = vector.shape_cast %543 : vector<1x1x128xf32> to vector<1x128xf32>
    %545 = vector.broadcast %4 : vector<1x128xf32> to vector<8x128xf32>
    %546 = arith.mulf %540, %545 : vector<8x128xf32>
    %cst_210 = arith.constant dense<0.000000e+00> : vector<8xf32>
    %547 = vector.multi_reduction <add>, %546, %cst_210 [1] : vector<8x128xf32> to vector<8xf32>
    %548 = vector.shape_cast %547 : vector<8xf32> to vector<8x1xf32>
    %cst_211 = arith.constant 3.125000e-02 : f32
    %549 = vector.broadcast %cst_211 : f32 to vector<8x1xf32>
    %550 = arith.mulf %548, %549 : vector<8x1xf32>
    %551 = vector.broadcast %550 : vector<8x1xf32> to vector<8x128xf32>
    %552 = arith.subf %540, %551 : vector<8x128xf32>
    %553 = vector.broadcast %4 : vector<1x128xf32> to vector<8x128xf32>
    %554 = arith.mulf %552, %553 : vector<8x128xf32>
    %555 = arith.mulf %554, %554 : vector<8x128xf32>
    %cst_212 = arith.constant dense<0.000000e+00> : vector<8xf32>
    %556 = vector.multi_reduction <add>, %555, %cst_212 [1] : vector<8x128xf32> to vector<8xf32>
    %557 = vector.shape_cast %556 : vector<8xf32> to vector<8x1xf32>
    %cst_213 = arith.constant 3.125000e-02 : f32
    %558 = vector.broadcast %cst_213 : f32 to vector<8x1xf32>
    %559 = arith.mulf %557, %558 : vector<8x1xf32>
    %cst_214 = arith.constant 9.99999974E-6 : f32
    %560 = vector.broadcast %cst_214 : f32 to vector<8x1xf32>
    %561 = arith.addf %559, %560 : vector<8x1xf32>
    %562 = math.rsqrt %561 : vector<8x1xf32>
    %563 = vector.broadcast %562 : vector<8x1xf32> to vector<8x128xf32>
    %564 = arith.mulf %554, %563 : vector<8x128xf32>
    %565 = vector.broadcast %542 : vector<1x128xf32> to vector<8x128xf32>
    %566 = arith.mulf %564, %565 : vector<8x128xf32>
    %567 = vector.broadcast %544 : vector<1x128xf32> to vector<8x128xf32>
    %568 = arith.addf %566, %567 : vector<8x128xf32>
    %c1_215 = arith.constant 1 : index
    %c0_216 = arith.constant 0 : index
    %c0_217 = arith.constant 0 : index
    %569 = vector.load %arg17[%c1_215, %c0_216, %c0_217] : memref<2x128x384xbf16, #tpu.memory_space<vmem>>, vector<1x128x384xbf16>
    %570 = vector.shape_cast %569 : vector<1x128x384xbf16> to vector<128x384xbf16>
    %c1_218 = arith.constant 1 : index
    %c0_219 = arith.constant 0 : index
    %c0_220 = arith.constant 0 : index
    %571 = vector.load %arg18[%c1_218, %c0_219, %c0_220] : memref<2x1x384xf32, #tpu.memory_space<vmem>>, vector<1x1x384xf32>
    %572 = vector.shape_cast %571 : vector<1x1x384xf32> to vector<1x384xf32>
    %c1_221 = arith.constant 1 : index
    %c0_222 = arith.constant 0 : index
    %c0_223 = arith.constant 0 : index
    %573 = vector.load %arg19[%c1_221, %c0_222, %c0_223] : memref<2x128x128xbf16, #tpu.memory_space<vmem>>, vector<1x128x128xbf16>
    %574 = vector.shape_cast %573 : vector<1x128x128xbf16> to vector<128x128xbf16>
    %c1_224 = arith.constant 1 : index
    %c0_225 = arith.constant 0 : index
    %c0_226 = arith.constant 0 : index
    %575 = vector.load %arg20[%c1_224, %c0_225, %c0_226] : memref<2x1x128xf32, #tpu.memory_space<vmem>>, vector<1x1x128xf32>
    %576 = vector.shape_cast %575 : vector<1x1x128xf32> to vector<1x128xf32>
    %577 = arith.truncf %568 : vector<8x128xf32> to vector<8x128xbf16>
    %cst_227 = arith.constant dense<0.000000e+00> : vector<8x384xf32>
    %578 = tpu.matmul %577, %570, %cst_227 {dimension_numbers = #tpu.dot_dimension_numbers<[1], [0], [0], [1], [0, 0, 1, 1], [], []>} : vector<8x128xbf16>, vector<128x384xbf16>, vector<8x384xf32> -> vector<8x384xf32>
    %579 = vector.broadcast %572 : vector<1x384xf32> to vector<8x384xf32>
    %580 = arith.addf %578, %579 : vector<8x384xf32>
    %581 = vector.extract_strided_slice %580 {offsets = [0, 128], sizes = [8, 128], strides = [1, 1]} : vector<8x384xf32> to vector<8x128xf32>
    %582 = arith.truncf %581 : vector<8x128xf32> to vector<8x128xbf16>
    %583 = vector.extract_strided_slice %580 {offsets = [0, 256], sizes = [8, 128], strides = [1, 1]} : vector<8x384xf32> to vector<8x128xf32>
    %584 = arith.truncf %583 : vector<8x128xf32> to vector<8x128xbf16>
    %585 = vector.extract_strided_slice %580 {offsets = [0, 0], sizes = [8, 128], strides = [1, 1]} : vector<8x384xf32> to vector<8x128xf32>
    %586 = vector.broadcast %11 : vector<1x128xf32> to vector<8x128xf32>
    %587 = arith.mulf %585, %586 : vector<8x128xf32>
    %588 = vector.broadcast %18 : vector<1x128xf32> to vector<8x128xf32>
    %589 = arith.mulf %585, %588 : vector<8x128xf32>
    %590 = vector.broadcast %25 : vector<1x128xf32> to vector<8x128xf32>
    %591 = arith.mulf %585, %590 : vector<8x128xf32>
    %592 = vector.broadcast %32 : vector<1x128xf32> to vector<8x128xf32>
    %593 = arith.mulf %585, %592 : vector<8x128xf32>
    %594 = tpu.concatenate %587, %589, %591, %593 in 0 : vector<8x128xf32>, vector<8x128xf32>, vector<8x128xf32>, vector<8x128xf32> -> vector<32x128xf32>
    %595 = arith.truncf %594 : vector<32x128xf32> to vector<32x128xbf16>
    %cst_228 = arith.constant dense<0.000000e+00> : vector<32x8xf32>
    %596 = tpu.matmul %595, %582, %cst_228 {dimension_numbers = #tpu.dot_dimension_numbers<[1], [1], [0], [0], [0, 0, 1, 0], [], []>} : vector<32x128xbf16>, vector<8x128xbf16>, vector<32x8xf32> -> vector<32x8xf32>
    %cst_229 = arith.constant 0.353553385 : f32
    %597 = vector.broadcast %cst_229 : f32 to vector<32x8xf32>
    %598 = arith.mulf %596, %597 : vector<32x8xf32>
    %cst_230 = arith.constant dense<0xFF800000> : vector<32xf32>
    %599 = vector.multi_reduction <maximumf>, %598, %cst_230 [1] : vector<32x8xf32> to vector<32xf32>
    %600 = vector.shape_cast %599 : vector<32xf32> to vector<32x1xf32>
    %601 = vector.broadcast %600 : vector<32x1xf32> to vector<32x8xf32>
    %602 = arith.subf %598, %601 : vector<32x8xf32>
    %603 = math.exp %602 : vector<32x8xf32>
    %cst_231 = arith.constant dense<0.000000e+00> : vector<32xf32>
    %604 = vector.multi_reduction <add>, %603, %cst_231 [1] : vector<32x8xf32> to vector<32xf32>
    %605 = vector.shape_cast %604 : vector<32xf32> to vector<32x1xf32>
    %606 = tpu.reciprocal %605 {approx = true} : vector<32x1xf32> -> vector<32x1xf32>
    %607 = vector.broadcast %606 : vector<32x1xf32> to vector<32x8xf32>
    %608 = arith.mulf %603, %607 : vector<32x8xf32>
    %609 = arith.truncf %608 : vector<32x8xf32> to vector<32x8xbf16>
    %cst_232 = arith.constant dense<0.000000e+00> : vector<32x128xf32>
    %610 = tpu.matmul %609, %584, %cst_232 {dimension_numbers = #tpu.dot_dimension_numbers<[1], [0], [0], [1], [0, 0, 1, 1], [], []>} : vector<32x8xbf16>, vector<8x128xbf16>, vector<32x128xf32> -> vector<32x128xf32>
    %611 = vector.extract_strided_slice %610 {offsets = [0, 0], sizes = [8, 128], strides = [1, 1]} : vector<32x128xf32> to vector<8x128xf32>
    %612 = vector.broadcast %11 : vector<1x128xf32> to vector<8x128xf32>
    %613 = arith.mulf %611, %612 : vector<8x128xf32>
    %614 = vector.extract_strided_slice %610 {offsets = [8, 0], sizes = [8, 128], strides = [1, 1]} : vector<32x128xf32> to vector<8x128xf32>
    %615 = vector.broadcast %18 : vector<1x128xf32> to vector<8x128xf32>
    %616 = arith.mulf %614, %615 : vector<8x128xf32>
    %617 = arith.addf %613, %616 : vector<8x128xf32>
    %618 = vector.extract_strided_slice %610 {offsets = [16, 0], sizes = [8, 128], strides = [1, 1]} : vector<32x128xf32> to vector<8x128xf32>
    %619 = vector.broadcast %25 : vector<1x128xf32> to vector<8x128xf32>
    %620 = arith.mulf %618, %619 : vector<8x128xf32>
    %621 = arith.addf %617, %620 : vector<8x128xf32>
    %622 = vector.extract_strided_slice %610 {offsets = [24, 0], sizes = [8, 128], strides = [1, 1]} : vector<32x128xf32> to vector<8x128xf32>
    %623 = vector.broadcast %32 : vector<1x128xf32> to vector<8x128xf32>
    %624 = arith.mulf %622, %623 : vector<8x128xf32>
    %625 = arith.addf %621, %624 : vector<8x128xf32>
    %626 = arith.truncf %625 : vector<8x128xf32> to vector<8x128xbf16>
    %cst_233 = arith.constant dense<0.000000e+00> : vector<8x128xf32>
    %627 = tpu.matmul %626, %574, %cst_233 {dimension_numbers = #tpu.dot_dimension_numbers<[1], [0], [0], [1], [0, 0, 1, 1], [], []>} : vector<8x128xbf16>, vector<128x128xbf16>, vector<8x128xf32> -> vector<8x128xf32>
    %628 = vector.broadcast %576 : vector<1x128xf32> to vector<8x128xf32>
    %629 = arith.addf %627, %628 : vector<8x128xf32>
    %630 = arith.addf %568, %629 : vector<8x128xf32>
    %c1_234 = arith.constant 1 : index
    %c0_235 = arith.constant 0 : index
    %c0_236 = arith.constant 0 : index
    %631 = vector.load %arg21[%c1_234, %c0_235, %c0_236] : memref<2x1x128xf32, #tpu.memory_space<vmem>>, vector<1x1x128xf32>
    %632 = vector.shape_cast %631 : vector<1x1x128xf32> to vector<1x128xf32>
    %c1_237 = arith.constant 1 : index
    %c0_238 = arith.constant 0 : index
    %c0_239 = arith.constant 0 : index
    %633 = vector.load %arg22[%c1_237, %c0_238, %c0_239] : memref<2x1x128xf32, #tpu.memory_space<vmem>>, vector<1x1x128xf32>
    %634 = vector.shape_cast %633 : vector<1x1x128xf32> to vector<1x128xf32>
    %635 = vector.broadcast %4 : vector<1x128xf32> to vector<8x128xf32>
    %636 = arith.mulf %630, %635 : vector<8x128xf32>
    %cst_240 = arith.constant dense<0.000000e+00> : vector<8xf32>
    %637 = vector.multi_reduction <add>, %636, %cst_240 [1] : vector<8x128xf32> to vector<8xf32>
    %638 = vector.shape_cast %637 : vector<8xf32> to vector<8x1xf32>
    %cst_241 = arith.constant 3.125000e-02 : f32
    %639 = vector.broadcast %cst_241 : f32 to vector<8x1xf32>
    %640 = arith.mulf %638, %639 : vector<8x1xf32>
    %641 = vector.broadcast %640 : vector<8x1xf32> to vector<8x128xf32>
    %642 = arith.subf %630, %641 : vector<8x128xf32>
    %643 = vector.broadcast %4 : vector<1x128xf32> to vector<8x128xf32>
    %644 = arith.mulf %642, %643 : vector<8x128xf32>
    %645 = arith.mulf %644, %644 : vector<8x128xf32>
    %cst_242 = arith.constant dense<0.000000e+00> : vector<8xf32>
    %646 = vector.multi_reduction <add>, %645, %cst_242 [1] : vector<8x128xf32> to vector<8xf32>
    %647 = vector.shape_cast %646 : vector<8xf32> to vector<8x1xf32>
    %cst_243 = arith.constant 3.125000e-02 : f32
    %648 = vector.broadcast %cst_243 : f32 to vector<8x1xf32>
    %649 = arith.mulf %647, %648 : vector<8x1xf32>
    %cst_244 = arith.constant 9.99999974E-6 : f32
    %650 = vector.broadcast %cst_244 : f32 to vector<8x1xf32>
    %651 = arith.addf %649, %650 : vector<8x1xf32>
    %652 = math.rsqrt %651 : vector<8x1xf32>
    %653 = vector.broadcast %652 : vector<8x1xf32> to vector<8x128xf32>
    %654 = arith.mulf %644, %653 : vector<8x128xf32>
    %655 = vector.broadcast %632 : vector<1x128xf32> to vector<8x128xf32>
    %656 = arith.mulf %654, %655 : vector<8x128xf32>
    %657 = vector.broadcast %634 : vector<1x128xf32> to vector<8x128xf32>
    %658 = arith.addf %656, %657 : vector<8x128xf32>
    %c1_245 = arith.constant 1 : index
    %c0_246 = arith.constant 0 : index
    %c0_247 = arith.constant 0 : index
    %659 = vector.load %arg23[%c1_245, %c0_246, %c0_247] : memref<2x128x384xbf16, #tpu.memory_space<vmem>>, vector<1x128x384xbf16>
    %660 = vector.shape_cast %659 : vector<1x128x384xbf16> to vector<128x384xbf16>
    %c1_248 = arith.constant 1 : index
    %c0_249 = arith.constant 0 : index
    %c0_250 = arith.constant 0 : index
    %661 = vector.load %arg24[%c1_248, %c0_249, %c0_250] : memref<2x1x384xf32, #tpu.memory_space<vmem>>, vector<1x1x384xf32>
    %662 = vector.shape_cast %661 : vector<1x1x384xf32> to vector<1x384xf32>
    %c1_251 = arith.constant 1 : index
    %c0_252 = arith.constant 0 : index
    %c0_253 = arith.constant 0 : index
    %663 = vector.load %arg25[%c1_251, %c0_252, %c0_253] : memref<2x128x128xbf16, #tpu.memory_space<vmem>>, vector<1x128x128xbf16>
    %664 = vector.shape_cast %663 : vector<1x128x128xbf16> to vector<128x128xbf16>
    %c1_254 = arith.constant 1 : index
    %c0_255 = arith.constant 0 : index
    %c0_256 = arith.constant 0 : index
    %665 = vector.load %arg26[%c1_254, %c0_255, %c0_256] : memref<2x1x128xf32, #tpu.memory_space<vmem>>, vector<1x1x128xf32>
    %666 = vector.shape_cast %665 : vector<1x1x128xf32> to vector<1x128xf32>
    %667 = arith.truncf %334 : vector<8x128xf32> to vector<8x128xbf16>
    %cst_257 = arith.constant dense<0.000000e+00> : vector<8x384xf32>
    %668 = tpu.matmul %667, %660, %cst_257 {dimension_numbers = #tpu.dot_dimension_numbers<[1], [0], [0], [1], [0, 0, 1, 1], [], []>} : vector<8x128xbf16>, vector<128x384xbf16>, vector<8x384xf32> -> vector<8x384xf32>
    %669 = vector.broadcast %662 : vector<1x384xf32> to vector<8x384xf32>
    %670 = arith.addf %668, %669 : vector<8x384xf32>
    %671 = vector.extract_strided_slice %670 {offsets = [0, 128], sizes = [8, 128], strides = [1, 1]} : vector<8x384xf32> to vector<8x128xf32>
    %672 = arith.truncf %671 : vector<8x128xf32> to vector<8x128xbf16>
    %673 = vector.extract_strided_slice %670 {offsets = [0, 256], sizes = [8, 128], strides = [1, 1]} : vector<8x384xf32> to vector<8x128xf32>
    %674 = arith.truncf %673 : vector<8x128xf32> to vector<8x128xbf16>
    %675 = arith.truncf %658 : vector<8x128xf32> to vector<8x128xbf16>
    %676 = vector.extract_strided_slice %660 {offsets = [0, 0], sizes = [128, 128], strides = [1, 1]} : vector<128x384xbf16> to vector<128x128xbf16>
    %cst_258 = arith.constant dense<0.000000e+00> : vector<8x128xf32>
    %677 = tpu.matmul %675, %676, %cst_258 {dimension_numbers = #tpu.dot_dimension_numbers<[1], [0], [0], [1], [0, 0, 1, 1], [], []>} : vector<8x128xbf16>, vector<128x128xbf16>, vector<8x128xf32> -> vector<8x128xf32>
    %678 = vector.extract_strided_slice %662 {offsets = [0, 0], sizes = [1, 128], strides = [1, 1]} : vector<1x384xf32> to vector<1x128xf32>
    %679 = vector.broadcast %678 : vector<1x128xf32> to vector<8x128xf32>
    %680 = arith.addf %677, %679 : vector<8x128xf32>
    %681 = vector.broadcast %11 : vector<1x128xf32> to vector<8x128xf32>
    %682 = arith.mulf %680, %681 : vector<8x128xf32>
    %683 = vector.broadcast %18 : vector<1x128xf32> to vector<8x128xf32>
    %684 = arith.mulf %680, %683 : vector<8x128xf32>
    %685 = vector.broadcast %25 : vector<1x128xf32> to vector<8x128xf32>
    %686 = arith.mulf %680, %685 : vector<8x128xf32>
    %687 = vector.broadcast %32 : vector<1x128xf32> to vector<8x128xf32>
    %688 = arith.mulf %680, %687 : vector<8x128xf32>
    %689 = tpu.concatenate %682, %684, %686, %688 in 0 : vector<8x128xf32>, vector<8x128xf32>, vector<8x128xf32>, vector<8x128xf32> -> vector<32x128xf32>
    %690 = arith.truncf %689 : vector<32x128xf32> to vector<32x128xbf16>
    %cst_259 = arith.constant dense<0.000000e+00> : vector<32x8xf32>
    %691 = tpu.matmul %690, %672, %cst_259 {dimension_numbers = #tpu.dot_dimension_numbers<[1], [1], [0], [0], [0, 0, 1, 0], [], []>} : vector<32x128xbf16>, vector<8x128xbf16>, vector<32x8xf32> -> vector<32x8xf32>
    %cst_260 = arith.constant 0.353553385 : f32
    %692 = vector.broadcast %cst_260 : f32 to vector<32x8xf32>
    %693 = arith.mulf %691, %692 : vector<32x8xf32>
    %cst_261 = arith.constant dense<0xFF800000> : vector<32xf32>
    %694 = vector.multi_reduction <maximumf>, %693, %cst_261 [1] : vector<32x8xf32> to vector<32xf32>
    %695 = vector.shape_cast %694 : vector<32xf32> to vector<32x1xf32>
    %696 = vector.broadcast %695 : vector<32x1xf32> to vector<32x8xf32>
    %697 = arith.subf %693, %696 : vector<32x8xf32>
    %698 = math.exp %697 : vector<32x8xf32>
    %cst_262 = arith.constant dense<0.000000e+00> : vector<32xf32>
    %699 = vector.multi_reduction <add>, %698, %cst_262 [1] : vector<32x8xf32> to vector<32xf32>
    %700 = vector.shape_cast %699 : vector<32xf32> to vector<32x1xf32>
    %701 = tpu.reciprocal %700 {approx = true} : vector<32x1xf32> -> vector<32x1xf32>
    %702 = vector.broadcast %701 : vector<32x1xf32> to vector<32x8xf32>
    %703 = arith.mulf %698, %702 : vector<32x8xf32>
    %704 = arith.truncf %703 : vector<32x8xf32> to vector<32x8xbf16>
    %cst_263 = arith.constant dense<0.000000e+00> : vector<32x128xf32>
    %705 = tpu.matmul %704, %674, %cst_263 {dimension_numbers = #tpu.dot_dimension_numbers<[1], [0], [0], [1], [0, 0, 1, 1], [], []>} : vector<32x8xbf16>, vector<8x128xbf16>, vector<32x128xf32> -> vector<32x128xf32>
    %706 = vector.extract_strided_slice %705 {offsets = [0, 0], sizes = [8, 128], strides = [1, 1]} : vector<32x128xf32> to vector<8x128xf32>
    %707 = vector.broadcast %11 : vector<1x128xf32> to vector<8x128xf32>
    %708 = arith.mulf %706, %707 : vector<8x128xf32>
    %709 = vector.extract_strided_slice %705 {offsets = [8, 0], sizes = [8, 128], strides = [1, 1]} : vector<32x128xf32> to vector<8x128xf32>
    %710 = vector.broadcast %18 : vector<1x128xf32> to vector<8x128xf32>
    %711 = arith.mulf %709, %710 : vector<8x128xf32>
    %712 = arith.addf %708, %711 : vector<8x128xf32>
    %713 = vector.extract_strided_slice %705 {offsets = [16, 0], sizes = [8, 128], strides = [1, 1]} : vector<32x128xf32> to vector<8x128xf32>
    %714 = vector.broadcast %25 : vector<1x128xf32> to vector<8x128xf32>
    %715 = arith.mulf %713, %714 : vector<8x128xf32>
    %716 = arith.addf %712, %715 : vector<8x128xf32>
    %717 = vector.extract_strided_slice %705 {offsets = [24, 0], sizes = [8, 128], strides = [1, 1]} : vector<32x128xf32> to vector<8x128xf32>
    %718 = vector.broadcast %32 : vector<1x128xf32> to vector<8x128xf32>
    %719 = arith.mulf %717, %718 : vector<8x128xf32>
    %720 = arith.addf %716, %719 : vector<8x128xf32>
    %721 = arith.truncf %720 : vector<8x128xf32> to vector<8x128xbf16>
    %cst_264 = arith.constant dense<0.000000e+00> : vector<8x128xf32>
    %722 = tpu.matmul %721, %664, %cst_264 {dimension_numbers = #tpu.dot_dimension_numbers<[1], [0], [0], [1], [0, 0, 1, 1], [], []>} : vector<8x128xbf16>, vector<128x128xbf16>, vector<8x128xf32> -> vector<8x128xf32>
    %723 = vector.broadcast %666 : vector<1x128xf32> to vector<8x128xf32>
    %724 = arith.addf %722, %723 : vector<8x128xf32>
    %725 = arith.addf %658, %724 : vector<8x128xf32>
    %c1_265 = arith.constant 1 : index
    %c0_266 = arith.constant 0 : index
    %c0_267 = arith.constant 0 : index
    %726 = vector.load %arg27[%c1_265, %c0_266, %c0_267] : memref<2x1x128xf32, #tpu.memory_space<vmem>>, vector<1x1x128xf32>
    %727 = vector.shape_cast %726 : vector<1x1x128xf32> to vector<1x128xf32>
    %c1_268 = arith.constant 1 : index
    %c0_269 = arith.constant 0 : index
    %c0_270 = arith.constant 0 : index
    %728 = vector.load %arg28[%c1_268, %c0_269, %c0_270] : memref<2x1x128xf32, #tpu.memory_space<vmem>>, vector<1x1x128xf32>
    %729 = vector.shape_cast %728 : vector<1x1x128xf32> to vector<1x128xf32>
    %730 = vector.broadcast %4 : vector<1x128xf32> to vector<8x128xf32>
    %731 = arith.mulf %725, %730 : vector<8x128xf32>
    %cst_271 = arith.constant dense<0.000000e+00> : vector<8xf32>
    %732 = vector.multi_reduction <add>, %731, %cst_271 [1] : vector<8x128xf32> to vector<8xf32>
    %733 = vector.shape_cast %732 : vector<8xf32> to vector<8x1xf32>
    %cst_272 = arith.constant 3.125000e-02 : f32
    %734 = vector.broadcast %cst_272 : f32 to vector<8x1xf32>
    %735 = arith.mulf %733, %734 : vector<8x1xf32>
    %736 = vector.broadcast %735 : vector<8x1xf32> to vector<8x128xf32>
    %737 = arith.subf %725, %736 : vector<8x128xf32>
    %738 = vector.broadcast %4 : vector<1x128xf32> to vector<8x128xf32>
    %739 = arith.mulf %737, %738 : vector<8x128xf32>
    %740 = arith.mulf %739, %739 : vector<8x128xf32>
    %cst_273 = arith.constant dense<0.000000e+00> : vector<8xf32>
    %741 = vector.multi_reduction <add>, %740, %cst_273 [1] : vector<8x128xf32> to vector<8xf32>
    %742 = vector.shape_cast %741 : vector<8xf32> to vector<8x1xf32>
    %cst_274 = arith.constant 3.125000e-02 : f32
    %743 = vector.broadcast %cst_274 : f32 to vector<8x1xf32>
    %744 = arith.mulf %742, %743 : vector<8x1xf32>
    %cst_275 = arith.constant 9.99999974E-6 : f32
    %745 = vector.broadcast %cst_275 : f32 to vector<8x1xf32>
    %746 = arith.addf %744, %745 : vector<8x1xf32>
    %747 = math.rsqrt %746 : vector<8x1xf32>
    %748 = vector.broadcast %747 : vector<8x1xf32> to vector<8x128xf32>
    %749 = arith.mulf %739, %748 : vector<8x128xf32>
    %750 = vector.broadcast %727 : vector<1x128xf32> to vector<8x128xf32>
    %751 = arith.mulf %749, %750 : vector<8x128xf32>
    %752 = vector.broadcast %729 : vector<1x128xf32> to vector<8x128xf32>
    %753 = arith.addf %751, %752 : vector<8x128xf32>
    %c1_276 = arith.constant 1 : index
    %c0_277 = arith.constant 0 : index
    %c0_278 = arith.constant 0 : index
    %754 = vector.load %arg29[%c1_276, %c0_277, %c0_278] : memref<2x128x128xbf16, #tpu.memory_space<vmem>>, vector<1x128x128xbf16>
    %755 = vector.shape_cast %754 : vector<1x128x128xbf16> to vector<128x128xbf16>
    %c1_279 = arith.constant 1 : index
    %c0_280 = arith.constant 0 : index
    %c0_281 = arith.constant 0 : index
    %756 = vector.load %arg30[%c1_279, %c0_280, %c0_281] : memref<2x1x128xf32, #tpu.memory_space<vmem>>, vector<1x1x128xf32>
    %757 = vector.shape_cast %756 : vector<1x1x128xf32> to vector<1x128xf32>
    %c1_282 = arith.constant 1 : index
    %c0_283 = arith.constant 0 : index
    %c0_284 = arith.constant 0 : index
    %758 = vector.load %arg31[%c1_282, %c0_283, %c0_284] : memref<2x128x128xbf16, #tpu.memory_space<vmem>>, vector<1x128x128xbf16>
    %759 = vector.shape_cast %758 : vector<1x128x128xbf16> to vector<128x128xbf16>
    %c1_285 = arith.constant 1 : index
    %c0_286 = arith.constant 0 : index
    %c0_287 = arith.constant 0 : index
    %760 = vector.load %arg32[%c1_285, %c0_286, %c0_287] : memref<2x1x128xf32, #tpu.memory_space<vmem>>, vector<1x1x128xf32>
    %761 = vector.shape_cast %760 : vector<1x1x128xf32> to vector<1x128xf32>
    %762 = arith.truncf %753 : vector<8x128xf32> to vector<8x128xbf16>
    %cst_288 = arith.constant dense<0.000000e+00> : vector<8x128xf32>
    %763 = tpu.matmul %762, %755, %cst_288 {dimension_numbers = #tpu.dot_dimension_numbers<[1], [0], [0], [1], [0, 0, 1, 1], [], []>} : vector<8x128xbf16>, vector<128x128xbf16>, vector<8x128xf32> -> vector<8x128xf32>
    %764 = vector.broadcast %757 : vector<1x128xf32> to vector<8x128xf32>
    %765 = arith.addf %763, %764 : vector<8x128xf32>
    %cst_289 = arith.constant 0.000000e+00 : f32
    %766 = vector.broadcast %cst_289 : f32 to vector<8x128xf32>
    %767 = arith.maximumf %765, %766 : vector<8x128xf32>
    %768 = arith.truncf %767 : vector<8x128xf32> to vector<8x128xbf16>
    %cst_290 = arith.constant dense<0.000000e+00> : vector<8x128xf32>
    %769 = tpu.matmul %768, %759, %cst_290 {dimension_numbers = #tpu.dot_dimension_numbers<[1], [0], [0], [1], [0, 0, 1, 1], [], []>} : vector<8x128xbf16>, vector<128x128xbf16>, vector<8x128xf32> -> vector<8x128xf32>
    %770 = vector.broadcast %761 : vector<1x128xf32> to vector<8x128xf32>
    %771 = arith.addf %769, %770 : vector<8x128xf32>
    %772 = arith.addf %753, %771 : vector<8x128xf32>
    %c1_291 = arith.constant 1 : index
    %c0_292 = arith.constant 0 : index
    %c0_293 = arith.constant 0 : index
    %773 = vector.load %arg33[%c1_291, %c0_292, %c0_293] : memref<2x1x128xf32, #tpu.memory_space<vmem>>, vector<1x1x128xf32>
    %774 = vector.shape_cast %773 : vector<1x1x128xf32> to vector<1x128xf32>
    %c1_294 = arith.constant 1 : index
    %c0_295 = arith.constant 0 : index
    %c0_296 = arith.constant 0 : index
    %775 = vector.load %arg34[%c1_294, %c0_295, %c0_296] : memref<2x1x128xf32, #tpu.memory_space<vmem>>, vector<1x1x128xf32>
    %776 = vector.shape_cast %775 : vector<1x1x128xf32> to vector<1x128xf32>
    %777 = vector.broadcast %4 : vector<1x128xf32> to vector<8x128xf32>
    %778 = arith.mulf %772, %777 : vector<8x128xf32>
    %cst_297 = arith.constant dense<0.000000e+00> : vector<8xf32>
    %779 = vector.multi_reduction <add>, %778, %cst_297 [1] : vector<8x128xf32> to vector<8xf32>
    %780 = vector.shape_cast %779 : vector<8xf32> to vector<8x1xf32>
    %cst_298 = arith.constant 3.125000e-02 : f32
    %781 = vector.broadcast %cst_298 : f32 to vector<8x1xf32>
    %782 = arith.mulf %780, %781 : vector<8x1xf32>
    %783 = vector.broadcast %782 : vector<8x1xf32> to vector<8x128xf32>
    %784 = arith.subf %772, %783 : vector<8x128xf32>
    %785 = vector.broadcast %4 : vector<1x128xf32> to vector<8x128xf32>
    %786 = arith.mulf %784, %785 : vector<8x128xf32>
    %787 = arith.mulf %786, %786 : vector<8x128xf32>
    %cst_299 = arith.constant dense<0.000000e+00> : vector<8xf32>
    %788 = vector.multi_reduction <add>, %787, %cst_299 [1] : vector<8x128xf32> to vector<8xf32>
    %789 = vector.shape_cast %788 : vector<8xf32> to vector<8x1xf32>
    %cst_300 = arith.constant 3.125000e-02 : f32
    %790 = vector.broadcast %cst_300 : f32 to vector<8x1xf32>
    %791 = arith.mulf %789, %790 : vector<8x1xf32>
    %cst_301 = arith.constant 9.99999974E-6 : f32
    %792 = vector.broadcast %cst_301 : f32 to vector<8x1xf32>
    %793 = arith.addf %791, %792 : vector<8x1xf32>
    %794 = math.rsqrt %793 : vector<8x1xf32>
    %795 = vector.broadcast %794 : vector<8x1xf32> to vector<8x128xf32>
    %796 = arith.mulf %786, %795 : vector<8x128xf32>
    %797 = vector.broadcast %774 : vector<1x128xf32> to vector<8x128xf32>
    %798 = arith.mulf %796, %797 : vector<8x128xf32>
    %799 = vector.broadcast %776 : vector<1x128xf32> to vector<8x128xf32>
    %800 = arith.addf %798, %799 : vector<8x128xf32>
    %c0_302 = arith.constant 0 : index
    %c0_303 = arith.constant 0 : index
    %801 = vector.load %arg35[%c0_302, %c0_303] : memref<1x128xf32, #tpu.memory_space<vmem>>, vector<1x128xf32>
    %c0_304 = arith.constant 0 : index
    %c0_305 = arith.constant 0 : index
    %802 = vector.load %arg36[%c0_304, %c0_305] : memref<1x128xf32, #tpu.memory_space<vmem>>, vector<1x128xf32>
    %803 = vector.broadcast %4 : vector<1x128xf32> to vector<8x128xf32>
    %804 = arith.mulf %800, %803 : vector<8x128xf32>
    %cst_306 = arith.constant dense<0.000000e+00> : vector<8xf32>
    %805 = vector.multi_reduction <add>, %804, %cst_306 [1] : vector<8x128xf32> to vector<8xf32>
    %806 = vector.shape_cast %805 : vector<8xf32> to vector<8x1xf32>
    %cst_307 = arith.constant 3.125000e-02 : f32
    %807 = vector.broadcast %cst_307 : f32 to vector<8x1xf32>
    %808 = arith.mulf %806, %807 : vector<8x1xf32>
    %809 = vector.broadcast %808 : vector<8x1xf32> to vector<8x128xf32>
    %810 = arith.subf %800, %809 : vector<8x128xf32>
    %811 = vector.broadcast %4 : vector<1x128xf32> to vector<8x128xf32>
    %812 = arith.mulf %810, %811 : vector<8x128xf32>
    %813 = arith.mulf %812, %812 : vector<8x128xf32>
    %cst_308 = arith.constant dense<0.000000e+00> : vector<8xf32>
    %814 = vector.multi_reduction <add>, %813, %cst_308 [1] : vector<8x128xf32> to vector<8xf32>
    %815 = vector.shape_cast %814 : vector<8xf32> to vector<8x1xf32>
    %cst_309 = arith.constant 3.125000e-02 : f32
    %816 = vector.broadcast %cst_309 : f32 to vector<8x1xf32>
    %817 = arith.mulf %815, %816 : vector<8x1xf32>
    %cst_310 = arith.constant 9.99999974E-6 : f32
    %818 = vector.broadcast %cst_310 : f32 to vector<8x1xf32>
    %819 = arith.addf %817, %818 : vector<8x1xf32>
    %820 = math.rsqrt %819 : vector<8x1xf32>
    %821 = vector.broadcast %820 : vector<8x1xf32> to vector<8x128xf32>
    %822 = arith.mulf %812, %821 : vector<8x128xf32>
    %823 = vector.broadcast %801 : vector<1x128xf32> to vector<8x128xf32>
    %824 = arith.mulf %822, %823 : vector<8x128xf32>
    %825 = vector.broadcast %802 : vector<1x128xf32> to vector<8x128xf32>
    %826 = arith.addf %824, %825 : vector<8x128xf32>
    %827 = arith.truncf %826 : vector<8x128xf32> to vector<8x128xbf16>
    %c0_311 = arith.constant 0 : index
    %c0_312 = arith.constant 0 : index
    %828 = vector.load %arg37[%c0_311, %c0_312] : memref<128x128xbf16, #tpu.memory_space<vmem>>, vector<128x128xbf16>
    %cst_313 = arith.constant dense<0.000000e+00> : vector<8x128xf32>
    %829 = tpu.matmul %827, %828, %cst_313 {dimension_numbers = #tpu.dot_dimension_numbers<[1], [0], [0], [1], [0, 0, 1, 1], [], []>} : vector<8x128xbf16>, vector<128x128xbf16>, vector<8x128xf32> -> vector<8x128xf32>
    %c0_314 = arith.constant 0 : index
    %c0_315 = arith.constant 0 : index
    %830 = vector.load %arg38[%c0_314, %c0_315] : memref<1x128xf32, #tpu.memory_space<vmem>>, vector<1x128xf32>
    %831 = vector.broadcast %830 : vector<1x128xf32> to vector<8x128xf32>
    %832 = arith.addf %829, %831 : vector<8x128xf32>
    %cst_316 = arith.constant dense<0xFF800000> : vector<128xf32>
    %833 = vector.multi_reduction <maximumf>, %832, %cst_316 [0] : vector<8x128xf32> to vector<128xf32>
    %834 = vector.shape_cast %833 : vector<128xf32> to vector<1x128xf32>
    %835 = vector.broadcast %834 : vector<1x128xf32> to vector<8x128xf32>
    %836 = arith.subf %832, %835 : vector<8x128xf32>
    %837 = math.exp %836 : vector<8x128xf32>
    %cst_317 = arith.constant dense<0.000000e+00> : vector<128xf32>
    %838 = vector.multi_reduction <add>, %837, %cst_317 [0] : vector<8x128xf32> to vector<128xf32>
    %839 = vector.shape_cast %838 : vector<128xf32> to vector<1x128xf32>
    %840 = vector.broadcast %839 : vector<1x128xf32> to vector<8x128xf32>
    %841 = arith.divf %837, %840 : vector<8x128xf32>
    %c0_318 = arith.constant 0 : index
    %c0_319 = arith.constant 0 : index
    %c0_320 = arith.constant 0 : index
    %842 = vector.load %arg39[%c0_318, %c0_319, %c0_320] : memref<1x8x128xf32, #tpu.memory_space<vmem>>, vector<1x8x128xf32>
    %843 = vector.shape_cast %842 : vector<1x8x128xf32> to vector<8x128xf32>
    %844 = vector.shape_cast %841 : vector<8x128xf32> to vector<1x8x128xf32>
    tpu.vector_store %arg39[%c0_318, %c0_319, %c0_320], %844 {strides = array<i32>} : memref<1x8x128xf32, #tpu.memory_space<vmem>>, vector<1x8x128xf32>,
    return
  }
  func.func @transform_0(%arg0: i32) -> (i32, i32, i32) {
    %c0_i32 = arith.constant 0 : i32
    %c0_i32_0 = arith.constant 0 : i32
    %c0_i32_1 = arith.constant 0 : i32
    return %arg0, %c0_i32, %c0_i32_0 : i32, i32, i32
  }
  func.func @transform_1(%arg0: i32) -> (i32, i32, i32) {
    %c0_i32 = arith.constant 0 : i32
    %c0_i32_0 = arith.constant 0 : i32
    %c0_i32_1 = arith.constant 0 : i32
    return %arg0, %c0_i32, %c0_i32_0 : i32, i32, i32
  }
  func.func @transform_2(%arg0: i32) -> (i32, i32, i32) {
    %c0_i32 = arith.constant 0 : i32
    %c0_i32_0 = arith.constant 0 : i32
    %c0_i32_1 = arith.constant 0 : i32
    %c0_i32_2 = arith.constant 0 : i32
    return %c0_i32, %c0_i32_0, %c0_i32_1 : i32, i32, i32
  }
  func.func @transform_3(%arg0: i32) -> (i32, i32, i32) {
    %c0_i32 = arith.constant 0 : i32
    %c0_i32_0 = arith.constant 0 : i32
    %c0_i32_1 = arith.constant 0 : i32
    %c0_i32_2 = arith.constant 0 : i32
    return %c0_i32, %c0_i32_0, %c0_i32_1 : i32, i32, i32
  }
  func.func @transform_4(%arg0: i32) -> (i32, i32, i32) {
    %c0_i32 = arith.constant 0 : i32
    %c0_i32_0 = arith.constant 0 : i32
    %c0_i32_1 = arith.constant 0 : i32
    %c0_i32_2 = arith.constant 0 : i32
    return %c0_i32, %c0_i32_0, %c0_i32_1 : i32, i32, i32
  }
  func.func @transform_5(%arg0: i32) -> (i32, i32, i32) {
    %c0_i32 = arith.constant 0 : i32
    %c0_i32_0 = arith.constant 0 : i32
    %c0_i32_1 = arith.constant 0 : i32
    %c0_i32_2 = arith.constant 0 : i32
    return %c0_i32, %c0_i32_0, %c0_i32_1 : i32, i32, i32
  }
  func.func @transform_6(%arg0: i32) -> (i32, i32, i32) {
    %c0_i32 = arith.constant 0 : i32
    %c0_i32_0 = arith.constant 0 : i32
    %c0_i32_1 = arith.constant 0 : i32
    %c0_i32_2 = arith.constant 0 : i32
    return %c0_i32, %c0_i32_0, %c0_i32_1 : i32, i32, i32
  }
  func.func @transform_7(%arg0: i32) -> (i32, i32, i32) {
    %c0_i32 = arith.constant 0 : i32
    %c0_i32_0 = arith.constant 0 : i32
    %c0_i32_1 = arith.constant 0 : i32
    %c0_i32_2 = arith.constant 0 : i32
    return %c0_i32, %c0_i32_0, %c0_i32_1 : i32, i32, i32
  }
  func.func @transform_8(%arg0: i32) -> (i32, i32, i32) {
    %c0_i32 = arith.constant 0 : i32
    %c0_i32_0 = arith.constant 0 : i32
    %c0_i32_1 = arith.constant 0 : i32
    %c0_i32_2 = arith.constant 0 : i32
    return %c0_i32, %c0_i32_0, %c0_i32_1 : i32, i32, i32
  }
  func.func @transform_9(%arg0: i32) -> (i32, i32, i32) {
    %c0_i32 = arith.constant 0 : i32
    %c0_i32_0 = arith.constant 0 : i32
    %c0_i32_1 = arith.constant 0 : i32
    %c0_i32_2 = arith.constant 0 : i32
    return %c0_i32, %c0_i32_0, %c0_i32_1 : i32, i32, i32
  }
  func.func @transform_10(%arg0: i32) -> (i32, i32, i32) {
    %c0_i32 = arith.constant 0 : i32
    %c0_i32_0 = arith.constant 0 : i32
    %c0_i32_1 = arith.constant 0 : i32
    %c0_i32_2 = arith.constant 0 : i32
    return %c0_i32, %c0_i32_0, %c0_i32_1 : i32, i32, i32
  }
  func.func @transform_11(%arg0: i32) -> (i32, i32, i32) {
    %c0_i32 = arith.constant 0 : i32
    %c0_i32_0 = arith.constant 0 : i32
    %c0_i32_1 = arith.constant 0 : i32
    %c0_i32_2 = arith.constant 0 : i32
    return %c0_i32, %c0_i32_0, %c0_i32_1 : i32, i32, i32
  }
  func.func @transform_12(%arg0: i32) -> (i32, i32, i32) {
    %c0_i32 = arith.constant 0 : i32
    %c0_i32_0 = arith.constant 0 : i32
    %c0_i32_1 = arith.constant 0 : i32
    %c0_i32_2 = arith.constant 0 : i32
    return %c0_i32, %c0_i32_0, %c0_i32_1 : i32, i32, i32
  }
  func.func @transform_13(%arg0: i32) -> (i32, i32, i32) {
    %c0_i32 = arith.constant 0 : i32
    %c0_i32_0 = arith.constant 0 : i32
    %c0_i32_1 = arith.constant 0 : i32
    %c0_i32_2 = arith.constant 0 : i32
    return %c0_i32, %c0_i32_0, %c0_i32_1 : i32, i32, i32
  }
  func.func @transform_14(%arg0: i32) -> (i32, i32) {
    %c0_i32 = arith.constant 0 : i32
    %c0_i32_0 = arith.constant 0 : i32
    %c0_i32_1 = arith.constant 0 : i32
    return %c0_i32, %c0_i32_0 : i32, i32
  }
  func.func @transform_15(%arg0: i32) -> (i32, i32) {
    %c0_i32 = arith.constant 0 : i32
    %c0_i32_0 = arith.constant 0 : i32
    %c0_i32_1 = arith.constant 0 : i32
    return %c0_i32, %c0_i32_0 : i32, i32
  }
  func.func @transform_16(%arg0: i32) -> (i32, i32, i32) {
    %c0_i32 = arith.constant 0 : i32
    %c0_i32_0 = arith.constant 0 : i32
    %c0_i32_1 = arith.constant 0 : i32
    %c0_i32_2 = arith.constant 0 : i32
    return %c0_i32, %c0_i32_0, %c0_i32_1 : i32, i32, i32
  }
  func.func @transform_17(%arg0: i32) -> (i32, i32, i32) {
    %c0_i32 = arith.constant 0 : i32
    %c0_i32_0 = arith.constant 0 : i32
    %c0_i32_1 = arith.constant 0 : i32
    %c0_i32_2 = arith.constant 0 : i32
    return %c0_i32, %c0_i32_0, %c0_i32_1 : i32, i32, i32
  }
  func.func @transform_18(%arg0: i32) -> (i32, i32, i32) {
    %c0_i32 = arith.constant 0 : i32
    %c0_i32_0 = arith.constant 0 : i32
    %c0_i32_1 = arith.constant 0 : i32
    %c0_i32_2 = arith.constant 0 : i32
    return %c0_i32, %c0_i32_0, %c0_i32_1 : i32, i32, i32
  }
  func.func @transform_19(%arg0: i32) -> (i32, i32, i32) {
    %c0_i32 = arith.constant 0 : i32
    %c0_i32_0 = arith.constant 0 : i32
    %c0_i32_1 = arith.constant 0 : i32
    %c0_i32_2 = arith.constant 0 : i32
    return %c0_i32, %c0_i32_0, %c0_i32_1 : i32, i32, i32
  }
  func.func @transform_20(%arg0: i32) -> (i32, i32, i32) {
    %c0_i32 = arith.constant 0 : i32
    %c0_i32_0 = arith.constant 0 : i32
    %c0_i32_1 = arith.constant 0 : i32
    %c0_i32_2 = arith.constant 0 : i32
    return %c0_i32, %c0_i32_0, %c0_i32_1 : i32, i32, i32
  }
  func.func @transform_21(%arg0: i32) -> (i32, i32, i32) {
    %c0_i32 = arith.constant 0 : i32
    %c0_i32_0 = arith.constant 0 : i32
    %c0_i32_1 = arith.constant 0 : i32
    %c0_i32_2 = arith.constant 0 : i32
    return %c0_i32, %c0_i32_0, %c0_i32_1 : i32, i32, i32
  }
  func.func @transform_22(%arg0: i32) -> (i32, i32, i32) {
    %c0_i32 = arith.constant 0 : i32
    %c0_i32_0 = arith.constant 0 : i32
    %c0_i32_1 = arith.constant 0 : i32
    %c0_i32_2 = arith.constant 0 : i32
    return %c0_i32, %c0_i32_0, %c0_i32_1 : i32, i32, i32
  }
  func.func @transform_23(%arg0: i32) -> (i32, i32, i32) {
    %c0_i32 = arith.constant 0 : i32
    %c0_i32_0 = arith.constant 0 : i32
    %c0_i32_1 = arith.constant 0 : i32
    %c0_i32_2 = arith.constant 0 : i32
    return %c0_i32, %c0_i32_0, %c0_i32_1 : i32, i32, i32
  }
  func.func @transform_24(%arg0: i32) -> (i32, i32, i32) {
    %c0_i32 = arith.constant 0 : i32
    %c0_i32_0 = arith.constant 0 : i32
    %c0_i32_1 = arith.constant 0 : i32
    %c0_i32_2 = arith.constant 0 : i32
    return %c0_i32, %c0_i32_0, %c0_i32_1 : i32, i32, i32
  }
  func.func @transform_25(%arg0: i32) -> (i32, i32, i32) {
    %c0_i32 = arith.constant 0 : i32
    %c0_i32_0 = arith.constant 0 : i32
    %c0_i32_1 = arith.constant 0 : i32
    %c0_i32_2 = arith.constant 0 : i32
    return %c0_i32, %c0_i32_0, %c0_i32_1 : i32, i32, i32
  }
  func.func @transform_26(%arg0: i32) -> (i32, i32, i32) {
    %c0_i32 = arith.constant 0 : i32
    %c0_i32_0 = arith.constant 0 : i32
    %c0_i32_1 = arith.constant 0 : i32
    %c0_i32_2 = arith.constant 0 : i32
    return %c0_i32, %c0_i32_0, %c0_i32_1 : i32, i32, i32
  }
  func.func @transform_27(%arg0: i32) -> (i32, i32, i32) {
    %c0_i32 = arith.constant 0 : i32
    %c0_i32_0 = arith.constant 0 : i32
    %c0_i32_1 = arith.constant 0 : i32
    %c0_i32_2 = arith.constant 0 : i32
    return %c0_i32, %c0_i32_0, %c0_i32_1 : i32, i32, i32
  }
  func.func @transform_28(%arg0: i32) -> (i32, i32, i32) {
    %c0_i32 = arith.constant 0 : i32
    %c0_i32_0 = arith.constant 0 : i32
    %c0_i32_1 = arith.constant 0 : i32
    %c0_i32_2 = arith.constant 0 : i32
    return %c0_i32, %c0_i32_0, %c0_i32_1 : i32, i32, i32
  }
  func.func @transform_29(%arg0: i32) -> (i32, i32, i32) {
    %c0_i32 = arith.constant 0 : i32
    %c0_i32_0 = arith.constant 0 : i32
    %c0_i32_1 = arith.constant 0 : i32
    %c0_i32_2 = arith.constant 0 : i32
    return %c0_i32, %c0_i32_0, %c0_i32_1 : i32, i32, i32
  }
  func.func @transform_30(%arg0: i32) -> (i32, i32, i32) {
    %c0_i32 = arith.constant 0 : i32
    %c0_i32_0 = arith.constant 0 : i32
    %c0_i32_1 = arith.constant 0 : i32
    %c0_i32_2 = arith.constant 0 : i32
    return %c0_i32, %c0_i32_0, %c0_i32_1 : i32, i32, i32
  }
  func.func @transform_31(%arg0: i32) -> (i32, i32, i32) {
    %c0_i32 = arith.constant 0 : i32
    %c0_i32_0 = arith.constant 0 : i32
    %c0_i32_1 = arith.constant 0 : i32
    %c0_i32_2 = arith.constant 0 : i32
    return %c0_i32, %c0_i32_0, %c0_i32_1 : i32, i32, i32
  }
  func.func @transform_32(%arg0: i32) -> (i32, i32, i32) {
    %c0_i32 = arith.constant 0 : i32
    %c0_i32_0 = arith.constant 0 : i32
    %c0_i32_1 = arith.constant 0 : i32
    %c0_i32_2 = arith.constant 0 : i32
    return %c0_i32, %c0_i32_0, %c0_i32_1 : i32, i32, i32
  }
  func.func @transform_33(%arg0: i32) -> (i32, i32, i32) {
    %c0_i32 = arith.constant 0 : i32
    %c0_i32_0 = arith.constant 0 : i32
    %c0_i32_1 = arith.constant 0 : i32
    %c0_i32_2 = arith.constant 0 : i32
    return %c0_i32, %c0_i32_0, %c0_i32_1 : i32, i32, i32
  }
  func.func @transform_34(%arg0: i32) -> (i32, i32) {
    %c0_i32 = arith.constant 0 : i32
    %c0_i32_0 = arith.constant 0 : i32
    %c0_i32_1 = arith.constant 0 : i32
    return %c0_i32, %c0_i32_0 : i32, i32
  }
  func.func @transform_35(%arg0: i32) -> (i32, i32) {
    %c0_i32 = arith.constant 0 : i32
    %c0_i32_0 = arith.constant 0 : i32
    %c0_i32_1 = arith.constant 0 : i32
    return %c0_i32, %c0_i32_0 : i32, i32
  }
  func.func @transform_36(%arg0: i32) -> (i32, i32) {
    %c0_i32 = arith.constant 0 : i32
    %c0_i32_0 = arith.constant 0 : i32
    %c0_i32_1 = arith.constant 0 : i32
    return %c0_i32, %c0_i32_0 : i32, i32
  }
  func.func @transform_37(%arg0: i32) -> (i32, i32) {
    %c0_i32 = arith.constant 0 : i32
    %c0_i32_0 = arith.constant 0 : i32
    %c0_i32_1 = arith.constant 0 : i32
    return %c0_i32, %c0_i32_0 : i32, i32
  }
  func.func @transform_38(%arg0: i32) -> (i32, i32, i32) {
    %c0_i32 = arith.constant 0 : i32
    %c0_i32_0 = arith.constant 0 : i32
    %c0_i32_1 = arith.constant 0 : i32
    return %arg0, %c0_i32, %c0_i32_0 : i32, i32, i32
  }
}

</mosaic_0001>

<llo_original>
// kernel: transformer_forward.1
$region0: #{transformer_forward.1}
  #allocation0 [shape = 'u32[]', space=smem, size = 0x4, offset = 0x4, fixed_abs, tag = 'smem constant byte address 0x4 - core index']
  #allocation1 [shape = 'u32[72,128]{1,0:T(1,128)}', space=vmem, size = 0x9000, scoped, tag = 'internal scratch']
  %s0 = inlined_call_operand.smem [shape: u32[39], index: -1, kind: input, shape index: {}]
  %s1 = sld [smem:[%s0]]
  %s2 = scalar_lea.smem %s0, 1
  %s3 = sld [smem:[%s2]]
  %s4 = scalar_lea.smem %s0, 2
  %s5 = sld [smem:[%s4]]
  %s6 = scalar_lea.smem %s0, 3
  %s7 = sld [smem:[%s6]]
  %s8 = scalar_lea.smem %s0, 4
  %s9 = sld [smem:[%s8]]
  %s10 = scalar_lea.smem %s0, 5
  %s11 = sld [smem:[%s10]]
  %s12 = scalar_lea.smem %s0, 6
  %s13 = sld [smem:[%s12]]
  %s14 = scalar_lea.smem %s0, 7
  %s15 = sld [smem:[%s14]]
  %s16 = scalar_lea.smem %s0, 8
  %s17 = sld [smem:[%s16]]
  %s18 = scalar_lea.smem %s0, 9
  %s19 = sld [smem:[%s18]]
  %s20 = scalar_lea.smem %s0, 10
  %s21 = sld [smem:[%s20]]
  %s22 = scalar_lea.smem %s0, 11
  %s23 = sld [smem:[%s22]]
  %s24 = scalar_lea.smem %s0, 12
  %s25 = sld [smem:[%s24]]
  %s26 = scalar_lea.smem %s0, 13
  %s27 = sld [smem:[%s26]]
  %s28 = scalar_lea.smem %s0, 14
  %s29 = sld [smem:[%s28]]
  %s30 = scalar_lea.smem %s0, 15
  %s31 = sld [smem:[%s30]]
  %s32 = scalar_lea.smem %s0, 16
  %s33 = sld [smem:[%s32]]
  %s34 = scalar_lea.smem %s0, 17
  %s35 = sld [smem:[%s34]]
  %s36 = scalar_lea.smem %s0, 18
  %s37 = sld [smem:[%s36]]
  %s38 = scalar_lea.smem %s0, 19
  %s39 = sld [smem:[%s38]]
  %s40 = scalar_lea.smem %s0, 20
  %s41 = sld [smem:[%s40]]
  %s42 = scalar_lea.smem %s0, 21
  %s43 = sld [smem:[%s42]]
  %s44 = scalar_lea.smem %s0, 22
  %s45 = sld [smem:[%s44]]
  %s46 = scalar_lea.smem %s0, 23
  %s47 = sld [smem:[%s46]]
  %s48 = scalar_lea.smem %s0, 24
  %s49 = sld [smem:[%s48]]
  %s50 = scalar_lea.smem %s0, 25
  %s51 = sld [smem:[%s50]]
  %s52 = scalar_lea.smem %s0, 26
  %s53 = sld [smem:[%s52]]
  %s54 = scalar_lea.smem %s0, 27
  %s55 = sld [smem:[%s54]]
  %s56 = scalar_lea.smem %s0, 28
  %s57 = sld [smem:[%s56]]
  %s58 = scalar_lea.smem %s0, 29
  %s59 = sld [smem:[%s58]]
  %s60 = scalar_lea.smem %s0, 30
  %s61 = sld [smem:[%s60]]
  %s62 = scalar_lea.smem %s0, 31
  %s63 = sld [smem:[%s62]]
  %s64 = scalar_lea.smem %s0, 32
  %s65 = sld [smem:[%s64]]
  %s66 = scalar_lea.smem %s0, 33
  %s67 = sld [smem:[%s66]]
  %s68 = scalar_lea.smem %s0, 34
  %s69 = sld [smem:[%s68]]
  %s70 = scalar_lea.smem %s0, 35
  %s71 = sld [smem:[%s70]]
  %s72 = scalar_lea.smem %s0, 36
  %s73 = sld [smem:[%s72]]
  %s74 = scalar_lea.smem %s0, 37
  %s75 = sld [smem:[%s74]]
  %s76 = scalar_lea.smem %s0, 38
  %s77 = sld [smem:[%s76]]
  %s78 = sld [smem:[#allocation0]]
  $region257: #{transformer_forward.1} parent=0
    _
  %s80 = ssub.s32 1, %s78
  %s81 = scalar_select 0, %s80, %s78
  $region1: #{transformer_forward.1} parent=0
    #allocation2 [shape = 'u8[196608]{0}', space=vmem, size = 0x30000, scoped, tag = 'input window, operand 2, single buffered']
    #allocation3 [shape = 's32[2]{0}', space=sflag, size = 0x8, scoped, tag = 'scoped memory for transformer_forward.1']
    #allocation4 [shape = 's32[2]{0}', space=sflag, size = 0x8, scoped, tag = 'scoped memory for transformer_forward.1']
    #allocation5 [shape = 'u8[65536]{0}', space=vmem, size = 0x10000, scoped, tag = 'input window, operand 10, single buffered']
    #allocation6 [shape = 's32[1]{0}', space=sflag, size = 0x4, scoped, tag = 'scoped memory for transformer_forward.1']
    #allocation7 [shape = 'u8[196608]{0}', space=vmem, size = 0x30000, scoped, tag = 'input window, operand 16, single buffered']
    #allocation8 [shape = 'u8[65536]{0}', space=vmem, size = 0x10000, scoped, tag = 'input window, operand 18, single buffered']
    #allocation9 [shape = 's32[1]{0}', space=sflag, size = 0x4, scoped, tag = 'scoped memory for transformer_forward.1']
    #allocation10 [shape = 'u8[1024]{0}', space=vmem, size = 0x400, scoped, tag = 'input window, operand 20, single buffered']
    #allocation11 [shape = 'u8[1024]{0}', space=vmem, size = 0x400, scoped, tag = 'input window, operand 21, single buffered']
    #allocation12 [shape = 's32[1]{0}', space=sflag, size = 0x4, scoped, tag = 'scoped memory for transformer_forward.1']
    #allocation13 [shape = 'u8[196608]{0}', space=vmem, size = 0x30000, scoped, tag = 'input window, operand 22, single buffered']
    #allocation14 [shape = 'u8[65536]{0}', space=vmem, size = 0x10000, scoped, tag = 'input window, operand 24, single buffered']
    #allocation15 [shape = 's32[1]{0}', space=sflag, size = 0x4, scoped, tag = 'scoped memory for transformer_forward.1']
    #allocation16 [shape = 'u8[1024]{0}', space=vmem, size = 0x400, scoped, tag = 'input window, operand 25, single buffered']
    #allocation17 [shape = 'u8[1024]{0}', space=vmem, size = 0x400, scoped, tag = 'input window, operand 26, single buffered']
    #allocation18 [shape = 's32[1]{0}', space=sflag, size = 0x4, scoped, tag = 'scoped memory for transformer_forward.1']
    #allocation19 [shape = 'u8[1024]{0}', space=vmem, size = 0x400, scoped, tag = 'input window, operand 27, single buffered']
    #allocation20 [shape = 'u8[65536]{0}', space=vmem, size = 0x10000, scoped, tag = 'input window, operand 28, single buffered']
    #allocation21 [shape = 's32[1]{0}', space=sflag, size = 0x4, scoped, tag = 'scoped memory for transformer_forward.1']
    #allocation22 [shape = 'u8[1024]{0}', space=vmem, size = 0x400, scoped, tag = 'input window, operand 29, single buffered']
    #allocation23 [shape = 'u8[65536]{0}', space=vmem, size = 0x10000, scoped, tag = 'input window, operand 30, single buffered']
    #allocation24 [shape = 's32[1]{0}', space=sflag, size = 0x4, scoped, tag = 'scoped memory for transformer_forward.1']
    #allocation25 [shape = 'u8[1024]{0}', space=vmem, size = 0x400, scoped, tag = 'input window, operand 31, single buffered']
    #allocation26 [shape = 'u8[1024]{0}', space=vmem, size = 0x400, scoped, tag = 'input window, operand 32, single buffered']
    #allocation27 [shape = 's32[1]{0}', space=sflag, size = 0x4, scoped, tag = 'scoped memory for transformer_forward.1']
    #allocation28 [shape = 'u8[1024]{0}', space=vmem, size = 0x400, scoped, tag = 'input window, operand 33, single buffered']
    #allocation29 [shape = 'u8[32768]{0}', space=vmem, size = 0x8000, scoped, tag = 'input window, operand 36, single buffered']
    #allocation30 [shape = 's32[1]{0}', space=sflag, size = 0x4, scoped, tag = 'scoped memory for transformer_forward.1']
    #allocation31 [shape = 'u8[8192]{0}', space=vmem, size = 0x2000, scoped, tag = 'output window, operand 0']
    %82 = vsyncpa [#allocation3], 0
    %83 = vsyncpa [#allocation6], 0
    %84 = vsyncpa [#allocation9], 0
    %85 = vsyncpa [#allocation12], 0
    %86 = vsyncpa [#allocation15], 0
    %87 = vsyncpa [#allocation18], 0
    %88 = vsyncpa [#allocation21], 0
    %89 = vsyncpa [#allocation24], 0
    %90 = vsyncpa [#allocation27], 0
    %91 = vsyncpa [#allocation30], 0
    %92 = vsyncpa [#allocation4], 0
    %s93 = scalar_lea.sflag [#allocation4], 1
    %94 = vsyncpa %s93, 0
    loop: start=0, step=1, limit=4
    $region2: #{transformer_forward.1} parent=1 // loop_pre_header
      _
    $region3: #{transformer_forward.1} parent=1 // loop_header
      %s96 = sphi 0, %s100
      %p97 = scmp.ge.s32.totalorder %s96, 4
      %s106 = sphi 0, %s108
      %s109 = sphi 0, %s106
      %s110 = sphi 0, %s109
      %s126 = sphi 0, %s110
      %s132 = sphi 0, %s134
      %s135 = sphi 0, %s132
      %s136 = sphi 0, %s135
      %s152 = sphi 0, %s136
      %s156 = sphi 0, %s156
      %s158 = sphi 0, %s156
      %s159 = sphi 0, %s158
      %s173 = sphi 0, %s159
      %s177 = sphi 0, %s177
      %s179 = sphi 0, %s177
      %s180 = sphi 0, %s179
      %s194 = sphi 0, %s180
      %s198 = sphi 0, %s198
      %s200 = sphi 0, %s198
      %s201 = sphi 0, %s200
      %s215 = sphi 0, %s201
      %s219 = sphi 0, %s219
      %s221 = sphi 0, %s219
      %s222 = sphi 0, %s221
      %s236 = sphi 0, %s222
      %s240 = sphi 0, %s240
      %s242 = sphi 0, %s240
      %s243 = sphi 0, %s242
      %s257 = sphi 0, %s243
      %s261 = sphi 0, %s261
      %s263 = sphi 0, %s261
      %s264 = sphi 0, %s263
      %s278 = sphi 0, %s264
      %s282 = sphi 0, %s282
      %s284 = sphi 0, %s282
      %s285 = sphi 0, %s284
      %s299 = sphi 0, %s285
      %s303 = sphi 0, %s303
      %s305 = sphi 0, %s303
      %s306 = sphi 0, %s305
      %s320 = sphi 0, %s306
      %s324 = sphi 0, %s324
      %s326 = sphi 0, %s324
      %s327 = sphi 0, %s326
      %s341 = sphi 0, %s327
      %s345 = sphi 0, %s345
      %s347 = sphi 0, %s345
      %s348 = sphi 0, %s347
      %s362 = sphi 0, %s348
      %s366 = sphi 0, %s366
      %s368 = sphi 0, %s366
      %s369 = sphi 0, %s368
      %s383 = sphi 0, %s369
      %s387 = sphi 0, %s387
      %s389 = sphi 0, %s387
      %s390 = sphi 0, %s389
      %s404 = sphi 0, %s390
      %s408 = sphi 0, %s408
      %s410 = sphi 0, %s408
      %s411 = sphi 0, %s410
      %s425 = sphi 0, %s411
      %s429 = sphi 0, %s429
      %s431 = sphi 0, %s429
      %s432 = sphi 0, %s431
      %s446 = sphi 0, %s432
      %s450 = sphi 0, %s450
      %s452 = sphi 0, %s450
      %s453 = sphi 0, %s452
      %s467 = sphi 0, %s453
      %s471 = sphi 0, %s471
      %s473 = sphi 0, %s471
      %s474 = sphi 0, %s473
      %s488 = sphi 0, %s474
      %s492 = sphi 0, %s492
      %s494 = sphi 0, %s492
      %s495 = sphi 0, %s494
      %s509 = sphi 0, %s495
      %s513 = sphi 0, %s513
      %s515 = sphi 0, %s513
      %s516 = sphi 0, %s515
      %s530 = sphi 0, %s516
      %s534 = sphi 0, %s534
      %s536 = sphi 0, %s534
      %s537 = sphi 0, %s536
      %s551 = sphi 0, %s537
      %s555 = sphi 0, %s555
      %s557 = sphi 0, %s555
      %s558 = sphi 0, %s557
      %s572 = sphi 0, %s558
      %s576 = sphi 0, %s576
      %s578 = sphi 0, %s576
      %s579 = sphi 0, %s578
      %s593 = sphi 0, %s579
      %s597 = sphi 0, %s597
      %s599 = sphi 0, %s597
      %s600 = sphi 0, %s599
      %s614 = sphi 0, %s600
      %s618 = sphi 0, %s618
      %s620 = sphi 0, %s618
      %s621 = sphi 0, %s620
      %s635 = sphi 0, %s621
      %s639 = sphi 0, %s639
      %s641 = sphi 0, %s639
      %s642 = sphi 0, %s641
      %s656 = sphi 0, %s642
      %s660 = sphi 0, %s660
      %s662 = sphi 0, %s660
      %s663 = sphi 0, %s662
      %s677 = sphi 0, %s663
      %s681 = sphi 0, %s681
      %s683 = sphi 0, %s681
      %s684 = sphi 0, %s683
      %s698 = sphi 0, %s684
      %s702 = sphi 0, %s702
      %s704 = sphi 0, %s702
      %s705 = sphi 0, %s704
      %s719 = sphi 0, %s705
      %s723 = sphi 0, %s723
      %s725 = sphi 0, %s723
      %s726 = sphi 0, %s725
      %s740 = sphi 0, %s726
      %s744 = sphi 0, %s744
      %s746 = sphi 0, %s744
      %s747 = sphi 0, %s746
      %s761 = sphi 0, %s747
      %s765 = sphi 0, %s765
      %s767 = sphi 0, %s765
      %s768 = sphi 0, %s767
      %s782 = sphi 0, %s768
      %s786 = sphi 0, %s786
      %s788 = sphi 0, %s786
      %s789 = sphi 0, %s788
      %s803 = sphi 0, %s789
      %s807 = sphi 0, %s807
      %s809 = sphi 0, %s807
      %s810 = sphi 0, %s809
      %s824 = sphi 0, %s810
      %s828 = sphi 0, %s828
      %s830 = sphi 0, %s828
      %s831 = sphi 0, %s830
      %s845 = sphi 0, %s831
      %s849 = sphi 0, %s849
      %s851 = sphi 0, %s849
      %s852 = sphi 0, %s851
      %s866 = sphi 0, %s852
      %s870 = sphi 0, %s870
      %s872 = sphi 0, %s870
      %s873 = sphi 0, %s872
      %s887 = sphi 0, %s873
      %s891 = sphi 0, %s891
      %s893 = sphi 0, %s891
      %s894 = sphi 0, %s893
      %s908 = sphi 0, %s894
      %s914 = sphi 0, %s916
      %s917 = sphi 0, %s914
      %s918 = sphi 0, %s917
      %s934 = sphi 0, %s918
    $region4: #{transformer_forward.1} parent=1 // loop_header_branch
      %99 = sbr.rel (%p97) target = $region8
    $region5: #{transformer_forward.1} parent=1 // loop_body
      %s101 = ssub.s32 %s96, 1
      %s102 = ssub.s32 %s96, 2
      %s103 = sadd.s32 %s96, 1
      %s104 = ssub.s32 %s96, %s103
      %p105 = scmp.eq.s32.totalorder %s104, 0
      %s107 = sadd.s32 %s106, 1
      %s108 = scalar_select %p105, %s106, %s107
      %p111 = pneg %p105
      %p112 = scmp.eq.s32.totalorder %s96, 1
      %p113 = por %p111, %p112
      %p114 = scmp.ne.s32.totalorder %s106, %s109
      %p115 = scmp.eq.s32.totalorder %s96, 0
      %p116 = por %p114, %p115
      %p117 = scmp.ne.s32.totalorder %s106, %s109
      %p118 = scmp.eq.s32.totalorder %s101, 1
      %p119 = por %p117, %p118
      %p120 = scmp.ne.s32.totalorder %s109, %s110
      %p121 = scmp.eq.s32.totalorder %s101, 0
      %p122 = por %p120, %p121
      %p123 = scmp.ne.s32.totalorder %s109, %s110
      %p124 = scmp.eq.s32.totalorder %s102, 1
      %p125 = por %p123, %p124
      %p127 = scmp.ne.s32.totalorder %s110, %s126
      %p128 = scmp.eq.s32.totalorder %s102, 0
      %p129 = por %p127, %p128
      %s130 = ssub.s32 %s96, %s103
      %p131 = scmp.eq.s32.totalorder %s130, 0
      %s133 = sadd.s32 %s132, 1
      %s134 = scalar_select %p131, %s132, %s133
      %p137 = pneg %p131
      %p138 = scmp.eq.s32.totalorder %s96, 1
      %p139 = por %p137, %p138
      %p140 = scmp.ne.s32.totalorder %s132, %s135
      %p141 = scmp.eq.s32.totalorder %s96, 0
      %p142 = por %p140, %p141
      %p143 = scmp.ne.s32.totalorder %s132, %s135
      %p144 = scmp.eq.s32.totalorder %s101, 1
      %p145 = por %p143, %p144
      %p146 = scmp.ne.s32.totalorder %s135, %s136
      %p147 = scmp.eq.s32.totalorder %s101, 0
      %p148 = por %p146, %p147
      %p149 = scmp.ne.s32.totalorder %s135, %s136
      %p150 = scmp.eq.s32.totalorder %s102, 1
      %p151 = por %p149, %p150
      %p153 = scmp.ne.s32.totalorder %s136, %s152
      %p154 = scmp.eq.s32.totalorder %s102, 0
      %p155 = por %p153, %p154
      %s157 = sadd.s32 %s156, 1
      %p160 = scmp.eq.s32.totalorder %s96, 1
      %p161 = scmp.ne.s32.totalorder %s156, %s158
      %p162 = scmp.eq.s32.totalorder %s96, 0
      %p163 = por %p161, %p162
      %p164 = scmp.ne.s32.totalorder %s156, %s158
      %p165 = scmp.eq.s32.totalorder %s101, 1
      %p166 = por %p164, %p165
      %p167 = scmp.ne.s32.totalorder %s158, %s159
      %p168 = scmp.eq.s32.totalorder %s101, 0
      %p169 = por %p167, %p168
      %p170 = scmp.ne.s32.totalorder %s158, %s159
      %p171 = scmp.eq.s32.totalorder %s102, 1
      %p172 = por %p170, %p171
      %p174 = scmp.ne.s32.totalorder %s159, %s173
      %p175 = scmp.eq.s32.totalorder %s102, 0
      %p176 = por %p174, %p175
      %s178 = sadd.s32 %s177, 1
      %p181 = scmp.eq.s32.totalorder %s96, 1
      %p182 = scmp.ne.s32.totalorder %s177, %s179
      %p183 = scmp.eq.s32.totalorder %s96, 0
      %p184 = por %p182, %p183
      %p185 = scmp.ne.s32.totalorder %s177, %s179
      %p186 = scmp.eq.s32.totalorder %s101, 1
      %p187 = por %p185, %p186
      %p188 = scmp.ne.s32.totalorder %s179, %s180
      %p189 = scmp.eq.s32.totalorder %s101, 0
      %p190 = por %p188, %p189
      %p191 = scmp.ne.s32.totalorder %s179, %s180
      %p192 = scmp.eq.s32.totalorder %s102, 1
      %p193 = por %p191, %p192
      %p195 = scmp.ne.s32.totalorder %s180, %s194
      %p196 = scmp.eq.s32.totalorder %s102, 0
      %p197 = por %p195, %p196
      %s199 = sadd.s32 %s198, 1
      %p202 = scmp.eq.s32.totalorder %s96, 1
      %p203 = scmp.ne.s32.totalorder %s198, %s200
      %p204 = scmp.eq.s32.totalorder %s96, 0
      %p205 = por %p203, %p204
      %p206 = scmp.ne.s32.totalorder %s198, %s200
      %p207 = scmp.eq.s32.totalorder %s101, 1
      %p208 = por %p206, %p207
      %p209 = scmp.ne.s32.totalorder %s200, %s201
      %p210 = scmp.eq.s32.totalorder %s101, 0
      %p211 = por %p209, %p210
      %p212 = scmp.ne.s32.totalorder %s200, %s201
      %p213 = scmp.eq.s32.totalorder %s102, 1
      %p214 = por %p212, %p213
      %p216 = scmp.ne.s32.totalorder %s201, %s215
      %p217 = scmp.eq.s32.totalorder %s102, 0
      %p218 = por %p216, %p217
      %s220 = sadd.s32 %s219, 1
      %p223 = scmp.eq.s32.totalorder %s96, 1
      %p224 = scmp.ne.s32.totalorder %s219, %s221
      %p225 = scmp.eq.s32.totalorder %s96, 0
      %p226 = por %p224, %p225
      %p227 = scmp.ne.s32.totalorder %s219, %s221
      %p228 = scmp.eq.s32.totalorder %s101, 1
      %p229 = por %p227, %p228
      %p230 = scmp.ne.s32.totalorder %s221, %s222
      %p231 = scmp.eq.s32.totalorder %s101, 0
      %p232 = por %p230, %p231
      %p233 = scmp.ne.s32.totalorder %s221, %s222
      %p234 = scmp.eq.s32.totalorder %s102, 1
      %p235 = por %p233, %p234
      %p237 = scmp.ne.s32.totalorder %s222, %s236
      %p238 = scmp.eq.s32.totalorder %s102, 0
      %p239 = por %p237, %p238
      %s241 = sadd.s32 %s240, 1
      %p244 = scmp.eq.s32.totalorder %s96, 1
      %p245 = scmp.ne.s32.totalorder %s240, %s242
      %p246 = scmp.eq.s32.totalorder %s96, 0
      %p247 = por %p245, %p246
      %p248 = scmp.ne.s32.totalorder %s240, %s242
      %p249 = scmp.eq.s32.totalorder %s101, 1
      %p250 = por %p248, %p249
      %p251 = scmp.ne.s32.totalorder %s242, %s243
      %p252 = scmp.eq.s32.totalorder %s101, 0
      %p253 = por %p251, %p252
      %p254 = scmp.ne.s32.totalorder %s242, %s243
      %p255 = scmp.eq.s32.totalorder %s102, 1
      %p256 = por %p254, %p255
      %p258 = scmp.ne.s32.totalorder %s243, %s257
      %p259 = scmp.eq.s32.totalorder %s102, 0
      %p260 = por %p258, %p259
      %s262 = sadd.s32 %s261, 1
      %p265 = scmp.eq.s32.totalorder %s96, 1
      %p266 = scmp.ne.s32.totalorder %s261, %s263
      %p267 = scmp.eq.s32.totalorder %s96, 0
      %p268 = por %p266, %p267
      %p269 = scmp.ne.s32.totalorder %s261, %s263
      %p270 = scmp.eq.s32.totalorder %s101, 1
      %p271 = por %p269, %p270
      %p272 = scmp.ne.s32.totalorder %s263, %s264
      %p273 = scmp.eq.s32.totalorder %s101, 0
      %p274 = por %p272, %p273
      %p275 = scmp.ne.s32.totalorder %s263, %s264
      %p276 = scmp.eq.s32.totalorder %s102, 1
      %p277 = por %p275, %p276
      %p279 = scmp.ne.s32.totalorder %s264, %s278
      %p280 = scmp.eq.s32.totalorder %s102, 0
      %p281 = por %p279, %p280
      %s283 = sadd.s32 %s282, 1
      %p286 = scmp.eq.s32.totalorder %s96, 1
      %p287 = scmp.ne.s32.totalorder %s282, %s284
      %p288 = scmp.eq.s32.totalorder %s96, 0
      %p289 = por %p287, %p288
      %p290 = scmp.ne.s32.totalorder %s282, %s284
      %p291 = scmp.eq.s32.totalorder %s101, 1
      %p292 = por %p290, %p291
      %p293 = scmp.ne.s32.totalorder %s284, %s285
      %p294 = scmp.eq.s32.totalorder %s101, 0
      %p295 = por %p293, %p294
      %p296 = scmp.ne.s32.totalorder %s284, %s285
      %p297 = scmp.eq.s32.totalorder %s102, 1
      %p298 = por %p296, %p297
      %p300 = scmp.ne.s32.totalorder %s285, %s299
      %p301 = scmp.eq.s32.totalorder %s102, 0
      %p302 = por %p300, %p301
      %s304 = sadd.s32 %s303, 1
      %p307 = scmp.eq.s32.totalorder %s96, 1
      %p308 = scmp.ne.s32.totalorder %s303, %s305
      %p309 = scmp.eq.s32.totalorder %s96, 0
      %p310 = por %p308, %p309
      %p311 = scmp.ne.s32.totalorder %s303, %s305
      %p312 = scmp.eq.s32.totalorder %s101, 1
      %p313 = por %p311, %p312
      %p314 = scmp.ne.s32.totalorder %s305, %s306
      %p315 = scmp.eq.s32.totalorder %s101, 0
      %p316 = por %p314, %p315
      %p317 = scmp.ne.s32.totalorder %s305, %s306
      %p318 = scmp.eq.s32.totalorder %s102, 1
      %p319 = por %p317, %p318
      %p321 = scmp.ne.s32.totalorder %s306, %s320
      %p322 = scmp.eq.s32.totalorder %s102, 0
      %p323 = por %p321, %p322
      %s325 = sadd.s32 %s324, 1
      %p328 = scmp.eq.s32.totalorder %s96, 1
      %p329 = scmp.ne.s32.totalorder %s324, %s326
      %p330 = scmp.eq.s32.totalorder %s96, 0
      %p331 = por %p329, %p330
      %p332 = scmp.ne.s32.totalorder %s324, %s326
      %p333 = scmp.eq.s32.totalorder %s101, 1
      %p334 = por %p332, %p333
      %p335 = scmp.ne.s32.totalorder %s326, %s327
      %p336 = scmp.eq.s32.totalorder %s101, 0
      %p337 = por %p335, %p336
      %p338 = scmp.ne.s32.totalorder %s326, %s327
      %p339 = scmp.eq.s32.totalorder %s102, 1
      %p340 = por %p338, %p339
      %p342 = scmp.ne.s32.totalorder %s327, %s341
      %p343 = scmp.eq.s32.totalorder %s102, 0
      %p344 = por %p342, %p343
      %s346 = sadd.s32 %s345, 1
      %p349 = scmp.eq.s32.totalorder %s96, 1
      %p350 = scmp.ne.s32.totalorder %s345, %s347
      %p351 = scmp.eq.s32.totalorder %s96, 0
      %p352 = por %p350, %p351
      %p353 = scmp.ne.s32.totalorder %s345, %s347
      %p354 = scmp.eq.s32.totalorder %s101, 1
      %p355 = por %p353, %p354
      %p356 = scmp.ne.s32.totalorder %s347, %s348
      %p357 = scmp.eq.s32.totalorder %s101, 0
      %p358 = por %p356, %p357
      %p359 = scmp.ne.s32.totalorder %s347, %s348
      %p360 = scmp.eq.s32.totalorder %s102, 1
      %p361 = por %p359, %p360
      %p363 = scmp.ne.s32.totalorder %s348, %s362
      %p364 = scmp.eq.s32.totalorder %s102, 0
      %p365 = por %p363, %p364
      %s367 = sadd.s32 %s366, 1
      %p370 = scmp.eq.s32.totalorder %s96, 1
      %p371 = scmp.ne.s32.totalorder %s366, %s368
      %p372 = scmp.eq.s32.totalorder %s96, 0
      %p373 = por %p371, %p372
      %p374 = scmp.ne.s32.totalorder %s366, %s368
      %p375 = scmp.eq.s32.totalorder %s101, 1
      %p376 = por %p374, %p375
      %p377 = scmp.ne.s32.totalorder %s368, %s369
      %p378 = scmp.eq.s32.totalorder %s101, 0
      %p379 = por %p377, %p378
      %p380 = scmp.ne.s32.totalorder %s368, %s369
      %p381 = scmp.eq.s32.totalorder %s102, 1
      %p382 = por %p380, %p381
      %p384 = scmp.ne.s32.totalorder %s369, %s383
      %p385 = scmp.eq.s32.totalorder %s102, 0
      %p386 = por %p384, %p385
      %s388 = sadd.s32 %s387, 1
      %p391 = scmp.eq.s32.totalorder %s96, 1
      %p392 = scmp.ne.s32.totalorder %s387, %s389
      %p393 = scmp.eq.s32.totalorder %s96, 0
      %p394 = por %p392, %p393
      %p395 = scmp.ne.s32.totalorder %s387, %s389
      %p396 = scmp.eq.s32.totalorder %s101, 1
      %p397 = por %p395, %p396
      %p398 = scmp.ne.s32.totalorder %s389, %s390
      %p399 = scmp.eq.s32.totalorder %s101, 0
      %p400 = por %p398, %p399
      %p401 = scmp.ne.s32.totalorder %s389, %s390
      %p402 = scmp.eq.s32.totalorder %s102, 1
      %p403 = por %p401, %p402
      %p405 = scmp.ne.s32.totalorder %s390, %s404
      %p406 = scmp.eq.s32.totalorder %s102, 0
      %p407 = por %p405, %p406
      %s409 = sadd.s32 %s408, 1
      %p412 = scmp.eq.s32.totalorder %s96, 1
      %p413 = scmp.ne.s32.totalorder %s408, %s410
      %p414 = scmp.eq.s32.totalorder %s96, 0
      %p415 = por %p413, %p414
      %p416 = scmp.ne.s32.totalorder %s408, %s410
      %p417 = scmp.eq.s32.totalorder %s101, 1
      %p418 = por %p416, %p417
      %p419 = scmp.ne.s32.totalorder %s410, %s411
      %p420 = scmp.eq.s32.totalorder %s101, 0
      %p421 = por %p419, %p420
      %p422 = scmp.ne.s32.totalorder %s410, %s411
      %p423 = scmp.eq.s32.totalorder %s102, 1
      %p424 = por %p422, %p423
      %p426 = scmp.ne.s32.totalorder %s411, %s425
      %p427 = scmp.eq.s32.totalorder %s102, 0
      %p428 = por %p426, %p427
      %s430 = sadd.s32 %s429, 1
      %p433 = scmp.eq.s32.totalorder %s96, 1
      %p434 = scmp.ne.s32.totalorder %s429, %s431
      %p435 = scmp.eq.s32.totalorder %s96, 0
      %p436 = por %p434, %p435
      %p437 = scmp.ne.s32.totalorder %s429, %s431
      %p438 = scmp.eq.s32.totalorder %s101, 1
      %p439 = por %p437, %p438
      %p440 = scmp.ne.s32.totalorder %s431, %s432
      %p441 = scmp.eq.s32.totalorder %s101, 0
      %p442 = por %p440, %p441
      %p443 = scmp.ne.s32.totalorder %s431, %s432
      %p444 = scmp.eq.s32.totalorder %s102, 1
      %p445 = por %p443, %p444
      %p447 = scmp.ne.s32.totalorder %s432, %s446
      %p448 = scmp.eq.s32.totalorder %s102, 0
      %p449 = por %p447, %p448
      %s451 = sadd.s32 %s450, 1
      %p454 = scmp.eq.s32.totalorder %s96, 1
      %p455 = scmp.ne.s32.totalorder %s450, %s452
      %p456 = scmp.eq.s32.totalorder %s96, 0
      %p457 = por %p455, %p456
      %p458 = scmp.ne.s32.totalorder %s450, %s452
      %p459 = scmp.eq.s32.totalorder %s101, 1
      %p460 = por %p458, %p459
      %p461 = scmp.ne.s32.totalorder %s452, %s453
      %p462 = scmp.eq.s32.totalorder %s101, 0
      %p463 = por %p461, %p462
      %p464 = scmp.ne.s32.totalorder %s452, %s453
      %p465 = scmp.eq.s32.totalorder %s102, 1
      %p466 = por %p464, %p465
      %p468 = scmp.ne.s32.totalorder %s453, %s467
      %p469 = scmp.eq.s32.totalorder %s102, 0
      %p470 = por %p468, %p469
      %s472 = sadd.s32 %s471, 1
      %p475 = scmp.eq.s32.totalorder %s96, 1
      %p476 = scmp.ne.s32.totalorder %s471, %s473
      %p477 = scmp.eq.s32.totalorder %s96, 0
      %p478 = por %p476, %p477
      %p479 = scmp.ne.s32.totalorder %s471, %s473
      %p480 = scmp.eq.s32.totalorder %s101, 1
      %p481 = por %p479, %p480
      %p482 = scmp.ne.s32.totalorder %s473, %s474
      %p483 = scmp.eq.s32.totalorder %s101, 0
      %p484 = por %p482, %p483
      %p485 = scmp.ne.s32.totalorder %s473, %s474
      %p486 = scmp.eq.s32.totalorder %s102, 1
      %p487 = por %p485, %p486
      %p489 = scmp.ne.s32.totalorder %s474, %s488
      %p490 = scmp.eq.s32.totalorder %s102, 0
      %p491 = por %p489, %p490
      %s493 = sadd.s32 %s492, 1
      %p496 = scmp.eq.s32.totalorder %s96, 1
      %p497 = scmp.ne.s32.totalorder %s492, %s494
      %p498 = scmp.eq.s32.totalorder %s96, 0
      %p499 = por %p497, %p498
      %p500 = scmp.ne.s32.totalorder %s492, %s494
      %p501 = scmp.eq.s32.totalorder %s101, 1
      %p502 = por %p500, %p501
      %p503 = scmp.ne.s32.totalorder %s494, %s495
      %p504 = scmp.eq.s32.totalorder %s101, 0
      %p505 = por %p503, %p504
      %p506 = scmp.ne.s32.totalorder %s494, %s495
      %p507 = scmp.eq.s32.totalorder %s102, 1
      %p508 = por %p506, %p507
      %p510 = scmp.ne.s32.totalorder %s495, %s509
      %p511 = scmp.eq.s32.totalorder %s102, 0
      %p512 = por %p510, %p511
      %s514 = sadd.s32 %s513, 1
      %p517 = scmp.eq.s32.totalorder %s96, 1
      %p518 = scmp.ne.s32.totalorder %s513, %s515
      %p519 = scmp.eq.s32.totalorder %s96, 0
      %p520 = por %p518, %p519
      %p521 = scmp.ne.s32.totalorder %s513, %s515
      %p522 = scmp.eq.s32.totalorder %s101, 1
      %p523 = por %p521, %p522
      %p524 = scmp.ne.s32.totalorder %s515, %s516
      %p525 = scmp.eq.s32.totalorder %s101, 0
      %p526 = por %p524, %p525
      %p527 = scmp.ne.s32.totalorder %s515, %s516
      %p528 = scmp.eq.s32.totalorder %s102, 1
      %p529 = por %p527, %p528
      %p531 = scmp.ne.s32.totalorder %s516, %s530
      %p532 = scmp.eq.s32.totalorder %s102, 0
      %p533 = por %p531, %p532
      %s535 = sadd.s32 %s534, 1
      %p538 = scmp.eq.s32.totalorder %s96, 1
      %p539 = scmp.ne.s32.totalorder %s534, %s536
      %p540 = scmp.eq.s32.totalorder %s96, 0
      %p541 = por %p539, %p540
      %p542 = scmp.ne.s32.totalorder %s534, %s536
      %p543 = scmp.eq.s32.totalorder %s101, 1
      %p544 = por %p542, %p543
      %p545 = scmp.ne.s32.totalorder %s536, %s537
      %p546 = scmp.eq.s32.totalorder %s101, 0
      %p547 = por %p545, %p546
      %p548 = scmp.ne.s32.totalorder %s536, %s537
      %p549 = scmp.eq.s32.totalorder %s102, 1
      %p550 = por %p548, %p549
      %p552 = scmp.ne.s32.totalorder %s537, %s551
      %p553 = scmp.eq.s32.totalorder %s102, 0
      %p554 = por %p552, %p553
      %s556 = sadd.s32 %s555, 1
      %p559 = scmp.eq.s32.totalorder %s96, 1
      %p560 = scmp.ne.s32.totalorder %s555, %s557
      %p561 = scmp.eq.s32.totalorder %s96, 0
      %p562 = por %p560, %p561
      %p563 = scmp.ne.s32.totalorder %s555, %s557
      %p564 = scmp.eq.s32.totalorder %s101, 1
      %p565 = por %p563, %p564
      %p566 = scmp.ne.s32.totalorder %s557, %s558
      %p567 = scmp.eq.s32.totalorder %s101, 0
      %p568 = por %p566, %p567
      %p569 = scmp.ne.s32.totalorder %s557, %s558
      %p570 = scmp.eq.s32.totalorder %s102, 1
      %p571 = por %p569, %p570
      %p573 = scmp.ne.s32.totalorder %s558, %s572
      %p574 = scmp.eq.s32.totalorder %s102, 0
      %p575 = por %p573, %p574
      %s577 = sadd.s32 %s576, 1
      %p580 = scmp.eq.s32.totalorder %s96, 1
      %p581 = scmp.ne.s32.totalorder %s576, %s578
      %p582 = scmp.eq.s32.totalorder %s96, 0
      %p583 = por %p581, %p582
      %p584 = scmp.ne.s32.totalorder %s576, %s578
      %p585 = scmp.eq.s32.totalorder %s101, 1
      %p586 = por %p584, %p585
      %p587 = scmp.ne.s32.totalorder %s578, %s579
      %p588 = scmp.eq.s32.totalorder %s101, 0
      %p589 = por %p587, %p588
      %p590 = scmp.ne.s32.totalorder %s578, %s579
      %p591 = scmp.eq.s32.totalorder %s102, 1
      %p592 = por %p590, %p591
      %p594 = scmp.ne.s32.totalorder %s579, %s593
      %p595 = scmp.eq.s32.totalorder %s102, 0
      %p596 = por %p594, %p595
      %s598 = sadd.s32 %s597, 1
      %p601 = scmp.eq.s32.totalorder %s96, 1
      %p602 = scmp.ne.s32.totalorder %s597, %s599
      %p603 = scmp.eq.s32.totalorder %s96, 0
      %p604 = por %p602, %p603
      %p605 = scmp.ne.s32.totalorder %s597, %s599
      %p606 = scmp.eq.s32.totalorder %s101, 1
      %p607 = por %p605, %p606
      %p608 = scmp.ne.s32.totalorder %s599, %s600
      %p609 = scmp.eq.s32.totalorder %s101, 0
      %p610 = por %p608, %p609
      %p611 = scmp.ne.s32.totalorder %s599, %s600
      %p612 = scmp.eq.s32.totalorder %s102, 1
      %p613 = por %p611, %p612
      %p615 = scmp.ne.s32.totalorder %s600, %s614
      %p616 = scmp.eq.s32.totalorder %s102, 0
      %p617 = por %p615, %p616
      %s619 = sadd.s32 %s618, 1
      %p622 = scmp.eq.s32.totalorder %s96, 1
      %p623 = scmp.ne.s32.totalorder %s618, %s620
      %p624 = scmp.eq.s32.totalorder %s96, 0
      %p625 = por %p623, %p624
      %p626 = scmp.ne.s32.totalorder %s618, %s620
      %p627 = scmp.eq.s32.totalorder %s101, 1
      %p628 = por %p626, %p627
      %p629 = scmp.ne.s32.totalorder %s620, %s621
      %p630 = scmp.eq.s32.totalorder %s101, 0
      %p631 = por %p629, %p630
      %p632 = scmp.ne.s32.totalorder %s620, %s621
      %p633 = scmp.eq.s32.totalorder %s102, 1
      %p634 = por %p632, %p633
      %p636 = scmp.ne.s32.totalorder %s621, %s635
      %p637 = scmp.eq.s32.totalorder %s102, 0
      %p638 = por %p636, %p637
      %s640 = sadd.s32 %s639, 1
      %p643 = scmp.eq.s32.totalorder %s96, 1
      %p644 = scmp.ne.s32.totalorder %s639, %s641
      %p645 = scmp.eq.s32.totalorder %s96, 0
      %p646 = por %p644, %p645
      %p647 = scmp.ne.s32.totalorder %s639, %s641
      %p648 = scmp.eq.s32.totalorder %s101, 1
      %p649 = por %p647, %p648
      %p650 = scmp.ne.s32.totalorder %s641, %s642
      %p651 = scmp.eq.s32.totalorder %s101, 0
      %p652 = por %p650, %p651
      %p653 = scmp.ne.s32.totalorder %s641, %s642
      %p654 = scmp.eq.s32.totalorder %s102, 1
      %p655 = por %p653, %p654
      %p657 = scmp.ne.s32.totalorder %s642, %s656
      %p658 = scmp.eq.s32.totalorder %s102, 0
      %p659 = por %p657, %p658
      %s661 = sadd.s32 %s660, 1
      %p664 = scmp.eq.s32.totalorder %s96, 1
      %p665 = scmp.ne.s32.totalorder %s660, %s662
      %p666 = scmp.eq.s32.totalorder %s96, 0
      %p667 = por %p665, %p666
      %p668 = scmp.ne.s32.totalorder %s660, %s662
      %p669 = scmp.eq.s32.totalorder %s101, 1
      %p670 = por %p668, %p669
      %p671 = scmp.ne.s32.totalorder %s662, %s663
      %p672 = scmp.eq.s32.totalorder %s101, 0
      %p673 = por %p671, %p672
      %p674 = scmp.ne.s32.totalorder %s662, %s663
      %p675 = scmp.eq.s32.totalorder %s102, 1
      %p676 = por %p674, %p675
      %p678 = scmp.ne.s32.totalorder %s663, %s677
      %p679 = scmp.eq.s32.totalorder %s102, 0
      %p680 = por %p678, %p679
      %s682 = sadd.s32 %s681, 1
      %p685 = scmp.eq.s32.totalorder %s96, 1
      %p686 = scmp.ne.s32.totalorder %s681, %s683
      %p687 = scmp.eq.s32.totalorder %s96, 0
      %p688 = por %p686, %p687
      %p689 = scmp.ne.s32.totalorder %s681, %s683
      %p690 = scmp.eq.s32.totalorder %s101, 1
      %p691 = por %p689, %p690
      %p692 = scmp.ne.s32.totalorder %s683, %s684
      %p693 = scmp.eq.s32.totalorder %s101, 0
      %p694 = por %p692, %p693
      %p695 = scmp.ne.s32.totalorder %s683, %s684
      %p696 = scmp.eq.s32.totalorder %s102, 1
      %p697 = por %p695, %p696
      %p699 = scmp.ne.s32.totalorder %s684, %s698
      %p700 = scmp.eq.s32.totalorder %s102, 0
      %p701 = por %p699, %p700
      %s703 = sadd.s32 %s702, 1
      %p706 = scmp.eq.s32.totalorder %s96, 1
      %p707 = scmp.ne.s32.totalorder %s702, %s704
      %p708 = scmp.eq.s32.totalorder %s96, 0
      %p709 = por %p707, %p708
      %p710 = scmp.ne.s32.totalorder %s702, %s704
      %p711 = scmp.eq.s32.totalorder %s101, 1
      %p712 = por %p710, %p711
      %p713 = scmp.ne.s32.totalorder %s704, %s705
      %p714 = scmp.eq.s32.totalorder %s101, 0
      %p715 = por %p713, %p714
      %p716 = scmp.ne.s32.totalorder %s704, %s705
      %p717 = scmp.eq.s32.totalorder %s102, 1
      %p718 = por %p716, %p717
      %p720 = scmp.ne.s32.totalorder %s705, %s719
      %p721 = scmp.eq.s32.totalorder %s102, 0
      %p722 = por %p720, %p721
      %s724 = sadd.s32 %s723, 1
      %p727 = scmp.eq.s32.totalorder %s96, 1
      %p728 = scmp.ne.s32.totalorder %s723, %s725
      %p729 = scmp.eq.s32.totalorder %s96, 0
      %p730 = por %p728, %p729
      %p731 = scmp.ne.s32.totalorder %s723, %s725
      %p732 = scmp.eq.s32.totalorder %s101, 1
      %p733 = por %p731, %p732
      %p734 = scmp.ne.s32.totalorder %s725, %s726
      %p735 = scmp.eq.s32.totalorder %s101, 0
      %p736 = por %p734, %p735
      %p737 = scmp.ne.s32.totalorder %s725, %s726
      %p738 = scmp.eq.s32.totalorder %s102, 1
      %p739 = por %p737, %p738
      %p741 = scmp.ne.s32.totalorder %s726, %s740
      %p742 = scmp.eq.s32.totalorder %s102, 0
      %p743 = por %p741, %p742
      %s745 = sadd.s32 %s744, 1
      %p748 = scmp.eq.s32.totalorder %s96, 1
      %p749 = scmp.ne.s32.totalorder %s744, %s746
      %p750 = scmp.eq.s32.totalorder %s96, 0
      %p751 = por %p749, %p750
      %p752 = scmp.ne.s32.totalorder %s744, %s746
      %p753 = scmp.eq.s32.totalorder %s101, 1
      %p754 = por %p752, %p753
      %p755 = scmp.ne.s32.totalorder %s746, %s747
      %p756 = scmp.eq.s32.totalorder %s101, 0
      %p757 = por %p755, %p756
      %p758 = scmp.ne.s32.totalorder %s746, %s747
      %p759 = scmp.eq.s32.totalorder %s102, 1
      %p760 = por %p758, %p759
      %p762 = scmp.ne.s32.totalorder %s747, %s761
      %p763 = scmp.eq.s32.totalorder %s102, 0
      %p764 = por %p762, %p763
      %s766 = sadd.s32 %s765, 1
      %p769 = scmp.eq.s32.totalorder %s96, 1
      %p770 = scmp.ne.s32.totalorder %s765, %s767
      %p771 = scmp.eq.s32.totalorder %s96, 0
      %p772 = por %p770, %p771
      %p773 = scmp.ne.s32.totalorder %s765, %s767
      %p774 = scmp.eq.s32.totalorder %s101, 1
      %p775 = por %p773, %p774
      %p776 = scmp.ne.s32.totalorder %s767, %s768
      %p777 = scmp.eq.s32.totalorder %s101, 0
      %p778 = por %p776, %p777
      %p779 = scmp.ne.s32.totalorder %s767, %s768
      %p780 = scmp.eq.s32.totalorder %s102, 1
      %p781 = por %p779, %p780
      %p783 = scmp.ne.s32.totalorder %s768, %s782
      %p784 = scmp.eq.s32.totalorder %s102, 0
      %p785 = por %p783, %p784
      %s787 = sadd.s32 %s786, 1
      %p790 = scmp.eq.s32.totalorder %s96, 1
      %p791 = scmp.ne.s32.totalorder %s786, %s788
      %p792 = scmp.eq.s32.totalorder %s96, 0
      %p793 = por %p791, %p792
      %p794 = scmp.ne.s32.totalorder %s786, %s788
      %p795 = scmp.eq.s32.totalorder %s101, 1
      %p796 = por %p794, %p795
      %p797 = scmp.ne.s32.totalorder %s788, %s789
      %p798 = scmp.eq.s32.totalorder %s101, 0
      %p799 = por %p797, %p798
      %p800 = scmp.ne.s32.totalorder %s788, %s789
      %p801 = scmp.eq.s32.totalorder %s102, 1
      %p802 = por %p800, %p801
      %p804 = scmp.ne.s32.totalorder %s789, %s803
      %p805 = scmp.eq.s32.totalorder %s102, 0
      %p806 = por %p804, %p805
      %s808 = sadd.s32 %s807, 1
      %p811 = scmp.eq.s32.totalorder %s96, 1
      %p812 = scmp.ne.s32.totalorder %s807, %s809
      %p813 = scmp.eq.s32.totalorder %s96, 0
      %p814 = por %p812, %p813
      %p815 = scmp.ne.s32.totalorder %s807, %s809
      %p816 = scmp.eq.s32.totalorder %s101, 1
      %p817 = por %p815, %p816
      %p818 = scmp.ne.s32.totalorder %s809, %s810
      %p819 = scmp.eq.s32.totalorder %s101, 0
      %p820 = por %p818, %p819
      %p821 = scmp.ne.s32.totalorder %s809, %s810
      %p822 = scmp.eq.s32.totalorder %s102, 1
      %p823 = por %p821, %p822
      %p825 = scmp.ne.s32.totalorder %s810, %s824
      %p826 = scmp.eq.s32.totalorder %s102, 0
      %p827 = por %p825, %p826
      %s829 = sadd.s32 %s828, 1
      %p832 = scmp.eq.s32.totalorder %s96, 1
      %p833 = scmp.ne.s32.totalorder %s828, %s830
      %p834 = scmp.eq.s32.totalorder %s96, 0
      %p835 = por %p833, %p834
      %p836 = scmp.ne.s32.totalorder %s828, %s830
      %p837 = scmp.eq.s32.totalorder %s101, 1
      %p838 = por %p836, %p837
      %p839 = scmp.ne.s32.totalorder %s830, %s831
      %p840 = scmp.eq.s32.totalorder %s101, 0
      %p841 = por %p839, %p840
      %p842 = scmp.ne.s32.totalorder %s830, %s831
      %p843 = scmp.eq.s32.totalorder %s102, 1
      %p844 = por %p842, %p843
      %p846 = scmp.ne.s32.totalorder %s831, %s845
      %p847 = scmp.eq.s32.totalorder %s102, 0
      %p848 = por %p846, %p847
      %s850 = sadd.s32 %s849, 1
      %p853 = scmp.eq.s32.totalorder %s96, 1
      %p854 = scmp.ne.s32.totalorder %s849, %s851
      %p855 = scmp.eq.s32.totalorder %s96, 0
      %p856 = por %p854, %p855
      %p857 = scmp.ne.s32.totalorder %s849, %s851
      %p858 = scmp.eq.s32.totalorder %s101, 1
      %p859 = por %p857, %p858
      %p860 = scmp.ne.s32.totalorder %s851, %s852
      %p861 = scmp.eq.s32.totalorder %s101, 0
      %p862 = por %p860, %p861
      %p863 = scmp.ne.s32.totalorder %s851, %s852
      %p864 = scmp.eq.s32.totalorder %s102, 1
      %p865 = por %p863, %p864
      %p867 = scmp.ne.s32.totalorder %s852, %s866
      %p868 = scmp.eq.s32.totalorder %s102, 0
      %p869 = por %p867, %p868
      %s871 = sadd.s32 %s870, 1
      %p874 = scmp.eq.s32.totalorder %s96, 1
      %p875 = scmp.ne.s32.totalorder %s870, %s872
      %p876 = scmp.eq.s32.totalorder %s96, 0
      %p877 = por %p875, %p876
      %p878 = scmp.ne.s32.totalorder %s870, %s872
      %p879 = scmp.eq.s32.totalorder %s101, 1
      %p880 = por %p878, %p879
      %p881 = scmp.ne.s32.totalorder %s872, %s873
      %p882 = scmp.eq.s32.totalorder %s101, 0
      %p883 = por %p881, %p882
      %p884 = scmp.ne.s32.totalorder %s872, %s873
      %p885 = scmp.eq.s32.totalorder %s102, 1
      %p886 = por %p884, %p885
      %p888 = scmp.ne.s32.totalorder %s873, %s887
      %p889 = scmp.eq.s32.totalorder %s102, 0
      %p890 = por %p888, %p889
      %s892 = sadd.s32 %s891, 1
      %p895 = scmp.eq.s32.totalorder %s96, 1
      %p896 = scmp.ne.s32.totalorder %s891, %s893
      %p897 = scmp.eq.s32.totalorder %s96, 0
      %p898 = por %p896, %p897
      %p899 = scmp.ne.s32.totalorder %s891, %s893
      %p900 = scmp.eq.s32.totalorder %s101, 1
      %p901 = por %p899, %p900
      %p902 = scmp.ne.s32.totalorder %s893, %s894
      %p903 = scmp.eq.s32.totalorder %s101, 0
      %p904 = por %p902, %p903
      %p905 = scmp.ne.s32.totalorder %s893, %s894
      %p906 = scmp.eq.s32.totalorder %s102, 1
      %p907 = por %p905, %p906
      %p909 = scmp.ne.s32.totalorder %s894, %s908
      %p910 = scmp.eq.s32.totalorder %s102, 0
      %p911 = por %p909, %p910
      %s912 = ssub.s32 %s96, %s103
      %p913 = scmp.eq.s32.totalorder %s912, 0
      %s915 = sadd.s32 %s914, 1
      %s916 = scalar_select %p913, %s914, %s915
      %p919 = pneg %p913
      %p920 = scmp.eq.s32.totalorder %s96, 1
      %p921 = por %p919, %p920
      %p922 = scmp.ne.s32.totalorder %s914, %s917
      %p923 = scmp.eq.s32.totalorder %s96, 0
      %p924 = por %p922, %p923
      %p925 = scmp.ne.s32.totalorder %s914, %s917
      %p926 = scmp.eq.s32.totalorder %s101, 1
      %p927 = por %p925, %p926
      %p928 = scmp.ne.s32.totalorder %s917, %s918
      %p929 = scmp.eq.s32.totalorder %s101, 0
      %p930 = por %p928, %p929
      %p931 = scmp.ne.s32.totalorder %s917, %s918
      %p932 = scmp.eq.s32.totalorder %s102, 1
      %p933 = por %p931, %p932
      %p935 = scmp.ne.s32.totalorder %s918, %s934
      %p936 = scmp.eq.s32.totalorder %s102, 0
      %p937 = por %p935, %p936
      %p938 = scmp.le.s32.totalorder 1, %s96
      %p939 = scmp.lt.s32.totalorder %s96, 3
      %p940 = pnand %p938, %p939
      %p941 = pneg %p940
      // Predicated region
      $region9: #{transformer_forward.1} parent=5 // pred_check
        _
      $region10: #{transformer_forward.1} parent=5 // pred_check_branch
        %943 = sbr.rel (%p940) target = $region12
      $region11: #{transformer_forward.1} parent=5 // pred_region
        %s944 = ssub.s32 %s96, 1
        // Predicated region
        $region13: #{transformer_forward.1} parent=11 // pred_check
          %p945 = pneg %p169
        $region14: #{transformer_forward.1} parent=11 // pred_check_branch
          %947 = sbr.rel (%p945) target = $region16
        $region15: #{transformer_forward.1} parent=11 // pred_region
          %949 = vsyncadd [#allocation3], 0
          %s950 = sshll.u32 %s5, 4
          %s951 = int_to_ptr.hbm [resolvable:$true] %s950
          %s952 = sshll.u32 [#allocation2], 4
          %s953 = int_to_ptr.vmem [resolvable:$true] %s952
          %958 = dma.hbm_to_vmem [thread:$0]  %s951, 6144, %s953, [#allocation3], 192, 192, 12
        $region16: #{transformer_forward.1} parent=11 // pred_fallthru
          _
        // Predicated region
        $region17: #{transformer_forward.1} parent=11 // pred_check
          %p959 = pneg %p190
        $region18: #{transformer_forward.1} parent=11 // pred_check_branch
          %961 = sbr.rel (%p959) target = $region20
        $region19: #{transformer_forward.1} parent=11 // pred_region
          _
        $region20: #{transformer_forward.1} parent=11 // pred_fallthru
          _
        // Predicated region
        $region21: #{transformer_forward.1} parent=11 // pred_check
          %p962 = pneg %p211
        $region22: #{transformer_forward.1} parent=11 // pred_check_branch
          %964 = sbr.rel (%p962) target = $region24
        $region23: #{transformer_forward.1} parent=11 // pred_region
          _
        $region24: #{transformer_forward.1} parent=11 // pred_fallthru
          _
        // Predicated region
        $region25: #{transformer_forward.1} parent=11 // pred_check
          %p965 = pneg %p232
        $region26: #{transformer_forward.1} parent=11 // pred_check_branch
          %967 = sbr.rel (%p965) target = $region28
        $region27: #{transformer_forward.1} parent=11 // pred_region
          _
        $region28: #{transformer_forward.1} parent=11 // pred_fallthru
          _
        // Predicated region
        $region29: #{transformer_forward.1} parent=11 // pred_check
          %p968 = pneg %p253
        $region30: #{transformer_forward.1} parent=11 // pred_check_branch
          %970 = sbr.rel (%p968) target = $region32
        $region31: #{transformer_forward.1} parent=11 // pred_region
          _
        $region32: #{transformer_forward.1} parent=11 // pred_fallthru
          _
        // Predicated region
        $region33: #{transformer_forward.1} parent=11 // pred_check
          %p971 = pneg %p274
        $region34: #{transformer_forward.1} parent=11 // pred_check_branch
          %973 = sbr.rel (%p971) target = $region36
        $region35: #{transformer_forward.1} parent=11 // pred_region
          _
        $region36: #{transformer_forward.1} parent=11 // pred_fallthru
          _
        // Predicated region
        $region37: #{transformer_forward.1} parent=11 // pred_check
          %p974 = pneg %p295
        $region38: #{transformer_forward.1} parent=11 // pred_check_branch
          %976 = sbr.rel (%p974) target = $region40
        $region39: #{transformer_forward.1} parent=11 // pred_region
          _
        $region40: #{transformer_forward.1} parent=11 // pred_fallthru
          _
        // Predicated region
        $region41: #{transformer_forward.1} parent=11 // pred_check
          %p977 = pneg %p316
        $region42: #{transformer_forward.1} parent=11 // pred_check_branch
          %979 = sbr.rel (%p977) target = $region44
        $region43: #{transformer_forward.1} parent=11 // pred_region
          _
        $region44: #{transformer_forward.1} parent=11 // pred_fallthru
          _
        // Predicated region
        $region45: #{transformer_forward.1} parent=11 // pred_check
          %p980 = pneg %p337
        $region46: #{transformer_forward.1} parent=11 // pred_check_branch
          %982 = sbr.rel (%p980) target = $region48
        $region47: #{transformer_forward.1} parent=11 // pred_region
          %984 = vsyncadd [#allocation6], 0
          %s985 = sshll.u32 %s21, 4
          %s986 = int_to_ptr.hbm [resolvable:$true] %s985
          %s987 = sshll.u32 [#allocation5], 4
          %s988 = int_to_ptr.vmem [resolvable:$true] %s987
          %993 = dma.hbm_to_vmem [thread:$0]  %s986, 2048, %s988, [#allocation6], 64, 64, 4
        $region48: #{transformer_forward.1} parent=11 // pred_fallthru
          _
        // Predicated region
        $region49: #{transformer_forward.1} parent=11 // pred_check
          %p994 = pneg %p358
        $region50: #{transformer_forward.1} parent=11 // pred_check_branch
          %996 = sbr.rel (%p994) target = $region52
        $region51: #{transformer_forward.1} parent=11 // pred_region
          _
        $region52: #{transformer_forward.1} parent=11 // pred_fallthru
          _
        // Predicated region
        $region53: #{transformer_forward.1} parent=11 // pred_check
          %p997 = pneg %p379
        $region54: #{transformer_forward.1} parent=11 // pred_check_branch
          %999 = sbr.rel (%p997) target = $region56
        $region55: #{transformer_forward.1} parent=11 // pred_region
          _
        $region56: #{transformer_forward.1} parent=11 // pred_fallthru
          _
        // Predicated region
        $region57: #{transformer_forward.1} parent=11 // pred_check
          %p1000 = pneg %p400
        $region58: #{transformer_forward.1} parent=11 // pred_check_branch
          %1002 = sbr.rel (%p1000) target = $region60
        $region59: #{transformer_forward.1} parent=11 // pred_region
          _
        $region60: #{transformer_forward.1} parent=11 // pred_fallthru
          _
        // Predicated region
        $region61: #{transformer_forward.1} parent=11 // pred_check
          %p1003 = pneg %p421
        $region62: #{transformer_forward.1} parent=11 // pred_check_branch
          %1005 = sbr.rel (%p1003) target = $region64
        $region63: #{transformer_forward.1} parent=11 // pred_region
          _
        $region64: #{transformer_forward.1} parent=11 // pred_fallthru
          _
        // Predicated region
        $region65: #{transformer_forward.1} parent=11 // pred_check
          %p1006 = pneg %p442
        $region66: #{transformer_forward.1} parent=11 // pred_check_branch
          %1008 = sbr.rel (%p1006) target = $region68
        $region67: #{transformer_forward.1} parent=11 // pred_region
          _
        $region68: #{transformer_forward.1} parent=11 // pred_fallthru
          _
        // Predicated region
        $region69: #{transformer_forward.1} parent=11 // pred_check
          %p1009 = pneg %p463
        $region70: #{transformer_forward.1} parent=11 // pred_check_branch
          %1011 = sbr.rel (%p1009) target = $region72
        $region71: #{transformer_forward.1} parent=11 // pred_region
          %1013 = vsyncadd [#allocation6], 0
          %s1014 = sshll.u32 %s33, 4
          %s1015 = int_to_ptr.hbm [resolvable:$true] %s1014
          %s1016 = sshll.u32 [#allocation7], 4
          %s1017 = int_to_ptr.vmem [resolvable:$true] %s1016
          %1022 = dma.hbm_to_vmem [thread:$0]  %s1015, 6144, %s1017, [#allocation6], 192, 192, 12
        $region72: #{transformer_forward.1} parent=11 // pred_fallthru
          _
        // Predicated region
        $region73: #{transformer_forward.1} parent=11 // pred_check
          %p1023 = pneg %p484
        $region74: #{transformer_forward.1} parent=11 // pred_check_branch
          %1025 = sbr.rel (%p1023) target = $region76
        $region75: #{transformer_forward.1} parent=11 // pred_region
          _
        $region76: #{transformer_forward.1} parent=11 // pred_fallthru
          _
        // Predicated region
        $region77: #{transformer_forward.1} parent=11 // pred_check
          %p1026 = pneg %p505
        $region78: #{transformer_forward.1} parent=11 // pred_check_branch
          %1028 = sbr.rel (%p1026) target = $region80
        $region79: #{transformer_forward.1} parent=11 // pred_region
          %1030 = vsyncadd [#allocation9], 0
          %s1031 = sshll.u32 %s37, 4
          %s1032 = int_to_ptr.hbm [resolvable:$true] %s1031
          %s1033 = sshll.u32 [#allocation8], 4
          %s1034 = int_to_ptr.vmem [resolvable:$true] %s1033
          %1039 = dma.hbm_to_vmem [thread:$0]  %s1032, 2048, %s1034, [#allocation9], 64, 64, 4
        $region80: #{transformer_forward.1} parent=11 // pred_fallthru
          _
        // Predicated region
        $region81: #{transformer_forward.1} parent=11 // pred_check
          %p1040 = pneg %p526
        $region82: #{transformer_forward.1} parent=11 // pred_check_branch
          %1042 = sbr.rel (%p1040) target = $region84
        $region83: #{transformer_forward.1} parent=11 // pred_region
          _
        $region84: #{transformer_forward.1} parent=11 // pred_fallthru
          _
        // Predicated region
        $region85: #{transformer_forward.1} parent=11 // pred_check
          %p1043 = pneg %p547
        $region86: #{transformer_forward.1} parent=11 // pred_check_branch
          %1045 = sbr.rel (%p1043) target = $region88
        $region87: #{transformer_forward.1} parent=11 // pred_region
          %1047 = vsyncadd [#allocation9], 0
          %s1048 = sshll.u32 %s41, 4
          %s1049 = int_to_ptr.hbm [resolvable:$true] %s1048
          %s1050 = sshll.u32 [#allocation10], 4
          %s1051 = int_to_ptr.vmem [resolvable:$true] %s1050
          %1056 = dma.hbm_to_vmem [thread:$0]  %s1049, 32, %s1051, [#allocation9], 16, 16, 1
        $region88: #{transformer_forward.1} parent=11 // pred_fallthru
          _
        // Predicated region
        $region89: #{transformer_forward.1} parent=11 // pred_check
          %p1057 = pneg %p568
        $region90: #{transformer_forward.1} parent=11 // pred_check_branch
          %1059 = sbr.rel (%p1057) target = $region92
        $region91: #{transformer_forward.1} parent=11 // pred_region
          %1061 = vsyncadd [#allocation12], 0
          %s1062 = sshll.u32 %s43, 4
          %s1063 = int_to_ptr.hbm [resolvable:$true] %s1062
          %s1064 = sshll.u32 [#allocation11], 4
          %s1065 = int_to_ptr.vmem [resolvable:$true] %s1064
          %1070 = dma.hbm_to_vmem [thread:$0]  %s1063, 32, %s1065, [#allocation12], 16, 16, 1
        $region92: #{transformer_forward.1} parent=11 // pred_fallthru
          _
        // Predicated region
        $region93: #{transformer_forward.1} parent=11 // pred_check
          %p1071 = pneg %p589
        $region94: #{transformer_forward.1} parent=11 // pred_check_branch
          %1073 = sbr.rel (%p1071) target = $region96
        $region95: #{transformer_forward.1} parent=11 // pred_region
          %1075 = vsyncadd [#allocation12], 0
          %s1076 = sshll.u32 %s45, 4
          %s1077 = int_to_ptr.hbm [resolvable:$true] %s1076
          %s1078 = sshll.u32 [#allocation13], 4
          %s1079 = int_to_ptr.vmem [resolvable:$true] %s1078
          %1084 = dma.hbm_to_vmem [thread:$0]  %s1077, 6144, %s1079, [#allocation12], 192, 192, 12
        $region96: #{transformer_forward.1} parent=11 // pred_fallthru
          _
        // Predicated region
        $region97: #{transformer_forward.1} parent=11 // pred_check
          %p1085 = pneg %p610
        $region98: #{transformer_forward.1} parent=11 // pred_check_branch
          %1087 = sbr.rel (%p1085) target = $region100
        $region99: #{transformer_forward.1} parent=11 // pred_region
          _
        $region100: #{transformer_forward.1} parent=11 // pred_fallthru
          _
        // Predicated region
        $region101: #{transformer_forward.1} parent=11 // pred_check
          %p1088 = pneg %p631
        $region102: #{transformer_forward.1} parent=11 // pred_check_branch
          %1090 = sbr.rel (%p1088) target = $region104
        $region103: #{transformer_forward.1} parent=11 // pred_region
          %1092 = vsyncadd [#allocation15], 0
          %s1093 = sshll.u32 %s49, 4
          %s1094 = int_to_ptr.hbm [resolvable:$true] %s1093
          %s1095 = sshll.u32 [#allocation14], 4
          %s1096 = int_to_ptr.vmem [resolvable:$true] %s1095
          %1101 = dma.hbm_to_vmem [thread:$0]  %s1094, 2048, %s1096, [#allocation15], 64, 64, 4
        $region104: #{transformer_forward.1} parent=11 // pred_fallthru
          _
        // Predicated region
        $region105: #{transformer_forward.1} parent=11 // pred_check
          %p1102 = pneg %p652
        $region106: #{transformer_forward.1} parent=11 // pred_check_branch
          %1104 = sbr.rel (%p1102) target = $region108
        $region107: #{transformer_forward.1} parent=11 // pred_region
          %1106 = vsyncadd [#allocation15], 0
          %s1107 = sshll.u32 %s51, 4
          %s1108 = int_to_ptr.hbm [resolvable:$true] %s1107
          %s1109 = sshll.u32 [#allocation16], 4
          %s1110 = int_to_ptr.vmem [resolvable:$true] %s1109
          %1115 = dma.hbm_to_vmem [thread:$0]  %s1108, 32, %s1110, [#allocation15], 16, 16, 1
        $region108: #{transformer_forward.1} parent=11 // pred_fallthru
          _
        // Predicated region
        $region109: #{transformer_forward.1} parent=11 // pred_check
          %p1116 = pneg %p673
        $region110: #{transformer_forward.1} parent=11 // pred_check_branch
          %1118 = sbr.rel (%p1116) target = $region112
        $region111: #{transformer_forward.1} parent=11 // pred_region
          %1120 = vsyncadd [#allocation18], 0
          %s1121 = sshll.u32 %s53, 4
          %s1122 = int_to_ptr.hbm [resolvable:$true] %s1121
          %s1123 = sshll.u32 [#allocation17], 4
          %s1124 = int_to_ptr.vmem [resolvable:$true] %s1123
          %1129 = dma.hbm_to_vmem [thread:$0]  %s1122, 32, %s1124, [#allocation18], 16, 16, 1
        $region112: #{transformer_forward.1} parent=11 // pred_fallthru
          _
        // Predicated region
        $region113: #{transformer_forward.1} parent=11 // pred_check
          %p1130 = pneg %p694
        $region114: #{transformer_forward.1} parent=11 // pred_check_branch
          %1132 = sbr.rel (%p1130) target = $region116
        $region115: #{transformer_forward.1} parent=11 // pred_region
          %1134 = vsyncadd [#allocation18], 0
          %s1135 = sshll.u32 %s55, 4
          %s1136 = int_to_ptr.hbm [resolvable:$true] %s1135
          %s1137 = sshll.u32 [#allocation19], 4
          %s1138 = int_to_ptr.vmem [resolvable:$true] %s1137
          %1143 = dma.hbm_to_vmem [thread:$0]  %s1136, 32, %s1138, [#allocation18], 16, 16, 1
        $region116: #{transformer_forward.1} parent=11 // pred_fallthru
          _
        // Predicated region
        $region117: #{transformer_forward.1} parent=11 // pred_check
          %p1144 = pneg %p715
        $region118: #{transformer_forward.1} parent=11 // pred_check_branch
          %1146 = sbr.rel (%p1144) target = $region120
        $region119: #{transformer_forward.1} parent=11 // pred_region
          %1148 = vsyncadd [#allocation21], 0
          %s1149 = sshll.u32 %s57, 4
          %s1150 = int_to_ptr.hbm [resolvable:$true] %s1149
          %s1151 = sshll.u32 [#allocation20], 4
          %s1152 = int_to_ptr.vmem [resolvable:$true] %s1151
          %1157 = dma.hbm_to_vmem [thread:$0]  %s1150, 2048, %s1152, [#allocation21], 64, 64, 4
        $region120: #{transformer_forward.1} parent=11 // pred_fallthru
          _
        // Predicated region
        $region121: #{transformer_forward.1} parent=11 // pred_check
          %p1158 = pneg %p736
        $region122: #{transformer_forward.1} parent=11 // pred_check_branch
          %1160 = sbr.rel (%p1158) target = $region124
        $region123: #{transformer_forward.1} parent=11 // pred_region
          %1162 = vsyncadd [#allocation21], 0
          %s1163 = sshll.u32 %s59, 4
          %s1164 = int_to_ptr.hbm [resolvable:$true] %s1163
          %s1165 = sshll.u32 [#allocation22], 4
          %s1166 = int_to_ptr.vmem [resolvable:$true] %s1165
          %1171 = dma.hbm_to_vmem [thread:$0]  %s1164, 32, %s1166, [#allocation21], 16, 16, 1
        $region124: #{transformer_forward.1} parent=11 // pred_fallthru
          _
        // Predicated region
        $region125: #{transformer_forward.1} parent=11 // pred_check
          %p1172 = pneg %p757
        $region126: #{transformer_forward.1} parent=11 // pred_check_branch
          %1174 = sbr.rel (%p1172) target = $region128
        $region127: #{transformer_forward.1} parent=11 // pred_region
          %1176 = vsyncadd [#allocation24], 0
          %s1177 = sshll.u32 %s61, 4
          %s1178 = int_to_ptr.hbm [resolvable:$true] %s1177
          %s1179 = sshll.u32 [#allocation23], 4
          %s1180 = int_to_ptr.vmem [resolvable:$true] %s1179
          %1185 = dma.hbm_to_vmem [thread:$0]  %s1178, 2048, %s1180, [#allocation24], 64, 64, 4
        $region128: #{transformer_forward.1} parent=11 // pred_fallthru
          _
        // Predicated region
        $region129: #{transformer_forward.1} parent=11 // pred_check
          %p1186 = pneg %p778
        $region130: #{transformer_forward.1} parent=11 // pred_check_branch
          %1188 = sbr.rel (%p1186) target = $region132
        $region131: #{transformer_forward.1} parent=11 // pred_region
          %1190 = vsyncadd [#allocation24], 0
          %s1191 = sshll.u32 %s63, 4
          %s1192 = int_to_ptr.hbm [resolvable:$true] %s1191
          %s1193 = sshll.u32 [#allocation25], 4
          %s1194 = int_to_ptr.vmem [resolvable:$true] %s1193
          %1199 = dma.hbm_to_vmem [thread:$0]  %s1192, 32, %s1194, [#allocation24], 16, 16, 1
        $region132: #{transformer_forward.1} parent=11 // pred_fallthru
          _
        // Predicated region
        $region133: #{transformer_forward.1} parent=11 // pred_check
          %p1200 = pneg %p799
        $region134: #{transformer_forward.1} parent=11 // pred_check_branch
          %1202 = sbr.rel (%p1200) target = $region136
        $region135: #{transformer_forward.1} parent=11 // pred_region
          %1204 = vsyncadd [#allocation27], 0
          %s1205 = sshll.u32 %s65, 4
          %s1206 = int_to_ptr.hbm [resolvable:$true] %s1205
          %s1207 = sshll.u32 [#allocation26], 4
          %s1208 = int_to_ptr.vmem [resolvable:$true] %s1207
          %1213 = dma.hbm_to_vmem [thread:$0]  %s1206, 32, %s1208, [#allocation27], 16, 16, 1
        $region136: #{transformer_forward.1} parent=11 // pred_fallthru
          _
        // Predicated region
        $region137: #{transformer_forward.1} parent=11 // pred_check
          %p1214 = pneg %p820
        $region138: #{transformer_forward.1} parent=11 // pred_check_branch
          %1216 = sbr.rel (%p1214) target = $region140
        $region139: #{transformer_forward.1} parent=11 // pred_region
          %1218 = vsyncadd [#allocation27], 0
          %s1219 = sshll.u32 %s67, 4
          %s1220 = int_to_ptr.hbm [resolvable:$true] %s1219
          %s1221 = sshll.u32 [#allocation28], 4
          %s1222 = int_to_ptr.vmem [resolvable:$true] %s1221
          %1227 = dma.hbm_to_vmem [thread:$0]  %s1220, 32, %s1222, [#allocation27], 16, 16, 1
        $region140: #{transformer_forward.1} parent=11 // pred_fallthru
          _
        // Predicated region
        $region141: #{transformer_forward.1} parent=11 // pred_check
          %p1228 = pneg %p841
        $region142: #{transformer_forward.1} parent=11 // pred_check_branch
          %1230 = sbr.rel (%p1228) target = $region144
        $region143: #{transformer_forward.1} parent=11 // pred_region
          _
        $region144: #{transformer_forward.1} parent=11 // pred_fallthru
          _
        // Predicated region
        $region145: #{transformer_forward.1} parent=11 // pred_check
          %p1231 = pneg %p862
        $region146: #{transformer_forward.1} parent=11 // pred_check_branch
          %1233 = sbr.rel (%p1231) target = $region148
        $region147: #{transformer_forward.1} parent=11 // pred_region
          _
        $region148: #{transformer_forward.1} parent=11 // pred_fallthru
          _
        // Predicated region
        $region149: #{transformer_forward.1} parent=11 // pred_check
          %p1234 = pneg %p883
        $region150: #{transformer_forward.1} parent=11 // pred_check_branch
          %1236 = sbr.rel (%p1234) target = $region152
        $region151: #{transformer_forward.1} parent=11 // pred_region
          %1238 = vsyncadd [#allocation30], 0
          %s1239 = sshll.u32 %s73, 4
          %s1240 = int_to_ptr.hbm [resolvable:$true] %s1239
          %s1241 = sshll.u32 [#allocation29], 4
          %s1242 = int_to_ptr.vmem [resolvable:$true] %s1241
          %1247 = dma.hbm_to_vmem [thread:$0]  %s1240, 1024, %s1242, [#allocation30], 64, 64, 4
        $region152: #{transformer_forward.1} parent=11 // pred_fallthru
          _
        // Predicated region
        $region153: #{transformer_forward.1} parent=11 // pred_check
          %p1248 = pneg %p904
        $region154: #{transformer_forward.1} parent=11 // pred_check_branch
          %1250 = sbr.rel (%p1248) target = $region156
        $region155: #{transformer_forward.1} parent=11 // pred_region
          _
        $region156: #{transformer_forward.1} parent=11 // pred_fallthru
          _
      $region12: #{transformer_forward.1} parent=5 // pred_fallthru
        _
      %p1251 = scmp.lt.s32.totalorder %s96, 2
      // Predicated region
      $region157: #{transformer_forward.1} parent=5 // pred_check
        %p1252 = pneg %p1251
      $region158: #{transformer_forward.1} parent=5 // pred_check_branch
        %1254 = sbr.rel (%p1252) target = $region160
      $region159: #{transformer_forward.1} parent=5 // pred_region
        // Predicated region
        $region161: #{transformer_forward.1} parent=159 // pred_check
          %p1255 = pneg %p116
        $region162: #{transformer_forward.1} parent=159 // pred_check_branch
          %1257 = sbr.rel (%p1255) target = $region164
        $region163: #{transformer_forward.1} parent=159 // pred_region
          %p1258 = scmp.lt.s32.totalorder %s96, 1
          %s1259 = scalar_select %p1258, %s96, 1
          %s1260 = smul.addr %s1259, 8
          %s1261 = scalar_lea.vmem %s1, %s1260
        $region164: #{transformer_forward.1} parent=159 // pred_fallthru
          _
        // Predicated region
        $region165: #{transformer_forward.1} parent=159 // pred_check
          %p1262 = pneg %p142
        $region166: #{transformer_forward.1} parent=159 // pred_check_branch
          %1264 = sbr.rel (%p1262) target = $region168
        $region167: #{transformer_forward.1} parent=159 // pred_region
          %p1265 = scmp.lt.s32.totalorder %s96, 1
          %s1266 = scalar_select %p1265, %s96, 1
          %s1267 = smul.addr %s1266, 8
          %s1268 = scalar_lea.vmem %s3, %s1267
        $region168: #{transformer_forward.1} parent=159 // pred_fallthru
          _
      $region160: #{transformer_forward.1} parent=5 // pred_fallthru
        _
      %p1269 = scmp.le.s32.totalorder 1, %s96
      %p1270 = scmp.lt.s32.totalorder %s96, 3
      %p1271 = pnand %p1269, %p1270
      %p1272 = pneg %p1271
      // Predicated region
      $region169: #{transformer_forward.1} parent=5 // pred_check
        _
      $region170: #{transformer_forward.1} parent=5 // pred_check_branch
        %1274 = sbr.rel (%p1271) target = $region172
      $region171: #{transformer_forward.1} parent=5 // pred_region
        %s1275 = ssub.s32 %s96, 1
        // Predicated region
        $region173: #{transformer_forward.1} parent=171 // pred_check
          %p1276 = pneg %p169
        $region174: #{transformer_forward.1} parent=171 // pred_check_branch
          %1278 = sbr.rel (%p1276) target = $region176
        $region175: #{transformer_forward.1} parent=171 // pred_region
          %1280 = dma.done [#allocation3], 6144
        $region176: #{transformer_forward.1} parent=171 // pred_fallthru
          _
        // Predicated region
        $region177: #{transformer_forward.1} parent=171 // pred_check
          %p1281 = pneg %p337
        $region178: #{transformer_forward.1} parent=171 // pred_check_branch
          %1283 = sbr.rel (%p1281) target = $region180
        $region179: #{transformer_forward.1} parent=171 // pred_region
          %1285 = dma.done [#allocation6], 2048
        $region180: #{transformer_forward.1} parent=171 // pred_fallthru
          _
        // Predicated region
        $region181: #{transformer_forward.1} parent=171 // pred_check
          %p1286 = pneg %p463
        $region182: #{transformer_forward.1} parent=171 // pred_check_branch
          %1288 = sbr.rel (%p1286) target = $region184
        $region183: #{transformer_forward.1} parent=171 // pred_region
          %1290 = dma.done [#allocation6], 6144
        $region184: #{transformer_forward.1} parent=171 // pred_fallthru
          _
        // Predicated region
        $region185: #{transformer_forward.1} parent=171 // pred_check
          %p1291 = pneg %p505
        $region186: #{transformer_forward.1} parent=171 // pred_check_branch
          %1293 = sbr.rel (%p1291) target = $region188
        $region187: #{transformer_forward.1} parent=171 // pred_region
          %1295 = dma.done [#allocation9], 2048
        $region188: #{transformer_forward.1} parent=171 // pred_fallthru
          _
        // Predicated region
        $region189: #{transformer_forward.1} parent=171 // pred_check
          %p1296 = pneg %p547
        $region190: #{transformer_forward.1} parent=171 // pred_check_branch
          %1298 = sbr.rel (%p1296) target = $region192
        $region191: #{transformer_forward.1} parent=171 // pred_region
          %1300 = dma.done [#allocation9], 32
        $region192: #{transformer_forward.1} parent=171 // pred_fallthru
          _
        // Predicated region
        $region193: #{transformer_forward.1} parent=171 // pred_check
          %p1301 = pneg %p568
        $region194: #{transformer_forward.1} parent=171 // pred_check_branch
          %1303 = sbr.rel (%p1301) target = $region196
        $region195: #{transformer_forward.1} parent=171 // pred_region
          %1305 = dma.done [#allocation12], 32
        $region196: #{transformer_forward.1} parent=171 // pred_fallthru
          _
        // Predicated region
        $region197: #{transformer_forward.1} parent=171 // pred_check
          %p1306 = pneg %p589
        $region198: #{transformer_forward.1} parent=171 // pred_check_branch
          %1308 = sbr.rel (%p1306) target = $region200
        $region199: #{transformer_forward.1} parent=171 // pred_region
          %1310 = dma.done [#allocation12], 6144
        $region200: #{transformer_forward.1} parent=171 // pred_fallthru
          _
        // Predicated region
        $region201: #{transformer_forward.1} parent=171 // pred_check
          %p1311 = pneg %p631
        $region202: #{transformer_forward.1} parent=171 // pred_check_branch
          %1313 = sbr.rel (%p1311) target = $region204
        $region203: #{transformer_forward.1} parent=171 // pred_region
          %1315 = dma.done [#allocation15], 2048
        $region204: #{transformer_forward.1} parent=171 // pred_fallthru
          _
        // Predicated region
        $region205: #{transformer_forward.1} parent=171 // pred_check
          %p1316 = pneg %p652
        $region206: #{transformer_forward.1} parent=171 // pred_check_branch
          %1318 = sbr.rel (%p1316) target = $region208
        $region207: #{transformer_forward.1} parent=171 // pred_region
          %1320 = dma.done [#allocation15], 32
        $region208: #{transformer_forward.1} parent=171 // pred_fallthru
          _
        // Predicated region
        $region209: #{transformer_forward.1} parent=171 // pred_check
          %p1321 = pneg %p673
        $region210: #{transformer_forward.1} parent=171 // pred_check_branch
          %1323 = sbr.rel (%p1321) target = $region212
        $region211: #{transformer_forward.1} parent=171 // pred_region
          %1325 = dma.done [#allocation18], 32
        $region212: #{transformer_forward.1} parent=171 // pred_fallthru
          _
        // Predicated region
        $region213: #{transformer_forward.1} parent=171 // pred_check
          %p1326 = pneg %p694
        $region214: #{transformer_forward.1} parent=171 // pred_check_branch
          %1328 = sbr.rel (%p1326) target = $region216
        $region215: #{transformer_forward.1} parent=171 // pred_region
          %1330 = dma.done [#allocation18], 32
        $region216: #{transformer_forward.1} parent=171 // pred_fallthru
          _
        // Predicated region
        $region217: #{transformer_forward.1} parent=171 // pred_check
          %p1331 = pneg %p715
        $region218: #{transformer_forward.1} parent=171 // pred_check_branch
          %1333 = sbr.rel (%p1331) target = $region220
        $region219: #{transformer_forward.1} parent=171 // pred_region
          %1335 = dma.done [#allocation21], 2048
        $region220: #{transformer_forward.1} parent=171 // pred_fallthru
          _
        // Predicated region
        $region221: #{transformer_forward.1} parent=171 // pred_check
          %p1336 = pneg %p736
        $region222: #{transformer_forward.1} parent=171 // pred_check_branch
          %1338 = sbr.rel (%p1336) target = $region224
        $region223: #{transformer_forward.1} parent=171 // pred_region
          %1340 = dma.done [#allocation21], 32
        $region224: #{transformer_forward.1} parent=171 // pred_fallthru
          _
        // Predicated region
        $region225: #{transformer_forward.1} parent=171 // pred_check
          %p1341 = pneg %p757
        $region226: #{transformer_forward.1} parent=171 // pred_check_branch
          %1343 = sbr.rel (%p1341) target = $region228
        $region227: #{transformer_forward.1} parent=171 // pred_region
          %1345 = dma.done [#allocation24], 2048
        $region228: #{transformer_forward.1} parent=171 // pred_fallthru
          _
        // Predicated region
        $region229: #{transformer_forward.1} parent=171 // pred_check
          %p1346 = pneg %p778
        $region230: #{transformer_forward.1} parent=171 // pred_check_branch
          %1348 = sbr.rel (%p1346) target = $region232
        $region231: #{transformer_forward.1} parent=171 // pred_region
          %1350 = dma.done [#allocation24], 32
        $region232: #{transformer_forward.1} parent=171 // pred_fallthru
          _
        // Predicated region
        $region233: #{transformer_forward.1} parent=171 // pred_check
          %p1351 = pneg %p799
        $region234: #{transformer_forward.1} parent=171 // pred_check_branch
          %1353 = sbr.rel (%p1351) target = $region236
        $region235: #{transformer_forward.1} parent=171 // pred_region
          %1355 = dma.done [#allocation27], 32
        $region236: #{transformer_forward.1} parent=171 // pred_fallthru
          _
        // Predicated region
        $region237: #{transformer_forward.1} parent=171 // pred_check
          %p1356 = pneg %p820
        $region238: #{transformer_forward.1} parent=171 // pred_check_branch
          %1358 = sbr.rel (%p1356) target = $region240
        $region239: #{transformer_forward.1} parent=171 // pred_region
          %1360 = dma.done [#allocation27], 32
        $region240: #{transformer_forward.1} parent=171 // pred_fallthru
          _
        // Predicated region
        $region241: #{transformer_forward.1} parent=171 // pred_check
          %p1361 = pneg %p883
        $region242: #{transformer_forward.1} parent=171 // pred_check_branch
          %1363 = sbr.rel (%p1361) target = $region244
        $region243: #{transformer_forward.1} parent=171 // pred_region
          %1365 = dma.done [#allocation30], 1024
        $region244: #{transformer_forward.1} parent=171 // pred_fallthru
          _
        %p1366 = scmp.lt.s32.totalorder %s101, 1
        %s1367 = scalar_select %p1366, %s101, 1
        %s1368 = smul.addr %s1367, 8
        %s1369 = scalar_lea.vmem %s1, %s1368
        %p1370 = pneg %p122
        %p1371 = pneg %p119
        %p1372 = scmp.lt.s32.totalorder %s101, 1
        %s1373 = scalar_select %p1372, %s101, 1
        %s1374 = smul.addr %s1373, 8
        %s1375 = scalar_lea.vmem %s3, %s1374
        %p1376 = pneg %p148
        %p1377 = pneg %p145
        %p1378 = pneg %p169
        %p1379 = pneg %p166
        %p1380 = pneg %p190
        %p1381 = pneg %p187
        %p1382 = pneg %p211
        %p1383 = pneg %p208
        %p1384 = pneg %p232
        %p1385 = pneg %p229
        %p1386 = pneg %p253
        %p1387 = pneg %p250
        %p1388 = pneg %p274
        %p1389 = pneg %p271
        %p1390 = pneg %p295
        %p1391 = pneg %p292
        %p1392 = pneg %p316
        %p1393 = pneg %p313
        %p1394 = pneg %p337
        %p1395 = pneg %p334
        %p1396 = pneg %p358
        %p1397 = pneg %p355
        %p1398 = pneg %p379
        %p1399 = pneg %p376
        %p1400 = pneg %p400
        %p1401 = pneg %p397
        %p1402 = pneg %p421
        %p1403 = pneg %p418
        %p1404 = pneg %p442
        %p1405 = pneg %p439
        %p1406 = pneg %p463
        %p1407 = pneg %p460
        %p1408 = pneg %p484
        %p1409 = pneg %p481
        %p1410 = pneg %p505
        %p1411 = pneg %p502
        %p1412 = pneg %p526
        %p1413 = pneg %p523
        %p1414 = pneg %p547
        %p1415 = pneg %p544
        %p1416 = pneg %p568
        %p1417 = pneg %p565
        %p1418 = pneg %p589
        %p1419 = pneg %p586
        %p1420 = pneg %p610
        %p1421 = pneg %p607
        %p1422 = pneg %p631
        %p1423 = pneg %p628
        %p1424 = pneg %p652
        %p1425 = pneg %p649
        %p1426 = pneg %p673
        %p1427 = pneg %p670
        %p1428 = pneg %p694
        %p1429 = pneg %p691
        %p1430 = pneg %p715
        %p1431 = pneg %p712
        %p1432 = pneg %p736
        %p1433 = pneg %p733
        %p1434 = pneg %p757
        %p1435 = pneg %p754
        %p1436 = pneg %p778
        %p1437 = pneg %p775
        %p1438 = pneg %p799
        %p1439 = pneg %p796
        %p1440 = pneg %p820
        %p1441 = pneg %p817
        %p1442 = pneg %p841
        %p1443 = pneg %p838
        %p1444 = pneg %p862
        %p1445 = pneg %p859
        %p1446 = pneg %p883
        %p1447 = pneg %p880
        %p1448 = pneg %p904
        %p1449 = pneg %p901
        %p1450 = pneg %p930
        %p1451 = pneg %p927
        %s1452 = sand.u32 %s917, 1
        %s1453 = scalar_lea.sflag [#allocation4], %s1452
        %s1454 = sand.u32 %s917, 1
        %s1455 = smul.addr %s1454, 8
        %s1456 = scalar_lea.vmem [#allocation31], %s1455
        %p1457 = scmp.lt.s32.totalorder %s101, 1
        %s1458 = scalar_select %p1457, %s101, 1
        %s1459 = smul.addr %s1458, 8
        %s1460 = scalar_lea.vmem %s1, %s1459
        %p1461 = scmp.lt.s32.totalorder %s101, 1
        %s1462 = scalar_select %p1461, %s101, 1
        %s1463 = smul.addr %s1462, 8
        %s1464 = scalar_lea.vmem %s3, %s1463
        %v1466 = vlaneseq
        %v1467 = vand.u32 %v1466, 127
        %vm1468 = vcmp.lt.s32.totalorder %v1467, 32
        %v1469 = vsel %vm1468, 1, 0
        %v1470 = vcvt.s32.f32 %v1469
        %vm1471 = vcmp.ge.s32.totalorder %v1467, 0
        %vm1472 = vcmp.lt.s32.totalorder %v1467, 8
        %vm1473 = vmand %vm1471, %vm1472
        %v1474 = vsel %vm1473, 1, 0
        %v1475 = vcvt.s32.f32 %v1474
        %vm1476 = vcmp.ge.s32.totalorder %v1467, 8
        %vm1477 = vcmp.lt.s32.totalorder %v1467, 16
        %vm1478 = vmand %vm1476, %vm1477
        %v1479 = vsel %vm1478, 1, 0
        %v1480 = vcvt.s32.f32 %v1479
        %vm1481 = vcmp.ge.s32.totalorder %v1467, 16
        %vm1482 = vcmp.lt.s32.totalorder %v1467, 24
        %vm1483 = vmand %vm1481, %vm1482
        %v1484 = vsel %vm1483, 1, 0
        %v1485 = vcvt.s32.f32 %v1484
        %vm1486 = vcmp.ge.s32.totalorder %v1467, 24
        %vm1487 = vmand %vm1486, %vm1468
        %v1488 = vsel %vm1487, 1, 0
        %v1489 = vcvt.s32.f32 %v1488
        %v1490 = vld [vmem:[%s1460] sm:$0xff]
        %v1491 = vld [vmem:[#allocation2] sm:$0xff]
        %v1492 = vld [vmem:[#allocation2 + $0x8] sm:$0xf]
        %v1493 = vld [vmem:[#allocation2 + $0xc] sm:$0xff]
        %v1494 = vld [vmem:[#allocation2 + $0x14] sm:$0xf]
        %v1495 = vld [vmem:[#allocation2 + $0x18] sm:$0xff]
        %v1496 = vld [vmem:[#allocation2 + $0x20] sm:$0xf]
        %v1497 = vld [vmem:[#allocation2 + $0x24] sm:$0xff]
        %v1498 = vld [vmem:[#allocation2 + $0x2c] sm:$0xf]
        %v1499 = vld [vmem:[#allocation2 + $0x30] sm:$0xff]
        %v1500 = vld [vmem:[#allocation2 + $0x38] sm:$0xf]
        %v1501 = vld [vmem:[#allocation2 + $0x3c] sm:$0xff]
        %v1502 = vld [vmem:[#allocation2 + $0x44] sm:$0xf]
        %v1503 = vld [vmem:[#allocation2 + $0x48] sm:$0xff]
        %v1504 = vld [vmem:[#allocation2 + $0x50] sm:$0xf]
        %v1505 = vld [vmem:[#allocation2 + $0x54] sm:$0xff]
        %v1506 = vld [vmem:[#allocation2 + $0x5c] sm:$0xf]
        %v1507 = vld [vmem:[#allocation2 + $0x60] sm:$0xff]
        %v1508 = vld [vmem:[#allocation2 + $0x68] sm:$0xf]
        %v1509 = vld [vmem:[#allocation2 + $0x6c] sm:$0xff]
        %v1510 = vld [vmem:[#allocation2 + $0x74] sm:$0xf]
        %v1511 = vld [vmem:[#allocation2 + $0x78] sm:$0xff]
        %v1512 = vld [vmem:[#allocation2 + $0x80] sm:$0xf]
        %v1513 = vld [vmem:[#allocation2 + $0x84] sm:$0xff]
        %v1514 = vld [vmem:[#allocation2 + $0x8c] sm:$0xf]
        %v1515 = vld [vmem:[#allocation2 + $0x90] sm:$0xff]
        %v1516 = vld [vmem:[#allocation2 + $0x98] sm:$0xf]
        %v1517 = vld [vmem:[#allocation2 + $0x9c] sm:$0xff]
        %v1518 = vld [vmem:[#allocation2 + $0xa4] sm:$0xf]
        %v1519 = vld [vmem:[#allocation2 + $0xa8] sm:$0xff]
        %v1520 = vld [vmem:[#allocation2 + $0xb0] sm:$0xf]
        %v1521 = vld [vmem:[#allocation2 + $0xb4] sm:$0xff]
        %v1522 = vld [vmem:[#allocation2 + $0xbc] sm:$0xf]
        %v1523 = vld [vmem:[%s7] sm:$0x7]
        %v1524 = vld [vmem:[%s9] sm:$0xf]
        %v1525 = vld [vmem:[%s9 + $0x4] sm:$0xf]
        %v1526 = vld [vmem:[%s9 + $0x8] sm:$0xf]
        %v1527 = vld [vmem:[%s9 + $0xc] sm:$0xf]
        %v1528 = vld [vmem:[%s9 + $0x10] sm:$0xf]
        %v1529 = vld [vmem:[%s9 + $0x14] sm:$0xf]
        %v1530 = vld [vmem:[%s9 + $0x18] sm:$0xf]
        %v1531 = vld [vmem:[%s9 + $0x1c] sm:$0xf]
        %v1532 = vld [vmem:[%s9 + $0x20] sm:$0xf]
        %v1533 = vld [vmem:[%s9 + $0x24] sm:$0xf]
        %v1534 = vld [vmem:[%s9 + $0x28] sm:$0xf]
        %v1535 = vld [vmem:[%s9 + $0x2c] sm:$0xf]
        %v1536 = vld [vmem:[%s9 + $0x30] sm:$0xf]
        %v1537 = vld [vmem:[%s9 + $0x34] sm:$0xf]
        %v1538 = vld [vmem:[%s9 + $0x38] sm:$0xf]
        %v1539 = vld [vmem:[%s9 + $0x3c] sm:$0xf]
        %v1540 = vld [vmem:[%s11] sm:$0x1]
        %v1541 = vpack.c.bf16 %v1490, %v1490
        %v1543 = vperm.slane %v1523, 0
        %v1544 = vperm.slane %v1523, 1
        %v1545 = vperm.slane %v1523, 2
        %v1581 = vunpack.c.l.b16 %v1491
        %v1582 = vunpack.c.h.b16 %v1491
        %v1583 = vunpack.c.l.b16 %v1492
        %v1584 = vunpack.c.l.b16 %v1493
        %v1585 = vunpack.c.h.b16 %v1493
        %v1586 = vunpack.c.l.b16 %v1494
        %v1587 = vunpack.c.l.b16 %v1495
        %v1588 = vunpack.c.h.b16 %v1495
        %v1589 = vunpack.c.l.b16 %v1496
        %v1590 = vunpack.c.l.b16 %v1497
        %v1591 = vunpack.c.h.b16 %v1497
        %v1592 = vunpack.c.l.b16 %v1498
        %v1593 = vunpack.c.l.b16 %v1499
        %v1594 = vunpack.c.h.b16 %v1499
        %v1595 = vunpack.c.l.b16 %v1500
        %v1596 = vunpack.c.l.b16 %v1501
        %v1597 = vunpack.c.h.b16 %v1501
        %v1598 = vunpack.c.l.b16 %v1502
        %v1599 = vunpack.c.l.b16 %v1503
        %v1600 = vunpack.c.h.b16 %v1503
        %v1601 = vunpack.c.l.b16 %v1504
        %v1602 = vunpack.c.l.b16 %v1505
        %v1603 = vunpack.c.h.b16 %v1505
        %v1604 = vunpack.c.l.b16 %v1506
        %v1605 = vunpack.c.l.b16 %v1507
        %v1606 = vunpack.c.h.b16 %v1507
        %v1607 = vunpack.c.l.b16 %v1508
        %v1608 = vunpack.c.l.b16 %v1509
        %v1609 = vunpack.c.h.b16 %v1509
        %v1610 = vunpack.c.l.b16 %v1510
        %v1611 = vunpack.c.l.b16 %v1511
        %v1612 = vunpack.c.h.b16 %v1511
        %v1613 = vunpack.c.l.b16 %v1512
        %v1614 = vunpack.c.l.b16 %v1513
        %v1615 = vunpack.c.h.b16 %v1513
        %v1616 = vunpack.c.l.b16 %v1514
        %v1617 = vunpack.c.l.b16 %v1515
        %v1618 = vunpack.c.h.b16 %v1515
        %v1619 = vunpack.c.l.b16 %v1516
        %v1620 = vunpack.c.l.b16 %v1517
        %v1621 = vunpack.c.h.b16 %v1517
        %v1622 = vunpack.c.l.b16 %v1518
        %v1623 = vunpack.c.l.b16 %v1519
        %v1624 = vunpack.c.h.b16 %v1519
        %v1625 = vunpack.c.l.b16 %v1520
        %v1626 = vunpack.c.l.b16 %v1521
        %v1627 = vunpack.c.h.b16 %v1521
        %v1628 = vunpack.c.l.b16 %v1522
        %v1629 = vpack.c.b16 %v1584, %v1581
        %v1630 = vpack.c.b16 %v1585, %v1582
        %v1631 = vpack.c.b16 %v1586, %v1583
        %v1632 = vpack.c.b16 %v1590, %v1587
        %v1633 = vpack.c.b16 %v1591, %v1588
        %v1634 = vpack.c.b16 %v1592, %v1589
        %v1635 = vpack.c.b16 %v1596, %v1593
        %v1636 = vpack.c.b16 %v1597, %v1594
        %v1637 = vpack.c.b16 %v1598, %v1595
        %v1638 = vpack.c.b16 %v1602, %v1599
        %v1639 = vpack.c.b16 %v1603, %v1600
        %v1640 = vpack.c.b16 %v1604, %v1601
        %v1641 = vpack.c.b16 %v1608, %v1605
        %v1642 = vpack.c.b16 %v1609, %v1606
        %v1643 = vpack.c.b16 %v1610, %v1607
        %v1644 = vpack.c.b16 %v1614, %v1611
        %v1645 = vpack.c.b16 %v1615, %v1612
        %v1646 = vpack.c.b16 %v1616, %v1613
        %v1647 = vpack.c.b16 %v1620, %v1617
        %v1648 = vpack.c.b16 %v1621, %v1618
        %v1649 = vpack.c.b16 %v1622, %v1619
        %v1650 = vpack.c.b16 %v1626, %v1623
        %v1651 = vpack.c.b16 %v1627, %v1624
        %v1652 = vpack.c.b16 %v1628, %v1625
        %1677 = vmatpush.bf16.msra.mxu0 %v1650
        %1678 = vmatpush.bf16.msra.mxu0 %v1647
        %1679 = vmatpush.bf16.msra.mxu0 %v1644
        %1680 = vmatpush.bf16.msra.mxu0 %v1641
        %1681 = vmatpush.bf16.msra.mxu0 %v1638
        %1682 = vmatpush.bf16.msra.mxu0 %v1635
        %1683 = vmatpush.bf16.msra.mxu0 %v1632
        %1684 = vmatpush.bf16.msra.mxu0 %v1629
        %1685 = vmatmul.bf16.gmra.mxu0 %v1541
        %v1686 = vpop.f32.mrf.mxu0
        %v1687 = vadd.f32 %v1543, %v1686
        %v1688 = vpop.f32.mrf.mxu0
        %1689 = vdwg.mxu0
        %1690 = vmatpush.bf16.msra.mxu0 %v1651
        %1691 = vmatpush.bf16.msra.mxu0 %v1648
        %1692 = vmatpush.bf16.msra.mxu0 %v1645
        %1693 = vmatpush.bf16.msra.mxu0 %v1642
        %1694 = vmatpush.bf16.msra.mxu0 %v1639
        %1695 = vmatpush.bf16.msra.mxu0 %v1636
        %1696 = vmatpush.bf16.msra.mxu0 %v1633
        %1697 = vmatpush.bf16.msra.mxu0 %v1630
        %1698 = vmatmul.bf16.gmra.mxu0 %v1541
        %v1699 = vpop.f32.mrf.mxu0
        %v1700 = vadd.f32 %v1544, %v1699
        %v1701 = vpop.f32.mrf.mxu0
        %1702 = vdwg.mxu0
        %1703 = vmatpush.bf16.msra.mxu0 %v1652
        %1704 = vmatpush.bf16.msra.mxu0 %v1649
        %1705 = vmatpush.bf16.msra.mxu0 %v1646
        %1706 = vmatpush.bf16.msra.mxu0 %v1643
        %1707 = vmatpush.bf16.msra.mxu0 %v1640
        %1708 = vmatpush.bf16.msra.mxu0 %v1637
        %1709 = vmatpush.bf16.msra.mxu0 %v1634
        %1710 = vmatpush.bf16.msra.mxu0 %v1631
        %1711 = vmatmul.bf16.gmra.mxu0 %v1541
        %v1712 = vpop.f32.mrf.mxu0
        %v1713 = vadd.f32 %v1545, %v1712
        %v1714 = vpop.f32.mrf.mxu0
        %1715 = vdwg.mxu0
        %v1716 = vpack.c.bf16 %v1700, %v1700
        %v1717 = vpack.c.bf16 %v1713, %v1713
        %v1718 = vmul.f32 %v1687, %v1475
        %v1719 = vmul.f32 %v1687, %v1480
        %v1720 = vmul.f32 %v1687, %v1485
        %v1721 = vmul.f32 %v1687, %v1489
        %v1722 = vpack.c.bf16 %v1719, %v1718
        %v1723 = vpack.c.bf16 %v1721, %v1720
        %1724 = vmatpush.bf16.xpose.msra.mxu0 0
        %1725 = vmatpush.bf16.xpose.msra.mxu0 0
        %1726 = vmatpush.bf16.xpose.msra.mxu0 0
        %1727 = vmatpush.bf16.xpose.msra.mxu0 0
        %1728 = vmatpush.bf16.xpose.msra.mxu0 0
        %1729 = vmatpush.bf16.xpose.msra.mxu0 0
        %1730 = vmatpush.bf16.xpose.msra.mxu0 0
        %1731 = vmatpush.bf16.xpose.msra.mxu0 %v1716
        %1732 = vmatmul.bf16.gmra.mxu0 %v1722
        %v1733 = vpop.f32.mrf.mxu0
        %v1734 = vadd.f32 0.0, %v1733
        %v1735 = vpop.f32.mrf.mxu0
        %v1736 = vadd.f32 0.0, %v1735
        %1737 = vmatmul.bf16.gmra.mxu0 %v1723
        %v1738 = vpop.f32.mrf.mxu0
        %v1739 = vadd.f32 0.0, %v1738
        %v1740 = vpop.f32.mrf.mxu0
        %v1741 = vadd.f32 0.0, %v1740
        %1742 = vdwg.mxu0
        %v1743 = vmul.f32 %v1734, 0.35355338
        %v1744 = vmul.f32 %v1736, 0.35355338
        %v1745 = vmul.f32 %v1739, 0.35355338
        %v1746 = vmul.f32 %v1741, 0.35355338
        %vm1747 = vcmask 64512
        %v1748 = vsel %vm1747, %v1743, -inf
        %1749 = vmax.xlane.f32.xlu0 %v1748
        %v1750 = vpop.xlane.xlu0 %1749
        %v1751 = vsel %vm1747, %v1744, -inf
        %1752 = vmax.xlane.f32.xlu0 %v1751
        %v1753 = vpop.xlane.xlu0 %1752
        %v1754 = vsel %vm1747, %v1745, -inf
        %1755 = vmax.xlane.f32.xlu0 %v1754
        %v1756 = vpop.xlane.xlu0 %1755
        %v1757 = vsel %vm1747, %v1746, -inf
        %1758 = vmax.xlane.f32.xlu0 %v1757
        %v1759 = vpop.xlane.xlu0 %1758
        %v1760 = vsub.f32 %v1743, %v1750
        %v1761 = vsub.f32 %v1744, %v1753
        %v1762 = vsub.f32 %v1745, %v1756
        %v1763 = vsub.f32 %v1746, %v1759
        %v1764 = vmul.f32 %v1760, 1.442695
        %v1765 = vpow.pop %v1764
        %v1766 = vmul.f32 %v1761, 1.442695
        %v1767 = vpow.pop %v1766
        %v1768 = vmul.f32 %v1762, 1.442695
        %v1769 = vpow.pop %v1768
        %v1770 = vmul.f32 %v1763, 1.442695
        %v1771 = vpow.pop %v1770
        %v1772 = vsel %vm1747, %v1765, 0.0
        %1773 = vadd.xlane.f32.xlu0 %v1772
        %v1774 = vpop.xlane.xlu0 %1773
        %v1775 = vsel %vm1747, %v1767, 0.0
        %1776 = vadd.xlane.f32.xlu0 %v1775
        %v1777 = vpop.xlane.xlu0 %1776
        %v1778 = vsel %vm1747, %v1769, 0.0
        %1779 = vadd.xlane.f32.xlu0 %v1778
        %v1780 = vpop.xlane.xlu0 %1779
        %v1781 = vsel %vm1747, %v1771, 0.0
        %1782 = vadd.xlane.f32.xlu0 %v1781
        %v1783 = vpop.xlane.xlu0 %1782
        %v1784 = vrcp.pop %v1774
        %v1785 = vrcp.pop %v1777
        %v1786 = vrcp.pop %v1780
        %v1787 = vrcp.pop %v1783
        %v1788 = vmul.f32 %v1765, %v1784
        %v1789 = vmul.f32 %v1767, %v1785
        %v1790 = vmul.f32 %v1769, %v1786
        %v1791 = vmul.f32 %v1771, %v1787
        %v1792 = vpack.c.bf16 %v1789, %v1788
        %v1793 = vpack.c.bf16 %v1791, %v1790
        %v1795 = vsel %vm1747, %v1792, 0
        %v1798 = vsel %vm1747, %v1793, 0
        %vm1800 = vcmask 1043456
        %v1802 = vsel %vm1800, %v1717, 0
        %1804 = vmatpush.bf16.msra.mxu0 0
        %1805 = vmatpush.bf16.msra.mxu0 0
        %1806 = vmatpush.bf16.msra.mxu0 0
        %1807 = vmatpush.bf16.msra.mxu0 0
        %1808 = vmatpush.bf16.msra.mxu0 0
        %1809 = vmatpush.bf16.msra.mxu0 0
        %1810 = vmatpush.bf16.msra.mxu0 0
        %1811 = vmatpush.bf16.msra.mxu0 %v1802
        %1812 = vmatmul.bf16.gmra.mxu0 %v1795
        %v1813 = vpop.f32.mrf.mxu0
        %v1814 = vadd.f32 0.0, %v1813
        %v1815 = vpop.f32.mrf.mxu0
        %v1816 = vadd.f32 0.0, %v1815
        %1817 = vmatmul.bf16.gmra.mxu0 %v1798
        %v1818 = vpop.f32.mrf.mxu0
        %v1819 = vadd.f32 0.0, %v1818
        %v1820 = vpop.f32.mrf.mxu0
        %v1821 = vadd.f32 0.0, %v1820
        %1822 = vdwg.mxu0
        %v1823 = vmul.f32 %v1814, %v1475
        %v1824 = vmul.f32 %v1816, %v1480
        %v1825 = vadd.f32 %v1823, %v1824
        %v1826 = vmul.f32 %v1819, %v1485
        %v1827 = vadd.f32 %v1825, %v1826
        %v1828 = vmul.f32 %v1821, %v1489
        %v1829 = vadd.f32 %v1827, %v1828
        %v1830 = vpack.c.bf16 %v1829, %v1829
        %v1832 = vperm.slane %v1540, 0
        %v1850 = vunpack.c.l.b16 %v1524
        %v1851 = vunpack.c.l.b16 %v1525
        %v1852 = vunpack.c.l.b16 %v1526
        %v1853 = vunpack.c.l.b16 %v1527
        %v1854 = vunpack.c.l.b16 %v1528
        %v1855 = vunpack.c.l.b16 %v1529
        %v1856 = vunpack.c.l.b16 %v1530
        %v1857 = vunpack.c.l.b16 %v1531
        %v1858 = vunpack.c.l.b16 %v1532
        %v1859 = vunpack.c.l.b16 %v1533
        %v1860 = vunpack.c.l.b16 %v1534
        %v1861 = vunpack.c.l.b16 %v1535
        %v1862 = vunpack.c.l.b16 %v1536
        %v1863 = vunpack.c.l.b16 %v1537
        %v1864 = vunpack.c.l.b16 %v1538
        %v1865 = vunpack.c.l.b16 %v1539
        %v1866 = vpack.c.b16 %v1851, %v1850
        %v1867 = vpack.c.b16 %v1853, %v1852
        %v1868 = vpack.c.b16 %v1855, %v1854
        %v1869 = vpack.c.b16 %v1857, %v1856
        %v1870 = vpack.c.b16 %v1859, %v1858
        %v1871 = vpack.c.b16 %v1861, %v1860
        %v1872 = vpack.c.b16 %v1863, %v1862
        %v1873 = vpack.c.b16 %v1865, %v1864
        %1882 = vmatpush.bf16.msra.mxu0 %v1873
        %1883 = vmatpush.bf16.msra.mxu0 %v1872
        %1884 = vmatpush.bf16.msra.mxu0 %v1871
        %1885 = vmatpush.bf16.msra.mxu0 %v1870
        %1886 = vmatpush.bf16.msra.mxu0 %v1869
        %1887 = vmatpush.bf16.msra.mxu0 %v1868
        %1888 = vmatpush.bf16.msra.mxu0 %v1867
        %1889 = vmatpush.bf16.msra.mxu0 %v1866
        %1890 = vmatmul.bf16.gmra.mxu0 %v1830
        %v1891 = vpop.f32.mrf.mxu0
        %v1892 = vadd.f32 %v1832, %v1891
        %v1893 = vpop.f32.mrf.mxu0
        %1894 = vdwg.mxu0
        %v1895 = vadd.f32 %v1490, %v1892
        %v1896 = vld [vmem:[%s13] sm:$0x1]
        %v1897 = vld [vmem:[%s15] sm:$0x1]
        %v1898 = vmul.f32 %v1895, %v1470
        %1899 = vadd.xlane.f32.xlu0 %v1898
        %v1900 = vpop.xlane.xlu0 %1899
        %v1901 = vmul.f32 %v1900, 0.03125
        %v1902 = vsub.f32 %v1895, %v1901
        %v1903 = vmul.f32 %v1902, %v1470
        %v1904 = vmul.f32 %v1903, %v1903
        %1905 = vadd.xlane.f32.xlu0 %v1904
        %v1906 = vpop.xlane.xlu0 %1905
        %v1907 = vmul.f32 %v1906, 0.03125
        %v1908 = vadd.f32 %v1907, 1e-05
        %v1909 = vrsqrt.pop %v1908
        %v1910 = vmul.f32 %v1909, %v1908
        %v1911 = vmul.f32 %v1910, %v1909
        %v1912 = vmul.f32 0.5, %v1911
        %v1913 = vsub.f32 1.5, %v1912
        %v1914 = vmul.f32 %v1909, %v1913
        %vm1915 = vweird.f32 %v1908
        %vm1916 = vweird.f32 %v1909
        %vm1917 = vmor %vm1915, %vm1916
        %v1918 = vsel %vm1917, %v1909, %v1914
        %v1919 = vmul.f32 %v1903, %v1918
        %v1921 = vperm.slane %v1896, 0
        %v1923 = vmul.f32 %v1919, %v1921
        %v1925 = vperm.slane %v1897, 0
        %v1927 = vadd.f32 %v1923, %v1925
        %v1928 = vld [vmem:[%s17] sm:$0xf]
        %v1929 = vld [vmem:[%s17 + $0x4] sm:$0xf]
        %v1930 = vld [vmem:[%s17 + $0x8] sm:$0xf]
        %v1931 = vld [vmem:[%s17 + $0xc] sm:$0xf]
        %v1932 = vld [vmem:[%s17 + $0x10] sm:$0xf]
        %v1933 = vld [vmem:[%s17 + $0x14] sm:$0xf]
        %v1934 = vld [vmem:[%s17 + $0x18] sm:$0xf]
        %v1935 = vld [vmem:[%s17 + $0x1c] sm:$0xf]
        %v1936 = vld [vmem:[%s17 + $0x20] sm:$0xf]
        %v1937 = vld [vmem:[%s17 + $0x24] sm:$0xf]
        %v1938 = vld [vmem:[%s17 + $0x28] sm:$0xf]
        %v1939 = vld [vmem:[%s17 + $0x2c] sm:$0xf]
        %v1940 = vld [vmem:[%s17 + $0x30] sm:$0xf]
        %v1941 = vld [vmem:[%s17 + $0x34] sm:$0xf]
        %v1942 = vld [vmem:[%s17 + $0x38] sm:$0xf]
        %v1943 = vld [vmem:[%s17 + $0x3c] sm:$0xf]
        %v1944 = vld [vmem:[%s19] sm:$0x1]
        %v1945 = vld [vmem:[#allocation5] sm:$0xf]
        %v1946 = vld [vmem:[#allocation5 + $0x4] sm:$0xf]
        %v1947 = vld [vmem:[#allocation5 + $0x8] sm:$0xf]
        %v1948 = vld [vmem:[#allocation5 + $0xc] sm:$0xf]
        %v1949 = vld [vmem:[#allocation5 + $0x10] sm:$0xf]
        %v1950 = vld [vmem:[#allocation5 + $0x14] sm:$0xf]
        %v1951 = vld [vmem:[#allocation5 + $0x18] sm:$0xf]
        %v1952 = vld [vmem:[#allocation5 + $0x1c] sm:$0xf]
        %v1953 = vld [vmem:[#allocation5 + $0x20] sm:$0xf]
        %v1954 = vld [vmem:[#allocation5 + $0x24] sm:$0xf]
        %v1955 = vld [vmem:[#allocation5 + $0x28] sm:$0xf]
        %v1956 = vld [vmem:[#allocation5 + $0x2c] sm:$0xf]
        %v1957 = vld [vmem:[#allocation5 + $0x30] sm:$0xf]
        %v1958 = vld [vmem:[#allocation5 + $0x34] sm:$0xf]
        %v1959 = vld [vmem:[#allocation5 + $0x38] sm:$0xf]
        %v1960 = vld [vmem:[#allocation5 + $0x3c] sm:$0xf]
        %v1961 = vld [vmem:[%s23] sm:$0x1]
        %v1962 = vpack.c.bf16 %v1927, %v1927
        %v1964 = vperm.slane %v1944, 0
        %v1982 = vunpack.c.l.b16 %v1928
        %v1983 = vunpack.c.l.b16 %v1929
        %v1984 = vunpack.c.l.b16 %v1930
        %v1985 = vunpack.c.l.b16 %v1931
        %v1986 = vunpack.c.l.b16 %v1932
        %v1987 = vunpack.c.l.b16 %v1933
        %v1988 = vunpack.c.l.b16 %v1934
        %v1989 = vunpack.c.l.b16 %v1935
        %v1990 = vunpack.c.l.b16 %v1936
        %v1991 = vunpack.c.l.b16 %v1937
        %v1992 = vunpack.c.l.b16 %v1938
        %v1993 = vunpack.c.l.b16 %v1939
        %v1994 = vunpack.c.l.b16 %v1940
        %v1995 = vunpack.c.l.b16 %v1941
        %v1996 = vunpack.c.l.b16 %v1942
        %v1997 = vunpack.c.l.b16 %v1943
        %v1998 = vpack.c.b16 %v1983, %v1982
        %v1999 = vpack.c.b16 %v1985, %v1984
        %v2000 = vpack.c.b16 %v1987, %v1986
        %v2001 = vpack.c.b16 %v1989, %v1988
        %v2002 = vpack.c.b16 %v1991, %v1990
        %v2003 = vpack.c.b16 %v1993, %v1992
        %v2004 = vpack.c.b16 %v1995, %v1994
        %v2005 = vpack.c.b16 %v1997, %v1996
        %2014 = vmatpush.bf16.msra.mxu0 %v2005
        %2015 = vmatpush.bf16.msra.mxu0 %v2004
        %2016 = vmatpush.bf16.msra.mxu0 %v2003
        %2017 = vmatpush.bf16.msra.mxu0 %v2002
        %2018 = vmatpush.bf16.msra.mxu0 %v2001
        %2019 = vmatpush.bf16.msra.mxu0 %v2000
        %2020 = vmatpush.bf16.msra.mxu0 %v1999
        %2021 = vmatpush.bf16.msra.mxu0 %v1998
        %2022 = vmatmul.bf16.gmra.mxu0 %v1962
        %v2023 = vpop.f32.mrf.mxu0
        %v2024 = vadd.f32 %v1964, %v2023
        %v2025 = vpop.f32.mrf.mxu0
        %2026 = vdwg.mxu0
        %v2027 = vmax.f32 %v2024, 0.0
        %v2028 = vpack.c.bf16 %v2027, %v2027
        %v2030 = vperm.slane %v1961, 0
        %v2048 = vunpack.c.l.b16 %v1945
        %v2049 = vunpack.c.l.b16 %v1946
        %v2050 = vunpack.c.l.b16 %v1947
        %v2051 = vunpack.c.l.b16 %v1948
        %v2052 = vunpack.c.l.b16 %v1949
        %v2053 = vunpack.c.l.b16 %v1950
        %v2054 = vunpack.c.l.b16 %v1951
        %v2055 = vunpack.c.l.b16 %v1952
        %v2056 = vunpack.c.l.b16 %v1953
        %v2057 = vunpack.c.l.b16 %v1954
        %v2058 = vunpack.c.l.b16 %v1955
        %v2059 = vunpack.c.l.b16 %v1956
        %v2060 = vunpack.c.l.b16 %v1957
        %v2061 = vunpack.c.l.b16 %v1958
        %v2062 = vunpack.c.l.b16 %v1959
        %v2063 = vunpack.c.l.b16 %v1960
        %v2064 = vpack.c.b16 %v2049, %v2048
        %v2065 = vpack.c.b16 %v2051, %v2050
        %v2066 = vpack.c.b16 %v2053, %v2052
        %v2067 = vpack.c.b16 %v2055, %v2054
        %v2068 = vpack.c.b16 %v2057, %v2056
        %v2069 = vpack.c.b16 %v2059, %v2058
        %v2070 = vpack.c.b16 %v2061, %v2060
        %v2071 = vpack.c.b16 %v2063, %v2062
        %2080 = vmatpush.bf16.msra.mxu0 %v2071
        %2081 = vmatpush.bf16.msra.mxu0 %v2070
        %2082 = vmatpush.bf16.msra.mxu0 %v2069
        %2083 = vmatpush.bf16.msra.mxu0 %v2068
        %2084 = vmatpush.bf16.msra.mxu0 %v2067
        %2085 = vmatpush.bf16.msra.mxu0 %v2066
        %2086 = vmatpush.bf16.msra.mxu0 %v2065
        %2087 = vmatpush.bf16.msra.mxu0 %v2064
        %2088 = vmatmul.bf16.gmra.mxu0 %v2028
        %v2089 = vpop.f32.mrf.mxu0
        %v2090 = vadd.f32 %v2030, %v2089
        %v2091 = vpop.f32.mrf.mxu0
        %2092 = vdwg.mxu0
        %v2093 = vadd.f32 %v1927, %v2090
        %v2094 = vld [vmem:[%s25] sm:$0x1]
        %v2095 = vld [vmem:[%s27] sm:$0x1]
        %v2096 = vmul.f32 %v2093, %v1470
        %2097 = vadd.xlane.f32.xlu0 %v2096
        %v2098 = vpop.xlane.xlu0 %2097
        %v2099 = vmul.f32 %v2098, 0.03125
        %v2100 = vsub.f32 %v2093, %v2099
        %v2101 = vmul.f32 %v2100, %v1470
        %v2102 = vmul.f32 %v2101, %v2101
        %2103 = vadd.xlane.f32.xlu0 %v2102
        %v2104 = vpop.xlane.xlu0 %2103
        %v2105 = vmul.f32 %v2104, 0.03125
        %v2106 = vadd.f32 %v2105, 1e-05
        %v2107 = vrsqrt.pop %v2106
        %v2108 = vmul.f32 %v2107, %v2106
        %v2109 = vmul.f32 %v2108, %v2107
        %v2110 = vmul.f32 0.5, %v2109
        %v2111 = vsub.f32 1.5, %v2110
        %v2112 = vmul.f32 %v2107, %v2111
        %vm2113 = vweird.f32 %v2106
        %vm2114 = vweird.f32 %v2107
        %vm2115 = vmor %vm2113, %vm2114
        %v2116 = vsel %vm2115, %v2107, %v2112
        %v2117 = vmul.f32 %v2101, %v2116
        %v2119 = vperm.slane %v2094, 0
        %v2121 = vmul.f32 %v2117, %v2119
        %v2123 = vperm.slane %v2095, 0
        %v2125 = vadd.f32 %v2121, %v2123
        %s2126 = scalar_lea.vmem [#allocation2], 192
        %v2127 = vld [vmem:[%s2126] sm:$0xff]
        %v2128 = vld [vmem:[%s2126 + $0x8] sm:$0xf]
        %v2129 = vld [vmem:[%s2126 + $0xc] sm:$0xff]
        %v2130 = vld [vmem:[%s2126 + $0x14] sm:$0xf]
        %v2131 = vld [vmem:[%s2126 + $0x18] sm:$0xff]
        %v2132 = vld [vmem:[%s2126 + $0x20] sm:$0xf]
        %v2133 = vld [vmem:[%s2126 + $0x24] sm:$0xff]
        %v2134 = vld [vmem:[%s2126 + $0x2c] sm:$0xf]
        %v2135 = vld [vmem:[%s2126 + $0x30] sm:$0xff]
        %v2136 = vld [vmem:[%s2126 + $0x38] sm:$0xf]
        %v2137 = vld [vmem:[%s2126 + $0x3c] sm:$0xff]
        %v2138 = vld [vmem:[%s2126 + $0x44] sm:$0xf]
        %v2139 = vld [vmem:[%s2126 + $0x48] sm:$0xff]
        %v2140 = vld [vmem:[%s2126 + $0x50] sm:$0xf]
        %v2141 = vld [vmem:[%s2126 + $0x54] sm:$0xff]
        %v2142 = vld [vmem:[%s2126 + $0x5c] sm:$0xf]
        %v2143 = vld [vmem:[%s2126 + $0x60] sm:$0xff]
        %v2144 = vld [vmem:[%s2126 + $0x68] sm:$0xf]
        %v2145 = vld [vmem:[%s2126 + $0x6c] sm:$0xff]
        %v2146 = vld [vmem:[%s2126 + $0x74] sm:$0xf]
        %v2147 = vld [vmem:[%s2126 + $0x78] sm:$0xff]
        %v2148 = vld [vmem:[%s2126 + $0x80] sm:$0xf]
        %v2149 = vld [vmem:[%s2126 + $0x84] sm:$0xff]
        %v2150 = vld [vmem:[%s2126 + $0x8c] sm:$0xf]
        %v2151 = vld [vmem:[%s2126 + $0x90] sm:$0xff]
        %v2152 = vld [vmem:[%s2126 + $0x98] sm:$0xf]
        %v2153 = vld [vmem:[%s2126 + $0x9c] sm:$0xff]
        %v2154 = vld [vmem:[%s2126 + $0xa4] sm:$0xf]
        %v2155 = vld [vmem:[%s2126 + $0xa8] sm:$0xff]
        %v2156 = vld [vmem:[%s2126 + $0xb0] sm:$0xf]
        %v2157 = vld [vmem:[%s2126 + $0xb4] sm:$0xff]
        %v2158 = vld [vmem:[%s2126 + $0xbc] sm:$0xf]
        %s2159 = scalar_lea.vmem %s7, 3
        %v2160 = vld [vmem:[%s2159] sm:$0x7]
        %s2161 = scalar_lea.vmem %s9, 64
        %v2162 = vld [vmem:[%s2161] sm:$0xf]
        %v2163 = vld [vmem:[%s2161 + $0x4] sm:$0xf]
        %v2164 = vld [vmem:[%s2161 + $0x8] sm:$0xf]
        %v2165 = vld [vmem:[%s2161 + $0xc] sm:$0xf]
        %v2166 = vld [vmem:[%s2161 + $0x10] sm:$0xf]
        %v2167 = vld [vmem:[%s2161 + $0x14] sm:$0xf]
        %v2168 = vld [vmem:[%s2161 + $0x18] sm:$0xf]
        %v2169 = vld [vmem:[%s2161 + $0x1c] sm:$0xf]
        %v2170 = vld [vmem:[%s2161 + $0x20] sm:$0xf]
        %v2171 = vld [vmem:[%s2161 + $0x24] sm:$0xf]
        %v2172 = vld [vmem:[%s2161 + $0x28] sm:$0xf]
        %v2173 = vld [vmem:[%s2161 + $0x2c] sm:$0xf]
        %v2174 = vld [vmem:[%s2161 + $0x30] sm:$0xf]
        %v2175 = vld [vmem:[%s2161 + $0x34] sm:$0xf]
        %v2176 = vld [vmem:[%s2161 + $0x38] sm:$0xf]
        %v2177 = vld [vmem:[%s2161 + $0x3c] sm:$0xf]
        %s2178 = scalar_lea.vmem %s11, 1
        %v2179 = vld [vmem:[%s2178] sm:$0x1]
        %v2180 = vpack.c.bf16 %v2125, %v2125
        %v2182 = vperm.slane %v2160, 0
        %v2183 = vperm.slane %v2160, 1
        %v2184 = vperm.slane %v2160, 2
        %v2220 = vunpack.c.l.b16 %v2127
        %v2221 = vunpack.c.h.b16 %v2127
        %v2222 = vunpack.c.l.b16 %v2128
        %v2223 = vunpack.c.l.b16 %v2129
        %v2224 = vunpack.c.h.b16 %v2129
        %v2225 = vunpack.c.l.b16 %v2130
        %v2226 = vunpack.c.l.b16 %v2131
        %v2227 = vunpack.c.h.b16 %v2131
        %v2228 = vunpack.c.l.b16 %v2132
        %v2229 = vunpack.c.l.b16 %v2133
        %v2230 = vunpack.c.h.b16 %v2133
        %v2231 = vunpack.c.l.b16 %v2134
        %v2232 = vunpack.c.l.b16 %v2135
        %v2233 = vunpack.c.h.b16 %v2135
        %v2234 = vunpack.c.l.b16 %v2136
        %v2235 = vunpack.c.l.b16 %v2137
        %v2236 = vunpack.c.h.b16 %v2137
        %v2237 = vunpack.c.l.b16 %v2138
        %v2238 = vunpack.c.l.b16 %v2139
        %v2239 = vunpack.c.h.b16 %v2139
        %v2240 = vunpack.c.l.b16 %v2140
        %v2241 = vunpack.c.l.b16 %v2141
        %v2242 = vunpack.c.h.b16 %v2141
        %v2243 = vunpack.c.l.b16 %v2142
        %v2244 = vunpack.c.l.b16 %v2143
        %v2245 = vunpack.c.h.b16 %v2143
        %v2246 = vunpack.c.l.b16 %v2144
        %v2247 = vunpack.c.l.b16 %v2145
        %v2248 = vunpack.c.h.b16 %v2145
        %v2249 = vunpack.c.l.b16 %v2146
        %v2250 = vunpack.c.l.b16 %v2147
        %v2251 = vunpack.c.h.b16 %v2147
        %v2252 = vunpack.c.l.b16 %v2148
        %v2253 = vunpack.c.l.b16 %v2149
        %v2254 = vunpack.c.h.b16 %v2149
        %v2255 = vunpack.c.l.b16 %v2150
        %v2256 = vunpack.c.l.b16 %v2151
        %v2257 = vunpack.c.h.b16 %v2151
        %v2258 = vunpack.c.l.b16 %v2152
        %v2259 = vunpack.c.l.b16 %v2153
        %v2260 = vunpack.c.h.b16 %v2153
        %v2261 = vunpack.c.l.b16 %v2154
        %v2262 = vunpack.c.l.b16 %v2155
        %v2263 = vunpack.c.h.b16 %v2155
        %v2264 = vunpack.c.l.b16 %v2156
        %v2265 = vunpack.c.l.b16 %v2157
        %v2266 = vunpack.c.h.b16 %v2157
        %v2267 = vunpack.c.l.b16 %v2158
        %v2268 = vpack.c.b16 %v2223, %v2220
        %v2269 = vpack.c.b16 %v2224, %v2221
        %v2270 = vpack.c.b16 %v2225, %v2222
        %v2271 = vpack.c.b16 %v2229, %v2226
        %v2272 = vpack.c.b16 %v2230, %v2227
        %v2273 = vpack.c.b16 %v2231, %v2228
        %v2274 = vpack.c.b16 %v2235, %v2232
        %v2275 = vpack.c.b16 %v2236, %v2233
        %v2276 = vpack.c.b16 %v2237, %v2234
        %v2277 = vpack.c.b16 %v2241, %v2238
        %v2278 = vpack.c.b16 %v2242, %v2239
        %v2279 = vpack.c.b16 %v2243, %v2240
        %v2280 = vpack.c.b16 %v2247, %v2244
        %v2281 = vpack.c.b16 %v2248, %v2245
        %v2282 = vpack.c.b16 %v2249, %v2246
        %v2283 = vpack.c.b16 %v2253, %v2250
        %v2284 = vpack.c.b16 %v2254, %v2251
        %v2285 = vpack.c.b16 %v2255, %v2252
        %v2286 = vpack.c.b16 %v2259, %v2256
        %v2287 = vpack.c.b16 %v2260, %v2257
        %v2288 = vpack.c.b16 %v2261, %v2258
        %v2289 = vpack.c.b16 %v2265, %v2262
        %v2290 = vpack.c.b16 %v2266, %v2263
        %v2291 = vpack.c.b16 %v2267, %v2264
        %2316 = vmatpush.bf16.msra.mxu0 %v2289
        %2317 = vmatpush.bf16.msra.mxu0 %v2286
        %2318 = vmatpush.bf16.msra.mxu0 %v2283
        %2319 = vmatpush.bf16.msra.mxu0 %v2280
        %2320 = vmatpush.bf16.msra.mxu0 %v2277
        %2321 = vmatpush.bf16.msra.mxu0 %v2274
        %2322 = vmatpush.bf16.msra.mxu0 %v2271
        %2323 = vmatpush.bf16.msra.mxu0 %v2268
        %2324 = vmatmul.bf16.gmra.mxu0 %v2180
        %v2325 = vpop.f32.mrf.mxu0
        %v2326 = vadd.f32 %v2182, %v2325
        %v2327 = vpop.f32.mrf.mxu0
        %2328 = vdwg.mxu0
        %2329 = vmatpush.bf16.msra.mxu0 %v2290
        %2330 = vmatpush.bf16.msra.mxu0 %v2287
        %2331 = vmatpush.bf16.msra.mxu0 %v2284
        %2332 = vmatpush.bf16.msra.mxu0 %v2281
        %2333 = vmatpush.bf16.msra.mxu0 %v2278
        %2334 = vmatpush.bf16.msra.mxu0 %v2275
        %2335 = vmatpush.bf16.msra.mxu0 %v2272
        %2336 = vmatpush.bf16.msra.mxu0 %v2269
        %2337 = vmatmul.bf16.gmra.mxu0 %v2180
        %v2338 = vpop.f32.mrf.mxu0
        %v2339 = vadd.f32 %v2183, %v2338
        %v2340 = vpop.f32.mrf.mxu0
        %2341 = vdwg.mxu0
        %2342 = vmatpush.bf16.msra.mxu0 %v2291
        %2343 = vmatpush.bf16.msra.mxu0 %v2288
        %2344 = vmatpush.bf16.msra.mxu0 %v2285
        %2345 = vmatpush.bf16.msra.mxu0 %v2282
        %2346 = vmatpush.bf16.msra.mxu0 %v2279
        %2347 = vmatpush.bf16.msra.mxu0 %v2276
        %2348 = vmatpush.bf16.msra.mxu0 %v2273
        %2349 = vmatpush.bf16.msra.mxu0 %v2270
        %2350 = vmatmul.bf16.gmra.mxu0 %v2180
        %v2351 = vpop.f32.mrf.mxu0
        %v2352 = vadd.f32 %v2184, %v2351
        %v2353 = vpop.f32.mrf.mxu0
        %2354 = vdwg.mxu0
        %v2355 = vpack.c.bf16 %v2339, %v2339
        %v2356 = vpack.c.bf16 %v2352, %v2352
        %v2357 = vmul.f32 %v2326, %v1475
        %v2358 = vmul.f32 %v2326, %v1480
        %v2359 = vmul.f32 %v2326, %v1485
        %v2360 = vmul.f32 %v2326, %v1489
        %v2361 = vpack.c.bf16 %v2358, %v2357
        %v2362 = vpack.c.bf16 %v2360, %v2359
        %2363 = vmatpush.bf16.xpose.msra.mxu0 0
        %2364 = vmatpush.bf16.xpose.msra.mxu0 0
        %2365 = vmatpush.bf16.xpose.msra.mxu0 0
        %2366 = vmatpush.bf16.xpose.msra.mxu0 0
        %2367 = vmatpush.bf16.xpose.msra.mxu0 0
        %2368 = vmatpush.bf16.xpose.msra.mxu0 0
        %2369 = vmatpush.bf16.xpose.msra.mxu0 0
        %2370 = vmatpush.bf16.xpose.msra.mxu0 %v2355
        %2371 = vmatmul.bf16.gmra.mxu0 %v2361
        %v2372 = vpop.f32.mrf.mxu0
        %v2373 = vadd.f32 0.0, %v2372
        %v2374 = vpop.f32.mrf.mxu0
        %v2375 = vadd.f32 0.0, %v2374
        %2376 = vmatmul.bf16.gmra.mxu0 %v2362
        %v2377 = vpop.f32.mrf.mxu0
        %v2378 = vadd.f32 0.0, %v2377
        %v2379 = vpop.f32.mrf.mxu0
        %v2380 = vadd.f32 0.0, %v2379
        %2381 = vdwg.mxu0
        %v2382 = vmul.f32 %v2373, 0.35355338
        %v2383 = vmul.f32 %v2375, 0.35355338
        %v2384 = vmul.f32 %v2378, 0.35355338
        %v2385 = vmul.f32 %v2380, 0.35355338
        %v2386 = vsel %vm1747, %v2382, -inf
        %2387 = vmax.xlane.f32.xlu0 %v2386
        %v2388 = vpop.xlane.xlu0 %2387
        %v2389 = vsel %vm1747, %v2383, -inf
        %2390 = vmax.xlane.f32.xlu0 %v2389
        %v2391 = vpop.xlane.xlu0 %2390
        %v2392 = vsel %vm1747, %v2384, -inf
        %2393 = vmax.xlane.f32.xlu0 %v2392
        %v2394 = vpop.xlane.xlu0 %2393
        %v2395 = vsel %vm1747, %v2385, -inf
        %2396 = vmax.xlane.f32.xlu0 %v2395
        %v2397 = vpop.xlane.xlu0 %2396
        %v2398 = vsub.f32 %v2382, %v2388
        %v2399 = vsub.f32 %v2383, %v2391
        %v2400 = vsub.f32 %v2384, %v2394
        %v2401 = vsub.f32 %v2385, %v2397
        %v2402 = vmul.f32 %v2398, 1.442695
        %v2403 = vpow.pop %v2402
        %v2404 = vmul.f32 %v2399, 1.442695
        %v2405 = vpow.pop %v2404
        %v2406 = vmul.f32 %v2400, 1.442695
        %v2407 = vpow.pop %v2406
        %v2408 = vmul.f32 %v2401, 1.442695
        %v2409 = vpow.pop %v2408
        %v2410 = vsel %vm1747, %v2403, 0.0
        %2411 = vadd.xlane.f32.xlu0 %v2410
        %v2412 = vpop.xlane.xlu0 %2411
        %v2413 = vsel %vm1747, %v2405, 0.0
        %2414 = vadd.xlane.f32.xlu0 %v2413
        %v2415 = vpop.xlane.xlu0 %2414
        %v2416 = vsel %vm1747, %v2407, 0.0
        %2417 = vadd.xlane.f32.xlu0 %v2416
        %v2418 = vpop.xlane.xlu0 %2417
        %v2419 = vsel %vm1747, %v2409, 0.0
        %2420 = vadd.xlane.f32.xlu0 %v2419
        %v2421 = vpop.xlane.xlu0 %2420
        %v2422 = vrcp.pop %v2412
        %v2423 = vrcp.pop %v2415
        %v2424 = vrcp.pop %v2418
        %v2425 = vrcp.pop %v2421
        %v2426 = vmul.f32 %v2403, %v2422
        %v2427 = vmul.f32 %v2405, %v2423
        %v2428 = vmul.f32 %v2407, %v2424
        %v2429 = vmul.f32 %v2409, %v2425
        %v2430 = vpack.c.bf16 %v2427, %v2426
        %v2431 = vpack.c.bf16 %v2429, %v2428
        %v2433 = vsel %vm1747, %v2430, 0
        %v2436 = vsel %vm1747, %v2431, 0
        %v2439 = vsel %vm1800, %v2356, 0
        %2441 = vmatpush.bf16.msra.mxu0 0
        %2442 = vmatpush.bf16.msra.mxu0 0
        %2443 = vmatpush.bf16.msra.mxu0 0
        %2444 = vmatpush.bf16.msra.mxu0 0
        %2445 = vmatpush.bf16.msra.mxu0 0
        %2446 = vmatpush.bf16.msra.mxu0 0
        %2447 = vmatpush.bf16.msra.mxu0 0
        %2448 = vmatpush.bf16.msra.mxu0 %v2439
        %2449 = vmatmul.bf16.gmra.mxu0 %v2433
        %v2450 = vpop.f32.mrf.mxu0
        %v2451 = vadd.f32 0.0, %v2450
        %v2452 = vpop.f32.mrf.mxu0
        %v2453 = vadd.f32 0.0, %v2452
        %2454 = vmatmul.bf16.gmra.mxu0 %v2436
        %v2455 = vpop.f32.mrf.mxu0
        %v2456 = vadd.f32 0.0, %v2455
        %v2457 = vpop.f32.mrf.mxu0
        %v2458 = vadd.f32 0.0, %v2457
        %2459 = vdwg.mxu0
        %v2460 = vmul.f32 %v2451, %v1475
        %v2461 = vmul.f32 %v2453, %v1480
        %v2462 = vadd.f32 %v2460, %v2461
        %v2463 = vmul.f32 %v2456, %v1485
        %v2464 = vadd.f32 %v2462, %v2463
        %v2465 = vmul.f32 %v2458, %v1489
        %v2466 = vadd.f32 %v2464, %v2465
        %v2467 = vpack.c.bf16 %v2466, %v2466
        %v2469 = vperm.slane %v2179, 0
        %v2487 = vunpack.c.l.b16 %v2162
        %v2488 = vunpack.c.l.b16 %v2163
        %v2489 = vunpack.c.l.b16 %v2164
        %v2490 = vunpack.c.l.b16 %v2165
        %v2491 = vunpack.c.l.b16 %v2166
        %v2492 = vunpack.c.l.b16 %v2167
        %v2493 = vunpack.c.l.b16 %v2168
        %v2494 = vunpack.c.l.b16 %v2169
        %v2495 = vunpack.c.l.b16 %v2170
        %v2496 = vunpack.c.l.b16 %v2171
        %v2497 = vunpack.c.l.b16 %v2172
        %v2498 = vunpack.c.l.b16 %v2173
        %v2499 = vunpack.c.l.b16 %v2174
        %v2500 = vunpack.c.l.b16 %v2175
        %v2501 = vunpack.c.l.b16 %v2176
        %v2502 = vunpack.c.l.b16 %v2177
        %v2503 = vpack.c.b16 %v2488, %v2487
        %v2504 = vpack.c.b16 %v2490, %v2489
        %v2505 = vpack.c.b16 %v2492, %v2491
        %v2506 = vpack.c.b16 %v2494, %v2493
        %v2507 = vpack.c.b16 %v2496, %v2495
        %v2508 = vpack.c.b16 %v2498, %v2497
        %v2509 = vpack.c.b16 %v2500, %v2499
        %v2510 = vpack.c.b16 %v2502, %v2501
        %2519 = vmatpush.bf16.msra.mxu0 %v2510
        %2520 = vmatpush.bf16.msra.mxu0 %v2509
        %2521 = vmatpush.bf16.msra.mxu0 %v2508
        %2522 = vmatpush.bf16.msra.mxu0 %v2507
        %2523 = vmatpush.bf16.msra.mxu0 %v2506
        %2524 = vmatpush.bf16.msra.mxu0 %v2505
        %2525 = vmatpush.bf16.msra.mxu0 %v2504
        %2526 = vmatpush.bf16.msra.mxu0 %v2503
        %2527 = vmatmul.bf16.gmra.mxu0 %v2467
        %v2528 = vpop.f32.mrf.mxu0
        %v2529 = vadd.f32 %v2469, %v2528
        %v2530 = vpop.f32.mrf.mxu0
        %2531 = vdwg.mxu0
        %v2532 = vadd.f32 %v2125, %v2529
        %s2533 = scalar_lea.vmem %s13, 1
        %v2534 = vld [vmem:[%s2533] sm:$0x1]
        %s2535 = scalar_lea.vmem %s15, 1
        %v2536 = vld [vmem:[%s2535] sm:$0x1]
        %v2537 = vmul.f32 %v2532, %v1470
        %2538 = vadd.xlane.f32.xlu0 %v2537
        %v2539 = vpop.xlane.xlu0 %2538
        %v2540 = vmul.f32 %v2539, 0.03125
        %v2541 = vsub.f32 %v2532, %v2540
        %v2542 = vmul.f32 %v2541, %v1470
        %v2543 = vmul.f32 %v2542, %v2542
        %2544 = vadd.xlane.f32.xlu0 %v2543
        %v2545 = vpop.xlane.xlu0 %2544
        %v2546 = vmul.f32 %v2545, 0.03125
        %v2547 = vadd.f32 %v2546, 1e-05
        %v2548 = vrsqrt.pop %v2547
        %v2549 = vmul.f32 %v2548, %v2547
        %v2550 = vmul.f32 %v2549, %v2548
        %v2551 = vmul.f32 0.5, %v2550
        %v2552 = vsub.f32 1.5, %v2551
        %v2553 = vmul.f32 %v2548, %v2552
        %vm2554 = vweird.f32 %v2547
        %vm2555 = vweird.f32 %v2548
        %vm2556 = vmor %vm2554, %vm2555
        %v2557 = vsel %vm2556, %v2548, %v2553
        %v2558 = vmul.f32 %v2542, %v2557
        %v2560 = vperm.slane %v2534, 0
        %v2562 = vmul.f32 %v2558, %v2560
        %v2564 = vperm.slane %v2536, 0
        %v2566 = vadd.f32 %v2562, %v2564
        %s2567 = scalar_lea.vmem %s17, 64
        %v2568 = vld [vmem:[%s2567] sm:$0xf]
        %v2569 = vld [vmem:[%s2567 + $0x4] sm:$0xf]
        %v2570 = vld [vmem:[%s2567 + $0x8] sm:$0xf]
        %v2571 = vld [vmem:[%s2567 + $0xc] sm:$0xf]
        %v2572 = vld [vmem:[%s2567 + $0x10] sm:$0xf]
        %v2573 = vld [vmem:[%s2567 + $0x14] sm:$0xf]
        %v2574 = vld [vmem:[%s2567 + $0x18] sm:$0xf]
        %v2575 = vld [vmem:[%s2567 + $0x1c] sm:$0xf]
        %v2576 = vld [vmem:[%s2567 + $0x20] sm:$0xf]
        %v2577 = vld [vmem:[%s2567 + $0x24] sm:$0xf]
        %v2578 = vld [vmem:[%s2567 + $0x28] sm:$0xf]
        %v2579 = vld [vmem:[%s2567 + $0x2c] sm:$0xf]
        %v2580 = vld [vmem:[%s2567 + $0x30] sm:$0xf]
        %v2581 = vld [vmem:[%s2567 + $0x34] sm:$0xf]
        %v2582 = vld [vmem:[%s2567 + $0x38] sm:$0xf]
        %v2583 = vld [vmem:[%s2567 + $0x3c] sm:$0xf]
        %s2584 = scalar_lea.vmem %s19, 1
        %v2585 = vld [vmem:[%s2584] sm:$0x1]
        %s2586 = scalar_lea.vmem [#allocation5], 64
        %v2587 = vld [vmem:[%s2586] sm:$0xf]
        %v2588 = vld [vmem:[%s2586 + $0x4] sm:$0xf]
        %v2589 = vld [vmem:[%s2586 + $0x8] sm:$0xf]
        %v2590 = vld [vmem:[%s2586 + $0xc] sm:$0xf]
        %v2591 = vld [vmem:[%s2586 + $0x10] sm:$0xf]
        %v2592 = vld [vmem:[%s2586 + $0x14] sm:$0xf]
        %v2593 = vld [vmem:[%s2586 + $0x18] sm:$0xf]
        %v2594 = vld [vmem:[%s2586 + $0x1c] sm:$0xf]
        %v2595 = vld [vmem:[%s2586 + $0x20] sm:$0xf]
        %v2596 = vld [vmem:[%s2586 + $0x24] sm:$0xf]
        %v2597 = vld [vmem:[%s2586 + $0x28] sm:$0xf]
        %v2598 = vld [vmem:[%s2586 + $0x2c] sm:$0xf]
        %v2599 = vld [vmem:[%s2586 + $0x30] sm:$0xf]
        %v2600 = vld [vmem:[%s2586 + $0x34] sm:$0xf]
        %v2601 = vld [vmem:[%s2586 + $0x38] sm:$0xf]
        %v2602 = vld [vmem:[%s2586 + $0x3c] sm:$0xf]
        %s2603 = scalar_lea.vmem %s23, 1
        %v2604 = vld [vmem:[%s2603] sm:$0x1]
        %v2605 = vpack.c.bf16 %v2566, %v2566
        %v2607 = vperm.slane %v2585, 0
        %v2625 = vunpack.c.l.b16 %v2568
        %v2626 = vunpack.c.l.b16 %v2569
        %v2627 = vunpack.c.l.b16 %v2570
        %v2628 = vunpack.c.l.b16 %v2571
        %v2629 = vunpack.c.l.b16 %v2572
        %v2630 = vunpack.c.l.b16 %v2573
        %v2631 = vunpack.c.l.b16 %v2574
        %v2632 = vunpack.c.l.b16 %v2575
        %v2633 = vunpack.c.l.b16 %v2576
        %v2634 = vunpack.c.l.b16 %v2577
        %v2635 = vunpack.c.l.b16 %v2578
        %v2636 = vunpack.c.l.b16 %v2579
        %v2637 = vunpack.c.l.b16 %v2580
        %v2638 = vunpack.c.l.b16 %v2581
        %v2639 = vunpack.c.l.b16 %v2582
        %v2640 = vunpack.c.l.b16 %v2583
        %v2641 = vpack.c.b16 %v2626, %v2625
        %v2642 = vpack.c.b16 %v2628, %v2627
        %v2643 = vpack.c.b16 %v2630, %v2629
        %v2644 = vpack.c.b16 %v2632, %v2631
        %v2645 = vpack.c.b16 %v2634, %v2633
        %v2646 = vpack.c.b16 %v2636, %v2635
        %v2647 = vpack.c.b16 %v2638, %v2637
        %v2648 = vpack.c.b16 %v2640, %v2639
        %2657 = vmatpush.bf16.msra.mxu0 %v2648
        %2658 = vmatpush.bf16.msra.mxu0 %v2647
        %2659 = vmatpush.bf16.msra.mxu0 %v2646
        %2660 = vmatpush.bf16.msra.mxu0 %v2645
        %2661 = vmatpush.bf16.msra.mxu0 %v2644
        %2662 = vmatpush.bf16.msra.mxu0 %v2643
        %2663 = vmatpush.bf16.msra.mxu0 %v2642
        %2664 = vmatpush.bf16.msra.mxu0 %v2641
        %2665 = vmatmul.bf16.gmra.mxu0 %v2605
        %v2666 = vpop.f32.mrf.mxu0
        %v2667 = vadd.f32 %v2607, %v2666
        %v2668 = vpop.f32.mrf.mxu0
        %2669 = vdwg.mxu0
        %v2670 = vmax.f32 %v2667, 0.0
        %v2671 = vpack.c.bf16 %v2670, %v2670
        %v2673 = vperm.slane %v2604, 0
        %v2691 = vunpack.c.l.b16 %v2587
        %v2692 = vunpack.c.l.b16 %v2588
        %v2693 = vunpack.c.l.b16 %v2589
        %v2694 = vunpack.c.l.b16 %v2590
        %v2695 = vunpack.c.l.b16 %v2591
        %v2696 = vunpack.c.l.b16 %v2592
        %v2697 = vunpack.c.l.b16 %v2593
        %v2698 = vunpack.c.l.b16 %v2594
        %v2699 = vunpack.c.l.b16 %v2595
        %v2700 = vunpack.c.l.b16 %v2596
        %v2701 = vunpack.c.l.b16 %v2597
        %v2702 = vunpack.c.l.b16 %v2598
        %v2703 = vunpack.c.l.b16 %v2599
        %v2704 = vunpack.c.l.b16 %v2600
        %v2705 = vunpack.c.l.b16 %v2601
        %v2706 = vunpack.c.l.b16 %v2602
        %v2707 = vpack.c.b16 %v2692, %v2691
        %v2708 = vpack.c.b16 %v2694, %v2693
        %v2709 = vpack.c.b16 %v2696, %v2695
        %v2710 = vpack.c.b16 %v2698, %v2697
        %v2711 = vpack.c.b16 %v2700, %v2699
        %v2712 = vpack.c.b16 %v2702, %v2701
        %v2713 = vpack.c.b16 %v2704, %v2703
        %v2714 = vpack.c.b16 %v2706, %v2705
        %2723 = vmatpush.bf16.msra.mxu0 %v2714
        %2724 = vmatpush.bf16.msra.mxu0 %v2713
        %2725 = vmatpush.bf16.msra.mxu0 %v2712
        %2726 = vmatpush.bf16.msra.mxu0 %v2711
        %2727 = vmatpush.bf16.msra.mxu0 %v2710
        %2728 = vmatpush.bf16.msra.mxu0 %v2709
        %2729 = vmatpush.bf16.msra.mxu0 %v2708
        %2730 = vmatpush.bf16.msra.mxu0 %v2707
        %2731 = vmatmul.bf16.gmra.mxu0 %v2671
        %v2732 = vpop.f32.mrf.mxu0
        %v2733 = vadd.f32 %v2673, %v2732
        %v2734 = vpop.f32.mrf.mxu0
        %2735 = vdwg.mxu0
        %v2736 = vadd.f32 %v2566, %v2733
        %s2737 = scalar_lea.vmem %s25, 1
        %v2738 = vld [vmem:[%s2737] sm:$0x1]
        %s2739 = scalar_lea.vmem %s27, 1
        %v2740 = vld [vmem:[%s2739] sm:$0x1]
        %v2741 = vmul.f32 %v2736, %v1470
        %2742 = vadd.xlane.f32.xlu0 %v2741
        %v2743 = vpop.xlane.xlu0 %2742
        %v2744 = vmul.f32 %v2743, 0.03125
        %v2745 = vsub.f32 %v2736, %v2744
        %v2746 = vmul.f32 %v2745, %v1470
        %v2747 = vmul.f32 %v2746, %v2746
        %2748 = vadd.xlane.f32.xlu0 %v2747
        %v2749 = vpop.xlane.xlu0 %2748
        %v2750 = vmul.f32 %v2749, 0.03125
        %v2751 = vadd.f32 %v2750, 1e-05
        %v2752 = vrsqrt.pop %v2751
        %v2753 = vmul.f32 %v2752, %v2751
        %v2754 = vmul.f32 %v2753, %v2752
        %v2755 = vmul.f32 0.5, %v2754
        %v2756 = vsub.f32 1.5, %v2755
        %v2757 = vmul.f32 %v2752, %v2756
        %vm2758 = vweird.f32 %v2751
        %vm2759 = vweird.f32 %v2752
        %vm2760 = vmor %vm2758, %vm2759
        %v2761 = vsel %vm2760, %v2752, %v2757
        %v2762 = vmul.f32 %v2746, %v2761
        %v2764 = vperm.slane %v2738, 0
        %v2766 = vmul.f32 %v2762, %v2764
        %v2768 = vperm.slane %v2740, 0
        %v2770 = vadd.f32 %v2766, %v2768
        %v2771 = vld [vmem:[%s29] sm:$0x1]
        %v2772 = vld [vmem:[%s31] sm:$0x1]
        %v2773 = vmul.f32 %v2770, %v1470
        %2774 = vadd.xlane.f32.xlu0 %v2773
        %v2775 = vpop.xlane.xlu0 %2774
        %v2776 = vmul.f32 %v2775, 0.03125
        %v2777 = vsub.f32 %v2770, %v2776
        %v2778 = vmul.f32 %v2777, %v1470
        %v2779 = vmul.f32 %v2778, %v2778
        %2780 = vadd.xlane.f32.xlu0 %v2779
        %v2781 = vpop.xlane.xlu0 %2780
        %v2782 = vmul.f32 %v2781, 0.03125
        %v2783 = vadd.f32 %v2782, 1e-05
        %v2784 = vrsqrt.pop %v2783
        %v2785 = vmul.f32 %v2784, %v2783
        %v2786 = vmul.f32 %v2785, %v2784
        %v2787 = vmul.f32 0.5, %v2786
        %v2788 = vsub.f32 1.5, %v2787
        %v2789 = vmul.f32 %v2784, %v2788
        %vm2790 = vweird.f32 %v2783
        %vm2791 = vweird.f32 %v2784
        %vm2792 = vmor %vm2790, %vm2791
        %v2793 = vsel %vm2792, %v2784, %v2789
        %v2794 = vmul.f32 %v2778, %v2793
        %v2796 = vperm.slane %v2771, 0
        %v2798 = vmul.f32 %v2794, %v2796
        %v2800 = vperm.slane %v2772, 0
        %v2802 = vadd.f32 %v2798, %v2800
        %v2803 = vld [vmem:[%s1464] sm:$0xff]
        %v2804 = vld [vmem:[#allocation7] sm:$0xff]
        %v2805 = vld [vmem:[#allocation7 + $0x8] sm:$0xf]
        %v2806 = vld [vmem:[#allocation7 + $0xc] sm:$0xff]
        %v2807 = vld [vmem:[#allocation7 + $0x14] sm:$0xf]
        %v2808 = vld [vmem:[#allocation7 + $0x18] sm:$0xff]
        %v2809 = vld [vmem:[#allocation7 + $0x20] sm:$0xf]
        %v2810 = vld [vmem:[#allocation7 + $0x24] sm:$0xff]
        %v2811 = vld [vmem:[#allocation7 + $0x2c] sm:$0xf]
        %v2812 = vld [vmem:[#allocation7 + $0x30] sm:$0xff]
        %v2813 = vld [vmem:[#allocation7 + $0x38] sm:$0xf]
        %v2814 = vld [vmem:[#allocation7 + $0x3c] sm:$0xff]
        %v2815 = vld [vmem:[#allocation7 + $0x44] sm:$0xf]
        %v2816 = vld [vmem:[#allocation7 + $0x48] sm:$0xff]
        %v2817 = vld [vmem:[#allocation7 + $0x50] sm:$0xf]
        %v2818 = vld [vmem:[#allocation7 + $0x54] sm:$0xff]
        %v2819 = vld [vmem:[#allocation7 + $0x5c] sm:$0xf]
        %v2820 = vld [vmem:[#allocation7 + $0x60] sm:$0xff]
        %v2821 = vld [vmem:[#allocation7 + $0x68] sm:$0xf]
        %v2822 = vld [vmem:[#allocation7 + $0x6c] sm:$0xff]
        %v2823 = vld [vmem:[#allocation7 + $0x74] sm:$0xf]
        %v2824 = vld [vmem:[#allocation7 + $0x78] sm:$0xff]
        %v2825 = vld [vmem:[#allocation7 + $0x80] sm:$0xf]
        %v2826 = vld [vmem:[#allocation7 + $0x84] sm:$0xff]
        %v2827 = vld [vmem:[#allocation7 + $0x8c] sm:$0xf]
        %v2828 = vld [vmem:[#allocation7 + $0x90] sm:$0xff]
        %v2829 = vld [vmem:[#allocation7 + $0x98] sm:$0xf]
        %v2830 = vld [vmem:[#allocation7 + $0x9c] sm:$0xff]
        %v2831 = vld [vmem:[#allocation7 + $0xa4] sm:$0xf]
        %v2832 = vld [vmem:[#allocation7 + $0xa8] sm:$0xff]
        %v2833 = vld [vmem:[#allocation7 + $0xb0] sm:$0xf]
        %v2834 = vld [vmem:[#allocation7 + $0xb4] sm:$0xff]
        %v2835 = vld [vmem:[#allocation7 + $0xbc] sm:$0xf]
        %v2836 = vld [vmem:[%s35] sm:$0x7]
        %v2837 = vld [vmem:[#allocation8] sm:$0xf]
        %v2838 = vld [vmem:[#allocation8 + $0x4] sm:$0xf]
        %v2839 = vld [vmem:[#allocation8 + $0x8] sm:$0xf]
        %v2840 = vld [vmem:[#allocation8 + $0xc] sm:$0xf]
        %v2841 = vld [vmem:[#allocation8 + $0x10] sm:$0xf]
        %v2842 = vld [vmem:[#allocation8 + $0x14] sm:$0xf]
        %v2843 = vld [vmem:[#allocation8 + $0x18] sm:$0xf]
        %v2844 = vld [vmem:[#allocation8 + $0x1c] sm:$0xf]
        %v2845 = vld [vmem:[#allocation8 + $0x20] sm:$0xf]
        %v2846 = vld [vmem:[#allocation8 + $0x24] sm:$0xf]
        %v2847 = vld [vmem:[#allocation8 + $0x28] sm:$0xf]
        %v2848 = vld [vmem:[#allocation8 + $0x2c] sm:$0xf]
        %v2849 = vld [vmem:[#allocation8 + $0x30] sm:$0xf]
        %v2850 = vld [vmem:[#allocation8 + $0x34] sm:$0xf]
        %v2851 = vld [vmem:[#allocation8 + $0x38] sm:$0xf]
        %v2852 = vld [vmem:[#allocation8 + $0x3c] sm:$0xf]
        %v2853 = vld [vmem:[%s39] sm:$0x1]
        %v2854 = vpack.c.bf16 %v2803, %v2803
        %v2856 = vperm.slane %v2836, 0
        %v2857 = vperm.slane %v2836, 1
        %v2858 = vperm.slane %v2836, 2
        %v2894 = vunpack.c.l.b16 %v2804
        %v2895 = vunpack.c.h.b16 %v2804
        %v2896 = vunpack.c.l.b16 %v2805
        %v2897 = vunpack.c.l.b16 %v2806
        %v2898 = vunpack.c.h.b16 %v2806
        %v2899 = vunpack.c.l.b16 %v2807
        %v2900 = vunpack.c.l.b16 %v2808
        %v2901 = vunpack.c.h.b16 %v2808
        %v2902 = vunpack.c.l.b16 %v2809
        %v2903 = vunpack.c.l.b16 %v2810
        %v2904 = vunpack.c.h.b16 %v2810
        %v2905 = vunpack.c.l.b16 %v2811
        %v2906 = vunpack.c.l.b16 %v2812
        %v2907 = vunpack.c.h.b16 %v2812
        %v2908 = vunpack.c.l.b16 %v2813
        %v2909 = vunpack.c.l.b16 %v2814
        %v2910 = vunpack.c.h.b16 %v2814
        %v2911 = vunpack.c.l.b16 %v2815
        %v2912 = vunpack.c.l.b16 %v2816
        %v2913 = vunpack.c.h.b16 %v2816
        %v2914 = vunpack.c.l.b16 %v2817
        %v2915 = vunpack.c.l.b16 %v2818
        %v2916 = vunpack.c.h.b16 %v2818
        %v2917 = vunpack.c.l.b16 %v2819
        %v2918 = vunpack.c.l.b16 %v2820
        %v2919 = vunpack.c.h.b16 %v2820
        %v2920 = vunpack.c.l.b16 %v2821
        %v2921 = vunpack.c.l.b16 %v2822
        %v2922 = vunpack.c.h.b16 %v2822
        %v2923 = vunpack.c.l.b16 %v2823
        %v2924 = vunpack.c.l.b16 %v2824
        %v2925 = vunpack.c.h.b16 %v2824
        %v2926 = vunpack.c.l.b16 %v2825
        %v2927 = vunpack.c.l.b16 %v2826
        %v2928 = vunpack.c.h.b16 %v2826
        %v2929 = vunpack.c.l.b16 %v2827
        %v2930 = vunpack.c.l.b16 %v2828
        %v2931 = vunpack.c.h.b16 %v2828
        %v2932 = vunpack.c.l.b16 %v2829
        %v2933 = vunpack.c.l.b16 %v2830
        %v2934 = vunpack.c.h.b16 %v2830
        %v2935 = vunpack.c.l.b16 %v2831
        %v2936 = vunpack.c.l.b16 %v2832
        %v2937 = vunpack.c.h.b16 %v2832
        %v2938 = vunpack.c.l.b16 %v2833
        %v2939 = vunpack.c.l.b16 %v2834
        %v2940 = vunpack.c.h.b16 %v2834
        %v2941 = vunpack.c.l.b16 %v2835
        %v2942 = vpack.c.b16 %v2897, %v2894
        %v2943 = vpack.c.b16 %v2898, %v2895
        %v2944 = vpack.c.b16 %v2899, %v2896
        %v2945 = vpack.c.b16 %v2903, %v2900
        %v2946 = vpack.c.b16 %v2904, %v2901
        %v2947 = vpack.c.b16 %v2905, %v2902
        %v2948 = vpack.c.b16 %v2909, %v2906
        %v2949 = vpack.c.b16 %v2910, %v2907
        %v2950 = vpack.c.b16 %v2911, %v2908
        %v2951 = vpack.c.b16 %v2915, %v2912
        %v2952 = vpack.c.b16 %v2916, %v2913
        %v2953 = vpack.c.b16 %v2917, %v2914
        %v2954 = vpack.c.b16 %v2921, %v2918
        %v2955 = vpack.c.b16 %v2922, %v2919
        %v2956 = vpack.c.b16 %v2923, %v2920
        %v2957 = vpack.c.b16 %v2927, %v2924
        %v2958 = vpack.c.b16 %v2928, %v2925
        %v2959 = vpack.c.b16 %v2929, %v2926
        %v2960 = vpack.c.b16 %v2933, %v2930
        %v2961 = vpack.c.b16 %v2934, %v2931
        %v2962 = vpack.c.b16 %v2935, %v2932
        %v2963 = vpack.c.b16 %v2939, %v2936
        %v2964 = vpack.c.b16 %v2940, %v2937
        %v2965 = vpack.c.b16 %v2941, %v2938
        %2990 = vmatpush.bf16.msra.mxu0 %v2963
        %2991 = vmatpush.bf16.msra.mxu0 %v2960
        %2992 = vmatpush.bf16.msra.mxu0 %v2957
        %2993 = vmatpush.bf16.msra.mxu0 %v2954
        %2994 = vmatpush.bf16.msra.mxu0 %v2951
        %2995 = vmatpush.bf16.msra.mxu0 %v2948
        %2996 = vmatpush.bf16.msra.mxu0 %v2945
        %2997 = vmatpush.bf16.msra.mxu0 %v2942
        %2998 = vmatmul.bf16.gmra.mxu0 %v2854
        %v2999 = vpop.f32.mrf.mxu0
        %v3000 = vadd.f32 %v2856, %v2999
        %v3001 = vpop.f32.mrf.mxu0
        %3002 = vdwg.mxu0
        %3003 = vmatpush.bf16.msra.mxu0 %v2964
        %3004 = vmatpush.bf16.msra.mxu0 %v2961
        %3005 = vmatpush.bf16.msra.mxu0 %v2958
        %3006 = vmatpush.bf16.msra.mxu0 %v2955
        %3007 = vmatpush.bf16.msra.mxu0 %v2952
        %3008 = vmatpush.bf16.msra.mxu0 %v2949
        %3009 = vmatpush.bf16.msra.mxu0 %v2946
        %3010 = vmatpush.bf16.msra.mxu0 %v2943
        %3011 = vmatmul.bf16.gmra.mxu0 %v2854
        %v3012 = vpop.f32.mrf.mxu0
        %v3013 = vadd.f32 %v2857, %v3012
        %v3014 = vpop.f32.mrf.mxu0
        %3015 = vdwg.mxu0
        %3016 = vmatpush.bf16.msra.mxu0 %v2965
        %3017 = vmatpush.bf16.msra.mxu0 %v2962
        %3018 = vmatpush.bf16.msra.mxu0 %v2959
        %3019 = vmatpush.bf16.msra.mxu0 %v2956
        %3020 = vmatpush.bf16.msra.mxu0 %v2953
        %3021 = vmatpush.bf16.msra.mxu0 %v2950
        %3022 = vmatpush.bf16.msra.mxu0 %v2947
        %3023 = vmatpush.bf16.msra.mxu0 %v2944
        %3024 = vmatmul.bf16.gmra.mxu0 %v2854
        %v3025 = vpop.f32.mrf.mxu0
        %v3026 = vadd.f32 %v2858, %v3025
        %v3027 = vpop.f32.mrf.mxu0
        %3028 = vdwg.mxu0
        %v3029 = vpack.c.bf16 %v3013, %v3013
        %v3030 = vpack.c.bf16 %v3026, %v3026
        %v3031 = vmul.f32 %v3000, %v1475
        %v3032 = vmul.f32 %v3000, %v1480
        %v3033 = vmul.f32 %v3000, %v1485
        %v3034 = vmul.f32 %v3000, %v1489
        %v3035 = vpack.c.bf16 %v3032, %v3031
        %v3036 = vpack.c.bf16 %v3034, %v3033
        %3037 = vmatpush.bf16.xpose.msra.mxu0 0
        %3038 = vmatpush.bf16.xpose.msra.mxu0 0
        %3039 = vmatpush.bf16.xpose.msra.mxu0 0
        %3040 = vmatpush.bf16.xpose.msra.mxu0 0
        %3041 = vmatpush.bf16.xpose.msra.mxu0 0
        %3042 = vmatpush.bf16.xpose.msra.mxu0 0
        %3043 = vmatpush.bf16.xpose.msra.mxu0 0
        %3044 = vmatpush.bf16.xpose.msra.mxu0 %v3029
        %3045 = vmatmul.bf16.gmra.mxu0 %v3035
        %v3046 = vpop.f32.mrf.mxu0
        %v3047 = vadd.f32 0.0, %v3046
        %v3048 = vpop.f32.mrf.mxu0
        %v3049 = vadd.f32 0.0, %v3048
        %3050 = vmatmul.bf16.gmra.mxu0 %v3036
        %v3051 = vpop.f32.mrf.mxu0
        %v3052 = vadd.f32 0.0, %v3051
        %v3053 = vpop.f32.mrf.mxu0
        %v3054 = vadd.f32 0.0, %v3053
        %3055 = vdwg.mxu0
        %v3056 = vmul.f32 %v3047, 0.35355338
        %v3057 = vmul.f32 %v3049, 0.35355338
        %v3058 = vmul.f32 %v3052, 0.35355338
        %v3059 = vmul.f32 %v3054, 0.35355338
        %v3060 = vsel %vm1747, %v3056, -inf
        %3061 = vmax.xlane.f32.xlu0 %v3060
        %v3062 = vpop.xlane.xlu0 %3061
        %v3063 = vsel %vm1747, %v3057, -inf
        %3064 = vmax.xlane.f32.xlu0 %v3063
        %v3065 = vpop.xlane.xlu0 %3064
        %v3066 = vsel %vm1747, %v3058, -inf
        %3067 = vmax.xlane.f32.xlu0 %v3066
        %v3068 = vpop.xlane.xlu0 %3067
        %v3069 = vsel %vm1747, %v3059, -inf
        %3070 = vmax.xlane.f32.xlu0 %v3069
        %v3071 = vpop.xlane.xlu0 %3070
        %v3072 = vsub.f32 %v3056, %v3062
        %v3073 = vsub.f32 %v3057, %v3065
        %v3074 = vsub.f32 %v3058, %v3068
        %v3075 = vsub.f32 %v3059, %v3071
        %v3076 = vmul.f32 %v3072, 1.442695
        %v3077 = vpow.pop %v3076
        %v3078 = vmul.f32 %v3073, 1.442695
        %v3079 = vpow.pop %v3078
        %v3080 = vmul.f32 %v3074, 1.442695
        %v3081 = vpow.pop %v3080
        %v3082 = vmul.f32 %v3075, 1.442695
        %v3083 = vpow.pop %v3082
        %v3084 = vsel %vm1747, %v3077, 0.0
        %3085 = vadd.xlane.f32.xlu0 %v3084
        %v3086 = vpop.xlane.xlu0 %3085
        %v3087 = vsel %vm1747, %v3079, 0.0
        %3088 = vadd.xlane.f32.xlu0 %v3087
        %v3089 = vpop.xlane.xlu0 %3088
        %v3090 = vsel %vm1747, %v3081, 0.0
        %3091 = vadd.xlane.f32.xlu0 %v3090
        %v3092 = vpop.xlane.xlu0 %3091
        %v3093 = vsel %vm1747, %v3083, 0.0
        %3094 = vadd.xlane.f32.xlu0 %v3093
        %v3095 = vpop.xlane.xlu0 %3094
        %v3096 = vrcp.pop %v3086
        %v3097 = vrcp.pop %v3089
        %v3098 = vrcp.pop %v3092
        %v3099 = vrcp.pop %v3095
        %v3100 = vmul.f32 %v3077, %v3096
        %v3101 = vmul.f32 %v3079, %v3097
        %v3102 = vmul.f32 %v3081, %v3098
        %v3103 = vmul.f32 %v3083, %v3099
        %v3104 = vpack.c.bf16 %v3101, %v3100
        %v3105 = vpack.c.bf16 %v3103, %v3102
        %v3107 = vsel %vm1747, %v3104, 0
        %v3110 = vsel %vm1747, %v3105, 0
        %v3113 = vsel %vm1800, %v3030, 0
        %3115 = vmatpush.bf16.msra.mxu0 0
        %3116 = vmatpush.bf16.msra.mxu0 0
        %3117 = vmatpush.bf16.msra.mxu0 0
        %3118 = vmatpush.bf16.msra.mxu0 0
        %3119 = vmatpush.bf16.msra.mxu0 0
        %3120 = vmatpush.bf16.msra.mxu0 0
        %3121 = vmatpush.bf16.msra.mxu0 0
        %3122 = vmatpush.bf16.msra.mxu0 %v3113
        %3123 = vmatmul.bf16.gmra.mxu0 %v3107
        %v3124 = vpop.f32.mrf.mxu0
        %v3125 = vadd.f32 0.0, %v3124
        %v3126 = vpop.f32.mrf.mxu0
        %v3127 = vadd.f32 0.0, %v3126
        %3128 = vmatmul.bf16.gmra.mxu0 %v3110
        %v3129 = vpop.f32.mrf.mxu0
        %v3130 = vadd.f32 0.0, %v3129
        %v3131 = vpop.f32.mrf.mxu0
        %v3132 = vadd.f32 0.0, %v3131
        %3133 = vdwg.mxu0
        %v3134 = vmul.f32 %v3125, %v1475
        %v3135 = vmul.f32 %v3127, %v1480
        %v3136 = vadd.f32 %v3134, %v3135
        %v3137 = vmul.f32 %v3130, %v1485
        %v3138 = vadd.f32 %v3136, %v3137
        %v3139 = vmul.f32 %v3132, %v1489
        %v3140 = vadd.f32 %v3138, %v3139
        %v3141 = vpack.c.bf16 %v3140, %v3140
        %v3143 = vperm.slane %v2853, 0
        %v3161 = vunpack.c.l.b16 %v2837
        %v3162 = vunpack.c.l.b16 %v2838
        %v3163 = vunpack.c.l.b16 %v2839
        %v3164 = vunpack.c.l.b16 %v2840
        %v3165 = vunpack.c.l.b16 %v2841
        %v3166 = vunpack.c.l.b16 %v2842
        %v3167 = vunpack.c.l.b16 %v2843
        %v3168 = vunpack.c.l.b16 %v2844
        %v3169 = vunpack.c.l.b16 %v2845
        %v3170 = vunpack.c.l.b16 %v2846
        %v3171 = vunpack.c.l.b16 %v2847
        %v3172 = vunpack.c.l.b16 %v2848
        %v3173 = vunpack.c.l.b16 %v2849
        %v3174 = vunpack.c.l.b16 %v2850
        %v3175 = vunpack.c.l.b16 %v2851
        %v3176 = vunpack.c.l.b16 %v2852
        %v3177 = vpack.c.b16 %v3162, %v3161
        %v3178 = vpack.c.b16 %v3164, %v3163
        %v3179 = vpack.c.b16 %v3166, %v3165
        %v3180 = vpack.c.b16 %v3168, %v3167
        %v3181 = vpack.c.b16 %v3170, %v3169
        %v3182 = vpack.c.b16 %v3172, %v3171
        %v3183 = vpack.c.b16 %v3174, %v3173
        %v3184 = vpack.c.b16 %v3176, %v3175
        %3193 = vmatpush.bf16.msra.mxu0 %v3184
        %3194 = vmatpush.bf16.msra.mxu0 %v3183
        %3195 = vmatpush.bf16.msra.mxu0 %v3182
        %3196 = vmatpush.bf16.msra.mxu0 %v3181
        %3197 = vmatpush.bf16.msra.mxu0 %v3180
        %3198 = vmatpush.bf16.msra.mxu0 %v3179
        %3199 = vmatpush.bf16.msra.mxu0 %v3178
        %3200 = vmatpush.bf16.msra.mxu0 %v3177
        %3201 = vmatmul.bf16.gmra.mxu0 %v3141
        %v3202 = vpop.f32.mrf.mxu0
        %v3203 = vadd.f32 %v3143, %v3202
        %v3204 = vpop.f32.mrf.mxu0
        %3205 = vdwg.mxu0
        %v3206 = vadd.f32 %v2803, %v3203
        %v3207 = vld [vmem:[#allocation10] sm:$0x1]
        %v3208 = vld [vmem:[#allocation11] sm:$0x1]
        %v3209 = vmul.f32 %v3206, %v1470
        %3210 = vadd.xlane.f32.xlu0 %v3209
        %v3211 = vpop.xlane.xlu0 %3210
        %v3212 = vmul.f32 %v3211, 0.03125
        %v3213 = vsub.f32 %v3206, %v3212
        %v3214 = vmul.f32 %v3213, %v1470
        %v3215 = vmul.f32 %v3214, %v3214
        %3216 = vadd.xlane.f32.xlu0 %v3215
        %v3217 = vpop.xlane.xlu0 %3216
        %v3218 = vmul.f32 %v3217, 0.03125
        %v3219 = vadd.f32 %v3218, 1e-05
        %v3220 = vrsqrt.pop %v3219
        %v3221 = vmul.f32 %v3220, %v3219
        %v3222 = vmul.f32 %v3221, %v3220
        %v3223 = vmul.f32 0.5, %v3222
        %v3224 = vsub.f32 1.5, %v3223
        %v3225 = vmul.f32 %v3220, %v3224
        %vm3226 = vweird.f32 %v3219
        %vm3227 = vweird.f32 %v3220
        %vm3228 = vmor %vm3226, %vm3227
        %v3229 = vsel %vm3228, %v3220, %v3225
        %v3230 = vmul.f32 %v3214, %v3229
        %v3232 = vperm.slane %v3207, 0
        %v3234 = vmul.f32 %v3230, %v3232
        %v3236 = vperm.slane %v3208, 0
        %v3238 = vadd.f32 %v3234, %v3236
        %v3239 = vld [vmem:[#allocation13] sm:$0xff]
        %v3240 = vld [vmem:[#allocation13 + $0x8] sm:$0xf]
        %v3241 = vld [vmem:[#allocation13 + $0xc] sm:$0xff]
        %v3242 = vld [vmem:[#allocation13 + $0x14] sm:$0xf]
        %v3243 = vld [vmem:[#allocation13 + $0x18] sm:$0xff]
        %v3244 = vld [vmem:[#allocation13 + $0x20] sm:$0xf]
        %v3245 = vld [vmem:[#allocation13 + $0x24] sm:$0xff]
        %v3246 = vld [vmem:[#allocation13 + $0x2c] sm:$0xf]
        %v3247 = vld [vmem:[#allocation13 + $0x30] sm:$0xff]
        %v3248 = vld [vmem:[#allocation13 + $0x38] sm:$0xf]
        %v3249 = vld [vmem:[#allocation13 + $0x3c] sm:$0xff]
        %v3250 = vld [vmem:[#allocation13 + $0x44] sm:$0xf]
        %v3251 = vld [vmem:[#allocation13 + $0x48] sm:$0xff]
        %v3252 = vld [vmem:[#allocation13 + $0x50] sm:$0xf]
        %v3253 = vld [vmem:[#allocation13 + $0x54] sm:$0xff]
        %v3254 = vld [vmem:[#allocation13 + $0x5c] sm:$0xf]
        %v3255 = vld [vmem:[#allocation13 + $0x60] sm:$0xff]
        %v3256 = vld [vmem:[#allocation13 + $0x68] sm:$0xf]
        %v3257 = vld [vmem:[#allocation13 + $0x6c] sm:$0xff]
        %v3258 = vld [vmem:[#allocation13 + $0x74] sm:$0xf]
        %v3259 = vld [vmem:[#allocation13 + $0x78] sm:$0xff]
        %v3260 = vld [vmem:[#allocation13 + $0x80] sm:$0xf]
        %v3261 = vld [vmem:[#allocation13 + $0x84] sm:$0xff]
        %v3262 = vld [vmem:[#allocation13 + $0x8c] sm:$0xf]
        %v3263 = vld [vmem:[#allocation13 + $0x90] sm:$0xff]
        %v3264 = vld [vmem:[#allocation13 + $0x98] sm:$0xf]
        %v3265 = vld [vmem:[#allocation13 + $0x9c] sm:$0xff]
        %v3266 = vld [vmem:[#allocation13 + $0xa4] sm:$0xf]
        %v3267 = vld [vmem:[#allocation13 + $0xa8] sm:$0xff]
        %v3268 = vld [vmem:[#allocation13 + $0xb0] sm:$0xf]
        %v3269 = vld [vmem:[#allocation13 + $0xb4] sm:$0xff]
        %v3270 = vld [vmem:[#allocation13 + $0xbc] sm:$0xf]
        %v3271 = vld [vmem:[%s47] sm:$0x7]
        %v3272 = vld [vmem:[#allocation14] sm:$0xf]
        %v3273 = vld [vmem:[#allocation14 + $0x4] sm:$0xf]
        %v3274 = vld [vmem:[#allocation14 + $0x8] sm:$0xf]
        %v3275 = vld [vmem:[#allocation14 + $0xc] sm:$0xf]
        %v3276 = vld [vmem:[#allocation14 + $0x10] sm:$0xf]
        %v3277 = vld [vmem:[#allocation14 + $0x14] sm:$0xf]
        %v3278 = vld [vmem:[#allocation14 + $0x18] sm:$0xf]
        %v3279 = vld [vmem:[#allocation14 + $0x1c] sm:$0xf]
        %v3280 = vld [vmem:[#allocation14 + $0x20] sm:$0xf]
        %v3281 = vld [vmem:[#allocation14 + $0x24] sm:$0xf]
        %v3282 = vld [vmem:[#allocation14 + $0x28] sm:$0xf]
        %v3283 = vld [vmem:[#allocation14 + $0x2c] sm:$0xf]
        %v3284 = vld [vmem:[#allocation14 + $0x30] sm:$0xf]
        %v3285 = vld [vmem:[#allocation14 + $0x34] sm:$0xf]
        %v3286 = vld [vmem:[#allocation14 + $0x38] sm:$0xf]
        %v3287 = vld [vmem:[#allocation14 + $0x3c] sm:$0xf]
        %v3288 = vld [vmem:[#allocation16] sm:$0x1]
        %v3289 = vpack.c.bf16 %v2802, %v2802
        %v3291 = vperm.slane %v3271, 1
        %v3292 = vperm.slane %v3271, 2
        %v3327 = vunpack.c.h.b16 %v3239
        %v3328 = vunpack.c.l.b16 %v3240
        %v3329 = vunpack.c.h.b16 %v3241
        %v3330 = vunpack.c.l.b16 %v3242
        %v3331 = vunpack.c.h.b16 %v3243
        %v3332 = vunpack.c.l.b16 %v3244
        %v3333 = vunpack.c.h.b16 %v3245
        %v3334 = vunpack.c.l.b16 %v3246
        %v3335 = vunpack.c.h.b16 %v3247
        %v3336 = vunpack.c.l.b16 %v3248
        %v3337 = vunpack.c.h.b16 %v3249
        %v3338 = vunpack.c.l.b16 %v3250
        %v3339 = vunpack.c.h.b16 %v3251
        %v3340 = vunpack.c.l.b16 %v3252
        %v3341 = vunpack.c.h.b16 %v3253
        %v3342 = vunpack.c.l.b16 %v3254
        %v3343 = vunpack.c.h.b16 %v3255
        %v3344 = vunpack.c.l.b16 %v3256
        %v3345 = vunpack.c.h.b16 %v3257
        %v3346 = vunpack.c.l.b16 %v3258
        %v3347 = vunpack.c.h.b16 %v3259
        %v3348 = vunpack.c.l.b16 %v3260
        %v3349 = vunpack.c.h.b16 %v3261
        %v3350 = vunpack.c.l.b16 %v3262
        %v3351 = vunpack.c.h.b16 %v3263
        %v3352 = vunpack.c.l.b16 %v3264
        %v3353 = vunpack.c.h.b16 %v3265
        %v3354 = vunpack.c.l.b16 %v3266
        %v3355 = vunpack.c.h.b16 %v3267
        %v3356 = vunpack.c.l.b16 %v3268
        %v3357 = vunpack.c.h.b16 %v3269
        %v3358 = vunpack.c.l.b16 %v3270
        %v3359 = vpack.c.b16 %v3329, %v3327
        %v3360 = vpack.c.b16 %v3330, %v3328
        %v3361 = vpack.c.b16 %v3333, %v3331
        %v3362 = vpack.c.b16 %v3334, %v3332
        %v3363 = vpack.c.b16 %v3337, %v3335
        %v3364 = vpack.c.b16 %v3338, %v3336
        %v3365 = vpack.c.b16 %v3341, %v3339
        %v3366 = vpack.c.b16 %v3342, %v3340
        %v3367 = vpack.c.b16 %v3345, %v3343
        %v3368 = vpack.c.b16 %v3346, %v3344
        %v3369 = vpack.c.b16 %v3349, %v3347
        %v3370 = vpack.c.b16 %v3350, %v3348
        %v3371 = vpack.c.b16 %v3353, %v3351
        %v3372 = vpack.c.b16 %v3354, %v3352
        %v3373 = vpack.c.b16 %v3357, %v3355
        %v3374 = vpack.c.b16 %v3358, %v3356
        %3391 = vmatpush.bf16.msra.mxu0 %v3373
        %3392 = vmatpush.bf16.msra.mxu0 %v3371
        %3393 = vmatpush.bf16.msra.mxu0 %v3369
        %3394 = vmatpush.bf16.msra.mxu0 %v3367
        %3395 = vmatpush.bf16.msra.mxu0 %v3365
        %3396 = vmatpush.bf16.msra.mxu0 %v3363
        %3397 = vmatpush.bf16.msra.mxu0 %v3361
        %3398 = vmatpush.bf16.msra.mxu0 %v3359
        %3399 = vmatmul.bf16.gmra.mxu0 %v3289
        %v3400 = vpop.f32.mrf.mxu0
        %v3401 = vadd.f32 %v3291, %v3400
        %v3402 = vpop.f32.mrf.mxu0
        %3403 = vdwg.mxu0
        %3404 = vmatpush.bf16.msra.mxu0 %v3374
        %3405 = vmatpush.bf16.msra.mxu0 %v3372
        %3406 = vmatpush.bf16.msra.mxu0 %v3370
        %3407 = vmatpush.bf16.msra.mxu0 %v3368
        %3408 = vmatpush.bf16.msra.mxu0 %v3366
        %3409 = vmatpush.bf16.msra.mxu0 %v3364
        %3410 = vmatpush.bf16.msra.mxu0 %v3362
        %3411 = vmatpush.bf16.msra.mxu0 %v3360
        %3412 = vmatmul.bf16.gmra.mxu0 %v3289
        %v3413 = vpop.f32.mrf.mxu0
        %v3414 = vadd.f32 %v3292, %v3413
        %v3415 = vpop.f32.mrf.mxu0
        %3416 = vdwg.mxu0
        %v3417 = vpack.c.bf16 %v3401, %v3401
        %v3418 = vpack.c.bf16 %v3414, %v3414
        %v3419 = vpack.c.bf16 %v3238, %v3238
        %v3420 = vperm.slane %v3271, 0
        %v3422 = vunpack.c.l.b16 %v3239
        %v3423 = vunpack.c.l.b16 %v3241
        %v3424 = vunpack.c.l.b16 %v3243
        %v3425 = vunpack.c.l.b16 %v3245
        %v3426 = vunpack.c.l.b16 %v3247
        %v3427 = vunpack.c.l.b16 %v3249
        %v3428 = vunpack.c.l.b16 %v3251
        %v3429 = vunpack.c.l.b16 %v3253
        %v3430 = vunpack.c.l.b16 %v3255
        %v3431 = vunpack.c.l.b16 %v3257
        %v3432 = vunpack.c.l.b16 %v3259
        %v3433 = vunpack.c.l.b16 %v3261
        %v3434 = vunpack.c.l.b16 %v3263
        %v3435 = vunpack.c.l.b16 %v3265
        %v3436 = vunpack.c.l.b16 %v3267
        %v3437 = vunpack.c.l.b16 %v3269
        %v3438 = vpack.c.b16 %v3423, %v3422
        %v3439 = vpack.c.b16 %v3425, %v3424
        %v3440 = vpack.c.b16 %v3427, %v3426
        %v3441 = vpack.c.b16 %v3429, %v3428
        %v3442 = vpack.c.b16 %v3431, %v3430
        %v3443 = vpack.c.b16 %v3433, %v3432
        %v3444 = vpack.c.b16 %v3435, %v3434
        %v3445 = vpack.c.b16 %v3437, %v3436
        %3454 = vmatpush.bf16.msra.mxu0 %v3445
        %3455 = vmatpush.bf16.msra.mxu0 %v3444
        %3456 = vmatpush.bf16.msra.mxu0 %v3443
        %3457 = vmatpush.bf16.msra.mxu0 %v3442
        %3458 = vmatpush.bf16.msra.mxu0 %v3441
        %3459 = vmatpush.bf16.msra.mxu0 %v3440
        %3460 = vmatpush.bf16.msra.mxu0 %v3439
        %3461 = vmatpush.bf16.msra.mxu0 %v3438
        %3462 = vmatmul.bf16.gmra.mxu0 %v3419
        %v3463 = vpop.f32.mrf.mxu0
        %v3464 = vadd.f32 %v3420, %v3463
        %v3465 = vpop.f32.mrf.mxu0
        %3466 = vdwg.mxu0
        %v3467 = vmul.f32 %v3464, %v1475
        %v3468 = vmul.f32 %v3464, %v1480
        %v3469 = vmul.f32 %v3464, %v1485
        %v3470 = vmul.f32 %v3464, %v1489
        %v3471 = vpack.c.bf16 %v3468, %v3467
        %v3472 = vpack.c.bf16 %v3470, %v3469
        %3473 = vmatpush.bf16.xpose.msra.mxu0 0
        %3474 = vmatpush.bf16.xpose.msra.mxu0 0
        %3475 = vmatpush.bf16.xpose.msra.mxu0 0
        %3476 = vmatpush.bf16.xpose.msra.mxu0 0
        %3477 = vmatpush.bf16.xpose.msra.mxu0 0
        %3478 = vmatpush.bf16.xpose.msra.mxu0 0
        %3479 = vmatpush.bf16.xpose.msra.mxu0 0
        %3480 = vmatpush.bf16.xpose.msra.mxu0 %v3417
        %3481 = vmatmul.bf16.gmra.mxu0 %v3471
        %v3482 = vpop.f32.mrf.mxu0
        %v3483 = vadd.f32 0.0, %v3482
        %v3484 = vpop.f32.mrf.mxu0
        %v3485 = vadd.f32 0.0, %v3484
        %3486 = vmatmul.bf16.gmra.mxu0 %v3472
        %v3487 = vpop.f32.mrf.mxu0
        %v3488 = vadd.f32 0.0, %v3487
        %v3489 = vpop.f32.mrf.mxu0
        %v3490 = vadd.f32 0.0, %v3489
        %3491 = vdwg.mxu0
        %v3492 = vmul.f32 %v3483, 0.35355338
        %v3493 = vmul.f32 %v3485, 0.35355338
        %v3494 = vmul.f32 %v3488, 0.35355338
        %v3495 = vmul.f32 %v3490, 0.35355338
        %v3496 = vsel %vm1747, %v3492, -inf
        %3497 = vmax.xlane.f32.xlu0 %v3496
        %v3498 = vpop.xlane.xlu0 %3497
        %v3499 = vsel %vm1747, %v3493, -inf
        %3500 = vmax.xlane.f32.xlu0 %v3499
        %v3501 = vpop.xlane.xlu0 %3500
        %v3502 = vsel %vm1747, %v3494, -inf
        %3503 = vmax.xlane.f32.xlu0 %v3502
        %v3504 = vpop.xlane.xlu0 %3503
        %v3505 = vsel %vm1747, %v3495, -inf
        %3506 = vmax.xlane.f32.xlu0 %v3505
        %v3507 = vpop.xlane.xlu0 %3506
        %v3508 = vsub.f32 %v3492, %v3498
        %v3509 = vsub.f32 %v3493, %v3501
        %v3510 = vsub.f32 %v3494, %v3504
        %v3511 = vsub.f32 %v3495, %v3507
        %v3512 = vmul.f32 %v3508, 1.442695
        %v3513 = vpow.pop %v3512
        %v3514 = vmul.f32 %v3509, 1.442695
        %v3515 = vpow.pop %v3514
        %v3516 = vmul.f32 %v3510, 1.442695
        %v3517 = vpow.pop %v3516
        %v3518 = vmul.f32 %v3511, 1.442695
        %v3519 = vpow.pop %v3518
        %v3520 = vsel %vm1747, %v3513, 0.0
        %3521 = vadd.xlane.f32.xlu0 %v3520
        %v3522 = vpop.xlane.xlu0 %3521
        %v3523 = vsel %vm1747, %v3515, 0.0
        %3524 = vadd.xlane.f32.xlu0 %v3523
        %v3525 = vpop.xlane.xlu0 %3524
        %v3526 = vsel %vm1747, %v3517, 0.0
        %3527 = vadd.xlane.f32.xlu0 %v3526
        %v3528 = vpop.xlane.xlu0 %3527
        %v3529 = vsel %vm1747, %v3519, 0.0
        %3530 = vadd.xlane.f32.xlu0 %v3529
        %v3531 = vpop.xlane.xlu0 %3530
        %v3532 = vrcp.pop %v3522
        %v3533 = vrcp.pop %v3525
        %v3534 = vrcp.pop %v3528
        %v3535 = vrcp.pop %v3531
        %v3536 = vmul.f32 %v3513, %v3532
        %v3537 = vmul.f32 %v3515, %v3533
        %v3538 = vmul.f32 %v3517, %v3534
        %v3539 = vmul.f32 %v3519, %v3535
        %v3540 = vpack.c.bf16 %v3537, %v3536
        %v3541 = vpack.c.bf16 %v3539, %v3538
        %v3543 = vsel %vm1747, %v3540, 0
        %v3546 = vsel %vm1747, %v3541, 0
        %v3549 = vsel %vm1800, %v3418, 0
        %3551 = vmatpush.bf16.msra.mxu0 0
        %3552 = vmatpush.bf16.msra.mxu0 0
        %3553 = vmatpush.bf16.msra.mxu0 0
        %3554 = vmatpush.bf16.msra.mxu0 0
        %3555 = vmatpush.bf16.msra.mxu0 0
        %3556 = vmatpush.bf16.msra.mxu0 0
        %3557 = vmatpush.bf16.msra.mxu0 0
        %3558 = vmatpush.bf16.msra.mxu0 %v3549
        %3559 = vmatmul.bf16.gmra.mxu0 %v3543
        %v3560 = vpop.f32.mrf.mxu0
        %v3561 = vadd.f32 0.0, %v3560
        %v3562 = vpop.f32.mrf.mxu0
        %v3563 = vadd.f32 0.0, %v3562
        %3564 = vmatmul.bf16.gmra.mxu0 %v3546
        %v3565 = vpop.f32.mrf.mxu0
        %v3566 = vadd.f32 0.0, %v3565
        %v3567 = vpop.f32.mrf.mxu0
        %v3568 = vadd.f32 0.0, %v3567
        %3569 = vdwg.mxu0
        %v3570 = vmul.f32 %v3561, %v1475
        %v3571 = vmul.f32 %v3563, %v1480
        %v3572 = vadd.f32 %v3570, %v3571
        %v3573 = vmul.f32 %v3566, %v1485
        %v3574 = vadd.f32 %v3572, %v3573
        %v3575 = vmul.f32 %v3568, %v1489
        %v3576 = vadd.f32 %v3574, %v3575
        %v3577 = vpack.c.bf16 %v3576, %v3576
        %v3579 = vperm.slane %v3288, 0
        %v3597 = vunpack.c.l.b16 %v3272
        %v3598 = vunpack.c.l.b16 %v3273
        %v3599 = vunpack.c.l.b16 %v3274
        %v3600 = vunpack.c.l.b16 %v3275
        %v3601 = vunpack.c.l.b16 %v3276
        %v3602 = vunpack.c.l.b16 %v3277
        %v3603 = vunpack.c.l.b16 %v3278
        %v3604 = vunpack.c.l.b16 %v3279
        %v3605 = vunpack.c.l.b16 %v3280
        %v3606 = vunpack.c.l.b16 %v3281
        %v3607 = vunpack.c.l.b16 %v3282
        %v3608 = vunpack.c.l.b16 %v3283
        %v3609 = vunpack.c.l.b16 %v3284
        %v3610 = vunpack.c.l.b16 %v3285
        %v3611 = vunpack.c.l.b16 %v3286
        %v3612 = vunpack.c.l.b16 %v3287
        %v3613 = vpack.c.b16 %v3598, %v3597
        %v3614 = vpack.c.b16 %v3600, %v3599
        %v3615 = vpack.c.b16 %v3602, %v3601
        %v3616 = vpack.c.b16 %v3604, %v3603
        %v3617 = vpack.c.b16 %v3606, %v3605
        %v3618 = vpack.c.b16 %v3608, %v3607
        %v3619 = vpack.c.b16 %v3610, %v3609
        %v3620 = vpack.c.b16 %v3612, %v3611
        %3629 = vmatpush.bf16.msra.mxu0 %v3620
        %3630 = vmatpush.bf16.msra.mxu0 %v3619
        %3631 = vmatpush.bf16.msra.mxu0 %v3618
        %3632 = vmatpush.bf16.msra.mxu0 %v3617
        %3633 = vmatpush.bf16.msra.mxu0 %v3616
        %3634 = vmatpush.bf16.msra.mxu0 %v3615
        %3635 = vmatpush.bf16.msra.mxu0 %v3614
        %3636 = vmatpush.bf16.msra.mxu0 %v3613
        %3637 = vmatmul.bf16.gmra.mxu0 %v3577
        %v3638 = vpop.f32.mrf.mxu0
        %v3639 = vadd.f32 %v3579, %v3638
        %v3640 = vpop.f32.mrf.mxu0
        %3641 = vdwg.mxu0
        %v3642 = vadd.f32 %v3238, %v3639
        %v3643 = vld [vmem:[#allocation17] sm:$0x1]
        %v3644 = vld [vmem:[#allocation19] sm:$0x1]
        %v3645 = vmul.f32 %v3642, %v1470
        %3646 = vadd.xlane.f32.xlu0 %v3645
        %v3647 = vpop.xlane.xlu0 %3646
        %v3648 = vmul.f32 %v3647, 0.03125
        %v3649 = vsub.f32 %v3642, %v3648
        %v3650 = vmul.f32 %v3649, %v1470
        %v3651 = vmul.f32 %v3650, %v3650
        %3652 = vadd.xlane.f32.xlu0 %v3651
        %v3653 = vpop.xlane.xlu0 %3652
        %v3654 = vmul.f32 %v3653, 0.03125
        %v3655 = vadd.f32 %v3654, 1e-05
        %v3656 = vrsqrt.pop %v3655
        %v3657 = vmul.f32 %v3656, %v3655
        %v3658 = vmul.f32 %v3657, %v3656
        %v3659 = vmul.f32 0.5, %v3658
        %v3660 = vsub.f32 1.5, %v3659
        %v3661 = vmul.f32 %v3656, %v3660
        %vm3662 = vweird.f32 %v3655
        %vm3663 = vweird.f32 %v3656
        %vm3664 = vmor %vm3662, %vm3663
        %v3665 = vsel %vm3664, %v3656, %v3661
        %v3666 = vmul.f32 %v3650, %v3665
        %v3668 = vperm.slane %v3643, 0
        %v3670 = vmul.f32 %v3666, %v3668
        %v3672 = vperm.slane %v3644, 0
        %v3674 = vadd.f32 %v3670, %v3672
        %v3675 = vld [vmem:[#allocation20] sm:$0xf]
        %v3676 = vld [vmem:[#allocation20 + $0x4] sm:$0xf]
        %v3677 = vld [vmem:[#allocation20 + $0x8] sm:$0xf]
        %v3678 = vld [vmem:[#allocation20 + $0xc] sm:$0xf]
        %v3679 = vld [vmem:[#allocation20 + $0x10] sm:$0xf]
        %v3680 = vld [vmem:[#allocation20 + $0x14] sm:$0xf]
        %v3681 = vld [vmem:[#allocation20 + $0x18] sm:$0xf]
        %v3682 = vld [vmem:[#allocation20 + $0x1c] sm:$0xf]
        %v3683 = vld [vmem:[#allocation20 + $0x20] sm:$0xf]
        %v3684 = vld [vmem:[#allocation20 + $0x24] sm:$0xf]
        %v3685 = vld [vmem:[#allocation20 + $0x28] sm:$0xf]
        %v3686 = vld [vmem:[#allocation20 + $0x2c] sm:$0xf]
        %v3687 = vld [vmem:[#allocation20 + $0x30] sm:$0xf]
        %v3688 = vld [vmem:[#allocation20 + $0x34] sm:$0xf]
        %v3689 = vld [vmem:[#allocation20 + $0x38] sm:$0xf]
        %v3690 = vld [vmem:[#allocation20 + $0x3c] sm:$0xf]
        %v3691 = vld [vmem:[#allocation22] sm:$0x1]
        %v3692 = vld [vmem:[#allocation23] sm:$0xf]
        %v3693 = vld [vmem:[#allocation23 + $0x4] sm:$0xf]
        %v3694 = vld [vmem:[#allocation23 + $0x8] sm:$0xf]
        %v3695 = vld [vmem:[#allocation23 + $0xc] sm:$0xf]
        %v3696 = vld [vmem:[#allocation23 + $0x10] sm:$0xf]
        %v3697 = vld [vmem:[#allocation23 + $0x14] sm:$0xf]
        %v3698 = vld [vmem:[#allocation23 + $0x18] sm:$0xf]
        %v3699 = vld [vmem:[#allocation23 + $0x1c] sm:$0xf]
        %v3700 = vld [vmem:[#allocation23 + $0x20] sm:$0xf]
        %v3701 = vld [vmem:[#allocation23 + $0x24] sm:$0xf]
        %v3702 = vld [vmem:[#allocation23 + $0x28] sm:$0xf]
        %v3703 = vld [vmem:[#allocation23 + $0x2c] sm:$0xf]
        %v3704 = vld [vmem:[#allocation23 + $0x30] sm:$0xf]
        %v3705 = vld [vmem:[#allocation23 + $0x34] sm:$0xf]
        %v3706 = vld [vmem:[#allocation23 + $0x38] sm:$0xf]
        %v3707 = vld [vmem:[#allocation23 + $0x3c] sm:$0xf]
        %v3708 = vld [vmem:[#allocation25] sm:$0x1]
        %v3709 = vpack.c.bf16 %v3674, %v3674
        %v3711 = vperm.slane %v3691, 0
        %v3729 = vunpack.c.l.b16 %v3675
        %v3730 = vunpack.c.l.b16 %v3676
        %v3731 = vunpack.c.l.b16 %v3677
        %v3732 = vunpack.c.l.b16 %v3678
        %v3733 = vunpack.c.l.b16 %v3679
        %v3734 = vunpack.c.l.b16 %v3680
        %v3735 = vunpack.c.l.b16 %v3681
        %v3736 = vunpack.c.l.b16 %v3682
        %v3737 = vunpack.c.l.b16 %v3683
        %v3738 = vunpack.c.l.b16 %v3684
        %v3739 = vunpack.c.l.b16 %v3685
        %v3740 = vunpack.c.l.b16 %v3686
        %v3741 = vunpack.c.l.b16 %v3687
        %v3742 = vunpack.c.l.b16 %v3688
        %v3743 = vunpack.c.l.b16 %v3689
        %v3744 = vunpack.c.l.b16 %v3690
        %v3745 = vpack.c.b16 %v3730, %v3729
        %v3746 = vpack.c.b16 %v3732, %v3731
        %v3747 = vpack.c.b16 %v3734, %v3733
        %v3748 = vpack.c.b16 %v3736, %v3735
        %v3749 = vpack.c.b16 %v3738, %v3737
        %v3750 = vpack.c.b16 %v3740, %v3739
        %v3751 = vpack.c.b16 %v3742, %v3741
        %v3752 = vpack.c.b16 %v3744, %v3743
        %3761 = vmatpush.bf16.msra.mxu0 %v3752
        %3762 = vmatpush.bf16.msra.mxu0 %v3751
        %3763 = vmatpush.bf16.msra.mxu0 %v3750
        %3764 = vmatpush.bf16.msra.mxu0 %v3749
        %3765 = vmatpush.bf16.msra.mxu0 %v3748
        %3766 = vmatpush.bf16.msra.mxu0 %v3747
        %3767 = vmatpush.bf16.msra.mxu0 %v3746
        %3768 = vmatpush.bf16.msra.mxu0 %v3745
        %3769 = vmatmul.bf16.gmra.mxu0 %v3709
        %v3770 = vpop.f32.mrf.mxu0
        %v3771 = vadd.f32 %v3711, %v3770
        %v3772 = vpop.f32.mrf.mxu0
        %3773 = vdwg.mxu0
        %v3774 = vmax.f32 %v3771, 0.0
        %v3775 = vpack.c.bf16 %v3774, %v3774
        %v3777 = vperm.slane %v3708, 0
        %v3795 = vunpack.c.l.b16 %v3692
        %v3796 = vunpack.c.l.b16 %v3693
        %v3797 = vunpack.c.l.b16 %v3694
        %v3798 = vunpack.c.l.b16 %v3695
        %v3799 = vunpack.c.l.b16 %v3696
        %v3800 = vunpack.c.l.b16 %v3697
        %v3801 = vunpack.c.l.b16 %v3698
        %v3802 = vunpack.c.l.b16 %v3699
        %v3803 = vunpack.c.l.b16 %v3700
        %v3804 = vunpack.c.l.b16 %v3701
        %v3805 = vunpack.c.l.b16 %v3702
        %v3806 = vunpack.c.l.b16 %v3703
        %v3807 = vunpack.c.l.b16 %v3704
        %v3808 = vunpack.c.l.b16 %v3705
        %v3809 = vunpack.c.l.b16 %v3706
        %v3810 = vunpack.c.l.b16 %v3707
        %v3811 = vpack.c.b16 %v3796, %v3795
        %v3812 = vpack.c.b16 %v3798, %v3797
        %v3813 = vpack.c.b16 %v3800, %v3799
        %v3814 = vpack.c.b16 %v3802, %v3801
        %v3815 = vpack.c.b16 %v3804, %v3803
        %v3816 = vpack.c.b16 %v3806, %v3805
        %v3817 = vpack.c.b16 %v3808, %v3807
        %v3818 = vpack.c.b16 %v3810, %v3809
        %3827 = vmatpush.bf16.msra.mxu0 %v3818
        %3828 = vmatpush.bf16.msra.mxu0 %v3817
        %3829 = vmatpush.bf16.msra.mxu0 %v3816
        %3830 = vmatpush.bf16.msra.mxu0 %v3815
        %3831 = vmatpush.bf16.msra.mxu0 %v3814
        %3832 = vmatpush.bf16.msra.mxu0 %v3813
        %3833 = vmatpush.bf16.msra.mxu0 %v3812
        %3834 = vmatpush.bf16.msra.mxu0 %v3811
        %3835 = vmatmul.bf16.gmra.mxu0 %v3775
        %v3836 = vpop.f32.mrf.mxu0
        %v3837 = vadd.f32 %v3777, %v3836
        %v3838 = vpop.f32.mrf.mxu0
        %3839 = vdwg.mxu0
        %v3840 = vadd.f32 %v3674, %v3837
        %v3841 = vld [vmem:[#allocation26] sm:$0x1]
        %v3842 = vld [vmem:[#allocation28] sm:$0x1]
        %v3843 = vmul.f32 %v3840, %v1470
        %3844 = vadd.xlane.f32.xlu0 %v3843
        %v3845 = vpop.xlane.xlu0 %3844
        %v3846 = vmul.f32 %v3845, 0.03125
        %v3847 = vsub.f32 %v3840, %v3846
        %v3848 = vmul.f32 %v3847, %v1470
        %v3849 = vmul.f32 %v3848, %v3848
        %3850 = vadd.xlane.f32.xlu0 %v3849
        %v3851 = vpop.xlane.xlu0 %3850
        %v3852 = vmul.f32 %v3851, 0.03125
        %v3853 = vadd.f32 %v3852, 1e-05
        %v3854 = vrsqrt.pop %v3853
        %v3855 = vmul.f32 %v3854, %v3853
        %v3856 = vmul.f32 %v3855, %v3854
        %v3857 = vmul.f32 0.5, %v3856
        %v3858 = vsub.f32 1.5, %v3857
        %v3859 = vmul.f32 %v3854, %v3858
        %vm3860 = vweird.f32 %v3853
        %vm3861 = vweird.f32 %v3854
        %vm3862 = vmor %vm3860, %vm3861
        %v3863 = vsel %vm3862, %v3854, %v3859
        %v3864 = vmul.f32 %v3848, %v3863
        %v3866 = vperm.slane %v3841, 0
        %v3868 = vmul.f32 %v3864, %v3866
        %v3870 = vperm.slane %v3842, 0
        %v3872 = vadd.f32 %v3868, %v3870
        %s3873 = scalar_lea.vmem [#allocation7], 192
        %v3874 = vld [vmem:[%s3873] sm:$0xff]
        %v3875 = vld [vmem:[%s3873 + $0x8] sm:$0xf]
        %v3876 = vld [vmem:[%s3873 + $0xc] sm:$0xff]
        %v3877 = vld [vmem:[%s3873 + $0x14] sm:$0xf]
        %v3878 = vld [vmem:[%s3873 + $0x18] sm:$0xff]
        %v3879 = vld [vmem:[%s3873 + $0x20] sm:$0xf]
        %v3880 = vld [vmem:[%s3873 + $0x24] sm:$0xff]
        %v3881 = vld [vmem:[%s3873 + $0x2c] sm:$0xf]
        %v3882 = vld [vmem:[%s3873 + $0x30] sm:$0xff]
        %v3883 = vld [vmem:[%s3873 + $0x38] sm:$0xf]
        %v3884 = vld [vmem:[%s3873 + $0x3c] sm:$0xff]
        %v3885 = vld [vmem:[%s3873 + $0x44] sm:$0xf]
        %v3886 = vld [vmem:[%s3873 + $0x48] sm:$0xff]
        %v3887 = vld [vmem:[%s3873 + $0x50] sm:$0xf]
        %v3888 = vld [vmem:[%s3873 + $0x54] sm:$0xff]
        %v3889 = vld [vmem:[%s3873 + $0x5c] sm:$0xf]
        %v3890 = vld [vmem:[%s3873 + $0x60] sm:$0xff]
        %v3891 = vld [vmem:[%s3873 + $0x68] sm:$0xf]
        %v3892 = vld [vmem:[%s3873 + $0x6c] sm:$0xff]
        %v3893 = vld [vmem:[%s3873 + $0x74] sm:$0xf]
        %v3894 = vld [vmem:[%s3873 + $0x78] sm:$0xff]
        %v3895 = vld [vmem:[%s3873 + $0x80] sm:$0xf]
        %v3896 = vld [vmem:[%s3873 + $0x84] sm:$0xff]
        %v3897 = vld [vmem:[%s3873 + $0x8c] sm:$0xf]
        %v3898 = vld [vmem:[%s3873 + $0x90] sm:$0xff]
        %v3899 = vld [vmem:[%s3873 + $0x98] sm:$0xf]
        %v3900 = vld [vmem:[%s3873 + $0x9c] sm:$0xff]
        %v3901 = vld [vmem:[%s3873 + $0xa4] sm:$0xf]
        %v3902 = vld [vmem:[%s3873 + $0xa8] sm:$0xff]
        %v3903 = vld [vmem:[%s3873 + $0xb0] sm:$0xf]
        %v3904 = vld [vmem:[%s3873 + $0xb4] sm:$0xff]
        %v3905 = vld [vmem:[%s3873 + $0xbc] sm:$0xf]
        %s3906 = scalar_lea.vmem %s35, 3
        %v3907 = vld [vmem:[%s3906] sm:$0x7]
        %s3908 = scalar_lea.vmem [#allocation8], 64
        %v3909 = vld [vmem:[%s3908] sm:$0xf]
        %v3910 = vld [vmem:[%s3908 + $0x4] sm:$0xf]
        %v3911 = vld [vmem:[%s3908 + $0x8] sm:$0xf]
        %v3912 = vld [vmem:[%s3908 + $0xc] sm:$0xf]
        %v3913 = vld [vmem:[%s3908 + $0x10] sm:$0xf]
        %v3914 = vld [vmem:[%s3908 + $0x14] sm:$0xf]
        %v3915 = vld [vmem:[%s3908 + $0x18] sm:$0xf]
        %v3916 = vld [vmem:[%s3908 + $0x1c] sm:$0xf]
        %v3917 = vld [vmem:[%s3908 + $0x20] sm:$0xf]
        %v3918 = vld [vmem:[%s3908 + $0x24] sm:$0xf]
        %v3919 = vld [vmem:[%s3908 + $0x28] sm:$0xf]
        %v3920 = vld [vmem:[%s3908 + $0x2c] sm:$0xf]
        %v3921 = vld [vmem:[%s3908 + $0x30] sm:$0xf]
        %v3922 = vld [vmem:[%s3908 + $0x34] sm:$0xf]
        %v3923 = vld [vmem:[%s3908 + $0x38] sm:$0xf]
        %v3924 = vld [vmem:[%s3908 + $0x3c] sm:$0xf]
        %s3925 = scalar_lea.vmem %s39, 1
        %v3926 = vld [vmem:[%s3925] sm:$0x1]
        %v3927 = vpack.c.bf16 %v3872, %v3872
        %v3929 = vperm.slane %v3907, 0
        %v3930 = vperm.slane %v3907, 1
        %v3931 = vperm.slane %v3907, 2
        %v3967 = vunpack.c.l.b16 %v3874
        %v3968 = vunpack.c.h.b16 %v3874
        %v3969 = vunpack.c.l.b16 %v3875
        %v3970 = vunpack.c.l.b16 %v3876
        %v3971 = vunpack.c.h.b16 %v3876
        %v3972 = vunpack.c.l.b16 %v3877
        %v3973 = vunpack.c.l.b16 %v3878
        %v3974 = vunpack.c.h.b16 %v3878
        %v3975 = vunpack.c.l.b16 %v3879
        %v3976 = vunpack.c.l.b16 %v3880
        %v3977 = vunpack.c.h.b16 %v3880
        %v3978 = vunpack.c.l.b16 %v3881
        %v3979 = vunpack.c.l.b16 %v3882
        %v3980 = vunpack.c.h.b16 %v3882
        %v3981 = vunpack.c.l.b16 %v3883
        %v3982 = vunpack.c.l.b16 %v3884
        %v3983 = vunpack.c.h.b16 %v3884
        %v3984 = vunpack.c.l.b16 %v3885
        %v3985 = vunpack.c.l.b16 %v3886
        %v3986 = vunpack.c.h.b16 %v3886
        %v3987 = vunpack.c.l.b16 %v3887
        %v3988 = vunpack.c.l.b16 %v3888
        %v3989 = vunpack.c.h.b16 %v3888
        %v3990 = vunpack.c.l.b16 %v3889
        %v3991 = vunpack.c.l.b16 %v3890
        %v3992 = vunpack.c.h.b16 %v3890
        %v3993 = vunpack.c.l.b16 %v3891
        %v3994 = vunpack.c.l.b16 %v3892
        %v3995 = vunpack.c.h.b16 %v3892
        %v3996 = vunpack.c.l.b16 %v3893
        %v3997 = vunpack.c.l.b16 %v3894
        %v3998 = vunpack.c.h.b16 %v3894
        %v3999 = vunpack.c.l.b16 %v3895
        %v4000 = vunpack.c.l.b16 %v3896
        %v4001 = vunpack.c.h.b16 %v3896
        %v4002 = vunpack.c.l.b16 %v3897
        %v4003 = vunpack.c.l.b16 %v3898
        %v4004 = vunpack.c.h.b16 %v3898
        %v4005 = vunpack.c.l.b16 %v3899
        %v4006 = vunpack.c.l.b16 %v3900
        %v4007 = vunpack.c.h.b16 %v3900
        %v4008 = vunpack.c.l.b16 %v3901
        %v4009 = vunpack.c.l.b16 %v3902
        %v4010 = vunpack.c.h.b16 %v3902
        %v4011 = vunpack.c.l.b16 %v3903
        %v4012 = vunpack.c.l.b16 %v3904
        %v4013 = vunpack.c.h.b16 %v3904
        %v4014 = vunpack.c.l.b16 %v3905
        %v4015 = vpack.c.b16 %v3970, %v3967
        %v4016 = vpack.c.b16 %v3971, %v3968
        %v4017 = vpack.c.b16 %v3972, %v3969
        %v4018 = vpack.c.b16 %v3976, %v3973
        %v4019 = vpack.c.b16 %v3977, %v3974
        %v4020 = vpack.c.b16 %v3978, %v3975
        %v4021 = vpack.c.b16 %v3982, %v3979
        %v4022 = vpack.c.b16 %v3983, %v3980
        %v4023 = vpack.c.b16 %v3984, %v3981
        %v4024 = vpack.c.b16 %v3988, %v3985
        %v4025 = vpack.c.b16 %v3989, %v3986
        %v4026 = vpack.c.b16 %v3990, %v3987
        %v4027 = vpack.c.b16 %v3994, %v3991
        %v4028 = vpack.c.b16 %v3995, %v3992
        %v4029 = vpack.c.b16 %v3996, %v3993
        %v4030 = vpack.c.b16 %v4000, %v3997
        %v4031 = vpack.c.b16 %v4001, %v3998
        %v4032 = vpack.c.b16 %v4002, %v3999
        %v4033 = vpack.c.b16 %v4006, %v4003
        %v4034 = vpack.c.b16 %v4007, %v4004
        %v4035 = vpack.c.b16 %v4008, %v4005
        %v4036 = vpack.c.b16 %v4012, %v4009
        %v4037 = vpack.c.b16 %v4013, %v4010
        %v4038 = vpack.c.b16 %v4014, %v4011
        %4063 = vmatpush.bf16.msra.mxu0 %v4036
        %4064 = vmatpush.bf16.msra.mxu0 %v4033
        %4065 = vmatpush.bf16.msra.mxu0 %v4030
        %4066 = vmatpush.bf16.msra.mxu0 %v4027
        %4067 = vmatpush.bf16.msra.mxu0 %v4024
        %4068 = vmatpush.bf16.msra.mxu0 %v4021
        %4069 = vmatpush.bf16.msra.mxu0 %v4018
        %4070 = vmatpush.bf16.msra.mxu0 %v4015
        %4071 = vmatmul.bf16.gmra.mxu0 %v3927
        %v4072 = vpop.f32.mrf.mxu0
        %v4073 = vadd.f32 %v3929, %v4072
        %v4074 = vpop.f32.mrf.mxu0
        %4075 = vdwg.mxu0
        %4076 = vmatpush.bf16.msra.mxu0 %v4037
        %4077 = vmatpush.bf16.msra.mxu0 %v4034
        %4078 = vmatpush.bf16.msra.mxu0 %v4031
        %4079 = vmatpush.bf16.msra.mxu0 %v4028
        %4080 = vmatpush.bf16.msra.mxu0 %v4025
        %4081 = vmatpush.bf16.msra.mxu0 %v4022
        %4082 = vmatpush.bf16.msra.mxu0 %v4019
        %4083 = vmatpush.bf16.msra.mxu0 %v4016
        %4084 = vmatmul.bf16.gmra.mxu0 %v3927
        %v4085 = vpop.f32.mrf.mxu0
        %v4086 = vadd.f32 %v3930, %v4085
        %v4087 = vpop.f32.mrf.mxu0
        %4088 = vdwg.mxu0
        %4089 = vmatpush.bf16.msra.mxu0 %v4038
        %4090 = vmatpush.bf16.msra.mxu0 %v4035
        %4091 = vmatpush.bf16.msra.mxu0 %v4032
        %4092 = vmatpush.bf16.msra.mxu0 %v4029
        %4093 = vmatpush.bf16.msra.mxu0 %v4026
        %4094 = vmatpush.bf16.msra.mxu0 %v4023
        %4095 = vmatpush.bf16.msra.mxu0 %v4020
        %4096 = vmatpush.bf16.msra.mxu0 %v4017
        %4097 = vmatmul.bf16.gmra.mxu0 %v3927
        %v4098 = vpop.f32.mrf.mxu0
        %v4099 = vadd.f32 %v3931, %v4098
        %v4100 = vpop.f32.mrf.mxu0
        %4101 = vdwg.mxu0
        %v4102 = vpack.c.bf16 %v4086, %v4086
        %v4103 = vpack.c.bf16 %v4099, %v4099
        %v4104 = vmul.f32 %v4073, %v1475
        %v4105 = vmul.f32 %v4073, %v1480
        %v4106 = vmul.f32 %v4073, %v1485
        %v4107 = vmul.f32 %v4073, %v1489
        %v4108 = vpack.c.bf16 %v4105, %v4104
        %v4109 = vpack.c.bf16 %v4107, %v4106
        %4110 = vmatpush.bf16.xpose.msra.mxu0 0
        %4111 = vmatpush.bf16.xpose.msra.mxu0 0
        %4112 = vmatpush.bf16.xpose.msra.mxu0 0
        %4113 = vmatpush.bf16.xpose.msra.mxu0 0
        %4114 = vmatpush.bf16.xpose.msra.mxu0 0
        %4115 = vmatpush.bf16.xpose.msra.mxu0 0
        %4116 = vmatpush.bf16.xpose.msra.mxu0 0
        %4117 = vmatpush.bf16.xpose.msra.mxu0 %v4102
        %4118 = vmatmul.bf16.gmra.mxu0 %v4108
        %v4119 = vpop.f32.mrf.mxu0
        %v4120 = vadd.f32 0.0, %v4119
        %v4121 = vpop.f32.mrf.mxu0
        %v4122 = vadd.f32 0.0, %v4121
        %4123 = vmatmul.bf16.gmra.mxu0 %v4109
        %v4124 = vpop.f32.mrf.mxu0
        %v4125 = vadd.f32 0.0, %v4124
        %v4126 = vpop.f32.mrf.mxu0
        %v4127 = vadd.f32 0.0, %v4126
        %4128 = vdwg.mxu0
        %v4129 = vmul.f32 %v4120, 0.35355338
        %v4130 = vmul.f32 %v4122, 0.35355338
        %v4131 = vmul.f32 %v4125, 0.35355338
        %v4132 = vmul.f32 %v4127, 0.35355338
        %v4133 = vsel %vm1747, %v4129, -inf
        %4134 = vmax.xlane.f32.xlu0 %v4133
        %v4135 = vpop.xlane.xlu0 %4134
        %v4136 = vsel %vm1747, %v4130, -inf
        %4137 = vmax.xlane.f32.xlu0 %v4136
        %v4138 = vpop.xlane.xlu0 %4137
        %v4139 = vsel %vm1747, %v4131, -inf
        %4140 = vmax.xlane.f32.xlu0 %v4139
        %v4141 = vpop.xlane.xlu0 %4140
        %v4142 = vsel %vm1747, %v4132, -inf
        %4143 = vmax.xlane.f32.xlu0 %v4142
        %v4144 = vpop.xlane.xlu0 %4143
        %v4145 = vsub.f32 %v4129, %v4135
        %v4146 = vsub.f32 %v4130, %v4138
        %v4147 = vsub.f32 %v4131, %v4141
        %v4148 = vsub.f32 %v4132, %v4144
        %v4149 = vmul.f32 %v4145, 1.442695
        %v4150 = vpow.pop %v4149
        %v4151 = vmul.f32 %v4146, 1.442695
        %v4152 = vpow.pop %v4151
        %v4153 = vmul.f32 %v4147, 1.442695
        %v4154 = vpow.pop %v4153
        %v4155 = vmul.f32 %v4148, 1.442695
        %v4156 = vpow.pop %v4155
        %v4157 = vsel %vm1747, %v4150, 0.0
        %4158 = vadd.xlane.f32.xlu0 %v4157
        %v4159 = vpop.xlane.xlu0 %4158
        %v4160 = vsel %vm1747, %v4152, 0.0
        %4161 = vadd.xlane.f32.xlu0 %v4160
        %v4162 = vpop.xlane.xlu0 %4161
        %v4163 = vsel %vm1747, %v4154, 0.0
        %4164 = vadd.xlane.f32.xlu0 %v4163
        %v4165 = vpop.xlane.xlu0 %4164
        %v4166 = vsel %vm1747, %v4156, 0.0
        %4167 = vadd.xlane.f32.xlu0 %v4166
        %v4168 = vpop.xlane.xlu0 %4167
        %v4169 = vrcp.pop %v4159
        %v4170 = vrcp.pop %v4162
        %v4171 = vrcp.pop %v4165
        %v4172 = vrcp.pop %v4168
        %v4173 = vmul.f32 %v4150, %v4169
        %v4174 = vmul.f32 %v4152, %v4170
        %v4175 = vmul.f32 %v4154, %v4171
        %v4176 = vmul.f32 %v4156, %v4172
        %v4177 = vpack.c.bf16 %v4174, %v4173
        %v4178 = vpack.c.bf16 %v4176, %v4175
        %v4180 = vsel %vm1747, %v4177, 0
        %v4183 = vsel %vm1747, %v4178, 0
        %v4186 = vsel %vm1800, %v4103, 0
        %4188 = vmatpush.bf16.msra.mxu0 0
        %4189 = vmatpush.bf16.msra.mxu0 0
        %4190 = vmatpush.bf16.msra.mxu0 0
        %4191 = vmatpush.bf16.msra.mxu0 0
        %4192 = vmatpush.bf16.msra.mxu0 0
        %4193 = vmatpush.bf16.msra.mxu0 0
        %4194 = vmatpush.bf16.msra.mxu0 0
        %4195 = vmatpush.bf16.msra.mxu0 %v4186
        %4196 = vmatmul.bf16.gmra.mxu0 %v4180
        %v4197 = vpop.f32.mrf.mxu0
        %v4198 = vadd.f32 0.0, %v4197
        %v4199 = vpop.f32.mrf.mxu0
        %v4200 = vadd.f32 0.0, %v4199
        %4201 = vmatmul.bf16.gmra.mxu0 %v4183
        %v4202 = vpop.f32.mrf.mxu0
        %v4203 = vadd.f32 0.0, %v4202
        %v4204 = vpop.f32.mrf.mxu0
        %v4205 = vadd.f32 0.0, %v4204
        %4206 = vdwg.mxu0
        %v4207 = vmul.f32 %v4198, %v1475
        %v4208 = vmul.f32 %v4200, %v1480
        %v4209 = vadd.f32 %v4207, %v4208
        %v4210 = vmul.f32 %v4203, %v1485
        %v4211 = vadd.f32 %v4209, %v4210
        %v4212 = vmul.f32 %v4205, %v1489
        %v4213 = vadd.f32 %v4211, %v4212
        %v4214 = vpack.c.bf16 %v4213, %v4213
        %v4216 = vperm.slane %v3926, 0
        %v4234 = vunpack.c.l.b16 %v3909
        %v4235 = vunpack.c.l.b16 %v3910
        %v4236 = vunpack.c.l.b16 %v3911
        %v4237 = vunpack.c.l.b16 %v3912
        %v4238 = vunpack.c.l.b16 %v3913
        %v4239 = vunpack.c.l.b16 %v3914
        %v4240 = vunpack.c.l.b16 %v3915
        %v4241 = vunpack.c.l.b16 %v3916
        %v4242 = vunpack.c.l.b16 %v3917
        %v4243 = vunpack.c.l.b16 %v3918
        %v4244 = vunpack.c.l.b16 %v3919
        %v4245 = vunpack.c.l.b16 %v3920
        %v4246 = vunpack.c.l.b16 %v3921
        %v4247 = vunpack.c.l.b16 %v3922
        %v4248 = vunpack.c.l.b16 %v3923
        %v4249 = vunpack.c.l.b16 %v3924
        %v4250 = vpack.c.b16 %v4235, %v4234
        %v4251 = vpack.c.b16 %v4237, %v4236
        %v4252 = vpack.c.b16 %v4239, %v4238
        %v4253 = vpack.c.b16 %v4241, %v4240
        %v4254 = vpack.c.b16 %v4243, %v4242
        %v4255 = vpack.c.b16 %v4245, %v4244
        %v4256 = vpack.c.b16 %v4247, %v4246
        %v4257 = vpack.c.b16 %v4249, %v4248
        %4266 = vmatpush.bf16.msra.mxu0 %v4257
        %4267 = vmatpush.bf16.msra.mxu0 %v4256
        %4268 = vmatpush.bf16.msra.mxu0 %v4255
        %4269 = vmatpush.bf16.msra.mxu0 %v4254
        %4270 = vmatpush.bf16.msra.mxu0 %v4253
        %4271 = vmatpush.bf16.msra.mxu0 %v4252
        %4272 = vmatpush.bf16.msra.mxu0 %v4251
        %4273 = vmatpush.bf16.msra.mxu0 %v4250
        %4274 = vmatmul.bf16.gmra.mxu0 %v4214
        %v4275 = vpop.f32.mrf.mxu0
        %v4276 = vadd.f32 %v4216, %v4275
        %v4277 = vpop.f32.mrf.mxu0
        %4278 = vdwg.mxu0
        %v4279 = vadd.f32 %v3872, %v4276
        %s4280 = scalar_lea.vmem [#allocation10], 1
        %v4281 = vld [vmem:[%s4280] sm:$0x1]
        %s4282 = scalar_lea.vmem [#allocation11], 1
        %v4283 = vld [vmem:[%s4282] sm:$0x1]
        %v4284 = vmul.f32 %v4279, %v1470
        %4285 = vadd.xlane.f32.xlu0 %v4284
        %v4286 = vpop.xlane.xlu0 %4285
        %v4287 = vmul.f32 %v4286, 0.03125
        %v4288 = vsub.f32 %v4279, %v4287
        %v4289 = vmul.f32 %v4288, %v1470
        %v4290 = vmul.f32 %v4289, %v4289
        %4291 = vadd.xlane.f32.xlu0 %v4290
        %v4292 = vpop.xlane.xlu0 %4291
        %v4293 = vmul.f32 %v4292, 0.03125
        %v4294 = vadd.f32 %v4293, 1e-05
        %v4295 = vrsqrt.pop %v4294
        %v4296 = vmul.f32 %v4295, %v4294
        %v4297 = vmul.f32 %v4296, %v4295
        %v4298 = vmul.f32 0.5, %v4297
        %v4299 = vsub.f32 1.5, %v4298
        %v4300 = vmul.f32 %v4295, %v4299
        %vm4301 = vweird.f32 %v4294
        %vm4302 = vweird.f32 %v4295
        %vm4303 = vmor %vm4301, %vm4302
        %v4304 = vsel %vm4303, %v4295, %v4300
        %v4305 = vmul.f32 %v4289, %v4304
        %v4307 = vperm.slane %v4281, 0
        %v4309 = vmul.f32 %v4305, %v4307
        %v4311 = vperm.slane %v4283, 0
        %v4313 = vadd.f32 %v4309, %v4311
        %s4314 = scalar_lea.vmem [#allocation13], 192
        %v4315 = vld [vmem:[%s4314] sm:$0xff]
        %v4316 = vld [vmem:[%s4314 + $0x8] sm:$0xf]
        %v4317 = vld [vmem:[%s4314 + $0xc] sm:$0xff]
        %v4318 = vld [vmem:[%s4314 + $0x14] sm:$0xf]
        %v4319 = vld [vmem:[%s4314 + $0x18] sm:$0xff]
        %v4320 = vld [vmem:[%s4314 + $0x20] sm:$0xf]
        %v4321 = vld [vmem:[%s4314 + $0x24] sm:$0xff]
        %v4322 = vld [vmem:[%s4314 + $0x2c] sm:$0xf]
        %v4323 = vld [vmem:[%s4314 + $0x30] sm:$0xff]
        %v4324 = vld [vmem:[%s4314 + $0x38] sm:$0xf]
        %v4325 = vld [vmem:[%s4314 + $0x3c] sm:$0xff]
        %v4326 = vld [vmem:[%s4314 + $0x44] sm:$0xf]
        %v4327 = vld [vmem:[%s4314 + $0x48] sm:$0xff]
        %v4328 = vld [vmem:[%s4314 + $0x50] sm:$0xf]
        %v4329 = vld [vmem:[%s4314 + $0x54] sm:$0xff]
        %v4330 = vld [vmem:[%s4314 + $0x5c] sm:$0xf]
        %v4331 = vld [vmem:[%s4314 + $0x60] sm:$0xff]
        %v4332 = vld [vmem:[%s4314 + $0x68] sm:$0xf]
        %v4333 = vld [vmem:[%s4314 + $0x6c] sm:$0xff]
        %v4334 = vld [vmem:[%s4314 + $0x74] sm:$0xf]
        %v4335 = vld [vmem:[%s4314 + $0x78] sm:$0xff]
        %v4336 = vld [vmem:[%s4314 + $0x80] sm:$0xf]
        %v4337 = vld [vmem:[%s4314 + $0x84] sm:$0xff]
        %v4338 = vld [vmem:[%s4314 + $0x8c] sm:$0xf]
        %v4339 = vld [vmem:[%s4314 + $0x90] sm:$0xff]
        %v4340 = vld [vmem:[%s4314 + $0x98] sm:$0xf]
        %v4341 = vld [vmem:[%s4314 + $0x9c] sm:$0xff]
        %v4342 = vld [vmem:[%s4314 + $0xa4] sm:$0xf]
        %v4343 = vld [vmem:[%s4314 + $0xa8] sm:$0xff]
        %v4344 = vld [vmem:[%s4314 + $0xb0] sm:$0xf]
        %v4345 = vld [vmem:[%s4314 + $0xb4] sm:$0xff]
        %v4346 = vld [vmem:[%s4314 + $0xbc] sm:$0xf]
        %s4347 = scalar_lea.vmem %s47, 3
        %v4348 = vld [vmem:[%s4347] sm:$0x7]
        %s4349 = scalar_lea.vmem [#allocation14], 64
        %v4350 = vld [vmem:[%s4349] sm:$0xf]
        %v4351 = vld [vmem:[%s4349 + $0x4] sm:$0xf]
        %v4352 = vld [vmem:[%s4349 + $0x8] sm:$0xf]
        %v4353 = vld [vmem:[%s4349 + $0xc] sm:$0xf]
        %v4354 = vld [vmem:[%s4349 + $0x10] sm:$0xf]
        %v4355 = vld [vmem:[%s4349 + $0x14] sm:$0xf]
        %v4356 = vld [vmem:[%s4349 + $0x18] sm:$0xf]
        %v4357 = vld [vmem:[%s4349 + $0x1c] sm:$0xf]
        %v4358 = vld [vmem:[%s4349 + $0x20] sm:$0xf]
        %v4359 = vld [vmem:[%s4349 + $0x24] sm:$0xf]
        %v4360 = vld [vmem:[%s4349 + $0x28] sm:$0xf]
        %v4361 = vld [vmem:[%s4349 + $0x2c] sm:$0xf]
        %v4362 = vld [vmem:[%s4349 + $0x30] sm:$0xf]
        %v4363 = vld [vmem:[%s4349 + $0x34] sm:$0xf]
        %v4364 = vld [vmem:[%s4349 + $0x38] sm:$0xf]
        %v4365 = vld [vmem:[%s4349 + $0x3c] sm:$0xf]
        %s4366 = scalar_lea.vmem [#allocation16], 1
        %v4367 = vld [vmem:[%s4366] sm:$0x1]
        %v4369 = vperm.slane %v4348, 1
        %v4370 = vperm.slane %v4348, 2
        %v4405 = vunpack.c.h.b16 %v4315
        %v4406 = vunpack.c.l.b16 %v4316
        %v4407 = vunpack.c.h.b16 %v4317
        %v4408 = vunpack.c.l.b16 %v4318
        %v4409 = vunpack.c.h.b16 %v4319
        %v4410 = vunpack.c.l.b16 %v4320
        %v4411 = vunpack.c.h.b16 %v4321
        %v4412 = vunpack.c.l.b16 %v4322
        %v4413 = vunpack.c.h.b16 %v4323
        %v4414 = vunpack.c.l.b16 %v4324
        %v4415 = vunpack.c.h.b16 %v4325
        %v4416 = vunpack.c.l.b16 %v4326
        %v4417 = vunpack.c.h.b16 %v4327
        %v4418 = vunpack.c.l.b16 %v4328
        %v4419 = vunpack.c.h.b16 %v4329
        %v4420 = vunpack.c.l.b16 %v4330
        %v4421 = vunpack.c.h.b16 %v4331
        %v4422 = vunpack.c.l.b16 %v4332
        %v4423 = vunpack.c.h.b16 %v4333
        %v4424 = vunpack.c.l.b16 %v4334
        %v4425 = vunpack.c.h.b16 %v4335
        %v4426 = vunpack.c.l.b16 %v4336
        %v4427 = vunpack.c.h.b16 %v4337
        %v4428 = vunpack.c.l.b16 %v4338
        %v4429 = vunpack.c.h.b16 %v4339
        %v4430 = vunpack.c.l.b16 %v4340
        %v4431 = vunpack.c.h.b16 %v4341
        %v4432 = vunpack.c.l.b16 %v4342
        %v4433 = vunpack.c.h.b16 %v4343
        %v4434 = vunpack.c.l.b16 %v4344
        %v4435 = vunpack.c.h.b16 %v4345
        %v4436 = vunpack.c.l.b16 %v4346
        %v4437 = vpack.c.b16 %v4407, %v4405
        %v4438 = vpack.c.b16 %v4408, %v4406
        %v4439 = vpack.c.b16 %v4411, %v4409
        %v4440 = vpack.c.b16 %v4412, %v4410
        %v4441 = vpack.c.b16 %v4415, %v4413
        %v4442 = vpack.c.b16 %v4416, %v4414
        %v4443 = vpack.c.b16 %v4419, %v4417
        %v4444 = vpack.c.b16 %v4420, %v4418
        %v4445 = vpack.c.b16 %v4423, %v4421
        %v4446 = vpack.c.b16 %v4424, %v4422
        %v4447 = vpack.c.b16 %v4427, %v4425
        %v4448 = vpack.c.b16 %v4428, %v4426
        %v4449 = vpack.c.b16 %v4431, %v4429
        %v4450 = vpack.c.b16 %v4432, %v4430
        %v4451 = vpack.c.b16 %v4435, %v4433
        %v4452 = vpack.c.b16 %v4436, %v4434
        %4469 = vmatpush.bf16.msra.mxu0 %v4451
        %4470 = vmatpush.bf16.msra.mxu0 %v4449
        %4471 = vmatpush.bf16.msra.mxu0 %v4447
        %4472 = vmatpush.bf16.msra.mxu0 %v4445
        %4473 = vmatpush.bf16.msra.mxu0 %v4443
        %4474 = vmatpush.bf16.msra.mxu0 %v4441
        %4475 = vmatpush.bf16.msra.mxu0 %v4439
        %4476 = vmatpush.bf16.msra.mxu0 %v4437
        %4477 = vmatmul.bf16.gmra.mxu0 %v3289
        %v4478 = vpop.f32.mrf.mxu0
        %v4479 = vadd.f32 %v4369, %v4478
        %v4480 = vpop.f32.mrf.mxu0
        %4481 = vdwg.mxu0
        %4482 = vmatpush.bf16.msra.mxu0 %v4452
        %4483 = vmatpush.bf16.msra.mxu0 %v4450
        %4484 = vmatpush.bf16.msra.mxu0 %v4448
        %4485 = vmatpush.bf16.msra.mxu0 %v4446
        %4486 = vmatpush.bf16.msra.mxu0 %v4444
        %4487 = vmatpush.bf16.msra.mxu0 %v4442
        %4488 = vmatpush.bf16.msra.mxu0 %v4440
        %4489 = vmatpush.bf16.msra.mxu0 %v4438
        %4490 = vmatmul.bf16.gmra.mxu0 %v3289
        %v4491 = vpop.f32.mrf.mxu0
        %v4492 = vadd.f32 %v4370, %v4491
        %v4493 = vpop.f32.mrf.mxu0
        %4494 = vdwg.mxu0
        %v4495 = vpack.c.bf16 %v4479, %v4479
        %v4496 = vpack.c.bf16 %v4492, %v4492
        %v4497 = vpack.c.bf16 %v4313, %v4313
        %v4498 = vperm.slane %v4348, 0
        %v4500 = vunpack.c.l.b16 %v4315
        %v4501 = vunpack.c.l.b16 %v4317
        %v4502 = vunpack.c.l.b16 %v4319
        %v4503 = vunpack.c.l.b16 %v4321
        %v4504 = vunpack.c.l.b16 %v4323
        %v4505 = vunpack.c.l.b16 %v4325
        %v4506 = vunpack.c.l.b16 %v4327
        %v4507 = vunpack.c.l.b16 %v4329
        %v4508 = vunpack.c.l.b16 %v4331
        %v4509 = vunpack.c.l.b16 %v4333
        %v4510 = vunpack.c.l.b16 %v4335
        %v4511 = vunpack.c.l.b16 %v4337
        %v4512 = vunpack.c.l.b16 %v4339
        %v4513 = vunpack.c.l.b16 %v4341
        %v4514 = vunpack.c.l.b16 %v4343
        %v4515 = vunpack.c.l.b16 %v4345
        %v4516 = vpack.c.b16 %v4501, %v4500
        %v4517 = vpack.c.b16 %v4503, %v4502
        %v4518 = vpack.c.b16 %v4505, %v4504
        %v4519 = vpack.c.b16 %v4507, %v4506
        %v4520 = vpack.c.b16 %v4509, %v4508
        %v4521 = vpack.c.b16 %v4511, %v4510
        %v4522 = vpack.c.b16 %v4513, %v4512
        %v4523 = vpack.c.b16 %v4515, %v4514
        %4532 = vmatpush.bf16.msra.mxu0 %v4523
        %4533 = vmatpush.bf16.msra.mxu0 %v4522
        %4534 = vmatpush.bf16.msra.mxu0 %v4521
        %4535 = vmatpush.bf16.msra.mxu0 %v4520
        %4536 = vmatpush.bf16.msra.mxu0 %v4519
        %4537 = vmatpush.bf16.msra.mxu0 %v4518
        %4538 = vmatpush.bf16.msra.mxu0 %v4517
        %4539 = vmatpush.bf16.msra.mxu0 %v4516
        %4540 = vmatmul.bf16.gmra.mxu0 %v4497
        %v4541 = vpop.f32.mrf.mxu0
        %v4542 = vadd.f32 %v4498, %v4541
        %v4543 = vpop.f32.mrf.mxu0
        %4544 = vdwg.mxu0
        %v4545 = vmul.f32 %v4542, %v1475
        %v4546 = vmul.f32 %v4542, %v1480
        %v4547 = vmul.f32 %v4542, %v1485
        %v4548 = vmul.f32 %v4542, %v1489
        %v4549 = vpack.c.bf16 %v4546, %v4545
        %v4550 = vpack.c.bf16 %v4548, %v4547
        %4551 = vmatpush.bf16.xpose.msra.mxu0 0
        %4552 = vmatpush.bf16.xpose.msra.mxu0 0
        %4553 = vmatpush.bf16.xpose.msra.mxu0 0
        %4554 = vmatpush.bf16.xpose.msra.mxu0 0
        %4555 = vmatpush.bf16.xpose.msra.mxu0 0
        %4556 = vmatpush.bf16.xpose.msra.mxu0 0
        %4557 = vmatpush.bf16.xpose.msra.mxu0 0
        %4558 = vmatpush.bf16.xpose.msra.mxu0 %v4495
        %4559 = vmatmul.bf16.gmra.mxu0 %v4549
        %v4560 = vpop.f32.mrf.mxu0
        %v4561 = vadd.f32 0.0, %v4560
        %v4562 = vpop.f32.mrf.mxu0
        %v4563 = vadd.f32 0.0, %v4562
        %4564 = vmatmul.bf16.gmra.mxu0 %v4550
        %v4565 = vpop.f32.mrf.mxu0
        %v4566 = vadd.f32 0.0, %v4565
        %v4567 = vpop.f32.mrf.mxu0
        %v4568 = vadd.f32 0.0, %v4567
        %4569 = vdwg.mxu0
        %v4570 = vmul.f32 %v4561, 0.35355338
        %v4571 = vmul.f32 %v4563, 0.35355338
        %v4572 = vmul.f32 %v4566, 0.35355338
        %v4573 = vmul.f32 %v4568, 0.35355338
        %v4574 = vsel %vm1747, %v4570, -inf
        %4575 = vmax.xlane.f32.xlu0 %v4574
        %v4576 = vpop.xlane.xlu0 %4575
        %v4577 = vsel %vm1747, %v4571, -inf
        %4578 = vmax.xlane.f32.xlu0 %v4577
        %v4579 = vpop.xlane.xlu0 %4578
        %v4580 = vsel %vm1747, %v4572, -inf
        %4581 = vmax.xlane.f32.xlu0 %v4580
        %v4582 = vpop.xlane.xlu0 %4581
        %v4583 = vsel %vm1747, %v4573, -inf
        %4584 = vmax.xlane.f32.xlu0 %v4583
        %v4585 = vpop.xlane.xlu0 %4584
        %v4586 = vsub.f32 %v4570, %v4576
        %v4587 = vsub.f32 %v4571, %v4579
        %v4588 = vsub.f32 %v4572, %v4582
        %v4589 = vsub.f32 %v4573, %v4585
        %v4590 = vmul.f32 %v4586, 1.442695
        %v4591 = vpow.pop %v4590
        %v4592 = vmul.f32 %v4587, 1.442695
        %v4593 = vpow.pop %v4592
        %v4594 = vmul.f32 %v4588, 1.442695
        %v4595 = vpow.pop %v4594
        %v4596 = vmul.f32 %v4589, 1.442695
        %v4597 = vpow.pop %v4596
        %v4598 = vsel %vm1747, %v4591, 0.0
        %4599 = vadd.xlane.f32.xlu0 %v4598
        %v4600 = vpop.xlane.xlu0 %4599
        %v4601 = vsel %vm1747, %v4593, 0.0
        %4602 = vadd.xlane.f32.xlu0 %v4601
        %v4603 = vpop.xlane.xlu0 %4602
        %v4604 = vsel %vm1747, %v4595, 0.0
        %4605 = vadd.xlane.f32.xlu0 %v4604
        %v4606 = vpop.xlane.xlu0 %4605
        %v4607 = vsel %vm1747, %v4597, 0.0
        %4608 = vadd.xlane.f32.xlu0 %v4607
        %v4609 = vpop.xlane.xlu0 %4608
        %v4610 = vrcp.pop %v4600
        %v4611 = vrcp.pop %v4603
        %v4612 = vrcp.pop %v4606
        %v4613 = vrcp.pop %v4609
        %v4614 = vmul.f32 %v4591, %v4610
        %v4615 = vmul.f32 %v4593, %v4611
        %v4616 = vmul.f32 %v4595, %v4612
        %v4617 = vmul.f32 %v4597, %v4613
        %v4618 = vpack.c.bf16 %v4615, %v4614
        %v4619 = vpack.c.bf16 %v4617, %v4616
        %v4621 = vsel %vm1747, %v4618, 0
        %v4624 = vsel %vm1747, %v4619, 0
        %v4627 = vsel %vm1800, %v4496, 0
        %4629 = vmatpush.bf16.msra.mxu0 0
        %4630 = vmatpush.bf16.msra.mxu0 0
        %4631 = vmatpush.bf16.msra.mxu0 0
        %4632 = vmatpush.bf16.msra.mxu0 0
        %4633 = vmatpush.bf16.msra.mxu0 0
        %4634 = vmatpush.bf16.msra.mxu0 0
        %4635 = vmatpush.bf16.msra.mxu0 0
        %4636 = vmatpush.bf16.msra.mxu0 %v4627
        %4637 = vmatmul.bf16.gmra.mxu0 %v4621
        %v4638 = vpop.f32.mrf.mxu0
        %v4639 = vadd.f32 0.0, %v4638
        %v4640 = vpop.f32.mrf.mxu0
        %v4641 = vadd.f32 0.0, %v4640
        %4642 = vmatmul.bf16.gmra.mxu0 %v4624
        %v4643 = vpop.f32.mrf.mxu0
        %v4644 = vadd.f32 0.0, %v4643
        %v4645 = vpop.f32.mrf.mxu0
        %v4646 = vadd.f32 0.0, %v4645
        %4647 = vdwg.mxu0
        %v4648 = vmul.f32 %v4639, %v1475
        %v4649 = vmul.f32 %v4641, %v1480
        %v4650 = vadd.f32 %v4648, %v4649
        %v4651 = vmul.f32 %v4644, %v1485
        %v4652 = vadd.f32 %v4650, %v4651
        %v4653 = vmul.f32 %v4646, %v1489
        %v4654 = vadd.f32 %v4652, %v4653
        %v4655 = vpack.c.bf16 %v4654, %v4654
        %v4657 = vperm.slane %v4367, 0
        %v4675 = vunpack.c.l.b16 %v4350
        %v4676 = vunpack.c.l.b16 %v4351
        %v4677 = vunpack.c.l.b16 %v4352
        %v4678 = vunpack.c.l.b16 %v4353
        %v4679 = vunpack.c.l.b16 %v4354
        %v4680 = vunpack.c.l.b16 %v4355
        %v4681 = vunpack.c.l.b16 %v4356
        %v4682 = vunpack.c.l.b16 %v4357
        %v4683 = vunpack.c.l.b16 %v4358
        %v4684 = vunpack.c.l.b16 %v4359
        %v4685 = vunpack.c.l.b16 %v4360
        %v4686 = vunpack.c.l.b16 %v4361
        %v4687 = vunpack.c.l.b16 %v4362
        %v4688 = vunpack.c.l.b16 %v4363
        %v4689 = vunpack.c.l.b16 %v4364
        %v4690 = vunpack.c.l.b16 %v4365
        %v4691 = vpack.c.b16 %v4676, %v4675
        %v4692 = vpack.c.b16 %v4678, %v4677
        %v4693 = vpack.c.b16 %v4680, %v4679
        %v4694 = vpack.c.b16 %v4682, %v4681
        %v4695 = vpack.c.b16 %v4684, %v4683
        %v4696 = vpack.c.b16 %v4686, %v4685
        %v4697 = vpack.c.b16 %v4688, %v4687
        %v4698 = vpack.c.b16 %v4690, %v4689
        %4707 = vmatpush.bf16.msra.mxu0 %v4698
        %4708 = vmatpush.bf16.msra.mxu0 %v4697
        %4709 = vmatpush.bf16.msra.mxu0 %v4696
        %4710 = vmatpush.bf16.msra.mxu0 %v4695
        %4711 = vmatpush.bf16.msra.mxu0 %v4694
        %4712 = vmatpush.bf16.msra.mxu0 %v4693
        %4713 = vmatpush.bf16.msra.mxu0 %v4692
        %4714 = vmatpush.bf16.msra.mxu0 %v4691
        %4715 = vmatmul.bf16.gmra.mxu0 %v4655
        %v4716 = vpop.f32.mrf.mxu0
        %v4717 = vadd.f32 %v4657, %v4716
        %v4718 = vpop.f32.mrf.mxu0
        %4719 = vdwg.mxu0
        %v4720 = vadd.f32 %v4313, %v4717
        %s4721 = scalar_lea.vmem [#allocation17], 1
        %v4722 = vld [vmem:[%s4721] sm:$0x1]
        %s4723 = scalar_lea.vmem [#allocation19], 1
        %v4724 = vld [vmem:[%s4723] sm:$0x1]
        %v4725 = vmul.f32 %v4720, %v1470
        %4726 = vadd.xlane.f32.xlu0 %v4725
        %v4727 = vpop.xlane.xlu0 %4726
        %v4728 = vmul.f32 %v4727, 0.03125
        %v4729 = vsub.f32 %v4720, %v4728
        %v4730 = vmul.f32 %v4729, %v1470
        %v4731 = vmul.f32 %v4730, %v4730
        %4732 = vadd.xlane.f32.xlu0 %v4731
        %v4733 = vpop.xlane.xlu0 %4732
        %v4734 = vmul.f32 %v4733, 0.03125
        %v4735 = vadd.f32 %v4734, 1e-05
        %v4736 = vrsqrt.pop %v4735
        %v4737 = vmul.f32 %v4736, %v4735
        %v4738 = vmul.f32 %v4737, %v4736
        %v4739 = vmul.f32 0.5, %v4738
        %v4740 = vsub.f32 1.5, %v4739
        %v4741 = vmul.f32 %v4736, %v4740
        %vm4742 = vweird.f32 %v4735
        %vm4743 = vweird.f32 %v4736
        %vm4744 = vmor %vm4742, %vm4743
        %v4745 = vsel %vm4744, %v4736, %v4741
        %v4746 = vmul.f32 %v4730, %v4745
        %v4748 = vperm.slane %v4722, 0
        %v4750 = vmul.f32 %v4746, %v4748
        %v4752 = vperm.slane %v4724, 0
        %v4754 = vadd.f32 %v4750, %v4752
        %s4755 = scalar_lea.vmem [#allocation20], 64
        %v4756 = vld [vmem:[%s4755] sm:$0xf]
        %v4757 = vld [vmem:[%s4755 + $0x4] sm:$0xf]
        %v4758 = vld [vmem:[%s4755 + $0x8] sm:$0xf]
        %v4759 = vld [vmem:[%s4755 + $0xc] sm:$0xf]
        %v4760 = vld [vmem:[%s4755 + $0x10] sm:$0xf]
        %v4761 = vld [vmem:[%s4755 + $0x14] sm:$0xf]
        %v4762 = vld [vmem:[%s4755 + $0x18] sm:$0xf]
        %v4763 = vld [vmem:[%s4755 + $0x1c] sm:$0xf]
        %v4764 = vld [vmem:[%s4755 + $0x20] sm:$0xf]
        %v4765 = vld [vmem:[%s4755 + $0x24] sm:$0xf]
        %v4766 = vld [vmem:[%s4755 + $0x28] sm:$0xf]
        %v4767 = vld [vmem:[%s4755 + $0x2c] sm:$0xf]
        %v4768 = vld [vmem:[%s4755 + $0x30] sm:$0xf]
        %v4769 = vld [vmem:[%s4755 + $0x34] sm:$0xf]
        %v4770 = vld [vmem:[%s4755 + $0x38] sm:$0xf]
        %v4771 = vld [vmem:[%s4755 + $0x3c] sm:$0xf]
        %s4772 = scalar_lea.vmem [#allocation22], 1
        %v4773 = vld [vmem:[%s4772] sm:$0x1]
        %s4774 = scalar_lea.vmem [#allocation23], 64
        %v4775 = vld [vmem:[%s4774] sm:$0xf]
        %v4776 = vld [vmem:[%s4774 + $0x4] sm:$0xf]
        %v4777 = vld [vmem:[%s4774 + $0x8] sm:$0xf]
        %v4778 = vld [vmem:[%s4774 + $0xc] sm:$0xf]
        %v4779 = vld [vmem:[%s4774 + $0x10] sm:$0xf]
        %v4780 = vld [vmem:[%s4774 + $0x14] sm:$0xf]
        %v4781 = vld [vmem:[%s4774 + $0x18] sm:$0xf]
        %v4782 = vld [vmem:[%s4774 + $0x1c] sm:$0xf]
        %v4783 = vld [vmem:[%s4774 + $0x20] sm:$0xf]
        %v4784 = vld [vmem:[%s4774 + $0x24] sm:$0xf]
        %v4785 = vld [vmem:[%s4774 + $0x28] sm:$0xf]
        %v4786 = vld [vmem:[%s4774 + $0x2c] sm:$0xf]
        %v4787 = vld [vmem:[%s4774 + $0x30] sm:$0xf]
        %v4788 = vld [vmem:[%s4774 + $0x34] sm:$0xf]
        %v4789 = vld [vmem:[%s4774 + $0x38] sm:$0xf]
        %v4790 = vld [vmem:[%s4774 + $0x3c] sm:$0xf]
        %s4791 = scalar_lea.vmem [#allocation25], 1
        %v4792 = vld [vmem:[%s4791] sm:$0x1]
        %v4793 = vpack.c.bf16 %v4754, %v4754
        %v4795 = vperm.slane %v4773, 0
        %v4813 = vunpack.c.l.b16 %v4756
        %v4814 = vunpack.c.l.b16 %v4757
        %v4815 = vunpack.c.l.b16 %v4758
        %v4816 = vunpack.c.l.b16 %v4759
        %v4817 = vunpack.c.l.b16 %v4760
        %v4818 = vunpack.c.l.b16 %v4761
        %v4819 = vunpack.c.l.b16 %v4762
        %v4820 = vunpack.c.l.b16 %v4763
        %v4821 = vunpack.c.l.b16 %v4764
        %v4822 = vunpack.c.l.b16 %v4765
        %v4823 = vunpack.c.l.b16 %v4766
        %v4824 = vunpack.c.l.b16 %v4767
        %v4825 = vunpack.c.l.b16 %v4768
        %v4826 = vunpack.c.l.b16 %v4769
        %v4827 = vunpack.c.l.b16 %v4770
        %v4828 = vunpack.c.l.b16 %v4771
        %v4829 = vpack.c.b16 %v4814, %v4813
        %v4830 = vpack.c.b16 %v4816, %v4815
        %v4831 = vpack.c.b16 %v4818, %v4817
        %v4832 = vpack.c.b16 %v4820, %v4819
        %v4833 = vpack.c.b16 %v4822, %v4821
        %v4834 = vpack.c.b16 %v4824, %v4823
        %v4835 = vpack.c.b16 %v4826, %v4825
        %v4836 = vpack.c.b16 %v4828, %v4827
        %4845 = vmatpush.bf16.msra.mxu0 %v4836
        %4846 = vmatpush.bf16.msra.mxu0 %v4835
        %4847 = vmatpush.bf16.msra.mxu0 %v4834
        %4848 = vmatpush.bf16.msra.mxu0 %v4833
        %4849 = vmatpush.bf16.msra.mxu0 %v4832
        %4850 = vmatpush.bf16.msra.mxu0 %v4831
        %4851 = vmatpush.bf16.msra.mxu0 %v4830
        %4852 = vmatpush.bf16.msra.mxu0 %v4829
        %4853 = vmatmul.bf16.gmra.mxu0 %v4793
        %v4854 = vpop.f32.mrf.mxu0
        %v4855 = vadd.f32 %v4795, %v4854
        %v4856 = vpop.f32.mrf.mxu0
        %4857 = vdwg.mxu0
        %v4858 = vmax.f32 %v4855, 0.0
        %v4859 = vpack.c.bf16 %v4858, %v4858
        %v4861 = vperm.slane %v4792, 0
        %v4879 = vunpack.c.l.b16 %v4775
        %v4880 = vunpack.c.l.b16 %v4776
        %v4881 = vunpack.c.l.b16 %v4777
        %v4882 = vunpack.c.l.b16 %v4778
        %v4883 = vunpack.c.l.b16 %v4779
        %v4884 = vunpack.c.l.b16 %v4780
        %v4885 = vunpack.c.l.b16 %v4781
        %v4886 = vunpack.c.l.b16 %v4782
        %v4887 = vunpack.c.l.b16 %v4783
        %v4888 = vunpack.c.l.b16 %v4784
        %v4889 = vunpack.c.l.b16 %v4785
        %v4890 = vunpack.c.l.b16 %v4786
        %v4891 = vunpack.c.l.b16 %v4787
        %v4892 = vunpack.c.l.b16 %v4788
        %v4893 = vunpack.c.l.b16 %v4789
        %v4894 = vunpack.c.l.b16 %v4790
        %v4895 = vpack.c.b16 %v4880, %v4879
        %v4896 = vpack.c.b16 %v4882, %v4881
        %v4897 = vpack.c.b16 %v4884, %v4883
        %v4898 = vpack.c.b16 %v4886, %v4885
        %v4899 = vpack.c.b16 %v4888, %v4887
        %v4900 = vpack.c.b16 %v4890, %v4889
        %v4901 = vpack.c.b16 %v4892, %v4891
        %v4902 = vpack.c.b16 %v4894, %v4893
        %4911 = vmatpush.bf16.msra.mxu0 %v4902
        %4912 = vmatpush.bf16.msra.mxu0 %v4901
        %4913 = vmatpush.bf16.msra.mxu0 %v4900
        %4914 = vmatpush.bf16.msra.mxu0 %v4899
        %4915 = vmatpush.bf16.msra.mxu0 %v4898
        %4916 = vmatpush.bf16.msra.mxu0 %v4897
        %4917 = vmatpush.bf16.msra.mxu0 %v4896
        %4918 = vmatpush.bf16.msra.mxu0 %v4895
        %4919 = vmatmul.bf16.gmra.mxu0 %v4859
        %v4920 = vpop.f32.mrf.mxu0
        %v4921 = vadd.f32 %v4861, %v4920
        %v4922 = vpop.f32.mrf.mxu0
        %4923 = vdwg.mxu0
        %v4924 = vadd.f32 %v4754, %v4921
        %s4925 = scalar_lea.vmem [#allocation26], 1
        %v4926 = vld [vmem:[%s4925] sm:$0x1]
        %s4927 = scalar_lea.vmem [#allocation28], 1
        %v4928 = vld [vmem:[%s4927] sm:$0x1]
        %v4929 = vmul.f32 %v4924, %v1470
        %4930 = vadd.xlane.f32.xlu0 %v4929
        %v4931 = vpop.xlane.xlu0 %4930
        %v4932 = vmul.f32 %v4931, 0.03125
        %v4933 = vsub.f32 %v4924, %v4932
        %v4934 = vmul.f32 %v4933, %v1470
        %v4935 = vmul.f32 %v4934, %v4934
        %4936 = vadd.xlane.f32.xlu0 %v4935
        %v4937 = vpop.xlane.xlu0 %4936
        %v4938 = vmul.f32 %v4937, 0.03125
        %v4939 = vadd.f32 %v4938, 1e-05
        %v4940 = vrsqrt.pop %v4939
        %v4941 = vmul.f32 %v4940, %v4939
        %v4942 = vmul.f32 %v4941, %v4940
        %v4943 = vmul.f32 0.5, %v4942
        %v4944 = vsub.f32 1.5, %v4943
        %v4945 = vmul.f32 %v4940, %v4944
        %vm4946 = vweird.f32 %v4939
        %vm4947 = vweird.f32 %v4940
        %vm4948 = vmor %vm4946, %vm4947
        %v4949 = vsel %vm4948, %v4940, %v4945
        %v4950 = vmul.f32 %v4934, %v4949
        %v4952 = vperm.slane %v4926, 0
        %v4954 = vmul.f32 %v4950, %v4952
        %v4956 = vperm.slane %v4928, 0
        %v4958 = vadd.f32 %v4954, %v4956
        %v4959 = vld [vmem:[%s69] sm:$0x1]
        %v4960 = vld [vmem:[%s71] sm:$0x1]
        %v4961 = vmul.f32 %v4958, %v1470
        %4962 = vadd.xlane.f32.xlu0 %v4961
        %v4963 = vpop.xlane.xlu0 %4962
        %v4964 = vmul.f32 %v4963, 0.03125
        %v4965 = vsub.f32 %v4958, %v4964
        %v4966 = vmul.f32 %v4965, %v1470
        %v4967 = vmul.f32 %v4966, %v4966
        %4968 = vadd.xlane.f32.xlu0 %v4967
        %v4969 = vpop.xlane.xlu0 %4968
        %v4970 = vmul.f32 %v4969, 0.03125
        %v4971 = vadd.f32 %v4970, 1e-05
        %v4972 = vrsqrt.pop %v4971
        %v4973 = vmul.f32 %v4972, %v4971
        %v4974 = vmul.f32 %v4973, %v4972
        %v4975 = vmul.f32 0.5, %v4974
        %v4976 = vsub.f32 1.5, %v4975
        %v4977 = vmul.f32 %v4972, %v4976
        %vm4978 = vweird.f32 %v4971
        %vm4979 = vweird.f32 %v4972
        %vm4980 = vmor %vm4978, %vm4979
        %v4981 = vsel %vm4980, %v4972, %v4977
        %v4982 = vmul.f32 %v4966, %v4981
        %v4984 = vperm.slane %v4959, 0
        %v4986 = vmul.f32 %v4982, %v4984
        %v4988 = vperm.slane %v4960, 0
        %v4990 = vadd.f32 %v4986, %v4988
        %v4991 = vpack.c.bf16 %v4990, %v4990
        %v4992 = vld [vmem:[#allocation29] sm:$0xf]
        %v4993 = vld [vmem:[#allocation29 + $0x4] sm:$0xf]
        %v4994 = vld [vmem:[#allocation29 + $0x8] sm:$0xf]
        %v4995 = vld [vmem:[#allocation29 + $0xc] sm:$0xf]
        %v4996 = vld [vmem:[#allocation29 + $0x10] sm:$0xf]
        %v4997 = vld [vmem:[#allocation29 + $0x14] sm:$0xf]
        %v4998 = vld [vmem:[#allocation29 + $0x18] sm:$0xf]
        %v4999 = vld [vmem:[#allocation29 + $0x1c] sm:$0xf]
        %v5000 = vld [vmem:[#allocation29 + $0x20] sm:$0xf]
        %v5001 = vld [vmem:[#allocation29 + $0x24] sm:$0xf]
        %v5002 = vld [vmem:[#allocation29 + $0x28] sm:$0xf]
        %v5003 = vld [vmem:[#allocation29 + $0x2c] sm:$0xf]
        %v5004 = vld [vmem:[#allocation29 + $0x30] sm:$0xf]
        %v5005 = vld [vmem:[#allocation29 + $0x34] sm:$0xf]
        %v5006 = vld [vmem:[#allocation29 + $0x38] sm:$0xf]
        %v5007 = vld [vmem:[#allocation29 + $0x3c] sm:$0xf]
        %v5008 = vld [vmem:[%s75] sm:$0x1]
        %v5010 = vperm.slane %v5008, 0
        %v5028 = vunpack.c.l.b16 %v4992
        %v5029 = vunpack.c.l.b16 %v4993
        %v5030 = vunpack.c.l.b16 %v4994
        %v5031 = vunpack.c.l.b16 %v4995
        %v5032 = vunpack.c.l.b16 %v4996
        %v5033 = vunpack.c.l.b16 %v4997
        %v5034 = vunpack.c.l.b16 %v4998
        %v5035 = vunpack.c.l.b16 %v4999
        %v5036 = vunpack.c.l.b16 %v5000
        %v5037 = vunpack.c.l.b16 %v5001
        %v5038 = vunpack.c.l.b16 %v5002
        %v5039 = vunpack.c.l.b16 %v5003
        %v5040 = vunpack.c.l.b16 %v5004
        %v5041 = vunpack.c.l.b16 %v5005
        %v5042 = vunpack.c.l.b16 %v5006
        %v5043 = vunpack.c.l.b16 %v5007
        %v5044 = vpack.c.b16 %v5029, %v5028
        %v5045 = vpack.c.b16 %v5031, %v5030
        %v5046 = vpack.c.b16 %v5033, %v5032
        %v5047 = vpack.c.b16 %v5035, %v5034
        %v5048 = vpack.c.b16 %v5037, %v5036
        %v5049 = vpack.c.b16 %v5039, %v5038
        %v5050 = vpack.c.b16 %v5041, %v5040
        %v5051 = vpack.c.b16 %v5043, %v5042
        %5060 = vmatpush.bf16.msra.mxu0 %v5051
        %5061 = vmatpush.bf16.msra.mxu0 %v5050
        %5062 = vmatpush.bf16.msra.mxu0 %v5049
        %5063 = vmatpush.bf16.msra.mxu0 %v5048
        %5064 = vmatpush.bf16.msra.mxu0 %v5047
        %5065 = vmatpush.bf16.msra.mxu0 %v5046
        %5066 = vmatpush.bf16.msra.mxu0 %v5045
        %5067 = vmatpush.bf16.msra.mxu0 %v5044
        %5068 = vmatmul.bf16.gmra.mxu0 %v4991
        %v5069 = vpop.f32.mrf.mxu0
        %v5070 = vadd.f32 %v5010, %v5069
        %v5071 = vpop.f32.mrf.mxu0
        %5072 = vdwg.mxu0
        %v5073 = vrot.slane %v5070, 4
        %v5074 = vmax.f32 %v5070, %v5073
        %v5075 = vrot.slane %v5074, 2
        %v5076 = vmax.f32 %v5074, %v5075
        %v5077 = vrot.slane %v5076, 1
        %v5078 = vmax.f32 %v5076, %v5077
        %v5079 = vsub.f32 %v5070, %v5078
        %v5080 = vmul.f32 %v5079, 1.442695
        %v5081 = vpow.pop %v5080
        %v5082 = vrot.slane %v5081, 4
        %v5083 = vadd.f32 %v5081, %v5082
        %v5084 = vrot.slane %v5083, 2
        %v5085 = vadd.f32 %v5083, %v5084
        %v5086 = vrot.slane %v5085, 1
        %v5087 = vadd.f32 %v5085, %v5086
        %v5088 = vrcp.pop %v5087
        %v5089 = vmul.f32 %v5087, %v5088
        %v5090 = vsub.f32 1.0, %v5089
        %v5091 = vmul.f32 %v5088, %v5090
        %v5092 = vadd.f32 %v5088, %v5091
        %vm5093 = vweird.f32 %v5087
        %vm5094 = vweird.f32 %v5088
        %vm5095 = vmor %vm5093, %vm5094
        %v5096 = vsel %vm5095, %v5088, %v5092
        %v5097 = vand.u32 2147483647, %v5087
        %vm5098 = vcmp.eq.f32.partialorder %v5097, 8.507059e+37
        %v5099 = vand.u32 %v5087, 2147483648
        %v5100 = vor.u32 1.1754944e-38, %v5099
        %v5101 = vsel %vm5098, %v5100, %v5096
        %v5102 = vmul.f32 %v5081, %v5101
        %5103 = vst [vmem:[%s1456] sm:$0xff] %v5102
        %s5104 = sand.u32 %s917, 1
        %s5105 = scalar_lea.sflag [#allocation4], %s5104
        %s5106 = sand.u32 %s917, 1
        %s5107 = smul.addr %s5106, 8
        %s5108 = scalar_lea.vmem [#allocation31], %s5107
        // Predicated region
        $region245: #{transformer_forward.1} parent=171 // pred_check
          %p5109 = pneg %p927
        $region246: #{transformer_forward.1} parent=171 // pred_check_branch
          %5111 = sbr.rel (%p5109) target = $region248
        $region247: #{transformer_forward.1} parent=171 // pred_region
          %5113 = vsyncadd %s5105, 0
          %s5114 = smul.addr %s101, 8
          %s5115 = scalar_lea.hbm %s77, %s5114
          %s5117 = sshll.u32 %s5108, 4
          %s5118 = int_to_ptr.vmem [resolvable:$true] %s5117
          %s5119 = sshll.u32 %s5115, 4
          %s5120 = int_to_ptr.hbm [resolvable:$true] %s5119
          %5122 = dma.vmem_to_hbm [thread:$0]  %s5118, 128, %s5120, %s5105
        $region248: #{transformer_forward.1} parent=171 // pred_fallthru
          _
      $region172: #{transformer_forward.1} parent=5 // pred_fallthru
        _
      %p5123 = scmp.le.s32.totalorder 2, %s96
      // Predicated region
      $region249: #{transformer_forward.1} parent=5 // pred_check
        %p5124 = pneg %p5123
      $region250: #{transformer_forward.1} parent=5 // pred_check_branch
        %5126 = sbr.rel (%p5124) target = $region252
      $region251: #{transformer_forward.1} parent=5 // pred_region
        %s5127 = ssub.s32 %s96, 2
        // Predicated region
        $region253: #{transformer_forward.1} parent=251 // pred_check
          %p5128 = pneg %p933
        $region254: #{transformer_forward.1} parent=251 // pred_check_branch
          %5130 = sbr.rel (%p5128) target = $region256
        $region255: #{transformer_forward.1} parent=251 // pred_region
          %s5131 = sand.u32 %s918, 1
          %s5132 = scalar_lea.sflag [#allocation4], %s5131
          %s5133 = sand.u32 %s918, 1
          %s5134 = smul.addr %s5133, 8
          %s5135 = scalar_lea.vmem [#allocation31], %s5134
          %5137 = dma.done %s5132, 128
        $region256: #{transformer_forward.1} parent=251 // pred_fallthru
          _
      $region252: #{transformer_forward.1} parent=5 // pred_fallthru
        _
    $region6: #{transformer_forward.1} parent=1 // loop_footer
      %s100 = sadd.s32 1, %s96
    $region7: #{transformer_forward.1} parent=1 // loop_footer_branch
      %95 = sbr.rel target = $region3
    $region8: #{transformer_forward.1} parent=1 // loop_exit
      _
    %5138 = vsyncpa [#allocation3], 1
    %s5139 = scalar_lea.sflag [#allocation3], 1
    %5140 = vsyncpa %s5139, 1
    %5141 = vsyncpa [#allocation6], 1
    %5142 = vsyncpa [#allocation9], 1
    %5143 = vsyncpa [#allocation12], 1
    %5144 = vsyncpa [#allocation15], 1
    %5145 = vsyncpa [#allocation18], 1
    %5146 = vsyncpa [#allocation21], 1
    %5147 = vsyncpa [#allocation24], 1
    %5148 = vsyncpa [#allocation27], 1
    %5149 = vsyncpa [#allocation30], 1
    %5150 = vsyncpa [#allocation4], 1
    %s5151 = scalar_lea.sflag [#allocation4], 1
    %5152 = vsyncpa %s5151, 1

</llo_original>
